<compile_context>
chip_gen: v6e
topology: v6e:2x2x1
jax: 0.10.0
libtpu: 0.0.40
codegen_flags: <defaults>
</compile_context>

<pallas_src>
import functools

import jax
import jax.numpy as jnp
from jax.experimental import pallas as pl
from jax.experimental.pallas import tpu as pltpu

_BN_EPS = 1e-5
_NEG = float(jnp.finfo(jnp.float32).min)      # "no floor" => linear column
_ACT_AFFINE, _ACT_SIGMOID = 0, 1


def _round_up(x, m):
    return ((x + m - 1) // m) * m


# --------------------------------------------------------------------------
# Pallas kernel: bf16 GEMM (f32 accum) + per-column shift + per-column floor
# (ReLU / linear mixed in one output) or sigmoid.
# --------------------------------------------------------------------------
def _fused_gemm_kernel(p_ref, w_ref, b_ref, f_ref, o_ref, *, act):
    acc = jnp.dot(p_ref[...], w_ref[...], preferred_element_type=jnp.float32)
    y = jnp.maximum(acc + b_ref[...], f_ref[...])   # floor=0 -> ReLU, -inf -> linear
    if act == _ACT_SIGMOID:
        y = jax.nn.sigmoid(y)
    o_ref[...] = y.astype(o_ref.dtype)


def fused_gemm(patches, wmat, shift, floor, act):
    """patches: (M, K) f32, wmat: (K, N) f32 (scale pre-folded) -> (M, N) f32."""
    M, K = patches.shape
    _, N = wmat.shape
    Np = _round_up(N, 128)                 # lane-dense output columns
    tm = min(256, _round_up(M, 8))         # single grid step unless M >= 512
    Mp = _round_up(M, tm)
    if Mp != M:
        patches = jnp.pad(patches, ((0, Mp - M), (0, 0)))
    if Np != N:
        wmat = jnp.pad(wmat, ((0, 0), (0, Np - N)))
        shift = jnp.pad(shift, (0, Np - N))
        floor = jnp.pad(floor, (0, Np - N), constant_values=_NEG)

    out = pl.pallas_call(
        functools.partial(_fused_gemm_kernel, act=act),
        out_shape=jax.ShapeDtypeStruct((Mp, Np), jnp.float32),
        grid_spec=pltpu.PrefetchScalarGridSpec(
            num_scalar_prefetch=0,
            grid=(Mp // tm,),
            in_specs=[
                pl.BlockSpec((tm, K), lambda i: (i, 0)),    # patch rows tile
                pl.BlockSpec((K, Np), lambda i: (0, 0)),    # full weight
                pl.BlockSpec((1, Np), lambda i: (0, 0)),    # shift
                pl.BlockSpec((1, Np), lambda i: (0, 0)),    # ReLU floor
            ],
            out_specs=pl.BlockSpec((tm, Np), lambda i: (i, 0)),
        ),
        compiler_params=pltpu.CompilerParams(
            dimension_semantics=("parallel",)),
    )(patches.astype(jnp.bfloat16), wmat.astype(jnp.bfloat16),
      shift.reshape(1, Np).astype(jnp.float32),
      floor.reshape(1, Np).astype(jnp.float32))
    return out[:M, :N]


# --------------------------------------------------------------------------
# Layout glue (plain JAX): im2col, weight-matrix construction, interleave
# --------------------------------------------------------------------------
def _im2col(x, k, stride, padding):
    """x: (N,H,W,C) -> patches (N*Ho*Wo, k*k*C) with K-order (kh, kw, ci)."""
    n, h, w, cin = x.shape
    ho = (h + 2 * padding - k) // stride + 1
    wo = (w + 2 * padding - k) // stride + 1
    xp = jnp.pad(x, ((0, 0), (padding, padding), (padding, padding), (0, 0)))
    cols = []
    for i in range(k):
        for j in range(k):
            cols.append(xp[:, i:i + stride * (ho - 1) + 1:stride,
                           j:j + stride * (wo - 1) + 1:stride, :])
    patches = jnp.concatenate(cols, axis=-1).reshape(n * ho * wo, k * k * cin)
    return patches, (n, ho, wo)


def _conv_weight_mat(w):
    """PyTorch Conv2d weight (Cout,Cin,KH,KW) -> (KH*KW*Cin, Cout)."""
    co, ci, kh, kw = w.shape
    return jnp.transpose(w, (2, 3, 1, 0)).reshape(kh * kw * ci, co)


# Sub-pixel decomposition of ConvTranspose2d(k=4, s=2, p=1) on a 3x3 patch
# basis of the input padded by 1.  For output phase r (= out_index mod 2) the
# contributing taps are: r=0 -> (patch offset 0, kernel idx 3), (1, 1);
#                        r=1 -> (patch offset 1, kernel idx 2), (2, 0).
_PHASE_TAPS = {0: ((0, 3), (1, 1)), 1: ((1, 2), (2, 0))}


def _deconv_weight_mat(w_t):
    """PyTorch ConvTranspose2d weight (Cin,Cout,4,4) -> (9*Cin, 4*Cout).

    Columns are blocked by phase (rh, rw); rows follow the (dh, dw, ci)
    im2col order of a 3x3 / stride-1 / pad-1 patch extraction."""
    ci, co = w_t.shape[0], w_t.shape[1]
    wb = jnp.zeros((2, 2, 3, 3, ci, co), w_t.dtype)
    for rh in (0, 1):
        for rw in (0, 1):
            for dh, kh in _PHASE_TAPS[rh]:
                for dw, kw in _PHASE_TAPS[rw]:
                    wb = wb.at[rh, rw, dh, dw].set(w_t[:, :, kh, kw])
    wb = jnp.transpose(wb, (2, 3, 4, 0, 1, 5))       # (dh, dw, ci, rh, rw, co)
    return wb.reshape(9 * ci, 4 * co)


# --------------------------------------------------------------------------
# Fused layer wrappers
# --------------------------------------------------------------------------
def conv2d_bn_relu(x, w, b, stride, bn_scale):
    """Conv2d(k, stride, pad=1) + eval-BN + ReLU, as one fused GEMM."""
    co, k = w.shape[0], w.shape[2]
    patches, (n, ho, wo) = _im2col(x, k, stride, 1)
    wmat = _conv_weight_mat(w) * bn_scale            # BN scale folded into W
    out = fused_gemm(patches, wmat, b * bn_scale,
                     jnp.zeros((co,), jnp.float32), _ACT_AFFINE)
    return out.reshape(n, ho, wo, co)


def deconv_block(x, w_t, *, bn_scale=1.0, sigmoid=False, pred_w=None, pred_b=None):
    """ConvTranspose2d(4, stride=2, pad=1, bias=False) [+BN] + ReLU/Sigmoid.

    Lowered as one GEMM over shared 3x3 patches of x (sub-pixel phases as
    column blocks).  If pred_w/pred_b are given, the predict_N 3x3 conv head
    (linear, with bias) is fused into the same GEMM as extra columns."""
    n, h, w, _ = x.shape
    co = w_t.shape[1]
    patches, _ = _im2col(x, 3, 1, 1)                 # (n*h*w, 9*cin), shared
    wmat = _deconv_weight_mat(w_t) * bn_scale
    nd = 4 * co
    shift = jnp.zeros((nd,), jnp.float32)
    floor = jnp.full((nd,), _NEG if sigmoid else 0.0, jnp.float32)
    if pred_w is not None:
        wmat = jnp.concatenate([wmat, _conv_weight_mat(pred_w)], axis=1)
        shift = jnp.concatenate([shift, pred_b.astype(jnp.float32)])
        floor = jnp.concatenate(
            [floor, jnp.full((pred_w.shape[0],), _NEG, jnp.float32)])
    out = fused_gemm(patches, wmat, shift, floor,
                     _ACT_SIGMOID if sigmoid else _ACT_AFFINE)
    # interleave the 4 phases -> (n, 2h, 2w, co)
    y = out[:, :nd].reshape(n, h, w, 2, 2, co)
    y = jnp.transpose(y, (0, 1, 3, 2, 4, 5)).reshape(n, 2 * h, 2 * w, co)
    if pred_w is None:
        return y, None
    return y, out[:, nd:].reshape(n, h, w, pred_w.shape[0])


# --------------------------------------------------------------------------
# Parameters (deterministic synthetic init, PyTorch layouts)
# --------------------------------------------------------------------------
def init_params(key):
    def conv_w(k, co, ci, ks):
        return jax.random.normal(k, (co, ci, ks, ks), jnp.float32) * 0.05

    def convt_w(k, ci, co, ks):
        return jax.random.normal(k, (ci, co, ks, ks), jnp.float32) * 0.05

    def bias(k, co):
        return jax.random.normal(k, (co,), jnp.float32) * 0.01

    keys = iter(jax.random.split(key, 64))
    p = {}
    # conv stacks: (conv 4x4 s2 p1 + BN + ReLU) -> (conv 3x3 s1 p1 + BN + ReLU)
    for name, ci, co in (("c1", 3, 32), ("c2", 32, 32), ("c3", 32, 64), ("c4", 64, 128)):
        p[f"{name}a_w"] = conv_w(next(keys), co, ci, 4)
        p[f"{name}a_b"] = bias(next(keys), co)
        p[f"{name}b_w"] = conv_w(next(keys), co, co, 3)
        p[f"{name}b_b"] = bias(next(keys), co)
    # deconvs (ConvTranspose2d, bias=False)
    p["d4_w"] = convt_w(next(keys), 128, 64, 4)
    p["d3_w"] = convt_w(next(keys), 67, 32, 4)
    p["d2_w"] = convt_w(next(keys), 35, 16, 4)
    p["d1_w"] = convt_w(next(keys), 19, 3, 4)
    # predict heads (Conv2d 3x3 s1 p1, with bias, no BN/act)
    for name, ci in (("p4", 128), ("p3", 67), ("p2", 35)):
        p[f"{name}_w"] = conv_w(next(keys), 3, ci, 3)
        p[f"{name}_b"] = bias(next(keys), 3)
    # up-samplers (ConvTranspose2d 4x4 s2 p1, bias=False, + Sigmoid)
    for name in ("u4", "u3", "u2"):
        p[f"{name}_w"] = convt_w(next(keys), 3, 3, 4)
    return p


# --------------------------------------------------------------------------
# Forward pass
# --------------------------------------------------------------------------
def traj_predictor_forward(params, x_nchw):
    p = params
    x = jnp.transpose(x_nchw, (0, 2, 3, 1)).astype(jnp.float32)   # NCHW -> NHWC
    bn_s = 1.0 / jnp.sqrt(1.0 + _BN_EPS)   # eval-mode BN folded scale

    def stack(h, a_w, a_b, b_w, b_b):
        h = conv2d_bn_relu(h, a_w, a_b, 2, bn_s)
        return conv2d_bn_relu(h, b_w, b_b, 1, bn_s)

    conv1 = stack(x,     p["c1a_w"], p["c1a_b"], p["c1b_w"], p["c1b_b"])
    conv2 = stack(conv1, p["c2a_w"], p["c2a_b"], p["c2b_w"], p["c2b_b"])
    conv3 = stack(conv2, p["c3a_w"], p["c3a_b"], p["c3b_w"], p["c3b_b"])
    conv4 = stack(conv3, p["c4a_w"], p["c4a_b"], p["c4b_w"], p["c4b_b"])

    # deconv_4 + predict_4 share patches of conv4 -> one GEMM
    deconv4, pred4 = deconv_block(conv4, p["d4_w"], bn_scale=bn_s,
                                  pred_w=p["p4_w"], pred_b=p["p4_b"])
    up4, _ = deconv_block(pred4, p["u4_w"], sigmoid=True)
    cat4 = jnp.concatenate([deconv4, up4], axis=-1)          # 64 + 3 = 67 ch

    deconv3, pred3 = deconv_block(cat4, p["d3_w"], bn_scale=bn_s,
                                  pred_w=p["p3_w"], pred_b=p["p3_b"])
    up3, _ = deconv_block(pred3, p["u3_w"], sigmoid=True)
    cat3 = jnp.concatenate([deconv3, up3], axis=-1)          # 32 + 3 = 35 ch

    deconv2, pred2 = deconv_block(cat3, p["d2_w"], bn_scale=bn_s,
                                  pred_w=p["p2_w"], pred_b=p["p2_b"])
    up2, _ = deconv_block(pred2, p["u2_w"], sigmoid=True)
    cat2 = jnp.concatenate([deconv2, up2], axis=-1)          # 16 + 3 = 19 ch

    out, _ = deconv_block(cat2, p["d1_w"], sigmoid=True)     # deconv_1 (sigmoid)
    return jnp.transpose(out, (0, 3, 1, 2))                  # back to NCHW


# --------------------------------------------------------------------------
if __name__ == "__main__":
    key = jax.random.PRNGKey(0)
    pkey, xkey = jax.random.split(key)
    params = init_params(pkey)
    # despite the docstring ("BS,4,3,H,W"), the forward only consumes (B,3,H,W)
    x = jax.random.normal(xkey, (2, 3, 32, 32), jnp.float32)

    fwd = jax.jit(traj_predictor_forward)
    y = fwd(params, x)
    y = jax.block_until_ready(y)
    assert y.shape == (2, 3, 32, 32), y.shape
    assert bool(jnp.all(jnp.isfinite(y)))
    assert bool(jnp.all((y >= 0.0) & (y <= 1.0)))  # final layer is sigmoid
    print("KERNEL_OK")
</pallas_src>

<mosaic_0001>
module attributes {stable_mosaic.version = 11 : i64} {
  func.func @_fused_gemm_kernel(%arg0: i32, %arg1: memref<256x48xbf16, #tpu.memory_space<vmem>>, %arg2: memref<48x128xbf16, #tpu.memory_space<vmem>>, %arg3: memref<1x128xf32, #tpu.memory_space<vmem>>, %arg4: memref<1x128xf32, #tpu.memory_space<vmem>>, %arg5: memref<256x128xf32, #tpu.memory_space<vmem>>) attributes {dimension_semantics = [#tpu.dimension_semantics<parallel>], iteration_bounds = array<i64: 2>, scalar_prefetch = 0 : i64, scratch_operands = 0 : i64, tpu.core_type = #tpu.core_type<tc>, window_params = [{transform_indices = @transform_0, window_bounds = array<i64: 256, 48>}, {pipeline_mode = #tpu.pipeline_mode<synchronous>, transform_indices = @transform_1, window_bounds = array<i64: 48, 128>}, {pipeline_mode = #tpu.pipeline_mode<synchronous>, transform_indices = @transform_2, window_bounds = array<i64: 1, 128>}, {pipeline_mode = #tpu.pipeline_mode<synchronous>, transform_indices = @transform_3, window_bounds = array<i64: 1, 128>}, {transform_indices = @transform_4, window_bounds = array<i64: 256, 128>}]} {
    %c0 = arith.constant 0 : index
    %c0_0 = arith.constant 0 : index
    %0 = vector.load %arg1[%c0, %c0_0] : memref<256x48xbf16, #tpu.memory_space<vmem>>, vector<256x48xbf16>
    %c0_1 = arith.constant 0 : index
    %c0_2 = arith.constant 0 : index
    %1 = vector.load %arg2[%c0_1, %c0_2] : memref<48x128xbf16, #tpu.memory_space<vmem>>, vector<48x128xbf16>
    %cst = arith.constant dense<0.000000e+00> : vector<256x128xf32>
    %2 = tpu.matmul %0, %1, %cst {dimension_numbers = #tpu.dot_dimension_numbers<[1], [0], [0], [1], [0, 0, 1, 1], [], []>} : vector<256x48xbf16>, vector<48x128xbf16>, vector<256x128xf32> -> vector<256x128xf32>
    %c0_3 = arith.constant 0 : index
    %c0_4 = arith.constant 0 : index
    %3 = vector.load %arg3[%c0_3, %c0_4] : memref<1x128xf32, #tpu.memory_space<vmem>>, vector<1x128xf32>
    %4 = vector.broadcast %3 : vector<1x128xf32> to vector<256x128xf32>
    %5 = arith.addf %2, %4 : vector<256x128xf32>
    %c0_5 = arith.constant 0 : index
    %c0_6 = arith.constant 0 : index
    %6 = vector.load %arg4[%c0_5, %c0_6] : memref<1x128xf32, #tpu.memory_space<vmem>>, vector<1x128xf32>
    %7 = vector.broadcast %6 : vector<1x128xf32> to vector<256x128xf32>
    %8 = arith.maximumf %5, %7 : vector<256x128xf32>
    %c0_7 = arith.constant 0 : index
    %c0_8 = arith.constant 0 : index
    %9 = vector.load %arg5[%c0_7, %c0_8] : memref<256x128xf32, #tpu.memory_space<vmem>>, vector<256x128xf32>
    tpu.vector_store %arg5[%c0_7, %c0_8], %8 {strides = array<i32>} : memref<256x128xf32, #tpu.memory_space<vmem>>, vector<256x128xf32>,
    return
  }
  func.func @transform_0(%arg0: i32) -> (i32, i32) {
    %c0_i32 = arith.constant 0 : i32
    %c0_i32_0 = arith.constant 0 : i32
    return %arg0, %c0_i32 : i32, i32
  }
  func.func @transform_1(%arg0: i32) -> (i32, i32) {
    %c0_i32 = arith.constant 0 : i32
    %c0_i32_0 = arith.constant 0 : i32
    %c0_i32_1 = arith.constant 0 : i32
    return %c0_i32, %c0_i32_0 : i32, i32
  }
  func.func @transform_2(%arg0: i32) -> (i32, i32) {
    %c0_i32 = arith.constant 0 : i32
    %c0_i32_0 = arith.constant 0 : i32
    %c0_i32_1 = arith.constant 0 : i32
    return %c0_i32, %c0_i32_0 : i32, i32
  }
  func.func @transform_3(%arg0: i32) -> (i32, i32) {
    %c0_i32 = arith.constant 0 : i32
    %c0_i32_0 = arith.constant 0 : i32
    %c0_i32_1 = arith.constant 0 : i32
    return %c0_i32, %c0_i32_0 : i32, i32
  }
  func.func @transform_4(%arg0: i32) -> (i32, i32) {
    %c0_i32 = arith.constant 0 : i32
    %c0_i32_0 = arith.constant 0 : i32
    return %arg0, %c0_i32 : i32, i32
  }
}

module attributes {stable_mosaic.version = 11 : i64} {
  func.func @_fused_gemm_kernel(%arg0: i32, %arg1: memref<256x288xbf16, #tpu.memory_space<vmem>>, %arg2: memref<288x128xbf16, #tpu.memory_space<vmem>>, %arg3: memref<1x128xf32, #tpu.memory_space<vmem>>, %arg4: memref<1x128xf32, #tpu.memory_space<vmem>>, %arg5: memref<256x128xf32, #tpu.memory_space<vmem>>) attributes {dimension_semantics = [#tpu.dimension_semantics<parallel>], iteration_bounds = array<i64: 2>, scalar_prefetch = 0 : i64, scratch_operands = 0 : i64, tpu.core_type = #tpu.core_type<tc>, window_params = [{transform_indices = @transform_0, window_bounds = array<i64: 256, 288>}, {pipeline_mode = #tpu.pipeline_mode<synchronous>, transform_indices = @transform_1, window_bounds = array<i64: 288, 128>}, {pipeline_mode = #tpu.pipeline_mode<synchronous>, transform_indices = @transform_2, window_bounds = array<i64: 1, 128>}, {pipeline_mode = #tpu.pipeline_mode<synchronous>, transform_indices = @transform_3, window_bounds = array<i64: 1, 128>}, {transform_indices = @transform_4, window_bounds = array<i64: 256, 128>}]} {
    %c0 = arith.constant 0 : index
    %c0_0 = arith.constant 0 : index
    %0 = vector.load %arg1[%c0, %c0_0] : memref<256x288xbf16, #tpu.memory_space<vmem>>, vector<256x288xbf16>
    %c0_1 = arith.constant 0 : index
    %c0_2 = arith.constant 0 : index
    %1 = vector.load %arg2[%c0_1, %c0_2] : memref<288x128xbf16, #tpu.memory_space<vmem>>, vector<288x128xbf16>
    %cst = arith.constant dense<0.000000e+00> : vector<256x128xf32>
    %2 = tpu.matmul %0, %1, %cst {dimension_numbers = #tpu.dot_dimension_numbers<[1], [0], [0], [1], [0, 0, 1, 1], [], []>} : vector<256x288xbf16>, vector<288x128xbf16>, vector<256x128xf32> -> vector<256x128xf32>
    %c0_3 = arith.constant 0 : index
    %c0_4 = arith.constant 0 : index
    %3 = vector.load %arg3[%c0_3, %c0_4] : memref<1x128xf32, #tpu.memory_space<vmem>>, vector<1x128xf32>
    %4 = vector.broadcast %3 : vector<1x128xf32> to vector<256x128xf32>
    %5 = arith.addf %2, %4 : vector<256x128xf32>
    %c0_5 = arith.constant 0 : index
    %c0_6 = arith.constant 0 : index
    %6 = vector.load %arg4[%c0_5, %c0_6] : memref<1x128xf32, #tpu.memory_space<vmem>>, vector<1x128xf32>
    %7 = vector.broadcast %6 : vector<1x128xf32> to vector<256x128xf32>
    %8 = arith.maximumf %5, %7 : vector<256x128xf32>
    %c0_7 = arith.constant 0 : index
    %c0_8 = arith.constant 0 : index
    %9 = vector.load %arg5[%c0_7, %c0_8] : memref<256x128xf32, #tpu.memory_space<vmem>>, vector<256x128xf32>
    tpu.vector_store %arg5[%c0_7, %c0_8], %8 {strides = array<i32>} : memref<256x128xf32, #tpu.memory_space<vmem>>, vector<256x128xf32>,
    return
  }
  func.func @transform_0(%arg0: i32) -> (i32, i32) {
    %c0_i32 = arith.constant 0 : i32
    %c0_i32_0 = arith.constant 0 : i32
    return %arg0, %c0_i32 : i32, i32
  }
  func.func @transform_1(%arg0: i32) -> (i32, i32) {
    %c0_i32 = arith.constant 0 : i32
    %c0_i32_0 = arith.constant 0 : i32
    %c0_i32_1 = arith.constant 0 : i32
    return %c0_i32, %c0_i32_0 : i32, i32
  }
  func.func @transform_2(%arg0: i32) -> (i32, i32) {
    %c0_i32 = arith.constant 0 : i32
    %c0_i32_0 = arith.constant 0 : i32
    %c0_i32_1 = arith.constant 0 : i32
    return %c0_i32, %c0_i32_0 : i32, i32
  }
  func.func @transform_3(%arg0: i32) -> (i32, i32) {
    %c0_i32 = arith.constant 0 : i32
    %c0_i32_0 = arith.constant 0 : i32
    %c0_i32_1 = arith.constant 0 : i32
    return %c0_i32, %c0_i32_0 : i32, i32
  }
  func.func @transform_4(%arg0: i32) -> (i32, i32) {
    %c0_i32 = arith.constant 0 : i32
    %c0_i32_0 = arith.constant 0 : i32
    return %arg0, %c0_i32 : i32, i32
  }
}

module attributes {stable_mosaic.version = 11 : i64} {
  func.func @_fused_gemm_kernel(%arg0: i32, %arg1: memref<128x512xbf16, #tpu.memory_space<vmem>>, %arg2: memref<512x128xbf16, #tpu.memory_space<vmem>>, %arg3: memref<1x128xf32, #tpu.memory_space<vmem>>, %arg4: memref<1x128xf32, #tpu.memory_space<vmem>>, %arg5: memref<128x128xf32, #tpu.memory_space<vmem>>) attributes {dimension_semantics = [#tpu.dimension_semantics<parallel>], iteration_bounds = array<i64: 1>, scalar_prefetch = 0 : i64, scratch_operands = 0 : i64, tpu.core_type = #tpu.core_type<tc>, window_params = [{transform_indices = @transform_0, window_bounds = array<i64: 128, 512>}, {pipeline_mode = #tpu.pipeline_mode<synchronous>, transform_indices = @transform_1, window_bounds = array<i64: 512, 128>}, {pipeline_mode = #tpu.pipeline_mode<synchronous>, transform_indices = @transform_2, window_bounds = array<i64: 1, 128>}, {pipeline_mode = #tpu.pipeline_mode<synchronous>, transform_indices = @transform_3, window_bounds = array<i64: 1, 128>}, {transform_indices = @transform_4, window_bounds = array<i64: 128, 128>}]} {
    %c0 = arith.constant 0 : index
    %c0_0 = arith.constant 0 : index
    %0 = vector.load %arg1[%c0, %c0_0] : memref<128x512xbf16, #tpu.memory_space<vmem>>, vector<128x512xbf16>
    %c0_1 = arith.constant 0 : index
    %c0_2 = arith.constant 0 : index
    %1 = vector.load %arg2[%c0_1, %c0_2] : memref<512x128xbf16, #tpu.memory_space<vmem>>, vector<512x128xbf16>
    %cst = arith.constant dense<0.000000e+00> : vector<128x128xf32>
    %2 = tpu.matmul %0, %1, %cst {dimension_numbers = #tpu.dot_dimension_numbers<[1], [0], [0], [1], [0, 0, 1, 1], [], []>} : vector<128x512xbf16>, vector<512x128xbf16>, vector<128x128xf32> -> vector<128x128xf32>
    %c0_3 = arith.constant 0 : index
    %c0_4 = arith.constant 0 : index
    %3 = vector.load %arg3[%c0_3, %c0_4] : memref<1x128xf32, #tpu.memory_space<vmem>>, vector<1x128xf32>
    %4 = vector.broadcast %3 : vector<1x128xf32> to vector<128x128xf32>
    %5 = arith.addf %2, %4 : vector<128x128xf32>
    %c0_5 = arith.constant 0 : index
    %c0_6 = arith.constant 0 : index
    %6 = vector.load %arg4[%c0_5, %c0_6] : memref<1x128xf32, #tpu.memory_space<vmem>>, vector<1x128xf32>
    %7 = vector.broadcast %6 : vector<1x128xf32> to vector<128x128xf32>
    %8 = arith.maximumf %5, %7 : vector<128x128xf32>
    %c0_7 = arith.constant 0 : index
    %c0_8 = arith.constant 0 : index
    %9 = vector.load %arg5[%c0_7, %c0_8] : memref<128x128xf32, #tpu.memory_space<vmem>>, vector<128x128xf32>
    tpu.vector_store %arg5[%c0_7, %c0_8], %8 {strides = array<i32>} : memref<128x128xf32, #tpu.memory_space<vmem>>, vector<128x128xf32>,
    return
  }
  func.func @transform_0(%arg0: i32) -> (i32, i32) {
    %c0_i32 = arith.constant 0 : i32
    %c0_i32_0 = arith.constant 0 : i32
    return %arg0, %c0_i32 : i32, i32
  }
  func.func @transform_1(%arg0: i32) -> (i32, i32) {
    %c0_i32 = arith.constant 0 : i32
    %c0_i32_0 = arith.constant 0 : i32
    %c0_i32_1 = arith.constant 0 : i32
    return %c0_i32, %c0_i32_0 : i32, i32
  }
  func.func @transform_2(%arg0: i32) -> (i32, i32) {
    %c0_i32 = arith.constant 0 : i32
    %c0_i32_0 = arith.constant 0 : i32
    %c0_i32_1 = arith.constant 0 : i32
    return %c0_i32, %c0_i32_0 : i32, i32
  }
  func.func @transform_3(%arg0: i32) -> (i32, i32) {
    %c0_i32 = arith.constant 0 : i32
    %c0_i32_0 = arith.constant 0 : i32
    %c0_i32_1 = arith.constant 0 : i32
    return %c0_i32, %c0_i32_0 : i32, i32
  }
  func.func @transform_4(%arg0: i32) -> (i32, i32) {
    %c0_i32 = arith.constant 0 : i32
    %c0_i32_0 = arith.constant 0 : i32
    return %arg0, %c0_i32 : i32, i32
  }
}

module attributes {stable_mosaic.version = 11 : i64} {
  func.func @_fused_gemm_kernel(%arg0: i32, %arg1: memref<128x288xbf16, #tpu.memory_space<vmem>>, %arg2: memref<288x128xbf16, #tpu.memory_space<vmem>>, %arg3: memref<1x128xf32, #tpu.memory_space<vmem>>, %arg4: memref<1x128xf32, #tpu.memory_space<vmem>>, %arg5: memref<128x128xf32, #tpu.memory_space<vmem>>) attributes {dimension_semantics = [#tpu.dimension_semantics<parallel>], iteration_bounds = array<i64: 1>, scalar_prefetch = 0 : i64, scratch_operands = 0 : i64, tpu.core_type = #tpu.core_type<tc>, window_params = [{transform_indices = @transform_0, window_bounds = array<i64: 128, 288>}, {pipeline_mode = #tpu.pipeline_mode<synchronous>, transform_indices = @transform_1, window_bounds = array<i64: 288, 128>}, {pipeline_mode = #tpu.pipeline_mode<synchronous>, transform_indices = @transform_2, window_bounds = array<i64: 1, 128>}, {pipeline_mode = #tpu.pipeline_mode<synchronous>, transform_indices = @transform_3, window_bounds = array<i64: 1, 128>}, {transform_indices = @transform_4, window_bounds = array<i64: 128, 128>}]} {
    %c0 = arith.constant 0 : index
    %c0_0 = arith.constant 0 : index
    %0 = vector.load %arg1[%c0, %c0_0] : memref<128x288xbf16, #tpu.memory_space<vmem>>, vector<128x288xbf16>
    %c0_1 = arith.constant 0 : index
    %c0_2 = arith.constant 0 : index
    %1 = vector.load %arg2[%c0_1, %c0_2] : memref<288x128xbf16, #tpu.memory_space<vmem>>, vector<288x128xbf16>
    %cst = arith.constant dense<0.000000e+00> : vector<128x128xf32>
    %2 = tpu.matmul %0, %1, %cst {dimension_numbers = #tpu.dot_dimension_numbers<[1], [0], [0], [1], [0, 0, 1, 1], [], []>} : vector<128x288xbf16>, vector<288x128xbf16>, vector<128x128xf32> -> vector<128x128xf32>
    %c0_3 = arith.constant 0 : index
    %c0_4 = arith.constant 0 : index
    %3 = vector.load %arg3[%c0_3, %c0_4] : memref<1x128xf32, #tpu.memory_space<vmem>>, vector<1x128xf32>
    %4 = vector.broadcast %3 : vector<1x128xf32> to vector<128x128xf32>
    %5 = arith.addf %2, %4 : vector<128x128xf32>
    %c0_5 = arith.constant 0 : index
    %c0_6 = arith.constant 0 : index
    %6 = vector.load %arg4[%c0_5, %c0_6] : memref<1x128xf32, #tpu.memory_space<vmem>>, vector<1x128xf32>
    %7 = vector.broadcast %6 : vector<1x128xf32> to vector<128x128xf32>
    %8 = arith.maximumf %5, %7 : vector<128x128xf32>
    %c0_7 = arith.constant 0 : index
    %c0_8 = arith.constant 0 : index
    %9 = vector.load %arg5[%c0_7, %c0_8] : memref<128x128xf32, #tpu.memory_space<vmem>>, vector<128x128xf32>
    tpu.vector_store %arg5[%c0_7, %c0_8], %8 {strides = array<i32>} : memref<128x128xf32, #tpu.memory_space<vmem>>, vector<128x128xf32>,
    return
  }
  func.func @transform_0(%arg0: i32) -> (i32, i32) {
    %c0_i32 = arith.constant 0 : i32
    %c0_i32_0 = arith.constant 0 : i32
    return %arg0, %c0_i32 : i32, i32
  }
  func.func @transform_1(%arg0: i32) -> (i32, i32) {
    %c0_i32 = arith.constant 0 : i32
    %c0_i32_0 = arith.constant 0 : i32
    %c0_i32_1 = arith.constant 0 : i32
    return %c0_i32, %c0_i32_0 : i32, i32
  }
  func.func @transform_2(%arg0: i32) -> (i32, i32) {
    %c0_i32 = arith.constant 0 : i32
    %c0_i32_0 = arith.constant 0 : i32
    %c0_i32_1 = arith.constant 0 : i32
    return %c0_i32, %c0_i32_0 : i32, i32
  }
  func.func @transform_3(%arg0: i32) -> (i32, i32) {
    %c0_i32 = arith.constant 0 : i32
    %c0_i32_0 = arith.constant 0 : i32
    %c0_i32_1 = arith.constant 0 : i32
    return %c0_i32, %c0_i32_0 : i32, i32
  }
  func.func @transform_4(%arg0: i32) -> (i32, i32) {
    %c0_i32 = arith.constant 0 : i32
    %c0_i32_0 = arith.constant 0 : i32
    return %arg0, %c0_i32 : i32, i32
  }
}

module attributes {stable_mosaic.version = 11 : i64} {
  func.func @_fused_gemm_kernel(%arg0: i32, %arg1: memref<32x512xbf16, #tpu.memory_space<vmem>>, %arg2: memref<512x128xbf16, #tpu.memory_space<vmem>>, %arg3: memref<1x128xf32, #tpu.memory_space<vmem>>, %arg4: memref<1x128xf32, #tpu.memory_space<vmem>>, %arg5: memref<32x128xf32, #tpu.memory_space<vmem>>) attributes {dimension_semantics = [#tpu.dimension_semantics<parallel>], iteration_bounds = array<i64: 1>, scalar_prefetch = 0 : i64, scratch_operands = 0 : i64, tpu.core_type = #tpu.core_type<tc>, window_params = [{transform_indices = @transform_0, window_bounds = array<i64: 32, 512>}, {pipeline_mode = #tpu.pipeline_mode<synchronous>, transform_indices = @transform_1, window_bounds = array<i64: 512, 128>}, {pipeline_mode = #tpu.pipeline_mode<synchronous>, transform_indices = @transform_2, window_bounds = array<i64: 1, 128>}, {pipeline_mode = #tpu.pipeline_mode<synchronous>, transform_indices = @transform_3, window_bounds = array<i64: 1, 128>}, {transform_indices = @transform_4, window_bounds = array<i64: 32, 128>}]} {
    %c0 = arith.constant 0 : index
    %c0_0 = arith.constant 0 : index
    %0 = vector.load %arg1[%c0, %c0_0] : memref<32x512xbf16, #tpu.memory_space<vmem>>, vector<32x512xbf16>
    %c0_1 = arith.constant 0 : index
    %c0_2 = arith.constant 0 : index
    %1 = vector.load %arg2[%c0_1, %c0_2] : memref<512x128xbf16, #tpu.memory_space<vmem>>, vector<512x128xbf16>
    %cst = arith.constant dense<0.000000e+00> : vector<32x128xf32>
    %2 = tpu.matmul %0, %1, %cst {dimension_numbers = #tpu.dot_dimension_numbers<[1], [0], [0], [1], [0, 0, 1, 1], [], []>} : vector<32x512xbf16>, vector<512x128xbf16>, vector<32x128xf32> -> vector<32x128xf32>
    %c0_3 = arith.constant 0 : index
    %c0_4 = arith.constant 0 : index
    %3 = vector.load %arg3[%c0_3, %c0_4] : memref<1x128xf32, #tpu.memory_space<vmem>>, vector<1x128xf32>
    %4 = vector.broadcast %3 : vector<1x128xf32> to vector<32x128xf32>
    %5 = arith.addf %2, %4 : vector<32x128xf32>
    %c0_5 = arith.constant 0 : index
    %c0_6 = arith.constant 0 : index
    %6 = vector.load %arg4[%c0_5, %c0_6] : memref<1x128xf32, #tpu.memory_space<vmem>>, vector<1x128xf32>
    %7 = vector.broadcast %6 : vector<1x128xf32> to vector<32x128xf32>
    %8 = arith.maximumf %5, %7 : vector<32x128xf32>
    %c0_7 = arith.constant 0 : index
    %c0_8 = arith.constant 0 : index
    %9 = vector.load %arg5[%c0_7, %c0_8] : memref<32x128xf32, #tpu.memory_space<vmem>>, vector<32x128xf32>
    tpu.vector_store %arg5[%c0_7, %c0_8], %8 {strides = array<i32>} : memref<32x128xf32, #tpu.memory_space<vmem>>, vector<32x128xf32>,
    return
  }
  func.func @transform_0(%arg0: i32) -> (i32, i32) {
    %c0_i32 = arith.constant 0 : i32
    %c0_i32_0 = arith.constant 0 : i32
    return %arg0, %c0_i32 : i32, i32
  }
  func.func @transform_1(%arg0: i32) -> (i32, i32) {
    %c0_i32 = arith.constant 0 : i32
    %c0_i32_0 = arith.constant 0 : i32
    %c0_i32_1 = arith.constant 0 : i32
    return %c0_i32, %c0_i32_0 : i32, i32
  }
  func.func @transform_2(%arg0: i32) -> (i32, i32) {
    %c0_i32 = arith.constant 0 : i32
    %c0_i32_0 = arith.constant 0 : i32
    %c0_i32_1 = arith.constant 0 : i32
    return %c0_i32, %c0_i32_0 : i32, i32
  }
  func.func @transform_3(%arg0: i32) -> (i32, i32) {
    %c0_i32 = arith.constant 0 : i32
    %c0_i32_0 = arith.constant 0 : i32
    %c0_i32_1 = arith.constant 0 : i32
    return %c0_i32, %c0_i32_0 : i32, i32
  }
  func.func @transform_4(%arg0: i32) -> (i32, i32) {
    %c0_i32 = arith.constant 0 : i32
    %c0_i32_0 = arith.constant 0 : i32
    return %arg0, %c0_i32 : i32, i32
  }
}

module attributes {stable_mosaic.version = 11 : i64} {
  func.func @_fused_gemm_kernel(%arg0: i32, %arg1: memref<32x576xbf16, #tpu.memory_space<vmem>>, %arg2: memref<576x128xbf16, #tpu.memory_space<vmem>>, %arg3: memref<1x128xf32, #tpu.memory_space<vmem>>, %arg4: memref<1x128xf32, #tpu.memory_space<vmem>>, %arg5: memref<32x128xf32, #tpu.memory_space<vmem>>) attributes {dimension_semantics = [#tpu.dimension_semantics<parallel>], iteration_bounds = array<i64: 1>, scalar_prefetch = 0 : i64, scratch_operands = 0 : i64, tpu.core_type = #tpu.core_type<tc>, window_params = [{transform_indices = @transform_0, window_bounds = array<i64: 32, 576>}, {pipeline_mode = #tpu.pipeline_mode<synchronous>, transform_indices = @transform_1, window_bounds = array<i64: 576, 128>}, {pipeline_mode = #tpu.pipeline_mode<synchronous>, transform_indices = @transform_2, window_bounds = array<i64: 1, 128>}, {pipeline_mode = #tpu.pipeline_mode<synchronous>, transform_indices = @transform_3, window_bounds = array<i64: 1, 128>}, {transform_indices = @transform_4, window_bounds = array<i64: 32, 128>}]} {
    %c0 = arith.constant 0 : index
    %c0_0 = arith.constant 0 : index
    %0 = vector.load %arg1[%c0, %c0_0] : memref<32x576xbf16, #tpu.memory_space<vmem>>, vector<32x576xbf16>
    %c0_1 = arith.constant 0 : index
    %c0_2 = arith.constant 0 : index
    %1 = vector.load %arg2[%c0_1, %c0_2] : memref<576x128xbf16, #tpu.memory_space<vmem>>, vector<576x128xbf16>
    %cst = arith.constant dense<0.000000e+00> : vector<32x128xf32>
    %2 = tpu.matmul %0, %1, %cst {dimension_numbers = #tpu.dot_dimension_numbers<[1], [0], [0], [1], [0, 0, 1, 1], [], []>} : vector<32x576xbf16>, vector<576x128xbf16>, vector<32x128xf32> -> vector<32x128xf32>
    %c0_3 = arith.constant 0 : index
    %c0_4 = arith.constant 0 : index
    %3 = vector.load %arg3[%c0_3, %c0_4] : memref<1x128xf32, #tpu.memory_space<vmem>>, vector<1x128xf32>
    %4 = vector.broadcast %3 : vector<1x128xf32> to vector<32x128xf32>
    %5 = arith.addf %2, %4 : vector<32x128xf32>
    %c0_5 = arith.constant 0 : index
    %c0_6 = arith.constant 0 : index
    %6 = vector.load %arg4[%c0_5, %c0_6] : memref<1x128xf32, #tpu.memory_space<vmem>>, vector<1x128xf32>
    %7 = vector.broadcast %6 : vector<1x128xf32> to vector<32x128xf32>
    %8 = arith.maximumf %5, %7 : vector<32x128xf32>
    %c0_7 = arith.constant 0 : index
    %c0_8 = arith.constant 0 : index
    %9 = vector.load %arg5[%c0_7, %c0_8] : memref<32x128xf32, #tpu.memory_space<vmem>>, vector<32x128xf32>
    tpu.vector_store %arg5[%c0_7, %c0_8], %8 {strides = array<i32>} : memref<32x128xf32, #tpu.memory_space<vmem>>, vector<32x128xf32>,
    return
  }
  func.func @transform_0(%arg0: i32) -> (i32, i32) {
    %c0_i32 = arith.constant 0 : i32
    %c0_i32_0 = arith.constant 0 : i32
    return %arg0, %c0_i32 : i32, i32
  }
  func.func @transform_1(%arg0: i32) -> (i32, i32) {
    %c0_i32 = arith.constant 0 : i32
    %c0_i32_0 = arith.constant 0 : i32
    %c0_i32_1 = arith.constant 0 : i32
    return %c0_i32, %c0_i32_0 : i32, i32
  }
  func.func @transform_2(%arg0: i32) -> (i32, i32) {
    %c0_i32 = arith.constant 0 : i32
    %c0_i32_0 = arith.constant 0 : i32
    %c0_i32_1 = arith.constant 0 : i32
    return %c0_i32, %c0_i32_0 : i32, i32
  }
  func.func @transform_3(%arg0: i32) -> (i32, i32) {
    %c0_i32 = arith.constant 0 : i32
    %c0_i32_0 = arith.constant 0 : i32
    %c0_i32_1 = arith.constant 0 : i32
    return %c0_i32, %c0_i32_0 : i32, i32
  }
  func.func @transform_4(%arg0: i32) -> (i32, i32) {
    %c0_i32 = arith.constant 0 : i32
    %c0_i32_0 = arith.constant 0 : i32
    return %arg0, %c0_i32 : i32, i32
  }
}

module attributes {stable_mosaic.version = 11 : i64} {
  func.func @_fused_gemm_kernel(%arg0: i32, %arg1: memref<8x1024xbf16, #tpu.memory_space<vmem>>, %arg2: memref<1024x128xbf16, #tpu.memory_space<vmem>>, %arg3: memref<1x128xf32, #tpu.memory_space<vmem>>, %arg4: memref<1x128xf32, #tpu.memory_space<vmem>>, %arg5: memref<8x128xf32, #tpu.memory_space<vmem>>) attributes {dimension_semantics = [#tpu.dimension_semantics<parallel>], iteration_bounds = array<i64: 1>, scalar_prefetch = 0 : i64, scratch_operands = 0 : i64, tpu.core_type = #tpu.core_type<tc>, window_params = [{transform_indices = @transform_0, window_bounds = array<i64: 8, 1024>}, {pipeline_mode = #tpu.pipeline_mode<synchronous>, transform_indices = @transform_1, window_bounds = array<i64: 1024, 128>}, {pipeline_mode = #tpu.pipeline_mode<synchronous>, transform_indices = @transform_2, window_bounds = array<i64: 1, 128>}, {pipeline_mode = #tpu.pipeline_mode<synchronous>, transform_indices = @transform_3, window_bounds = array<i64: 1, 128>}, {transform_indices = @transform_4, window_bounds = array<i64: 8, 128>}]} {
    %c0 = arith.constant 0 : index
    %c0_0 = arith.constant 0 : index
    %0 = vector.load %arg1[%c0, %c0_0] : memref<8x1024xbf16, #tpu.memory_space<vmem>>, vector<8x1024xbf16>
    %c0_1 = arith.constant 0 : index
    %c0_2 = arith.constant 0 : index
    %1 = vector.load %arg2[%c0_1, %c0_2] : memref<1024x128xbf16, #tpu.memory_space<vmem>>, vector<1024x128xbf16>
    %cst = arith.constant dense<0.000000e+00> : vector<8x128xf32>
    %2 = tpu.matmul %0, %1, %cst {dimension_numbers = #tpu.dot_dimension_numbers<[1], [0], [0], [1], [0, 0, 1, 1], [], []>} : vector<8x1024xbf16>, vector<1024x128xbf16>, vector<8x128xf32> -> vector<8x128xf32>
    %c0_3 = arith.constant 0 : index
    %c0_4 = arith.constant 0 : index
    %3 = vector.load %arg3[%c0_3, %c0_4] : memref<1x128xf32, #tpu.memory_space<vmem>>, vector<1x128xf32>
    %4 = vector.broadcast %3 : vector<1x128xf32> to vector<8x128xf32>
    %5 = arith.addf %2, %4 : vector<8x128xf32>
    %c0_5 = arith.constant 0 : index
    %c0_6 = arith.constant 0 : index
    %6 = vector.load %arg4[%c0_5, %c0_6] : memref<1x128xf32, #tpu.memory_space<vmem>>, vector<1x128xf32>
    %7 = vector.broadcast %6 : vector<1x128xf32> to vector<8x128xf32>
    %8 = arith.maximumf %5, %7 : vector<8x128xf32>
    %c0_7 = arith.constant 0 : index
    %c0_8 = arith.constant 0 : index
    %9 = vector.load %arg5[%c0_7, %c0_8] : memref<8x128xf32, #tpu.memory_space<vmem>>, vector<8x128xf32>
    tpu.vector_store %arg5[%c0_7, %c0_8], %8 {strides = array<i32>} : memref<8x128xf32, #tpu.memory_space<vmem>>, vector<8x128xf32>,
    return
  }
  func.func @transform_0(%arg0: i32) -> (i32, i32) {
    %c0_i32 = arith.constant 0 : i32
    %c0_i32_0 = arith.constant 0 : i32
    return %arg0, %c0_i32 : i32, i32
  }
  func.func @transform_1(%arg0: i32) -> (i32, i32) {
    %c0_i32 = arith.constant 0 : i32
    %c0_i32_0 = arith.constant 0 : i32
    %c0_i32_1 = arith.constant 0 : i32
    return %c0_i32, %c0_i32_0 : i32, i32
  }
  func.func @transform_2(%arg0: i32) -> (i32, i32) {
    %c0_i32 = arith.constant 0 : i32
    %c0_i32_0 = arith.constant 0 : i32
    %c0_i32_1 = arith.constant 0 : i32
    return %c0_i32, %c0_i32_0 : i32, i32
  }
  func.func @transform_3(%arg0: i32) -> (i32, i32) {
    %c0_i32 = arith.constant 0 : i32
    %c0_i32_0 = arith.constant 0 : i32
    %c0_i32_1 = arith.constant 0 : i32
    return %c0_i32, %c0_i32_0 : i32, i32
  }
  func.func @transform_4(%arg0: i32) -> (i32, i32) {
    %c0_i32 = arith.constant 0 : i32
    %c0_i32_0 = arith.constant 0 : i32
    return %arg0, %c0_i32 : i32, i32
  }
}

module attributes {stable_mosaic.version = 11 : i64} {
  func.func @_fused_gemm_kernel(%arg0: i32, %arg1: memref<8x1152xbf16, #tpu.memory_space<vmem>>, %arg2: memref<1152x128xbf16, #tpu.memory_space<vmem>>, %arg3: memref<1x128xf32, #tpu.memory_space<vmem>>, %arg4: memref<1x128xf32, #tpu.memory_space<vmem>>, %arg5: memref<8x128xf32, #tpu.memory_space<vmem>>) attributes {dimension_semantics = [#tpu.dimension_semantics<parallel>], iteration_bounds = array<i64: 1>, scalar_prefetch = 0 : i64, scratch_operands = 0 : i64, tpu.core_type = #tpu.core_type<tc>, window_params = [{transform_indices = @transform_0, window_bounds = array<i64: 8, 1152>}, {pipeline_mode = #tpu.pipeline_mode<synchronous>, transform_indices = @transform_1, window_bounds = array<i64: 1152, 128>}, {pipeline_mode = #tpu.pipeline_mode<synchronous>, transform_indices = @transform_2, window_bounds = array<i64: 1, 128>}, {pipeline_mode = #tpu.pipeline_mode<synchronous>, transform_indices = @transform_3, window_bounds = array<i64: 1, 128>}, {transform_indices = @transform_4, window_bounds = array<i64: 8, 128>}]} {
    %c0 = arith.constant 0 : index
    %c0_0 = arith.constant 0 : index
    %0 = vector.load %arg1[%c0, %c0_0] : memref<8x1152xbf16, #tpu.memory_space<vmem>>, vector<8x1152xbf16>
    %c0_1 = arith.constant 0 : index
    %c0_2 = arith.constant 0 : index
    %1 = vector.load %arg2[%c0_1, %c0_2] : memref<1152x128xbf16, #tpu.memory_space<vmem>>, vector<1152x128xbf16>
    %cst = arith.constant dense<0.000000e+00> : vector<8x128xf32>
    %2 = tpu.matmul %0, %1, %cst {dimension_numbers = #tpu.dot_dimension_numbers<[1], [0], [0], [1], [0, 0, 1, 1], [], []>} : vector<8x1152xbf16>, vector<1152x128xbf16>, vector<8x128xf32> -> vector<8x128xf32>
    %c0_3 = arith.constant 0 : index
    %c0_4 = arith.constant 0 : index
    %3 = vector.load %arg3[%c0_3, %c0_4] : memref<1x128xf32, #tpu.memory_space<vmem>>, vector<1x128xf32>
    %4 = vector.broadcast %3 : vector<1x128xf32> to vector<8x128xf32>
    %5 = arith.addf %2, %4 : vector<8x128xf32>
    %c0_5 = arith.constant 0 : index
    %c0_6 = arith.constant 0 : index
    %6 = vector.load %arg4[%c0_5, %c0_6] : memref<1x128xf32, #tpu.memory_space<vmem>>, vector<1x128xf32>
    %7 = vector.broadcast %6 : vector<1x128xf32> to vector<8x128xf32>
    %8 = arith.maximumf %5, %7 : vector<8x128xf32>
    %c0_7 = arith.constant 0 : index
    %c0_8 = arith.constant 0 : index
    %9 = vector.load %arg5[%c0_7, %c0_8] : memref<8x128xf32, #tpu.memory_space<vmem>>, vector<8x128xf32>
    tpu.vector_store %arg5[%c0_7, %c0_8], %8 {strides = array<i32>} : memref<8x128xf32, #tpu.memory_space<vmem>>, vector<8x128xf32>,
    return
  }
  func.func @transform_0(%arg0: i32) -> (i32, i32) {
    %c0_i32 = arith.constant 0 : i32
    %c0_i32_0 = arith.constant 0 : i32
    return %arg0, %c0_i32 : i32, i32
  }
  func.func @transform_1(%arg0: i32) -> (i32, i32) {
    %c0_i32 = arith.constant 0 : i32
    %c0_i32_0 = arith.constant 0 : i32
    %c0_i32_1 = arith.constant 0 : i32
    return %c0_i32, %c0_i32_0 : i32, i32
  }
  func.func @transform_2(%arg0: i32) -> (i32, i32) {
    %c0_i32 = arith.constant 0 : i32
    %c0_i32_0 = arith.constant 0 : i32
    %c0_i32_1 = arith.constant 0 : i32
    return %c0_i32, %c0_i32_0 : i32, i32
  }
  func.func @transform_3(%arg0: i32) -> (i32, i32) {
    %c0_i32 = arith.constant 0 : i32
    %c0_i32_0 = arith.constant 0 : i32
    %c0_i32_1 = arith.constant 0 : i32
    return %c0_i32, %c0_i32_0 : i32, i32
  }
  func.func @transform_4(%arg0: i32) -> (i32, i32) {
    %c0_i32 = arith.constant 0 : i32
    %c0_i32_0 = arith.constant 0 : i32
    return %arg0, %c0_i32 : i32, i32
  }
}

module attributes {stable_mosaic.version = 11 : i64} {
  func.func @_fused_gemm_kernel(%arg0: i32, %arg1: memref<8x1152xbf16, #tpu.memory_space<vmem>>, %arg2: memref<1152x384xbf16, #tpu.memory_space<vmem>>, %arg3: memref<1x384xf32, #tpu.memory_space<vmem>>, %arg4: memref<1x384xf32, #tpu.memory_space<vmem>>, %arg5: memref<8x384xf32, #tpu.memory_space<vmem>>) attributes {dimension_semantics = [#tpu.dimension_semantics<parallel>], iteration_bounds = array<i64: 1>, scalar_prefetch = 0 : i64, scratch_operands = 0 : i64, tpu.core_type = #tpu.core_type<tc>, window_params = [{transform_indices = @transform_0, window_bounds = array<i64: 8, 1152>}, {pipeline_mode = #tpu.pipeline_mode<synchronous>, transform_indices = @transform_1, window_bounds = array<i64: 1152, 384>}, {pipeline_mode = #tpu.pipeline_mode<synchronous>, transform_indices = @transform_2, window_bounds = array<i64: 1, 384>}, {pipeline_mode = #tpu.pipeline_mode<synchronous>, transform_indices = @transform_3, window_bounds = array<i64: 1, 384>}, {transform_indices = @transform_4, window_bounds = array<i64: 8, 384>}]} {
    %c0 = arith.constant 0 : index
    %c0_0 = arith.constant 0 : index
    %0 = vector.load %arg1[%c0, %c0_0] : memref<8x1152xbf16, #tpu.memory_space<vmem>>, vector<8x1152xbf16>
    %c0_1 = arith.constant 0 : index
    %c0_2 = arith.constant 0 : index
    %1 = vector.load %arg2[%c0_1, %c0_2] : memref<1152x384xbf16, #tpu.memory_space<vmem>>, vector<1152x384xbf16>
    %cst = arith.constant dense<0.000000e+00> : vector<8x384xf32>
    %2 = tpu.matmul %0, %1, %cst {dimension_numbers = #tpu.dot_dimension_numbers<[1], [0], [0], [1], [0, 0, 1, 1], [], []>} : vector<8x1152xbf16>, vector<1152x384xbf16>, vector<8x384xf32> -> vector<8x384xf32>
    %c0_3 = arith.constant 0 : index
    %c0_4 = arith.constant 0 : index
    %3 = vector.load %arg3[%c0_3, %c0_4] : memref<1x384xf32, #tpu.memory_space<vmem>>, vector<1x384xf32>
    %4 = vector.broadcast %3 : vector<1x384xf32> to vector<8x384xf32>
    %5 = arith.addf %2, %4 : vector<8x384xf32>
    %c0_5 = arith.constant 0 : index
    %c0_6 = arith.constant 0 : index
    %6 = vector.load %arg4[%c0_5, %c0_6] : memref<1x384xf32, #tpu.memory_space<vmem>>, vector<1x384xf32>
    %7 = vector.broadcast %6 : vector<1x384xf32> to vector<8x384xf32>
    %8 = arith.maximumf %5, %7 : vector<8x384xf32>
    %c0_7 = arith.constant 0 : index
    %c0_8 = arith.constant 0 : index
    %9 = vector.load %arg5[%c0_7, %c0_8] : memref<8x384xf32, #tpu.memory_space<vmem>>, vector<8x384xf32>
    tpu.vector_store %arg5[%c0_7, %c0_8], %8 {strides = array<i32>} : memref<8x384xf32, #tpu.memory_space<vmem>>, vector<8x384xf32>,
    return
  }
  func.func @transform_0(%arg0: i32) -> (i32, i32) {
    %c0_i32 = arith.constant 0 : i32
    %c0_i32_0 = arith.constant 0 : i32
    return %arg0, %c0_i32 : i32, i32
  }
  func.func @transform_1(%arg0: i32) -> (i32, i32) {
    %c0_i32 = arith.constant 0 : i32
    %c0_i32_0 = arith.constant 0 : i32
    %c0_i32_1 = arith.constant 0 : i32
    return %c0_i32, %c0_i32_0 : i32, i32
  }
  func.func @transform_2(%arg0: i32) -> (i32, i32) {
    %c0_i32 = arith.constant 0 : i32
    %c0_i32_0 = arith.constant 0 : i32
    %c0_i32_1 = arith.constant 0 : i32
    return %c0_i32, %c0_i32_0 : i32, i32
  }
  func.func @transform_3(%arg0: i32) -> (i32, i32) {
    %c0_i32 = arith.constant 0 : i32
    %c0_i32_0 = arith.constant 0 : i32
    %c0_i32_1 = arith.constant 0 : i32
    return %c0_i32, %c0_i32_0 : i32, i32
  }
  func.func @transform_4(%arg0: i32) -> (i32, i32) {
    %c0_i32 = arith.constant 0 : i32
    %c0_i32_0 = arith.constant 0 : i32
    return %arg0, %c0_i32 : i32, i32
  }
}

module attributes {stable_mosaic.version = 11 : i64} {
  func.func @_fused_gemm_kernel(%arg0: i32, %arg1: memref<8x27xbf16, #tpu.memory_space<vmem>>, %arg2: memref<27x128xbf16, #tpu.memory_space<vmem>>, %arg3: memref<1x128xf32, #tpu.memory_space<vmem>>, %arg4: memref<1x128xf32, #tpu.memory_space<vmem>>, %arg5: memref<8x128xf32, #tpu.memory_space<vmem>>) attributes {dimension_semantics = [#tpu.dimension_semantics<parallel>], iteration_bounds = array<i64: 1>, scalar_prefetch = 0 : i64, scratch_operands = 0 : i64, tpu.core_type = #tpu.core_type<tc>, window_params = [{transform_indices = @transform_0, window_bounds = array<i64: 8, 27>}, {pipeline_mode = #tpu.pipeline_mode<synchronous>, transform_indices = @transform_1, window_bounds = array<i64: 27, 128>}, {pipeline_mode = #tpu.pipeline_mode<synchronous>, transform_indices = @transform_2, window_bounds = array<i64: 1, 128>}, {pipeline_mode = #tpu.pipeline_mode<synchronous>, transform_indices = @transform_3, window_bounds = array<i64: 1, 128>}, {transform_indices = @transform_4, window_bounds = array<i64: 8, 128>}]} {
    %c0 = arith.constant 0 : index
    %c0_0 = arith.constant 0 : index
    %0 = vector.load %arg1[%c0, %c0_0] : memref<8x27xbf16, #tpu.memory_space<vmem>>, vector<8x27xbf16>
    %c0_1 = arith.constant 0 : index
    %c0_2 = arith.constant 0 : index
    %1 = vector.load %arg2[%c0_1, %c0_2] : memref<27x128xbf16, #tpu.memory_space<vmem>>, vector<27x128xbf16>
    %cst = arith.constant dense<0.000000e+00> : vector<8x128xf32>
    %2 = tpu.matmul %0, %1, %cst {dimension_numbers = #tpu.dot_dimension_numbers<[1], [0], [0], [1], [0, 0, 1, 1], [], []>} : vector<8x27xbf16>, vector<27x128xbf16>, vector<8x128xf32> -> vector<8x128xf32>
    %c0_3 = arith.constant 0 : index
    %c0_4 = arith.constant 0 : index
    %3 = vector.load %arg3[%c0_3, %c0_4] : memref<1x128xf32, #tpu.memory_space<vmem>>, vector<1x128xf32>
    %4 = vector.broadcast %3 : vector<1x128xf32> to vector<8x128xf32>
    %5 = arith.addf %2, %4 : vector<8x128xf32>
    %c0_5 = arith.constant 0 : index
    %c0_6 = arith.constant 0 : index
    %6 = vector.load %arg4[%c0_5, %c0_6] : memref<1x128xf32, #tpu.memory_space<vmem>>, vector<1x128xf32>
    %7 = vector.broadcast %6 : vector<1x128xf32> to vector<8x128xf32>
    %8 = arith.maximumf %5, %7 : vector<8x128xf32>
    %9 = arith.negf %8 : vector<8x128xf32>
    %10 = math.exp %9 : vector<8x128xf32>
    %cst_7 = arith.constant 1.000000e+00 : f32
    %11 = vector.broadcast %cst_7 : f32 to vector<8x128xf32>
    %12 = arith.addf %11, %10 : vector<8x128xf32>
    %13 = arith.divf %11, %12 : vector<8x128xf32>
    %c0_8 = arith.constant 0 : index
    %c0_9 = arith.constant 0 : index
    %14 = vector.load %arg5[%c0_8, %c0_9] : memref<8x128xf32, #tpu.memory_space<vmem>>, vector<8x128xf32>
    tpu.vector_store %arg5[%c0_8, %c0_9], %13 {strides = array<i32>} : memref<8x128xf32, #tpu.memory_space<vmem>>, vector<8x128xf32>,
    return
  }
  func.func @transform_0(%arg0: i32) -> (i32, i32) {
    %c0_i32 = arith.constant 0 : i32
    %c0_i32_0 = arith.constant 0 : i32
    return %arg0, %c0_i32 : i32, i32
  }
  func.func @transform_1(%arg0: i32) -> (i32, i32) {
    %c0_i32 = arith.constant 0 : i32
    %c0_i32_0 = arith.constant 0 : i32
    %c0_i32_1 = arith.constant 0 : i32
    return %c0_i32, %c0_i32_0 : i32, i32
  }
  func.func @transform_2(%arg0: i32) -> (i32, i32) {
    %c0_i32 = arith.constant 0 : i32
    %c0_i32_0 = arith.constant 0 : i32
    %c0_i32_1 = arith.constant 0 : i32
    return %c0_i32, %c0_i32_0 : i32, i32
  }
  func.func @transform_3(%arg0: i32) -> (i32, i32) {
    %c0_i32 = arith.constant 0 : i32
    %c0_i32_0 = arith.constant 0 : i32
    %c0_i32_1 = arith.constant 0 : i32
    return %c0_i32, %c0_i32_0 : i32, i32
  }
  func.func @transform_4(%arg0: i32) -> (i32, i32) {
    %c0_i32 = arith.constant 0 : i32
    %c0_i32_0 = arith.constant 0 : i32
    return %arg0, %c0_i32 : i32, i32
  }
}

module attributes {stable_mosaic.version = 11 : i64} {
  func.func @_fused_gemm_kernel(%arg0: i32, %arg1: memref<32x603xbf16, #tpu.memory_space<vmem>>, %arg2: memref<603x256xbf16, #tpu.memory_space<vmem>>, %arg3: memref<1x256xf32, #tpu.memory_space<vmem>>, %arg4: memref<1x256xf32, #tpu.memory_space<vmem>>, %arg5: memref<32x256xf32, #tpu.memory_space<vmem>>) attributes {dimension_semantics = [#tpu.dimension_semantics<parallel>], iteration_bounds = array<i64: 1>, scalar_prefetch = 0 : i64, scratch_operands = 0 : i64, tpu.core_type = #tpu.core_type<tc>, window_params = [{transform_indices = @transform_0, window_bounds = array<i64: 32, 603>}, {pipeline_mode = #tpu.pipeline_mode<synchronous>, transform_indices = @transform_1, window_bounds = array<i64: 603, 256>}, {pipeline_mode = #tpu.pipeline_mode<synchronous>, transform_indices = @transform_2, window_bounds = array<i64: 1, 256>}, {pipeline_mode = #tpu.pipeline_mode<synchronous>, transform_indices = @transform_3, window_bounds = array<i64: 1, 256>}, {transform_indices = @transform_4, window_bounds = array<i64: 32, 256>}]} {
    %c0 = arith.constant 0 : index
    %c0_0 = arith.constant 0 : index
    %0 = vector.load %arg1[%c0, %c0_0] : memref<32x603xbf16, #tpu.memory_space<vmem>>, vector<32x603xbf16>
    %c0_1 = arith.constant 0 : index
    %c0_2 = arith.constant 0 : index
    %1 = vector.load %arg2[%c0_1, %c0_2] : memref<603x256xbf16, #tpu.memory_space<vmem>>, vector<603x256xbf16>
    %cst = arith.constant dense<0.000000e+00> : vector<32x256xf32>
    %2 = tpu.matmul %0, %1, %cst {dimension_numbers = #tpu.dot_dimension_numbers<[1], [0], [0], [1], [0, 0, 1, 1], [], []>} : vector<32x603xbf16>, vector<603x256xbf16>, vector<32x256xf32> -> vector<32x256xf32>
    %c0_3 = arith.constant 0 : index
    %c0_4 = arith.constant 0 : index
    %3 = vector.load %arg3[%c0_3, %c0_4] : memref<1x256xf32, #tpu.memory_space<vmem>>, vector<1x256xf32>
    %4 = vector.broadcast %3 : vector<1x256xf32> to vector<32x256xf32>
    %5 = arith.addf %2, %4 : vector<32x256xf32>
    %c0_5 = arith.constant 0 : index
    %c0_6 = arith.constant 0 : index
    %6 = vector.load %arg4[%c0_5, %c0_6] : memref<1x256xf32, #tpu.memory_space<vmem>>, vector<1x256xf32>
    %7 = vector.broadcast %6 : vector<1x256xf32> to vector<32x256xf32>
    %8 = arith.maximumf %5, %7 : vector<32x256xf32>
    %c0_7 = arith.constant 0 : index
    %c0_8 = arith.constant 0 : index
    %9 = vector.load %arg5[%c0_7, %c0_8] : memref<32x256xf32, #tpu.memory_space<vmem>>, vector<32x256xf32>
    tpu.vector_store %arg5[%c0_7, %c0_8], %8 {strides = array<i32>} : memref<32x256xf32, #tpu.memory_space<vmem>>, vector<32x256xf32>,
    return
  }
  func.func @transform_0(%arg0: i32) -> (i32, i32) {
    %c0_i32 = arith.constant 0 : i32
    %c0_i32_0 = arith.constant 0 : i32
    return %arg0, %c0_i32 : i32, i32
  }
  func.func @transform_1(%arg0: i32) -> (i32, i32) {
    %c0_i32 = arith.constant 0 : i32
    %c0_i32_0 = arith.constant 0 : i32
    %c0_i32_1 = arith.constant 0 : i32
    return %c0_i32, %c0_i32_0 : i32, i32
  }
  func.func @transform_2(%arg0: i32) -> (i32, i32) {
    %c0_i32 = arith.constant 0 : i32
    %c0_i32_0 = arith.constant 0 : i32
    %c0_i32_1 = arith.constant 0 : i32
    return %c0_i32, %c0_i32_0 : i32, i32
  }
  func.func @transform_3(%arg0: i32) -> (i32, i32) {
    %c0_i32 = arith.constant 0 : i32
    %c0_i32_0 = arith.constant 0 : i32
    %c0_i32_1 = arith.constant 0 : i32
    return %c0_i32, %c0_i32_0 : i32, i32
  }
  func.func @transform_4(%arg0: i32) -> (i32, i32) {
    %c0_i32 = arith.constant 0 : i32
    %c0_i32_0 = arith.constant 0 : i32
    return %arg0, %c0_i32 : i32, i32
  }
}

module attributes {stable_mosaic.version = 11 : i64} {
  func.func @_fused_gemm_kernel(%arg0: i32, %arg1: memref<32x27xbf16, #tpu.memory_space<vmem>>, %arg2: memref<27x128xbf16, #tpu.memory_space<vmem>>, %arg3: memref<1x128xf32, #tpu.memory_space<vmem>>, %arg4: memref<1x128xf32, #tpu.memory_space<vmem>>, %arg5: memref<32x128xf32, #tpu.memory_space<vmem>>) attributes {dimension_semantics = [#tpu.dimension_semantics<parallel>], iteration_bounds = array<i64: 1>, scalar_prefetch = 0 : i64, scratch_operands = 0 : i64, tpu.core_type = #tpu.core_type<tc>, window_params = [{transform_indices = @transform_0, window_bounds = array<i64: 32, 27>}, {pipeline_mode = #tpu.pipeline_mode<synchronous>, transform_indices = @transform_1, window_bounds = array<i64: 27, 128>}, {pipeline_mode = #tpu.pipeline_mode<synchronous>, transform_indices = @transform_2, window_bounds = array<i64: 1, 128>}, {pipeline_mode = #tpu.pipeline_mode<synchronous>, transform_indices = @transform_3, window_bounds = array<i64: 1, 128>}, {transform_indices = @transform_4, window_bounds = array<i64: 32, 128>}]} {
    %c0 = arith.constant 0 : index
    %c0_0 = arith.constant 0 : index
    %0 = vector.load %arg1[%c0, %c0_0] : memref<32x27xbf16, #tpu.memory_space<vmem>>, vector<32x27xbf16>
    %c0_1 = arith.constant 0 : index
    %c0_2 = arith.constant 0 : index
    %1 = vector.load %arg2[%c0_1, %c0_2] : memref<27x128xbf16, #tpu.memory_space<vmem>>, vector<27x128xbf16>
    %cst = arith.constant dense<0.000000e+00> : vector<32x128xf32>
    %2 = tpu.matmul %0, %1, %cst {dimension_numbers = #tpu.dot_dimension_numbers<[1], [0], [0], [1], [0, 0, 1, 1], [], []>} : vector<32x27xbf16>, vector<27x128xbf16>, vector<32x128xf32> -> vector<32x128xf32>
    %c0_3 = arith.constant 0 : index
    %c0_4 = arith.constant 0 : index
    %3 = vector.load %arg3[%c0_3, %c0_4] : memref<1x128xf32, #tpu.memory_space<vmem>>, vector<1x128xf32>
    %4 = vector.broadcast %3 : vector<1x128xf32> to vector<32x128xf32>
    %5 = arith.addf %2, %4 : vector<32x128xf32>
    %c0_5 = arith.constant 0 : index
    %c0_6 = arith.constant 0 : index
    %6 = vector.load %arg4[%c0_5, %c0_6] : memref<1x128xf32, #tpu.memory_space<vmem>>, vector<1x128xf32>
    %7 = vector.broadcast %6 : vector<1x128xf32> to vector<32x128xf32>
    %8 = arith.maximumf %5, %7 : vector<32x128xf32>
    %9 = arith.negf %8 : vector<32x128xf32>
    %10 = math.exp %9 : vector<32x128xf32>
    %cst_7 = arith.constant 1.000000e+00 : f32
    %11 = vector.broadcast %cst_7 : f32 to vector<32x128xf32>
    %12 = arith.addf %11, %10 : vector<32x128xf32>
    %13 = arith.divf %11, %12 : vector<32x128xf32>
    %c0_8 = arith.constant 0 : index
    %c0_9 = arith.constant 0 : index
    %14 = vector.load %arg5[%c0_8, %c0_9] : memref<32x128xf32, #tpu.memory_space<vmem>>, vector<32x128xf32>
    tpu.vector_store %arg5[%c0_8, %c0_9], %13 {strides = array<i32>} : memref<32x128xf32, #tpu.memory_space<vmem>>, vector<32x128xf32>,
    return
  }
  func.func @transform_0(%arg0: i32) -> (i32, i32) {
    %c0_i32 = arith.constant 0 : i32
    %c0_i32_0 = arith.constant 0 : i32
    return %arg0, %c0_i32 : i32, i32
  }
  func.func @transform_1(%arg0: i32) -> (i32, i32) {
    %c0_i32 = arith.constant 0 : i32
    %c0_i32_0 = arith.constant 0 : i32
    %c0_i32_1 = arith.constant 0 : i32
    return %c0_i32, %c0_i32_0 : i32, i32
  }
  func.func @transform_2(%arg0: i32) -> (i32, i32) {
    %c0_i32 = arith.constant 0 : i32
    %c0_i32_0 = arith.constant 0 : i32
    %c0_i32_1 = arith.constant 0 : i32
    return %c0_i32, %c0_i32_0 : i32, i32
  }
  func.func @transform_3(%arg0: i32) -> (i32, i32) {
    %c0_i32 = arith.constant 0 : i32
    %c0_i32_0 = arith.constant 0 : i32
    %c0_i32_1 = arith.constant 0 : i32
    return %c0_i32, %c0_i32_0 : i32, i32
  }
  func.func @transform_4(%arg0: i32) -> (i32, i32) {
    %c0_i32 = arith.constant 0 : i32
    %c0_i32_0 = arith.constant 0 : i32
    return %arg0, %c0_i32 : i32, i32
  }
}

module attributes {stable_mosaic.version = 11 : i64} {
  func.func @_fused_gemm_kernel(%arg0: i32, %arg1: memref<128x315xbf16, #tpu.memory_space<vmem>>, %arg2: memref<315x128xbf16, #tpu.memory_space<vmem>>, %arg3: memref<1x128xf32, #tpu.memory_space<vmem>>, %arg4: memref<1x128xf32, #tpu.memory_space<vmem>>, %arg5: memref<128x128xf32, #tpu.memory_space<vmem>>) attributes {dimension_semantics = [#tpu.dimension_semantics<parallel>], iteration_bounds = array<i64: 1>, scalar_prefetch = 0 : i64, scratch_operands = 0 : i64, tpu.core_type = #tpu.core_type<tc>, window_params = [{transform_indices = @transform_0, window_bounds = array<i64: 128, 315>}, {pipeline_mode = #tpu.pipeline_mode<synchronous>, transform_indices = @transform_1, window_bounds = array<i64: 315, 128>}, {pipeline_mode = #tpu.pipeline_mode<synchronous>, transform_indices = @transform_2, window_bounds = array<i64: 1, 128>}, {pipeline_mode = #tpu.pipeline_mode<synchronous>, transform_indices = @transform_3, window_bounds = array<i64: 1, 128>}, {transform_indices = @transform_4, window_bounds = array<i64: 128, 128>}]} {
    %c0 = arith.constant 0 : index
    %c0_0 = arith.constant 0 : index
    %0 = vector.load %arg1[%c0, %c0_0] : memref<128x315xbf16, #tpu.memory_space<vmem>>, vector<128x315xbf16>
    %c0_1 = arith.constant 0 : index
    %c0_2 = arith.constant 0 : index
    %1 = vector.load %arg2[%c0_1, %c0_2] : memref<315x128xbf16, #tpu.memory_space<vmem>>, vector<315x128xbf16>
    %cst = arith.constant dense<0.000000e+00> : vector<128x128xf32>
    %2 = tpu.matmul %0, %1, %cst {dimension_numbers = #tpu.dot_dimension_numbers<[1], [0], [0], [1], [0, 0, 1, 1], [], []>} : vector<128x315xbf16>, vector<315x128xbf16>, vector<128x128xf32> -> vector<128x128xf32>
    %c0_3 = arith.constant 0 : index
    %c0_4 = arith.constant 0 : index
    %3 = vector.load %arg3[%c0_3, %c0_4] : memref<1x128xf32, #tpu.memory_space<vmem>>, vector<1x128xf32>
    %4 = vector.broadcast %3 : vector<1x128xf32> to vector<128x128xf32>
    %5 = arith.addf %2, %4 : vector<128x128xf32>
    %c0_5 = arith.constant 0 : index
    %c0_6 = arith.constant 0 : index
    %6 = vector.load %arg4[%c0_5, %c0_6] : memref<1x128xf32, #tpu.memory_space<vmem>>, vector<1x128xf32>
    %7 = vector.broadcast %6 : vector<1x128xf32> to vector<128x128xf32>
    %8 = arith.maximumf %5, %7 : vector<128x128xf32>
    %c0_7 = arith.constant 0 : index
    %c0_8 = arith.constant 0 : index
    %9 = vector.load %arg5[%c0_7, %c0_8] : memref<128x128xf32, #tpu.memory_space<vmem>>, vector<128x128xf32>
    tpu.vector_store %arg5[%c0_7, %c0_8], %8 {strides = array<i32>} : memref<128x128xf32, #tpu.memory_space<vmem>>, vector<128x128xf32>,
    return
  }
  func.func @transform_0(%arg0: i32) -> (i32, i32) {
    %c0_i32 = arith.constant 0 : i32
    %c0_i32_0 = arith.constant 0 : i32
    return %arg0, %c0_i32 : i32, i32
  }
  func.func @transform_1(%arg0: i32) -> (i32, i32) {
    %c0_i32 = arith.constant 0 : i32
    %c0_i32_0 = arith.constant 0 : i32
    %c0_i32_1 = arith.constant 0 : i32
    return %c0_i32, %c0_i32_0 : i32, i32
  }
  func.func @transform_2(%arg0: i32) -> (i32, i32) {
    %c0_i32 = arith.constant 0 : i32
    %c0_i32_0 = arith.constant 0 : i32
    %c0_i32_1 = arith.constant 0 : i32
    return %c0_i32, %c0_i32_0 : i32, i32
  }
  func.func @transform_3(%arg0: i32) -> (i32, i32) {
    %c0_i32 = arith.constant 0 : i32
    %c0_i32_0 = arith.constant 0 : i32
    %c0_i32_1 = arith.constant 0 : i32
    return %c0_i32, %c0_i32_0 : i32, i32
  }
  func.func @transform_4(%arg0: i32) -> (i32, i32) {
    %c0_i32 = arith.constant 0 : i32
    %c0_i32_0 = arith.constant 0 : i32
    return %arg0, %c0_i32 : i32, i32
  }
}

module attributes {stable_mosaic.version = 11 : i64} {
  func.func @_fused_gemm_kernel(%arg0: i32, %arg1: memref<128x27xbf16, #tpu.memory_space<vmem>>, %arg2: memref<27x128xbf16, #tpu.memory_space<vmem>>, %arg3: memref<1x128xf32, #tpu.memory_space<vmem>>, %arg4: memref<1x128xf32, #tpu.memory_space<vmem>>, %arg5: memref<128x128xf32, #tpu.memory_space<vmem>>) attributes {dimension_semantics = [#tpu.dimension_semantics<parallel>], iteration_bounds = array<i64: 1>, scalar_prefetch = 0 : i64, scratch_operands = 0 : i64, tpu.core_type = #tpu.core_type<tc>, window_params = [{transform_indices = @transform_0, window_bounds = array<i64: 128, 27>}, {pipeline_mode = #tpu.pipeline_mode<synchronous>, transform_indices = @transform_1, window_bounds = array<i64: 27, 128>}, {pipeline_mode = #tpu.pipeline_mode<synchronous>, transform_indices = @transform_2, window_bounds = array<i64: 1, 128>}, {pipeline_mode = #tpu.pipeline_mode<synchronous>, transform_indices = @transform_3, window_bounds = array<i64: 1, 128>}, {transform_indices = @transform_4, window_bounds = array<i64: 128, 128>}]} {
    %c0 = arith.constant 0 : index
    %c0_0 = arith.constant 0 : index
    %0 = vector.load %arg1[%c0, %c0_0] : memref<128x27xbf16, #tpu.memory_space<vmem>>, vector<128x27xbf16>
    %c0_1 = arith.constant 0 : index
    %c0_2 = arith.constant 0 : index
    %1 = vector.load %arg2[%c0_1, %c0_2] : memref<27x128xbf16, #tpu.memory_space<vmem>>, vector<27x128xbf16>
    %cst = arith.constant dense<0.000000e+00> : vector<128x128xf32>
    %2 = tpu.matmul %0, %1, %cst {dimension_numbers = #tpu.dot_dimension_numbers<[1], [0], [0], [1], [0, 0, 1, 1], [], []>} : vector<128x27xbf16>, vector<27x128xbf16>, vector<128x128xf32> -> vector<128x128xf32>
    %c0_3 = arith.constant 0 : index
    %c0_4 = arith.constant 0 : index
    %3 = vector.load %arg3[%c0_3, %c0_4] : memref<1x128xf32, #tpu.memory_space<vmem>>, vector<1x128xf32>
    %4 = vector.broadcast %3 : vector<1x128xf32> to vector<128x128xf32>
    %5 = arith.addf %2, %4 : vector<128x128xf32>
    %c0_5 = arith.constant 0 : index
    %c0_6 = arith.constant 0 : index
    %6 = vector.load %arg4[%c0_5, %c0_6] : memref<1x128xf32, #tpu.memory_space<vmem>>, vector<1x128xf32>
    %7 = vector.broadcast %6 : vector<1x128xf32> to vector<128x128xf32>
    %8 = arith.maximumf %5, %7 : vector<128x128xf32>
    %9 = arith.negf %8 : vector<128x128xf32>
    %10 = math.exp %9 : vector<128x128xf32>
    %cst_7 = arith.constant 1.000000e+00 : f32
    %11 = vector.broadcast %cst_7 : f32 to vector<128x128xf32>
    %12 = arith.addf %11, %10 : vector<128x128xf32>
    %13 = arith.divf %11, %12 : vector<128x128xf32>
    %c0_8 = arith.constant 0 : index
    %c0_9 = arith.constant 0 : index
    %14 = vector.load %arg5[%c0_8, %c0_9] : memref<128x128xf32, #tpu.memory_space<vmem>>, vector<128x128xf32>
    tpu.vector_store %arg5[%c0_8, %c0_9], %13 {strides = array<i32>} : memref<128x128xf32, #tpu.memory_space<vmem>>, vector<128x128xf32>,
    return
  }
  func.func @transform_0(%arg0: i32) -> (i32, i32) {
    %c0_i32 = arith.constant 0 : i32
    %c0_i32_0 = arith.constant 0 : i32
    return %arg0, %c0_i32 : i32, i32
  }
  func.func @transform_1(%arg0: i32) -> (i32, i32) {
    %c0_i32 = arith.constant 0 : i32
    %c0_i32_0 = arith.constant 0 : i32
    %c0_i32_1 = arith.constant 0 : i32
    return %c0_i32, %c0_i32_0 : i32, i32
  }
  func.func @transform_2(%arg0: i32) -> (i32, i32) {
    %c0_i32 = arith.constant 0 : i32
    %c0_i32_0 = arith.constant 0 : i32
    %c0_i32_1 = arith.constant 0 : i32
    return %c0_i32, %c0_i32_0 : i32, i32
  }
  func.func @transform_3(%arg0: i32) -> (i32, i32) {
    %c0_i32 = arith.constant 0 : i32
    %c0_i32_0 = arith.constant 0 : i32
    %c0_i32_1 = arith.constant 0 : i32
    return %c0_i32, %c0_i32_0 : i32, i32
  }
  func.func @transform_4(%arg0: i32) -> (i32, i32) {
    %c0_i32 = arith.constant 0 : i32
    %c0_i32_0 = arith.constant 0 : i32
    return %arg0, %c0_i32 : i32, i32
  }
}

module attributes {stable_mosaic.version = 11 : i64} {
  func.func @_fused_gemm_kernel(%arg0: i32, %arg1: memref<256x171xbf16, #tpu.memory_space<vmem>>, %arg2: memref<171x128xbf16, #tpu.memory_space<vmem>>, %arg3: memref<1x128xf32, #tpu.memory_space<vmem>>, %arg4: memref<1x128xf32, #tpu.memory_space<vmem>>, %arg5: memref<256x128xf32, #tpu.memory_space<vmem>>) attributes {dimension_semantics = [#tpu.dimension_semantics<parallel>], iteration_bounds = array<i64: 2>, scalar_prefetch = 0 : i64, scratch_operands = 0 : i64, tpu.core_type = #tpu.core_type<tc>, window_params = [{transform_indices = @transform_0, window_bounds = array<i64: 256, 171>}, {pipeline_mode = #tpu.pipeline_mode<synchronous>, transform_indices = @transform_1, window_bounds = array<i64: 171, 128>}, {pipeline_mode = #tpu.pipeline_mode<synchronous>, transform_indices = @transform_2, window_bounds = array<i64: 1, 128>}, {pipeline_mode = #tpu.pipeline_mode<synchronous>, transform_indices = @transform_3, window_bounds = array<i64: 1, 128>}, {transform_indices = @transform_4, window_bounds = array<i64: 256, 128>}]} {
    %c0 = arith.constant 0 : index
    %c0_0 = arith.constant 0 : index
    %0 = vector.load %arg1[%c0, %c0_0] : memref<256x171xbf16, #tpu.memory_space<vmem>>, vector<256x171xbf16>
    %c0_1 = arith.constant 0 : index
    %c0_2 = arith.constant 0 : index
    %1 = vector.load %arg2[%c0_1, %c0_2] : memref<171x128xbf16, #tpu.memory_space<vmem>>, vector<171x128xbf16>
    %cst = arith.constant dense<0.000000e+00> : vector<256x128xf32>
    %2 = tpu.matmul %0, %1, %cst {dimension_numbers = #tpu.dot_dimension_numbers<[1], [0], [0], [1], [0, 0, 1, 1], [], []>} : vector<256x171xbf16>, vector<171x128xbf16>, vector<256x128xf32> -> vector<256x128xf32>
    %c0_3 = arith.constant 0 : index
    %c0_4 = arith.constant 0 : index
    %3 = vector.load %arg3[%c0_3, %c0_4] : memref<1x128xf32, #tpu.memory_space<vmem>>, vector<1x128xf32>
    %4 = vector.broadcast %3 : vector<1x128xf32> to vector<256x128xf32>
    %5 = arith.addf %2, %4 : vector<256x128xf32>
    %c0_5 = arith.constant 0 : index
    %c0_6 = arith.constant 0 : index
    %6 = vector.load %arg4[%c0_5, %c0_6] : memref<1x128xf32, #tpu.memory_space<vmem>>, vector<1x128xf32>
    %7 = vector.broadcast %6 : vector<1x128xf32> to vector<256x128xf32>
    %8 = arith.maximumf %5, %7 : vector<256x128xf32>
    %9 = arith.negf %8 : vector<256x128xf32>
    %10 = math.exp %9 : vector<256x128xf32>
    %cst_7 = arith.constant 1.000000e+00 : f32
    %11 = vector.broadcast %cst_7 : f32 to vector<256x128xf32>
    %12 = arith.addf %11, %10 : vector<256x128xf32>
    %13 = arith.divf %11, %12 : vector<256x128xf32>
    %c0_8 = arith.constant 0 : index
    %c0_9 = arith.constant 0 : index
    %14 = vector.load %arg5[%c0_8, %c0_9] : memref<256x128xf32, #tpu.memory_space<vmem>>, vector<256x128xf32>
    tpu.vector_store %arg5[%c0_8, %c0_9], %13 {strides = array<i32>} : memref<256x128xf32, #tpu.memory_space<vmem>>, vector<256x128xf32>,
    return
  }
  func.func @transform_0(%arg0: i32) -> (i32, i32) {
    %c0_i32 = arith.constant 0 : i32
    %c0_i32_0 = arith.constant 0 : i32
    return %arg0, %c0_i32 : i32, i32
  }
  func.func @transform_1(%arg0: i32) -> (i32, i32) {
    %c0_i32 = arith.constant 0 : i32
    %c0_i32_0 = arith.constant 0 : i32
    %c0_i32_1 = arith.constant 0 : i32
    return %c0_i32, %c0_i32_0 : i32, i32
  }
  func.func @transform_2(%arg0: i32) -> (i32, i32) {
    %c0_i32 = arith.constant 0 : i32
    %c0_i32_0 = arith.constant 0 : i32
    %c0_i32_1 = arith.constant 0 : i32
    return %c0_i32, %c0_i32_0 : i32, i32
  }
  func.func @transform_3(%arg0: i32) -> (i32, i32) {
    %c0_i32 = arith.constant 0 : i32
    %c0_i32_0 = arith.constant 0 : i32
    %c0_i32_1 = arith.constant 0 : i32
    return %c0_i32, %c0_i32_0 : i32, i32
  }
  func.func @transform_4(%arg0: i32) -> (i32, i32) {
    %c0_i32 = arith.constant 0 : i32
    %c0_i32_0 = arith.constant 0 : i32
    return %arg0, %c0_i32 : i32, i32
  }
}

</mosaic_0001>

<llo_original>
// kernel: traj_predictor_forward.15
$region0: #{traj_predictor_forward.15}
  #allocation0 [shape = 'u32[]', space=smem, size = 0x4, offset = 0x4, fixed_abs, tag = 'smem constant byte address 0x4 - core index']
  #allocation1 [shape = 'u32[144,128]{1,0:T(1,128)}', space=vmem, size = 0x12000, scoped, tag = 'internal scratch']
  %s0 = inlined_call_operand.vmem [shape: bf16[512,48], index: 0, kind: input, shape index: {}]
  %s1 = inlined_call_operand.vmem [shape: bf16[48,128], index: 1, kind: input, shape index: {}]
  %s2 = inlined_call_operand.vmem [shape: f32[1,128], index: 2, kind: input, shape index: {}]
  %s3 = inlined_call_operand.vmem [shape: f32[1,128], index: 3, kind: input, shape index: {}]
  %s4 = inlined_call_operand.vmem [shape: f32[512,128], index: 4, kind: output, shape index: {}]
  %s5 = sld [smem:[#allocation0]]
  $region49: #{traj_predictor_forward.15} parent=0
    _
  %s7 = ssub.s32 1, %s5
  %s8 = scalar_select 0, %s7, %s5
  loop: start=0, step=1, limit=4
  $region2: #{traj_predictor_forward.15} parent=0 // loop_pre_header
    _
  $region3: #{traj_predictor_forward.15} parent=0 // loop_header
    %s10 = sphi 0, %s14
    %p11 = scmp.ge.s32.totalorder %s10, 4
    %s20 = sphi 0, %s22
    %s23 = sphi 0, %s20
    %s24 = sphi 0, %s23
    %s40 = sphi 0, %s24
    %s44 = sphi 0, %s44
    %s46 = sphi 0, %s44
    %s47 = sphi 0, %s46
    %s61 = sphi 0, %s47
    %s65 = sphi 0, %s65
    %s67 = sphi 0, %s65
    %s68 = sphi 0, %s67
    %s82 = sphi 0, %s68
    %s86 = sphi 0, %s86
    %s88 = sphi 0, %s86
    %s89 = sphi 0, %s88
    %s103 = sphi 0, %s89
    %s109 = sphi 0, %s111
    %s112 = sphi 0, %s109
    %s113 = sphi 0, %s112
    %s129 = sphi 0, %s113
  $region4: #{traj_predictor_forward.15} parent=0 // loop_header_branch
    %13 = sbr.rel (%p11) target = $region8
  $region5: #{traj_predictor_forward.15} parent=0 // loop_body
    %s15 = ssub.s32 %s10, 1
    %s16 = ssub.s32 %s10, 2
    %s17 = sadd.s32 %s10, 1
    %s18 = ssub.s32 %s10, %s17
    %p19 = scmp.eq.s32.totalorder %s18, 0
    %s21 = sadd.s32 %s20, 1
    %s22 = scalar_select %p19, %s20, %s21
    %p25 = pneg %p19
    %p26 = scmp.eq.s32.totalorder %s10, 1
    %p27 = por %p25, %p26
    %p28 = scmp.ne.s32.totalorder %s20, %s23
    %p29 = scmp.eq.s32.totalorder %s10, 0
    %p30 = por %p28, %p29
    %p31 = scmp.ne.s32.totalorder %s20, %s23
    %p32 = scmp.eq.s32.totalorder %s15, 1
    %p33 = por %p31, %p32
    %p34 = scmp.ne.s32.totalorder %s23, %s24
    %p35 = scmp.eq.s32.totalorder %s15, 0
    %p36 = por %p34, %p35
    %p37 = scmp.ne.s32.totalorder %s23, %s24
    %p38 = scmp.eq.s32.totalorder %s16, 1
    %p39 = por %p37, %p38
    %p41 = scmp.ne.s32.totalorder %s24, %s40
    %p42 = scmp.eq.s32.totalorder %s16, 0
    %p43 = por %p41, %p42
    %s45 = sadd.s32 %s44, 1
    %p48 = scmp.eq.s32.totalorder %s10, 1
    %p49 = scmp.ne.s32.totalorder %s44, %s46
    %p50 = scmp.eq.s32.totalorder %s10, 0
    %p51 = por %p49, %p50
    %p52 = scmp.ne.s32.totalorder %s44, %s46
    %p53 = scmp.eq.s32.totalorder %s15, 1
    %p54 = por %p52, %p53
    %p55 = scmp.ne.s32.totalorder %s46, %s47
    %p56 = scmp.eq.s32.totalorder %s15, 0
    %p57 = por %p55, %p56
    %p58 = scmp.ne.s32.totalorder %s46, %s47
    %p59 = scmp.eq.s32.totalorder %s16, 1
    %p60 = por %p58, %p59
    %p62 = scmp.ne.s32.totalorder %s47, %s61
    %p63 = scmp.eq.s32.totalorder %s16, 0
    %p64 = por %p62, %p63
    %s66 = sadd.s32 %s65, 1
    %p69 = scmp.eq.s32.totalorder %s10, 1
    %p70 = scmp.ne.s32.totalorder %s65, %s67
    %p71 = scmp.eq.s32.totalorder %s10, 0
    %p72 = por %p70, %p71
    %p73 = scmp.ne.s32.totalorder %s65, %s67
    %p74 = scmp.eq.s32.totalorder %s15, 1
    %p75 = por %p73, %p74
    %p76 = scmp.ne.s32.totalorder %s67, %s68
    %p77 = scmp.eq.s32.totalorder %s15, 0
    %p78 = por %p76, %p77
    %p79 = scmp.ne.s32.totalorder %s67, %s68
    %p80 = scmp.eq.s32.totalorder %s16, 1
    %p81 = por %p79, %p80
    %p83 = scmp.ne.s32.totalorder %s68, %s82
    %p84 = scmp.eq.s32.totalorder %s16, 0
    %p85 = por %p83, %p84
    %s87 = sadd.s32 %s86, 1
    %p90 = scmp.eq.s32.totalorder %s10, 1
    %p91 = scmp.ne.s32.totalorder %s86, %s88
    %p92 = scmp.eq.s32.totalorder %s10, 0
    %p93 = por %p91, %p92
    %p94 = scmp.ne.s32.totalorder %s86, %s88
    %p95 = scmp.eq.s32.totalorder %s15, 1
    %p96 = por %p94, %p95
    %p97 = scmp.ne.s32.totalorder %s88, %s89
    %p98 = scmp.eq.s32.totalorder %s15, 0
    %p99 = por %p97, %p98
    %p100 = scmp.ne.s32.totalorder %s88, %s89
    %p101 = scmp.eq.s32.totalorder %s16, 1
    %p102 = por %p100, %p101
    %p104 = scmp.ne.s32.totalorder %s89, %s103
    %p105 = scmp.eq.s32.totalorder %s16, 0
    %p106 = por %p104, %p105
    %s107 = ssub.s32 %s10, %s17
    %p108 = scmp.eq.s32.totalorder %s107, 0
    %s110 = sadd.s32 %s109, 1
    %s111 = scalar_select %p108, %s109, %s110
    %p114 = pneg %p108
    %p115 = scmp.eq.s32.totalorder %s10, 1
    %p116 = por %p114, %p115
    %p117 = scmp.ne.s32.totalorder %s109, %s112
    %p118 = scmp.eq.s32.totalorder %s10, 0
    %p119 = por %p117, %p118
    %p120 = scmp.ne.s32.totalorder %s109, %s112
    %p121 = scmp.eq.s32.totalorder %s15, 1
    %p122 = por %p120, %p121
    %p123 = scmp.ne.s32.totalorder %s112, %s113
    %p124 = scmp.eq.s32.totalorder %s15, 0
    %p125 = por %p123, %p124
    %p126 = scmp.ne.s32.totalorder %s112, %s113
    %p127 = scmp.eq.s32.totalorder %s16, 1
    %p128 = por %p126, %p127
    %p130 = scmp.ne.s32.totalorder %s113, %s129
    %p131 = scmp.eq.s32.totalorder %s16, 0
    %p132 = por %p130, %p131
    %p133 = scmp.le.s32.totalorder 1, %s10
    %p134 = scmp.lt.s32.totalorder %s10, 3
    %p135 = pnand %p133, %p134
    %p136 = pneg %p135
    // Predicated region
    $region9: #{traj_predictor_forward.15} parent=5 // pred_check
      _
    $region10: #{traj_predictor_forward.15} parent=5 // pred_check_branch
      %138 = sbr.rel (%p135) target = $region12
    $region11: #{traj_predictor_forward.15} parent=5 // pred_region
      %s139 = ssub.s32 %s10, 1
      // Predicated region
      $region13: #{traj_predictor_forward.15} parent=11 // pred_check
        %p140 = pneg %p57
      $region14: #{traj_predictor_forward.15} parent=11 // pred_check_branch
        %142 = sbr.rel (%p140) target = $region16
      $region15: #{traj_predictor_forward.15} parent=11 // pred_region
        _
      $region16: #{traj_predictor_forward.15} parent=11 // pred_fallthru
        _
      // Predicated region
      $region17: #{traj_predictor_forward.15} parent=11 // pred_check
        %p143 = pneg %p78
      $region18: #{traj_predictor_forward.15} parent=11 // pred_check_branch
        %145 = sbr.rel (%p143) target = $region20
      $region19: #{traj_predictor_forward.15} parent=11 // pred_region
        _
      $region20: #{traj_predictor_forward.15} parent=11 // pred_fallthru
        _
      // Predicated region
      $region21: #{traj_predictor_forward.15} parent=11 // pred_check
        %p146 = pneg %p99
      $region22: #{traj_predictor_forward.15} parent=11 // pred_check_branch
        %148 = sbr.rel (%p146) target = $region24
      $region23: #{traj_predictor_forward.15} parent=11 // pred_region
        _
      $region24: #{traj_predictor_forward.15} parent=11 // pred_fallthru
        _
    $region12: #{traj_predictor_forward.15} parent=5 // pred_fallthru
      _
    %p149 = scmp.lt.s32.totalorder %s10, 2
    // Predicated region
    $region25: #{traj_predictor_forward.15} parent=5 // pred_check
      %p150 = pneg %p149
    $region26: #{traj_predictor_forward.15} parent=5 // pred_check_branch
      %152 = sbr.rel (%p150) target = $region28
    $region27: #{traj_predictor_forward.15} parent=5 // pred_region
      // Predicated region
      $region29: #{traj_predictor_forward.15} parent=27 // pred_check
        %p153 = pneg %p30
      $region30: #{traj_predictor_forward.15} parent=27 // pred_check_branch
        %155 = sbr.rel (%p153) target = $region32
      $region31: #{traj_predictor_forward.15} parent=27 // pred_region
        %s156 = smul.u32 32, %s10
        %p157 = scmp.lt.s32.totalorder %s156, 63
        %s158 = scalar_select %p157, %s156, 63
        %s159 = smul.addr %s158, 4
        %s160 = scalar_lea.vmem %s0, %s159
        %s161 = smul.u32 32, %s10
      $region32: #{traj_predictor_forward.15} parent=27 // pred_fallthru
        _
    $region28: #{traj_predictor_forward.15} parent=5 // pred_fallthru
      _
    %p162 = scmp.le.s32.totalorder 1, %s10
    %p163 = scmp.lt.s32.totalorder %s10, 3
    %p164 = pnand %p162, %p163
    %p165 = pneg %p164
    // Predicated region
    $region33: #{traj_predictor_forward.15} parent=5 // pred_check
      _
    $region34: #{traj_predictor_forward.15} parent=5 // pred_check_branch
      %167 = sbr.rel (%p164) target = $region36
    $region35: #{traj_predictor_forward.15} parent=5 // pred_region
      %s168 = ssub.s32 %s10, 1
      %s169 = smul.u32 32, %s15
      %p170 = scmp.lt.s32.totalorder %s169, 63
      %s171 = scalar_select %p170, %s169, 63
      %s172 = smul.addr %s171, 4
      %s173 = scalar_lea.vmem %s0, %s172
      %p174 = pneg %p36
      %p175 = pneg %p33
      %p176 = pneg %p57
      %p177 = pneg %p54
      %p178 = pneg %p78
      %p179 = pneg %p75
      %p180 = pneg %p99
      %p181 = pneg %p96
      %p182 = pneg %p125
      %p183 = pneg %p122
      %s184 = smul.u32 32, %s15
      %p185 = scmp.lt.s32.totalorder %s184, 63
      %s186 = scalar_select %p185, %s184, 63
      %s187 = smul.addr %s186, 8
      %s188 = scalar_lea.vmem %s4, %s187
      %s189 = smul.u32 32, %s15
      %p190 = scmp.lt.s32.totalorder %s189, 63
      %s191 = scalar_select %p190, %s189, 63
      %s192 = smul.addr %s191, 4
      %s193 = scalar_lea.vmem %s0, %s192
      %s194 = smul.u32 32, %s15
      %s195 = smul.u32 32, %s15
      %p196 = scmp.lt.s32.totalorder %s195, 63
      %s197 = scalar_select %p196, %s195, 63
      %s198 = smul.addr %s197, 8
      %s199 = scalar_lea.vmem %s4, %s198
      %s200 = smul.u32 32, %s15
      %v202 = vld [vmem:[%s193] sm:$0xf]
      %v203 = vld [vmem:[%s193 + $0x4] sm:$0xf]
      %v204 = vld [vmem:[%s193 + $0x8] sm:$0xf]
      %v205 = vld [vmem:[%s193 + $0xc] sm:$0xf]
      %v206 = vld [vmem:[%s193 + $0x10] sm:$0xf]
      %v207 = vld [vmem:[%s193 + $0x14] sm:$0xf]
      %v208 = vld [vmem:[%s193 + $0x18] sm:$0xf]
      %v209 = vld [vmem:[%s193 + $0x1c] sm:$0xf]
      %v210 = vld [vmem:[%s193 + $0x20] sm:$0xf]
      %v211 = vld [vmem:[%s193 + $0x24] sm:$0xf]
      %v212 = vld [vmem:[%s193 + $0x28] sm:$0xf]
      %v213 = vld [vmem:[%s193 + $0x2c] sm:$0xf]
      %v214 = vld [vmem:[%s193 + $0x30] sm:$0xf]
      %v215 = vld [vmem:[%s193 + $0x34] sm:$0xf]
      %v216 = vld [vmem:[%s193 + $0x38] sm:$0xf]
      %v217 = vld [vmem:[%s193 + $0x3c] sm:$0xf]
      %v218 = vld [vmem:[%s193 + $0x40] sm:$0xf]
      %v219 = vld [vmem:[%s193 + $0x44] sm:$0xf]
      %v220 = vld [vmem:[%s193 + $0x48] sm:$0xf]
      %v221 = vld [vmem:[%s193 + $0x4c] sm:$0xf]
      %v222 = vld [vmem:[%s193 + $0x50] sm:$0xf]
      %v223 = vld [vmem:[%s193 + $0x54] sm:$0xf]
      %v224 = vld [vmem:[%s193 + $0x58] sm:$0xf]
      %v225 = vld [vmem:[%s193 + $0x5c] sm:$0xf]
      %v226 = vld [vmem:[%s193 + $0x60] sm:$0xf]
      %v227 = vld [vmem:[%s193 + $0x64] sm:$0xf]
      %v228 = vld [vmem:[%s193 + $0x68] sm:$0xf]
      %v229 = vld [vmem:[%s193 + $0x6c] sm:$0xf]
      %v230 = vld [vmem:[%s193 + $0x70] sm:$0xf]
      %v231 = vld [vmem:[%s193 + $0x74] sm:$0xf]
      %v232 = vld [vmem:[%s193 + $0x78] sm:$0xf]
      %v233 = vld [vmem:[%s193 + $0x7c] sm:$0xf]
      %v234 = vld [vmem:[%s1] sm:$0xf]
      %v235 = vld [vmem:[%s1 + $0x4] sm:$0xf]
      %v236 = vld [vmem:[%s1 + $0x8] sm:$0xf]
      %v237 = vld [vmem:[%s1 + $0xc] sm:$0xf]
      %v238 = vld [vmem:[%s1 + $0x10] sm:$0xf]
      %v239 = vld [vmem:[%s1 + $0x14] sm:$0xf]
      %v240 = vld [vmem:[%s2] sm:$0x1]
      %v242 = vlaneseq
      %v243 = vshrl.u32 %v242, 7
      %v244 = vsub.s32 0, %v243
      %v245 = vrot.slane %v240, %v244
      %v279 = vunpack.c.l.b16 %v202
      %v280 = vunpack.c.l.b16 %v203
      %v281 = vunpack.c.l.b16 %v204
      %v282 = vunpack.c.l.b16 %v205
      %v283 = vunpack.c.l.b16 %v206
      %v284 = vunpack.c.l.b16 %v207
      %v285 = vunpack.c.l.b16 %v208
      %v286 = vunpack.c.l.b16 %v209
      %v287 = vunpack.c.l.b16 %v210
      %v288 = vunpack.c.l.b16 %v211
      %v289 = vunpack.c.l.b16 %v212
      %v290 = vunpack.c.l.b16 %v213
      %v291 = vunpack.c.l.b16 %v214
      %v292 = vunpack.c.l.b16 %v215
      %v293 = vunpack.c.l.b16 %v216
      %v294 = vunpack.c.l.b16 %v217
      %v295 = vunpack.c.l.b16 %v218
      %v296 = vunpack.c.l.b16 %v219
      %v297 = vunpack.c.l.b16 %v220
      %v298 = vunpack.c.l.b16 %v221
      %v299 = vunpack.c.l.b16 %v222
      %v300 = vunpack.c.l.b16 %v223
      %v301 = vunpack.c.l.b16 %v224
      %v302 = vunpack.c.l.b16 %v225
      %v303 = vunpack.c.l.b16 %v226
      %v304 = vunpack.c.l.b16 %v227
      %v305 = vunpack.c.l.b16 %v228
      %v306 = vunpack.c.l.b16 %v229
      %v307 = vunpack.c.l.b16 %v230
      %v308 = vunpack.c.l.b16 %v231
      %v309 = vunpack.c.l.b16 %v232
      %v310 = vunpack.c.l.b16 %v233
      %v311 = vpack.c.b16 %v280, %v279
      %v312 = vpack.c.b16 %v282, %v281
      %v313 = vpack.c.b16 %v284, %v283
      %v314 = vpack.c.b16 %v286, %v285
      %v315 = vpack.c.b16 %v288, %v287
      %v316 = vpack.c.b16 %v290, %v289
      %v317 = vpack.c.b16 %v292, %v291
      %v318 = vpack.c.b16 %v294, %v293
      %v319 = vpack.c.b16 %v296, %v295
      %v320 = vpack.c.b16 %v298, %v297
      %v321 = vpack.c.b16 %v300, %v299
      %v322 = vpack.c.b16 %v302, %v301
      %v323 = vpack.c.b16 %v304, %v303
      %v324 = vpack.c.b16 %v306, %v305
      %v325 = vpack.c.b16 %v308, %v307
      %v326 = vpack.c.b16 %v310, %v309
      %v333 = vunpack.c.l.b16 %v234
      %v334 = vunpack.c.l.b16 %v235
      %v335 = vunpack.c.l.b16 %v236
      %v336 = vunpack.c.l.b16 %v237
      %v337 = vunpack.c.l.b16 %v238
      %v338 = vunpack.c.l.b16 %v239
      %v339 = vpack.c.b16 %v334, %v333
      %v340 = vpack.c.b16 %v336, %v335
      %v341 = vpack.c.b16 %v338, %v337
      %vm345 = vcmask 392192
      %v347 = vsel %vm345, %v311, 0
      %v350 = vsel %vm345, %v312, 0
      %v353 = vsel %vm345, %v313, 0
      %v356 = vsel %vm345, %v314, 0
      %v359 = vsel %vm345, %v315, 0
      %v362 = vsel %vm345, %v316, 0
      %v365 = vsel %vm345, %v317, 0
      %v368 = vsel %vm345, %v318, 0
      %v371 = vsel %vm345, %v319, 0
      %v374 = vsel %vm345, %v320, 0
      %v377 = vsel %vm345, %v321, 0
      %v380 = vsel %vm345, %v322, 0
      %v383 = vsel %vm345, %v323, 0
      %v386 = vsel %vm345, %v324, 0
      %v389 = vsel %vm345, %v325, 0
      %v392 = vsel %vm345, %v326, 0
      %394 = vmatprep.subr.bf16.mxu0 0
      %395 = vmatpush1.bf16.msra.mxu0 0
      %396 = vmatprep.subr.bf16.mxu0 0
      %397 = vmatpush1.bf16.msra.mxu0 0
      %398 = vmatprep.subr.bf16.mxu0 0
      %399 = vmatpush1.bf16.msra.mxu0 0
      %400 = vmatprep.subr.bf16.mxu0 0
      %401 = vmatpush1.bf16.msra.mxu0 0
      %402 = vmatprep.subr.bf16.mxu0 0
      %403 = vmatpush1.bf16.msra.mxu0 0
      %404 = vmatprep.subr.bf16.mxu0 0
      %405 = vmatpush1.bf16.msra.mxu0 %v341
      %406 = vmatprep.subr.bf16.mxu0 0
      %407 = vmatpush1.bf16.msra.mxu0 %v340
      %408 = vmatprep.subr.bf16.mxu0 0
      %409 = vmatpush1.bf16.msra.mxu0 %v339
      %410 = vmatprep.subr.bf16.mxu0 0
      %411 = vmatpush2.bf16.msra.mxu0 0
      %412 = vmatprep.subr.bf16.mxu0 0
      %413 = vmatpush2.bf16.msra.mxu0 0
      %414 = vmatprep.subr.bf16.mxu0 0
      %415 = vmatpush2.bf16.msra.mxu0 0
      %416 = vmatprep.subr.bf16.mxu0 0
      %417 = vmatpush2.bf16.msra.mxu0 0
      %418 = vmatprep.subr.bf16.mxu0 0
      %419 = vmatpush2.bf16.msra.mxu0 0
      %420 = vmatprep.subr.bf16.mxu0 0
      %421 = vmatpush2.bf16.msra.mxu0 0
      %422 = vmatprep.subr.bf16.mxu0 0
      %423 = vmatpush2.bf16.msra.mxu0 0
      %424 = vmatprep.subr.bf16.mxu0 0
      %425 = vmatpush2.bf16.msra.mxu0 0
      %426 = vmatprep.mubr.bf16.mxu0 0
      %427 = vmatmul.mubr.bf16.gmra.mxu0 %v347
      %v428 = vpop.f32.mrf.mxu0
      %v429 = vadd.f32 %v245, %v428
      %v430 = vpop.f32.mrf.mxu0
      %v431 = vpop.f32.mrf.mxu0
      %v432 = vadd.f32 %v245, %v431
      %v433 = vpop.f32.mrf.mxu0
      %434 = vmatprep.mubr.bf16.mxu0 0
      %435 = vmatmul.mubr.bf16.gmra.mxu0 %v350
      %v436 = vpop.f32.mrf.mxu0
      %v437 = vadd.f32 %v245, %v436
      %v438 = vpop.f32.mrf.mxu0
      %v439 = vpop.f32.mrf.mxu0
      %v440 = vadd.f32 %v245, %v439
      %v441 = vpop.f32.mrf.mxu0
      %442 = vmatprep.mubr.bf16.mxu0 0
      %443 = vmatmul.mubr.bf16.gmra.mxu0 %v353
      %v444 = vpop.f32.mrf.mxu0
      %v445 = vadd.f32 %v245, %v444
      %v446 = vpop.f32.mrf.mxu0
      %v447 = vpop.f32.mrf.mxu0
      %v448 = vadd.f32 %v245, %v447
      %v449 = vpop.f32.mrf.mxu0
      %450 = vmatprep.mubr.bf16.mxu0 0
      %451 = vmatmul.mubr.bf16.gmra.mxu0 %v356
      %v452 = vpop.f32.mrf.mxu0
      %v453 = vadd.f32 %v245, %v452
      %v454 = vpop.f32.mrf.mxu0
      %v455 = vpop.f32.mrf.mxu0
      %v456 = vadd.f32 %v245, %v455
      %v457 = vpop.f32.mrf.mxu0
      %458 = vmatprep.mubr.bf16.mxu0 0
      %459 = vmatmul.mubr.bf16.gmra.mxu0 %v359
      %v460 = vpop.f32.mrf.mxu0
      %v461 = vadd.f32 %v245, %v460
      %v462 = vpop.f32.mrf.mxu0
      %v463 = vpop.f32.mrf.mxu0
      %v464 = vadd.f32 %v245, %v463
      %v465 = vpop.f32.mrf.mxu0
      %466 = vmatprep.mubr.bf16.mxu0 0
      %467 = vmatmul.mubr.bf16.gmra.mxu0 %v362
      %v468 = vpop.f32.mrf.mxu0
      %v469 = vadd.f32 %v245, %v468
      %v470 = vpop.f32.mrf.mxu0
      %v471 = vpop.f32.mrf.mxu0
      %v472 = vadd.f32 %v245, %v471
      %v473 = vpop.f32.mrf.mxu0
      %474 = vmatprep.mubr.bf16.mxu0 0
      %475 = vmatmul.mubr.bf16.gmra.mxu0 %v365
      %v476 = vpop.f32.mrf.mxu0
      %v477 = vadd.f32 %v245, %v476
      %v478 = vpop.f32.mrf.mxu0
      %v479 = vpop.f32.mrf.mxu0
      %v480 = vadd.f32 %v245, %v479
      %v481 = vpop.f32.mrf.mxu0
      %482 = vmatprep.mubr.bf16.mxu0 0
      %483 = vmatmul.mubr.bf16.gmra.mxu0 %v368
      %v484 = vpop.f32.mrf.mxu0
      %v485 = vadd.f32 %v245, %v484
      %v486 = vpop.f32.mrf.mxu0
      %v487 = vpop.f32.mrf.mxu0
      %v488 = vadd.f32 %v245, %v487
      %v489 = vpop.f32.mrf.mxu0
      %490 = vmatprep.mubr.bf16.mxu0 0
      %491 = vmatmul.mubr.bf16.gmra.mxu0 %v371
      %v492 = vpop.f32.mrf.mxu0
      %v493 = vadd.f32 %v245, %v492
      %v494 = vpop.f32.mrf.mxu0
      %v495 = vpop.f32.mrf.mxu0
      %v496 = vadd.f32 %v245, %v495
      %v497 = vpop.f32.mrf.mxu0
      %498 = vmatprep.mubr.bf16.mxu0 0
      %499 = vmatmul.mubr.bf16.gmra.mxu0 %v374
      %v500 = vpop.f32.mrf.mxu0
      %v501 = vadd.f32 %v245, %v500
      %v502 = vpop.f32.mrf.mxu0
      %v503 = vpop.f32.mrf.mxu0
      %v504 = vadd.f32 %v245, %v503
      %v505 = vpop.f32.mrf.mxu0
      %506 = vmatprep.mubr.bf16.mxu0 0
      %507 = vmatmul.mubr.bf16.gmra.mxu0 %v377
      %v508 = vpop.f32.mrf.mxu0
      %v509 = vadd.f32 %v245, %v508
      %v510 = vpop.f32.mrf.mxu0
      %v511 = vpop.f32.mrf.mxu0
      %v512 = vadd.f32 %v245, %v511
      %v513 = vpop.f32.mrf.mxu0
      %514 = vmatprep.mubr.bf16.mxu0 0
      %515 = vmatmul.mubr.bf16.gmra.mxu0 %v380
      %v516 = vpop.f32.mrf.mxu0
      %v517 = vadd.f32 %v245, %v516
      %v518 = vpop.f32.mrf.mxu0
      %v519 = vpop.f32.mrf.mxu0
      %v520 = vadd.f32 %v245, %v519
      %v521 = vpop.f32.mrf.mxu0
      %522 = vmatprep.mubr.bf16.mxu0 0
      %523 = vmatmul.mubr.bf16.gmra.mxu0 %v383
      %v524 = vpop.f32.mrf.mxu0
      %v525 = vadd.f32 %v245, %v524
      %v526 = vpop.f32.mrf.mxu0
      %v527 = vpop.f32.mrf.mxu0
      %v528 = vadd.f32 %v245, %v527
      %v529 = vpop.f32.mrf.mxu0
      %530 = vmatprep.mubr.bf16.mxu0 0
      %531 = vmatmul.mubr.bf16.gmra.mxu0 %v386
      %v532 = vpop.f32.mrf.mxu0
      %v533 = vadd.f32 %v245, %v532
      %v534 = vpop.f32.mrf.mxu0
      %v535 = vpop.f32.mrf.mxu0
      %v536 = vadd.f32 %v245, %v535
      %v537 = vpop.f32.mrf.mxu0
      %538 = vmatprep.mubr.bf16.mxu0 0
      %539 = vmatmul.mubr.bf16.gmra.mxu0 %v389
      %v540 = vpop.f32.mrf.mxu0
      %v541 = vadd.f32 %v245, %v540
      %v542 = vpop.f32.mrf.mxu0
      %v543 = vpop.f32.mrf.mxu0
      %v544 = vadd.f32 %v245, %v543
      %v545 = vpop.f32.mrf.mxu0
      %546 = vmatprep.mubr.bf16.mxu0 0
      %547 = vmatmul.mubr.bf16.gmra.mxu0 %v392
      %v548 = vpop.f32.mrf.mxu0
      %v549 = vadd.f32 %v245, %v548
      %v550 = vpop.f32.mrf.mxu0
      %v551 = vpop.f32.mrf.mxu0
      %v552 = vadd.f32 %v245, %v551
      %v553 = vpop.f32.mrf.mxu0
      %554 = vdwg.mxu0
      %v555 = vld [vmem:[%s3] sm:$0x1]
      %v557 = vlaneseq
      %v558 = vshrl.u32 %v557, 7
      %v559 = vsub.s32 0, %v558
      %v560 = vrot.slane %v555, %v559
      %v562 = vmax.f32 %v429, %v560
      %v563 = vmax.f32 %v432, %v560
      %v564 = vmax.f32 %v437, %v560
      %v565 = vmax.f32 %v440, %v560
      %v566 = vmax.f32 %v445, %v560
      %v567 = vmax.f32 %v448, %v560
      %v568 = vmax.f32 %v453, %v560
      %v569 = vmax.f32 %v456, %v560
      %v570 = vmax.f32 %v461, %v560
      %v571 = vmax.f32 %v464, %v560
      %v572 = vmax.f32 %v469, %v560
      %v573 = vmax.f32 %v472, %v560
      %v574 = vmax.f32 %v477, %v560
      %v575 = vmax.f32 %v480, %v560
      %v576 = vmax.f32 %v485, %v560
      %v577 = vmax.f32 %v488, %v560
      %v578 = vmax.f32 %v493, %v560
      %v579 = vmax.f32 %v496, %v560
      %v580 = vmax.f32 %v501, %v560
      %v581 = vmax.f32 %v504, %v560
      %v582 = vmax.f32 %v509, %v560
      %v583 = vmax.f32 %v512, %v560
      %v584 = vmax.f32 %v517, %v560
      %v585 = vmax.f32 %v520, %v560
      %v586 = vmax.f32 %v525, %v560
      %v587 = vmax.f32 %v528, %v560
      %v588 = vmax.f32 %v533, %v560
      %v589 = vmax.f32 %v536, %v560
      %v590 = vmax.f32 %v541, %v560
      %v591 = vmax.f32 %v544, %v560
      %v592 = vmax.f32 %v549, %v560
      %v593 = vmax.f32 %v552, %v560
      %594 = vst [vmem:[%s199] sm:$0xff] %v562
      %595 = vst [vmem:[%s199 + $0x8] sm:$0xff] %v563
      %596 = vst [vmem:[%s199 + $0x10] sm:$0xff] %v564
      %597 = vst [vmem:[%s199 + $0x18] sm:$0xff] %v565
      %598 = vst [vmem:[%s199 + $0x20] sm:$0xff] %v566
      %599 = vst [vmem:[%s199 + $0x28] sm:$0xff] %v567
      %600 = vst [vmem:[%s199 + $0x30] sm:$0xff] %v568
      %601 = vst [vmem:[%s199 + $0x38] sm:$0xff] %v569
      %602 = vst [vmem:[%s199 + $0x40] sm:$0xff] %v570
      %603 = vst [vmem:[%s199 + $0x48] sm:$0xff] %v571
      %604 = vst [vmem:[%s199 + $0x50] sm:$0xff] %v572
      %605 = vst [vmem:[%s199 + $0x58] sm:$0xff] %v573
      %606 = vst [vmem:[%s199 + $0x60] sm:$0xff] %v574
      %607 = vst [vmem:[%s199 + $0x68] sm:$0xff] %v575
      %608 = vst [vmem:[%s199 + $0x70] sm:$0xff] %v576
      %609 = vst [vmem:[%s199 + $0x78] sm:$0xff] %v577
      %610 = vst [vmem:[%s199 + $0x80] sm:$0xff] %v578
      %611 = vst [vmem:[%s199 + $0x88] sm:$0xff] %v579
      %612 = vst [vmem:[%s199 + $0x90] sm:$0xff] %v580
      %613 = vst [vmem:[%s199 + $0x98] sm:$0xff] %v581
      %614 = vst [vmem:[%s199 + $0xa0] sm:$0xff] %v582
      %615 = vst [vmem:[%s199 + $0xa8] sm:$0xff] %v583
      %616 = vst [vmem:[%s199 + $0xb0] sm:$0xff] %v584
      %617 = vst [vmem:[%s199 + $0xb8] sm:$0xff] %v585
      %618 = vst [vmem:[%s199 + $0xc0] sm:$0xff] %v586
      %619 = vst [vmem:[%s199 + $0xc8] sm:$0xff] %v587
      %620 = vst [vmem:[%s199 + $0xd0] sm:$0xff] %v588
      %621 = vst [vmem:[%s199 + $0xd8] sm:$0xff] %v589
      %622 = vst [vmem:[%s199 + $0xe0] sm:$0xff] %v590
      %623 = vst [vmem:[%s199 + $0xe8] sm:$0xff] %v591
      %624 = vst [vmem:[%s199 + $0xf0] sm:$0xff] %v592
      %625 = vst [vmem:[%s199 + $0xf8] sm:$0xff] %v593
      %s626 = smul.u32 32, %s15
      %p627 = scmp.lt.s32.totalorder %s626, 63
      %s628 = scalar_select %p627, %s626, 63
      %s629 = smul.addr %s628, 8
      %s630 = scalar_lea.vmem %s4, %s629
      // Predicated region
      $region37: #{traj_predictor_forward.15} parent=35 // pred_check
        %p631 = pneg %p122
      $region38: #{traj_predictor_forward.15} parent=35 // pred_check_branch
        %633 = sbr.rel (%p631) target = $region40
      $region39: #{traj_predictor_forward.15} parent=35 // pred_region
        %s634 = smul.u32 32, %s15
      $region40: #{traj_predictor_forward.15} parent=35 // pred_fallthru
        _
    $region36: #{traj_predictor_forward.15} parent=5 // pred_fallthru
      _
    %p635 = scmp.le.s32.totalorder 2, %s10
    // Predicated region
    $region41: #{traj_predictor_forward.15} parent=5 // pred_check
      %p636 = pneg %p635
    $region42: #{traj_predictor_forward.15} parent=5 // pred_check_branch
      %638 = sbr.rel (%p636) target = $region44
    $region43: #{traj_predictor_forward.15} parent=5 // pred_region
      %s639 = ssub.s32 %s10, 2
      // Predicated region
      $region45: #{traj_predictor_forward.15} parent=43 // pred_check
        %p640 = pneg %p128
      $region46: #{traj_predictor_forward.15} parent=43 // pred_check_branch
        %642 = sbr.rel (%p640) target = $region48
      $region47: #{traj_predictor_forward.15} parent=43 // pred_region
        %s643 = smul.u32 32, %s16
        %p644 = scmp.lt.s32.totalorder %s643, 63
        %s645 = scalar_select %p644, %s643, 63
        %s646 = smul.addr %s645, 8
        %s647 = scalar_lea.vmem %s4, %s646
      $region48: #{traj_predictor_forward.15} parent=43 // pred_fallthru
        _
    $region44: #{traj_predictor_forward.15} parent=5 // pred_fallthru
      _
  $region6: #{traj_predictor_forward.15} parent=0 // loop_footer
    %s14 = sadd.s32 1, %s10
  $region7: #{traj_predictor_forward.15} parent=0 // loop_footer_branch
    %9 = sbr.rel target = $region3
  $region8: #{traj_predictor_forward.15} parent=0 // loop_exit
    _

// kernel: traj_predictor_forward.16
$region0: #{traj_predictor_forward.16}
  #allocation0 [shape = 'u32[]', space=smem, size = 0x4, offset = 0x4, fixed_abs, tag = 'smem constant byte address 0x4 - core index']
  #allocation1 [shape = 'u32[144,128]{1,0:T(1,128)}', space=vmem, size = 0x12000, scoped, tag = 'internal scratch']
  %s0 = inlined_call_operand.vmem [shape: bf16[512,288], index: 0, kind: input, shape index: {}]
  %s1 = inlined_call_operand.vmem [shape: bf16[288,128], index: 1, kind: input, shape index: {}]
  %s2 = inlined_call_operand.vmem [shape: f32[1,128], index: 2, kind: input, shape index: {}]
  %s3 = inlined_call_operand.vmem [shape: f32[1,128], index: 3, kind: input, shape index: {}]
  %s4 = inlined_call_operand.vmem [shape: f32[512,128], index: 4, kind: output, shape index: {}]
  %s5 = sld [smem:[#allocation0]]
  $region49: #{traj_predictor_forward.16} parent=0
    _
  %s7 = ssub.s32 1, %s5
  %s8 = scalar_select 0, %s7, %s5
  loop: start=0, step=1, limit=4
  $region2: #{traj_predictor_forward.16} parent=0 // loop_pre_header
    _
  $region3: #{traj_predictor_forward.16} parent=0 // loop_header
    %s10 = sphi 0, %s14
    %p11 = scmp.ge.s32.totalorder %s10, 4
    %s20 = sphi 0, %s22
    %s23 = sphi 0, %s20
    %s24 = sphi 0, %s23
    %s40 = sphi 0, %s24
    %s44 = sphi 0, %s44
    %s46 = sphi 0, %s44
    %s47 = sphi 0, %s46
    %s61 = sphi 0, %s47
    %s65 = sphi 0, %s65
    %s67 = sphi 0, %s65
    %s68 = sphi 0, %s67
    %s82 = sphi 0, %s68
    %s86 = sphi 0, %s86
    %s88 = sphi 0, %s86
    %s89 = sphi 0, %s88
    %s103 = sphi 0, %s89
    %s109 = sphi 0, %s111
    %s112 = sphi 0, %s109
    %s113 = sphi 0, %s112
    %s129 = sphi 0, %s113
  $region4: #{traj_predictor_forward.16} parent=0 // loop_header_branch
    %13 = sbr.rel (%p11) target = $region8
  $region5: #{traj_predictor_forward.16} parent=0 // loop_body
    %s15 = ssub.s32 %s10, 1
    %s16 = ssub.s32 %s10, 2
    %s17 = sadd.s32 %s10, 1
    %s18 = ssub.s32 %s10, %s17
    %p19 = scmp.eq.s32.totalorder %s18, 0
    %s21 = sadd.s32 %s20, 1
    %s22 = scalar_select %p19, %s20, %s21
    %p25 = pneg %p19
    %p26 = scmp.eq.s32.totalorder %s10, 1
    %p27 = por %p25, %p26
    %p28 = scmp.ne.s32.totalorder %s20, %s23
    %p29 = scmp.eq.s32.totalorder %s10, 0
    %p30 = por %p28, %p29
    %p31 = scmp.ne.s32.totalorder %s20, %s23
    %p32 = scmp.eq.s32.totalorder %s15, 1
    %p33 = por %p31, %p32
    %p34 = scmp.ne.s32.totalorder %s23, %s24
    %p35 = scmp.eq.s32.totalorder %s15, 0
    %p36 = por %p34, %p35
    %p37 = scmp.ne.s32.totalorder %s23, %s24
    %p38 = scmp.eq.s32.totalorder %s16, 1
    %p39 = por %p37, %p38
    %p41 = scmp.ne.s32.totalorder %s24, %s40
    %p42 = scmp.eq.s32.totalorder %s16, 0
    %p43 = por %p41, %p42
    %s45 = sadd.s32 %s44, 1
    %p48 = scmp.eq.s32.totalorder %s10, 1
    %p49 = scmp.ne.s32.totalorder %s44, %s46
    %p50 = scmp.eq.s32.totalorder %s10, 0
    %p51 = por %p49, %p50
    %p52 = scmp.ne.s32.totalorder %s44, %s46
    %p53 = scmp.eq.s32.totalorder %s15, 1
    %p54 = por %p52, %p53
    %p55 = scmp.ne.s32.totalorder %s46, %s47
    %p56 = scmp.eq.s32.totalorder %s15, 0
    %p57 = por %p55, %p56
    %p58 = scmp.ne.s32.totalorder %s46, %s47
    %p59 = scmp.eq.s32.totalorder %s16, 1
    %p60 = por %p58, %p59
    %p62 = scmp.ne.s32.totalorder %s47, %s61
    %p63 = scmp.eq.s32.totalorder %s16, 0
    %p64 = por %p62, %p63
    %s66 = sadd.s32 %s65, 1
    %p69 = scmp.eq.s32.totalorder %s10, 1
    %p70 = scmp.ne.s32.totalorder %s65, %s67
    %p71 = scmp.eq.s32.totalorder %s10, 0
    %p72 = por %p70, %p71
    %p73 = scmp.ne.s32.totalorder %s65, %s67
    %p74 = scmp.eq.s32.totalorder %s15, 1
    %p75 = por %p73, %p74
    %p76 = scmp.ne.s32.totalorder %s67, %s68
    %p77 = scmp.eq.s32.totalorder %s15, 0
    %p78 = por %p76, %p77
    %p79 = scmp.ne.s32.totalorder %s67, %s68
    %p80 = scmp.eq.s32.totalorder %s16, 1
    %p81 = por %p79, %p80
    %p83 = scmp.ne.s32.totalorder %s68, %s82
    %p84 = scmp.eq.s32.totalorder %s16, 0
    %p85 = por %p83, %p84
    %s87 = sadd.s32 %s86, 1
    %p90 = scmp.eq.s32.totalorder %s10, 1
    %p91 = scmp.ne.s32.totalorder %s86, %s88
    %p92 = scmp.eq.s32.totalorder %s10, 0
    %p93 = por %p91, %p92
    %p94 = scmp.ne.s32.totalorder %s86, %s88
    %p95 = scmp.eq.s32.totalorder %s15, 1
    %p96 = por %p94, %p95
    %p97 = scmp.ne.s32.totalorder %s88, %s89
    %p98 = scmp.eq.s32.totalorder %s15, 0
    %p99 = por %p97, %p98
    %p100 = scmp.ne.s32.totalorder %s88, %s89
    %p101 = scmp.eq.s32.totalorder %s16, 1
    %p102 = por %p100, %p101
    %p104 = scmp.ne.s32.totalorder %s89, %s103
    %p105 = scmp.eq.s32.totalorder %s16, 0
    %p106 = por %p104, %p105
    %s107 = ssub.s32 %s10, %s17
    %p108 = scmp.eq.s32.totalorder %s107, 0
    %s110 = sadd.s32 %s109, 1
    %s111 = scalar_select %p108, %s109, %s110
    %p114 = pneg %p108
    %p115 = scmp.eq.s32.totalorder %s10, 1
    %p116 = por %p114, %p115
    %p117 = scmp.ne.s32.totalorder %s109, %s112
    %p118 = scmp.eq.s32.totalorder %s10, 0
    %p119 = por %p117, %p118
    %p120 = scmp.ne.s32.totalorder %s109, %s112
    %p121 = scmp.eq.s32.totalorder %s15, 1
    %p122 = por %p120, %p121
    %p123 = scmp.ne.s32.totalorder %s112, %s113
    %p124 = scmp.eq.s32.totalorder %s15, 0
    %p125 = por %p123, %p124
    %p126 = scmp.ne.s32.totalorder %s112, %s113
    %p127 = scmp.eq.s32.totalorder %s16, 1
    %p128 = por %p126, %p127
    %p130 = scmp.ne.s32.totalorder %s113, %s129
    %p131 = scmp.eq.s32.totalorder %s16, 0
    %p132 = por %p130, %p131
    %p133 = scmp.le.s32.totalorder 1, %s10
    %p134 = scmp.lt.s32.totalorder %s10, 3
    %p135 = pnand %p133, %p134
    %p136 = pneg %p135
    // Predicated region
    $region9: #{traj_predictor_forward.16} parent=5 // pred_check
      _
    $region10: #{traj_predictor_forward.16} parent=5 // pred_check_branch
      %138 = sbr.rel (%p135) target = $region12
    $region11: #{traj_predictor_forward.16} parent=5 // pred_region
      %s139 = ssub.s32 %s10, 1
      // Predicated region
      $region13: #{traj_predictor_forward.16} parent=11 // pred_check
        %p140 = pneg %p57
      $region14: #{traj_predictor_forward.16} parent=11 // pred_check_branch
        %142 = sbr.rel (%p140) target = $region16
      $region15: #{traj_predictor_forward.16} parent=11 // pred_region
        _
      $region16: #{traj_predictor_forward.16} parent=11 // pred_fallthru
        _
      // Predicated region
      $region17: #{traj_predictor_forward.16} parent=11 // pred_check
        %p143 = pneg %p78
      $region18: #{traj_predictor_forward.16} parent=11 // pred_check_branch
        %145 = sbr.rel (%p143) target = $region20
      $region19: #{traj_predictor_forward.16} parent=11 // pred_region
        _
      $region20: #{traj_predictor_forward.16} parent=11 // pred_fallthru
        _
      // Predicated region
      $region21: #{traj_predictor_forward.16} parent=11 // pred_check
        %p146 = pneg %p99
      $region22: #{traj_predictor_forward.16} parent=11 // pred_check_branch
        %148 = sbr.rel (%p146) target = $region24
      $region23: #{traj_predictor_forward.16} parent=11 // pred_region
        _
      $region24: #{traj_predictor_forward.16} parent=11 // pred_fallthru
        _
    $region12: #{traj_predictor_forward.16} parent=5 // pred_fallthru
      _
    %p149 = scmp.lt.s32.totalorder %s10, 2
    // Predicated region
    $region25: #{traj_predictor_forward.16} parent=5 // pred_check
      %p150 = pneg %p149
    $region26: #{traj_predictor_forward.16} parent=5 // pred_check_branch
      %152 = sbr.rel (%p150) target = $region28
    $region27: #{traj_predictor_forward.16} parent=5 // pred_region
      // Predicated region
      $region29: #{traj_predictor_forward.16} parent=27 // pred_check
        %p153 = pneg %p30
      $region30: #{traj_predictor_forward.16} parent=27 // pred_check_branch
        %155 = sbr.rel (%p153) target = $region32
      $region31: #{traj_predictor_forward.16} parent=27 // pred_region
        %s156 = smul.u32 32, %s10
        %p157 = scmp.lt.s32.totalorder %s156, 63
        %s158 = scalar_select %p157, %s156, 63
        %s159 = smul.addr %s158, 3
        %s160 = smul.addr %s159, 4
        %s161 = scalar_lea.vmem %s0, %s160
        %s162 = smul.u32 32, %s10
      $region32: #{traj_predictor_forward.16} parent=27 // pred_fallthru
        _
    $region28: #{traj_predictor_forward.16} parent=5 // pred_fallthru
      _
    %p163 = scmp.le.s32.totalorder 1, %s10
    %p164 = scmp.lt.s32.totalorder %s10, 3
    %p165 = pnand %p163, %p164
    %p166 = pneg %p165
    // Predicated region
    $region33: #{traj_predictor_forward.16} parent=5 // pred_check
      _
    $region34: #{traj_predictor_forward.16} parent=5 // pred_check_branch
      %168 = sbr.rel (%p165) target = $region36
    $region35: #{traj_predictor_forward.16} parent=5 // pred_region
      %s169 = ssub.s32 %s10, 1
      %s170 = smul.u32 32, %s15
      %p171 = scmp.lt.s32.totalorder %s170, 63
      %s172 = scalar_select %p171, %s170, 63
      %s173 = smul.addr %s172, 3
      %s174 = smul.addr %s173, 4
      %s175 = scalar_lea.vmem %s0, %s174
      %p176 = pneg %p36
      %p177 = pneg %p33
      %p178 = pneg %p57
      %p179 = pneg %p54
      %p180 = pneg %p78
      %p181 = pneg %p75
      %p182 = pneg %p99
      %p183 = pneg %p96
      %p184 = pneg %p125
      %p185 = pneg %p122
      %s186 = smul.u32 32, %s15
      %p187 = scmp.lt.s32.totalorder %s186, 63
      %s188 = scalar_select %p187, %s186, 63
      %s189 = smul.addr %s188, 8
      %s190 = scalar_lea.vmem %s4, %s189
      %s191 = smul.u32 32, %s15
      %p192 = scmp.lt.s32.totalorder %s191, 63
      %s193 = scalar_select %p192, %s191, 63
      %s194 = smul.addr %s193, 3
      %s195 = smul.addr %s194, 4
      %s196 = scalar_lea.vmem %s0, %s195
      %s197 = smul.u32 32, %s15
      %s198 = smul.u32 32, %s15
      %p199 = scmp.lt.s32.totalorder %s198, 63
      %s200 = scalar_select %p199, %s198, 63
      %s201 = smul.addr %s200, 8
      %s202 = scalar_lea.vmem %s4, %s201
      %s203 = smul.u32 32, %s15
      %v205 = vld [vmem:[%s196] sm:$0xff]
      %v206 = vld [vmem:[%s196 + $0x8] sm:$0xf]
      %v207 = vld [vmem:[%s196 + $0xc] sm:$0xff]
      %v208 = vld [vmem:[%s196 + $0x14] sm:$0xf]
      %v209 = vld [vmem:[%s196 + $0x18] sm:$0xff]
      %v210 = vld [vmem:[%s196 + $0x20] sm:$0xf]
      %v211 = vld [vmem:[%s196 + $0x24] sm:$0xff]
      %v212 = vld [vmem:[%s196 + $0x2c] sm:$0xf]
      %v213 = vld [vmem:[%s196 + $0x30] sm:$0xff]
      %v214 = vld [vmem:[%s196 + $0x38] sm:$0xf]
      %v215 = vld [vmem:[%s196 + $0x3c] sm:$0xff]
      %v216 = vld [vmem:[%s196 + $0x44] sm:$0xf]
      %v217 = vld [vmem:[%s196 + $0x48] sm:$0xff]
      %v218 = vld [vmem:[%s196 + $0x50] sm:$0xf]
      %v219 = vld [vmem:[%s196 + $0x54] sm:$0xff]
      %v220 = vld [vmem:[%s196 + $0x5c] sm:$0xf]
      %v221 = vld [vmem:[%s196 + $0x60] sm:$0xff]
      %v222 = vld [vmem:[%s196 + $0x68] sm:$0xf]
      %v223 = vld [vmem:[%s196 + $0x6c] sm:$0xff]
      %v224 = vld [vmem:[%s196 + $0x74] sm:$0xf]
      %v225 = vld [vmem:[%s196 + $0x78] sm:$0xff]
      %v226 = vld [vmem:[%s196 + $0x80] sm:$0xf]
      %v227 = vld [vmem:[%s196 + $0x84] sm:$0xff]
      %v228 = vld [vmem:[%s196 + $0x8c] sm:$0xf]
      %v229 = vld [vmem:[%s196 + $0x90] sm:$0xff]
      %v230 = vld [vmem:[%s196 + $0x98] sm:$0xf]
      %v231 = vld [vmem:[%s196 + $0x9c] sm:$0xff]
      %v232 = vld [vmem:[%s196 + $0xa4] sm:$0xf]
      %v233 = vld [vmem:[%s196 + $0xa8] sm:$0xff]
      %v234 = vld [vmem:[%s196 + $0xb0] sm:$0xf]
      %v235 = vld [vmem:[%s196 + $0xb4] sm:$0xff]
      %v236 = vld [vmem:[%s196 + $0xbc] sm:$0xf]
      %v237 = vld [vmem:[%s196 + $0xc0] sm:$0xff]
      %v238 = vld [vmem:[%s196 + $0xc8] sm:$0xf]
      %v239 = vld [vmem:[%s196 + $0xcc] sm:$0xff]
      %v240 = vld [vmem:[%s196 + $0xd4] sm:$0xf]
      %v241 = vld [vmem:[%s196 + $0xd8] sm:$0xff]
      %v242 = vld [vmem:[%s196 + $0xe0] sm:$0xf]
      %v243 = vld [vmem:[%s196 + $0xe4] sm:$0xff]
      %v244 = vld [vmem:[%s196 + $0xec] sm:$0xf]
      %v245 = vld [vmem:[%s196 + $0xf0] sm:$0xff]
      %v246 = vld [vmem:[%s196 + $0xf8] sm:$0xf]
      %v247 = vld [vmem:[%s196 + $0xfc] sm:$0xff]
      %v248 = vld [vmem:[%s196 + $0x104] sm:$0xf]
      %v249 = vld [vmem:[%s196 + $0x108] sm:$0xff]
      %v250 = vld [vmem:[%s196 + $0x110] sm:$0xf]
      %v251 = vld [vmem:[%s196 + $0x114] sm:$0xff]
      %v252 = vld [vmem:[%s196 + $0x11c] sm:$0xf]
      %v253 = vld [vmem:[%s196 + $0x120] sm:$0xff]
      %v254 = vld [vmem:[%s196 + $0x128] sm:$0xf]
      %v255 = vld [vmem:[%s196 + $0x12c] sm:$0xff]
      %v256 = vld [vmem:[%s196 + $0x134] sm:$0xf]
      %v257 = vld [vmem:[%s196 + $0x138] sm:$0xff]
      %v258 = vld [vmem:[%s196 + $0x140] sm:$0xf]
      %v259 = vld [vmem:[%s196 + $0x144] sm:$0xff]
      %v260 = vld [vmem:[%s196 + $0x14c] sm:$0xf]
      %v261 = vld [vmem:[%s196 + $0x150] sm:$0xff]
      %v262 = vld [vmem:[%s196 + $0x158] sm:$0xf]
      %v263 = vld [vmem:[%s196 + $0x15c] sm:$0xff]
      %v264 = vld [vmem:[%s196 + $0x164] sm:$0xf]
      %v265 = vld [vmem:[%s196 + $0x168] sm:$0xff]
      %v266 = vld [vmem:[%s196 + $0x170] sm:$0xf]
      %v267 = vld [vmem:[%s196 + $0x174] sm:$0xff]
      %v268 = vld [vmem:[%s196 + $0x17c] sm:$0xf]
      %v269 = vld [vmem:[%s1] sm:$0xf]
      %v270 = vld [vmem:[%s1 + $0x4] sm:$0xf]
      %v271 = vld [vmem:[%s1 + $0x8] sm:$0xf]
      %v272 = vld [vmem:[%s1 + $0xc] sm:$0xf]
      %v273 = vld [vmem:[%s1 + $0x10] sm:$0xf]
      %v274 = vld [vmem:[%s1 + $0x14] sm:$0xf]
      %v275 = vld [vmem:[%s1 + $0x18] sm:$0xf]
      %v276 = vld [vmem:[%s1 + $0x1c] sm:$0xf]
      %v277 = vld [vmem:[%s1 + $0x20] sm:$0xf]
      %v278 = vld [vmem:[%s1 + $0x24] sm:$0xf]
      %v279 = vld [vmem:[%s1 + $0x28] sm:$0xf]
      %v280 = vld [vmem:[%s1 + $0x2c] sm:$0xf]
      %v281 = vld [vmem:[%s1 + $0x30] sm:$0xf]
      %v282 = vld [vmem:[%s1 + $0x34] sm:$0xf]
      %v283 = vld [vmem:[%s1 + $0x38] sm:$0xf]
      %v284 = vld [vmem:[%s1 + $0x3c] sm:$0xf]
      %v285 = vld [vmem:[%s1 + $0x40] sm:$0xf]
      %v286 = vld [vmem:[%s1 + $0x44] sm:$0xf]
      %v287 = vld [vmem:[%s1 + $0x48] sm:$0xf]
      %v288 = vld [vmem:[%s1 + $0x4c] sm:$0xf]
      %v289 = vld [vmem:[%s1 + $0x50] sm:$0xf]
      %v290 = vld [vmem:[%s1 + $0x54] sm:$0xf]
      %v291 = vld [vmem:[%s1 + $0x58] sm:$0xf]
      %v292 = vld [vmem:[%s1 + $0x5c] sm:$0xf]
      %v293 = vld [vmem:[%s1 + $0x60] sm:$0xf]
      %v294 = vld [vmem:[%s1 + $0x64] sm:$0xf]
      %v295 = vld [vmem:[%s1 + $0x68] sm:$0xf]
      %v296 = vld [vmem:[%s1 + $0x6c] sm:$0xf]
      %v297 = vld [vmem:[%s1 + $0x70] sm:$0xf]
      %v298 = vld [vmem:[%s1 + $0x74] sm:$0xf]
      %v299 = vld [vmem:[%s1 + $0x78] sm:$0xf]
      %v300 = vld [vmem:[%s1 + $0x7c] sm:$0xf]
      %v301 = vld [vmem:[%s1 + $0x80] sm:$0xf]
      %v302 = vld [vmem:[%s1 + $0x84] sm:$0xf]
      %v303 = vld [vmem:[%s1 + $0x88] sm:$0xf]
      %v304 = vld [vmem:[%s1 + $0x8c] sm:$0xf]
      %v305 = vld [vmem:[%s2] sm:$0x1]
      %v307 = vlaneseq
      %v308 = vshrl.u32 %v307, 7
      %v309 = vsub.s32 0, %v308
      %v310 = vrot.slane %v305, %v309
      %v376 = vunpack.c.l.b16 %v205
      %v377 = vunpack.c.h.b16 %v205
      %v378 = vunpack.c.l.b16 %v206
      %v379 = vunpack.c.l.b16 %v207
      %v380 = vunpack.c.h.b16 %v207
      %v381 = vunpack.c.l.b16 %v208
      %v382 = vunpack.c.l.b16 %v209
      %v383 = vunpack.c.h.b16 %v209
      %v384 = vunpack.c.l.b16 %v210
      %v385 = vunpack.c.l.b16 %v211
      %v386 = vunpack.c.h.b16 %v211
      %v387 = vunpack.c.l.b16 %v212
      %v388 = vunpack.c.l.b16 %v213
      %v389 = vunpack.c.h.b16 %v213
      %v390 = vunpack.c.l.b16 %v214
      %v391 = vunpack.c.l.b16 %v215
      %v392 = vunpack.c.h.b16 %v215
      %v393 = vunpack.c.l.b16 %v216
      %v394 = vunpack.c.l.b16 %v217
      %v395 = vunpack.c.h.b16 %v217
      %v396 = vunpack.c.l.b16 %v218
      %v397 = vunpack.c.l.b16 %v219
      %v398 = vunpack.c.h.b16 %v219
      %v399 = vunpack.c.l.b16 %v220
      %v400 = vunpack.c.l.b16 %v221
      %v401 = vunpack.c.h.b16 %v221
      %v402 = vunpack.c.l.b16 %v222
      %v403 = vunpack.c.l.b16 %v223
      %v404 = vunpack.c.h.b16 %v223
      %v405 = vunpack.c.l.b16 %v224
      %v406 = vunpack.c.l.b16 %v225
      %v407 = vunpack.c.h.b16 %v225
      %v408 = vunpack.c.l.b16 %v226
      %v409 = vunpack.c.l.b16 %v227
      %v410 = vunpack.c.h.b16 %v227
      %v411 = vunpack.c.l.b16 %v228
      %v412 = vunpack.c.l.b16 %v229
      %v413 = vunpack.c.h.b16 %v229
      %v414 = vunpack.c.l.b16 %v230
      %v415 = vunpack.c.l.b16 %v231
      %v416 = vunpack.c.h.b16 %v231
      %v417 = vunpack.c.l.b16 %v232
      %v418 = vunpack.c.l.b16 %v233
      %v419 = vunpack.c.h.b16 %v233
      %v420 = vunpack.c.l.b16 %v234
      %v421 = vunpack.c.l.b16 %v235
      %v422 = vunpack.c.h.b16 %v235
      %v423 = vunpack.c.l.b16 %v236
      %v424 = vunpack.c.l.b16 %v237
      %v425 = vunpack.c.h.b16 %v237
      %v426 = vunpack.c.l.b16 %v238
      %v427 = vunpack.c.l.b16 %v239
      %v428 = vunpack.c.h.b16 %v239
      %v429 = vunpack.c.l.b16 %v240
      %v430 = vunpack.c.l.b16 %v241
      %v431 = vunpack.c.h.b16 %v241
      %v432 = vunpack.c.l.b16 %v242
      %v433 = vunpack.c.l.b16 %v243
      %v434 = vunpack.c.h.b16 %v243
      %v435 = vunpack.c.l.b16 %v244
      %v436 = vunpack.c.l.b16 %v245
      %v437 = vunpack.c.h.b16 %v245
      %v438 = vunpack.c.l.b16 %v246
      %v439 = vunpack.c.l.b16 %v247
      %v440 = vunpack.c.h.b16 %v247
      %v441 = vunpack.c.l.b16 %v248
      %v442 = vunpack.c.l.b16 %v249
      %v443 = vunpack.c.h.b16 %v249
      %v444 = vunpack.c.l.b16 %v250
      %v445 = vunpack.c.l.b16 %v251
      %v446 = vunpack.c.h.b16 %v251
      %v447 = vunpack.c.l.b16 %v252
      %v448 = vunpack.c.l.b16 %v253
      %v449 = vunpack.c.h.b16 %v253
      %v450 = vunpack.c.l.b16 %v254
      %v451 = vunpack.c.l.b16 %v255
      %v452 = vunpack.c.h.b16 %v255
      %v453 = vunpack.c.l.b16 %v256
      %v454 = vunpack.c.l.b16 %v257
      %v455 = vunpack.c.h.b16 %v257
      %v456 = vunpack.c.l.b16 %v258
      %v457 = vunpack.c.l.b16 %v259
      %v458 = vunpack.c.h.b16 %v259
      %v459 = vunpack.c.l.b16 %v260
      %v460 = vunpack.c.l.b16 %v261
      %v461 = vunpack.c.h.b16 %v261
      %v462 = vunpack.c.l.b16 %v262
      %v463 = vunpack.c.l.b16 %v263
      %v464 = vunpack.c.h.b16 %v263
      %v465 = vunpack.c.l.b16 %v264
      %v466 = vunpack.c.l.b16 %v265
      %v467 = vunpack.c.h.b16 %v265
      %v468 = vunpack.c.l.b16 %v266
      %v469 = vunpack.c.l.b16 %v267
      %v470 = vunpack.c.h.b16 %v267
      %v471 = vunpack.c.l.b16 %v268
      %v472 = vpack.c.b16 %v379, %v376
      %v473 = vpack.c.b16 %v380, %v377
      %v474 = vpack.c.b16 %v381, %v378
      %v475 = vpack.c.b16 %v385, %v382
      %v476 = vpack.c.b16 %v386, %v383
      %v477 = vpack.c.b16 %v387, %v384
      %v478 = vpack.c.b16 %v391, %v388
      %v479 = vpack.c.b16 %v392, %v389
      %v480 = vpack.c.b16 %v393, %v390
      %v481 = vpack.c.b16 %v397, %v394
      %v482 = vpack.c.b16 %v398, %v395
      %v483 = vpack.c.b16 %v399, %v396
      %v484 = vpack.c.b16 %v403, %v400
      %v485 = vpack.c.b16 %v404, %v401
      %v486 = vpack.c.b16 %v405, %v402
      %v487 = vpack.c.b16 %v409, %v406
      %v488 = vpack.c.b16 %v410, %v407
      %v489 = vpack.c.b16 %v411, %v408
      %v490 = vpack.c.b16 %v415, %v412
      %v491 = vpack.c.b16 %v416, %v413
      %v492 = vpack.c.b16 %v417, %v414
      %v493 = vpack.c.b16 %v421, %v418
      %v494 = vpack.c.b16 %v422, %v419
      %v495 = vpack.c.b16 %v423, %v420
      %v496 = vpack.c.b16 %v427, %v424
      %v497 = vpack.c.b16 %v428, %v425
      %v498 = vpack.c.b16 %v429, %v426
      %v499 = vpack.c.b16 %v433, %v430
      %v500 = vpack.c.b16 %v434, %v431
      %v501 = vpack.c.b16 %v435, %v432
      %v502 = vpack.c.b16 %v439, %v436
      %v503 = vpack.c.b16 %v440, %v437
      %v504 = vpack.c.b16 %v441, %v438
      %v505 = vpack.c.b16 %v445, %v442
      %v506 = vpack.c.b16 %v446, %v443
      %v507 = vpack.c.b16 %v447, %v444
      %v508 = vpack.c.b16 %v451, %v448
      %v509 = vpack.c.b16 %v452, %v449
      %v510 = vpack.c.b16 %v453, %v450
      %v511 = vpack.c.b16 %v457, %v454
      %v512 = vpack.c.b16 %v458, %v455
      %v513 = vpack.c.b16 %v459, %v456
      %v514 = vpack.c.b16 %v463, %v460
      %v515 = vpack.c.b16 %v464, %v461
      %v516 = vpack.c.b16 %v465, %v462
      %v517 = vpack.c.b16 %v469, %v466
      %v518 = vpack.c.b16 %v470, %v467
      %v519 = vpack.c.b16 %v471, %v468
      %v588 = vunpack.c.l.b16 %v269
      %v589 = vunpack.c.l.b16 %v270
      %v590 = vunpack.c.l.b16 %v271
      %v591 = vunpack.c.l.b16 %v272
      %v592 = vunpack.c.l.b16 %v273
      %v593 = vunpack.c.l.b16 %v274
      %v594 = vunpack.c.l.b16 %v275
      %v595 = vunpack.c.l.b16 %v276
      %v596 = vunpack.c.l.b16 %v277
      %v597 = vunpack.c.l.b16 %v278
      %v598 = vunpack.c.l.b16 %v279
      %v599 = vunpack.c.l.b16 %v280
      %v600 = vunpack.c.l.b16 %v281
      %v601 = vunpack.c.l.b16 %v282
      %v602 = vunpack.c.l.b16 %v283
      %v603 = vunpack.c.l.b16 %v284
      %v604 = vunpack.c.l.b16 %v285
      %v605 = vunpack.c.l.b16 %v286
      %v606 = vunpack.c.l.b16 %v287
      %v607 = vunpack.c.l.b16 %v288
      %v608 = vunpack.c.l.b16 %v289
      %v609 = vunpack.c.l.b16 %v290
      %v610 = vunpack.c.l.b16 %v291
      %v611 = vunpack.c.l.b16 %v292
      %v612 = vunpack.c.l.b16 %v293
      %v613 = vunpack.c.l.b16 %v294
      %v614 = vunpack.c.l.b16 %v295
      %v615 = vunpack.c.l.b16 %v296
      %v616 = vunpack.c.l.b16 %v297
      %v617 = vunpack.c.l.b16 %v298
      %v618 = vunpack.c.l.b16 %v299
      %v619 = vunpack.c.l.b16 %v300
      %v620 = vunpack.c.l.b16 %v301
      %v621 = vunpack.c.l.b16 %v302
      %v622 = vunpack.c.l.b16 %v303
      %v623 = vunpack.c.l.b16 %v304
      %v624 = vpack.c.b16 %v589, %v588
      %v625 = vpack.c.b16 %v591, %v590
      %v626 = vpack.c.b16 %v593, %v592
      %v627 = vpack.c.b16 %v595, %v594
      %v628 = vpack.c.b16 %v597, %v596
      %v629 = vpack.c.b16 %v599, %v598
      %v630 = vpack.c.b16 %v601, %v600
      %v631 = vpack.c.b16 %v603, %v602
      %v632 = vpack.c.b16 %v605, %v604
      %v633 = vpack.c.b16 %v607, %v606
      %v634 = vpack.c.b16 %v609, %v608
      %v635 = vpack.c.b16 %v611, %v610
      %v636 = vpack.c.b16 %v613, %v612
      %v637 = vpack.c.b16 %v615, %v614
      %v638 = vpack.c.b16 %v617, %v616
      %v639 = vpack.c.b16 %v619, %v618
      %v640 = vpack.c.b16 %v621, %v620
      %v641 = vpack.c.b16 %v623, %v622
      %vm660 = vcmask 261120
      %v662 = vsel %vm660, %v474, 0
      %v665 = vsel %vm660, %v477, 0
      %v668 = vsel %vm660, %v480, 0
      %v671 = vsel %vm660, %v483, 0
      %v674 = vsel %vm660, %v486, 0
      %v677 = vsel %vm660, %v489, 0
      %v680 = vsel %vm660, %v492, 0
      %v683 = vsel %vm660, %v495, 0
      %v686 = vsel %vm660, %v498, 0
      %v689 = vsel %vm660, %v501, 0
      %v692 = vsel %vm660, %v504, 0
      %v695 = vsel %vm660, %v507, 0
      %v698 = vsel %vm660, %v510, 0
      %v701 = vsel %vm660, %v513, 0
      %v704 = vsel %vm660, %v516, 0
      %v707 = vsel %vm660, %v519, 0
      %709 = vmatprep.subr.bf16.mxu0 0
      %710 = vmatpush1.bf16.msra.mxu0 %v631
      %711 = vmatprep.subr.bf16.mxu0 0
      %712 = vmatpush1.bf16.msra.mxu0 %v630
      %713 = vmatprep.subr.bf16.mxu0 0
      %714 = vmatpush1.bf16.msra.mxu0 %v629
      %715 = vmatprep.subr.bf16.mxu0 0
      %716 = vmatpush1.bf16.msra.mxu0 %v628
      %717 = vmatprep.subr.bf16.mxu0 0
      %718 = vmatpush1.bf16.msra.mxu0 %v627
      %719 = vmatprep.subr.bf16.mxu0 0
      %720 = vmatpush1.bf16.msra.mxu0 %v626
      %721 = vmatprep.subr.bf16.mxu0 0
      %722 = vmatpush1.bf16.msra.mxu0 %v625
      %723 = vmatprep.subr.bf16.mxu0 0
      %724 = vmatpush1.bf16.msra.mxu0 %v624
      %725 = vmatprep.subr.bf16.mxu0 0
      %726 = vmatpush2.bf16.msra.mxu0 %v639
      %727 = vmatprep.subr.bf16.mxu0 0
      %728 = vmatpush2.bf16.msra.mxu0 %v638
      %729 = vmatprep.subr.bf16.mxu0 0
      %730 = vmatpush2.bf16.msra.mxu0 %v637
      %731 = vmatprep.subr.bf16.mxu0 0
      %732 = vmatpush2.bf16.msra.mxu0 %v636
      %733 = vmatprep.subr.bf16.mxu0 0
      %734 = vmatpush2.bf16.msra.mxu0 %v635
      %735 = vmatprep.subr.bf16.mxu0 0
      %736 = vmatpush2.bf16.msra.mxu0 %v634
      %737 = vmatprep.subr.bf16.mxu0 0
      %738 = vmatpush2.bf16.msra.mxu0 %v633
      %739 = vmatprep.subr.bf16.mxu0 0
      %740 = vmatpush2.bf16.msra.mxu0 %v632
      %741 = vmatprep.mubr.bf16.mxu0 %v473
      %742 = vmatmul.mubr.bf16.gmra.mxu0 %v472
      %v743 = vpop.f32.mrf.mxu0
      %v744 = vadd.f32 %v310, %v743
      %v745 = vpop.f32.mrf.mxu0
      %v746 = vpop.f32.mrf.mxu0
      %v747 = vadd.f32 %v310, %v746
      %v748 = vpop.f32.mrf.mxu0
      %749 = vmatprep.mubr.bf16.mxu0 %v476
      %750 = vmatmul.mubr.bf16.gmra.mxu0 %v475
      %v751 = vpop.f32.mrf.mxu0
      %v752 = vadd.f32 %v310, %v751
      %v753 = vpop.f32.mrf.mxu0
      %v754 = vpop.f32.mrf.mxu0
      %v755 = vadd.f32 %v310, %v754
      %v756 = vpop.f32.mrf.mxu0
      %757 = vmatprep.mubr.bf16.mxu0 %v479
      %758 = vmatmul.mubr.bf16.gmra.mxu0 %v478
      %v759 = vpop.f32.mrf.mxu0
      %v760 = vadd.f32 %v310, %v759
      %v761 = vpop.f32.mrf.mxu0
      %v762 = vpop.f32.mrf.mxu0
      %v763 = vadd.f32 %v310, %v762
      %v764 = vpop.f32.mrf.mxu0
      %765 = vmatprep.mubr.bf16.mxu0 %v482
      %766 = vmatmul.mubr.bf16.gmra.mxu0 %v481
      %v767 = vpop.f32.mrf.mxu0
      %v768 = vadd.f32 %v310, %v767
      %v769 = vpop.f32.mrf.mxu0
      %v770 = vpop.f32.mrf.mxu0
      %v771 = vadd.f32 %v310, %v770
      %v772 = vpop.f32.mrf.mxu0
      %773 = vmatprep.mubr.bf16.mxu0 %v485
      %774 = vmatmul.mubr.bf16.gmra.mxu0 %v484
      %v775 = vpop.f32.mrf.mxu0
      %v776 = vadd.f32 %v310, %v775
      %v777 = vpop.f32.mrf.mxu0
      %v778 = vpop.f32.mrf.mxu0
      %v779 = vadd.f32 %v310, %v778
      %v780 = vpop.f32.mrf.mxu0
      %781 = vmatprep.mubr.bf16.mxu0 %v488
      %782 = vmatmul.mubr.bf16.gmra.mxu0 %v487
      %v783 = vpop.f32.mrf.mxu0
      %v784 = vadd.f32 %v310, %v783
      %v785 = vpop.f32.mrf.mxu0
      %v786 = vpop.f32.mrf.mxu0
      %v787 = vadd.f32 %v310, %v786
      %v788 = vpop.f32.mrf.mxu0
      %789 = vmatprep.mubr.bf16.mxu0 %v491
      %790 = vmatmul.mubr.bf16.gmra.mxu0 %v490
      %v791 = vpop.f32.mrf.mxu0
      %v792 = vadd.f32 %v310, %v791
      %v793 = vpop.f32.mrf.mxu0
      %v794 = vpop.f32.mrf.mxu0
      %v795 = vadd.f32 %v310, %v794
      %v796 = vpop.f32.mrf.mxu0
      %797 = vmatprep.mubr.bf16.mxu0 %v494
      %798 = vmatmul.mubr.bf16.gmra.mxu0 %v493
      %v799 = vpop.f32.mrf.mxu0
      %v800 = vadd.f32 %v310, %v799
      %v801 = vpop.f32.mrf.mxu0
      %v802 = vpop.f32.mrf.mxu0
      %v803 = vadd.f32 %v310, %v802
      %v804 = vpop.f32.mrf.mxu0
      %805 = vmatprep.mubr.bf16.mxu0 %v497
      %806 = vmatmul.mubr.bf16.gmra.mxu0 %v496
      %v807 = vpop.f32.mrf.mxu0
      %v808 = vadd.f32 %v310, %v807
      %v809 = vpop.f32.mrf.mxu0
      %v810 = vpop.f32.mrf.mxu0
      %v811 = vadd.f32 %v310, %v810
      %v812 = vpop.f32.mrf.mxu0
      %813 = vmatprep.mubr.bf16.mxu0 %v500
      %814 = vmatmul.mubr.bf16.gmra.mxu0 %v499
      %v815 = vpop.f32.mrf.mxu0
      %v816 = vadd.f32 %v310, %v815
      %v817 = vpop.f32.mrf.mxu0
      %v818 = vpop.f32.mrf.mxu0
      %v819 = vadd.f32 %v310, %v818
      %v820 = vpop.f32.mrf.mxu0
      %821 = vmatprep.mubr.bf16.mxu0 %v503
      %822 = vmatmul.mubr.bf16.gmra.mxu0 %v502
      %v823 = vpop.f32.mrf.mxu0
      %v824 = vadd.f32 %v310, %v823
      %v825 = vpop.f32.mrf.mxu0
      %v826 = vpop.f32.mrf.mxu0
      %v827 = vadd.f32 %v310, %v826
      %v828 = vpop.f32.mrf.mxu0
      %829 = vmatprep.mubr.bf16.mxu0 %v506
      %830 = vmatmul.mubr.bf16.gmra.mxu0 %v505
      %v831 = vpop.f32.mrf.mxu0
      %v832 = vadd.f32 %v310, %v831
      %v833 = vpop.f32.mrf.mxu0
      %v834 = vpop.f32.mrf.mxu0
      %v835 = vadd.f32 %v310, %v834
      %v836 = vpop.f32.mrf.mxu0
      %837 = vmatprep.mubr.bf16.mxu0 %v509
      %838 = vmatmul.mubr.bf16.gmra.mxu0 %v508
      %v839 = vpop.f32.mrf.mxu0
      %v840 = vadd.f32 %v310, %v839
      %v841 = vpop.f32.mrf.mxu0
      %v842 = vpop.f32.mrf.mxu0
      %v843 = vadd.f32 %v310, %v842
      %v844 = vpop.f32.mrf.mxu0
      %845 = vmatprep.mubr.bf16.mxu0 %v512
      %846 = vmatmul.mubr.bf16.gmra.mxu0 %v511
      %v847 = vpop.f32.mrf.mxu0
      %v848 = vadd.f32 %v310, %v847
      %v849 = vpop.f32.mrf.mxu0
      %v850 = vpop.f32.mrf.mxu0
      %v851 = vadd.f32 %v310, %v850
      %v852 = vpop.f32.mrf.mxu0
      %853 = vmatprep.mubr.bf16.mxu0 %v515
      %854 = vmatmul.mubr.bf16.gmra.mxu0 %v514
      %v855 = vpop.f32.mrf.mxu0
      %v856 = vadd.f32 %v310, %v855
      %v857 = vpop.f32.mrf.mxu0
      %v858 = vpop.f32.mrf.mxu0
      %v859 = vadd.f32 %v310, %v858
      %v860 = vpop.f32.mrf.mxu0
      %861 = vmatprep.mubr.bf16.mxu0 %v518
      %862 = vmatmul.mubr.bf16.gmra.mxu0 %v517
      %v863 = vpop.f32.mrf.mxu0
      %v864 = vadd.f32 %v310, %v863
      %v865 = vpop.f32.mrf.mxu0
      %v866 = vpop.f32.mrf.mxu0
      %v867 = vadd.f32 %v310, %v866
      %v868 = vpop.f32.mrf.mxu0
      %869 = vdwg.mxu0
      %870 = vmatprep.subr.bf16.mxu0 0
      %871 = vmatpush1.bf16.msra.mxu0 0
      %872 = vmatprep.subr.bf16.mxu0 0
      %873 = vmatpush1.bf16.msra.mxu0 0
      %874 = vmatprep.subr.bf16.mxu0 0
      %875 = vmatpush1.bf16.msra.mxu0 0
      %876 = vmatprep.subr.bf16.mxu0 0
      %877 = vmatpush1.bf16.msra.mxu0 0
      %878 = vmatprep.subr.bf16.mxu0 0
      %879 = vmatpush1.bf16.msra.mxu0 0
      %880 = vmatprep.subr.bf16.mxu0 0
      %881 = vmatpush1.bf16.msra.mxu0 0
      %882 = vmatprep.subr.bf16.mxu0 0
      %883 = vmatpush1.bf16.msra.mxu0 %v641
      %884 = vmatprep.subr.bf16.mxu0 0
      %885 = vmatpush1.bf16.msra.mxu0 %v640
      %886 = vmatprep.subr.bf16.mxu0 0
      %887 = vmatpush2.bf16.msra.mxu0 0
      %888 = vmatprep.subr.bf16.mxu0 0
      %889 = vmatpush2.bf16.msra.mxu0 0
      %890 = vmatprep.subr.bf16.mxu0 0
      %891 = vmatpush2.bf16.msra.mxu0 0
      %892 = vmatprep.subr.bf16.mxu0 0
      %893 = vmatpush2.bf16.msra.mxu0 0
      %894 = vmatprep.subr.bf16.mxu0 0
      %895 = vmatpush2.bf16.msra.mxu0 0
      %896 = vmatprep.subr.bf16.mxu0 0
      %897 = vmatpush2.bf16.msra.mxu0 0
      %898 = vmatprep.subr.bf16.mxu0 0
      %899 = vmatpush2.bf16.msra.mxu0 0
      %900 = vmatprep.subr.bf16.mxu0 0
      %901 = vmatpush2.bf16.msra.mxu0 0
      %902 = vmatprep.mubr.bf16.mxu0 0
      %903 = vmatmul.mubr.bf16.gmra.mxu0 %v662
      %v904 = vpop.f32.mrf.mxu0
      %v905 = vadd.f32 %v744, %v904
      %v906 = vpop.f32.mrf.mxu0
      %v907 = vpop.f32.mrf.mxu0
      %v908 = vadd.f32 %v747, %v907
      %v909 = vpop.f32.mrf.mxu0
      %910 = vmatprep.mubr.bf16.mxu0 0
      %911 = vmatmul.mubr.bf16.gmra.mxu0 %v665
      %v912 = vpop.f32.mrf.mxu0
      %v913 = vadd.f32 %v752, %v912
      %v914 = vpop.f32.mrf.mxu0
      %v915 = vpop.f32.mrf.mxu0
      %v916 = vadd.f32 %v755, %v915
      %v917 = vpop.f32.mrf.mxu0
      %918 = vmatprep.mubr.bf16.mxu0 0
      %919 = vmatmul.mubr.bf16.gmra.mxu0 %v668
      %v920 = vpop.f32.mrf.mxu0
      %v921 = vadd.f32 %v760, %v920
      %v922 = vpop.f32.mrf.mxu0
      %v923 = vpop.f32.mrf.mxu0
      %v924 = vadd.f32 %v763, %v923
      %v925 = vpop.f32.mrf.mxu0
      %926 = vmatprep.mubr.bf16.mxu0 0
      %927 = vmatmul.mubr.bf16.gmra.mxu0 %v671
      %v928 = vpop.f32.mrf.mxu0
      %v929 = vadd.f32 %v768, %v928
      %v930 = vpop.f32.mrf.mxu0
      %v931 = vpop.f32.mrf.mxu0
      %v932 = vadd.f32 %v771, %v931
      %v933 = vpop.f32.mrf.mxu0
      %934 = vmatprep.mubr.bf16.mxu0 0
      %935 = vmatmul.mubr.bf16.gmra.mxu0 %v674
      %v936 = vpop.f32.mrf.mxu0
      %v937 = vadd.f32 %v776, %v936
      %v938 = vpop.f32.mrf.mxu0
      %v939 = vpop.f32.mrf.mxu0
      %v940 = vadd.f32 %v779, %v939
      %v941 = vpop.f32.mrf.mxu0
      %942 = vmatprep.mubr.bf16.mxu0 0
      %943 = vmatmul.mubr.bf16.gmra.mxu0 %v677
      %v944 = vpop.f32.mrf.mxu0
      %v945 = vadd.f32 %v784, %v944
      %v946 = vpop.f32.mrf.mxu0
      %v947 = vpop.f32.mrf.mxu0
      %v948 = vadd.f32 %v787, %v947
      %v949 = vpop.f32.mrf.mxu0
      %950 = vmatprep.mubr.bf16.mxu0 0
      %951 = vmatmul.mubr.bf16.gmra.mxu0 %v680
      %v952 = vpop.f32.mrf.mxu0
      %v953 = vadd.f32 %v792, %v952
      %v954 = vpop.f32.mrf.mxu0
      %v955 = vpop.f32.mrf.mxu0
      %v956 = vadd.f32 %v795, %v955
      %v957 = vpop.f32.mrf.mxu0
      %958 = vmatprep.mubr.bf16.mxu0 0
      %959 = vmatmul.mubr.bf16.gmra.mxu0 %v683
      %v960 = vpop.f32.mrf.mxu0
      %v961 = vadd.f32 %v800, %v960
      %v962 = vpop.f32.mrf.mxu0
      %v963 = vpop.f32.mrf.mxu0
      %v964 = vadd.f32 %v803, %v963
      %v965 = vpop.f32.mrf.mxu0
      %966 = vmatprep.mubr.bf16.mxu0 0
      %967 = vmatmul.mubr.bf16.gmra.mxu0 %v686
      %v968 = vpop.f32.mrf.mxu0
      %v969 = vadd.f32 %v808, %v968
      %v970 = vpop.f32.mrf.mxu0
      %v971 = vpop.f32.mrf.mxu0
      %v972 = vadd.f32 %v811, %v971
      %v973 = vpop.f32.mrf.mxu0
      %974 = vmatprep.mubr.bf16.mxu0 0
      %975 = vmatmul.mubr.bf16.gmra.mxu0 %v689
      %v976 = vpop.f32.mrf.mxu0
      %v977 = vadd.f32 %v816, %v976
      %v978 = vpop.f32.mrf.mxu0
      %v979 = vpop.f32.mrf.mxu0
      %v980 = vadd.f32 %v819, %v979
      %v981 = vpop.f32.mrf.mxu0
      %982 = vmatprep.mubr.bf16.mxu0 0
      %983 = vmatmul.mubr.bf16.gmra.mxu0 %v692
      %v984 = vpop.f32.mrf.mxu0
      %v985 = vadd.f32 %v824, %v984
      %v986 = vpop.f32.mrf.mxu0
      %v987 = vpop.f32.mrf.mxu0
      %v988 = vadd.f32 %v827, %v987
      %v989 = vpop.f32.mrf.mxu0
      %990 = vmatprep.mubr.bf16.mxu0 0
      %991 = vmatmul.mubr.bf16.gmra.mxu0 %v695
      %v992 = vpop.f32.mrf.mxu0
      %v993 = vadd.f32 %v832, %v992
      %v994 = vpop.f32.mrf.mxu0
      %v995 = vpop.f32.mrf.mxu0
      %v996 = vadd.f32 %v835, %v995
      %v997 = vpop.f32.mrf.mxu0
      %998 = vmatprep.mubr.bf16.mxu0 0
      %999 = vmatmul.mubr.bf16.gmra.mxu0 %v698
      %v1000 = vpop.f32.mrf.mxu0
      %v1001 = vadd.f32 %v840, %v1000
      %v1002 = vpop.f32.mrf.mxu0
      %v1003 = vpop.f32.mrf.mxu0
      %v1004 = vadd.f32 %v843, %v1003
      %v1005 = vpop.f32.mrf.mxu0
      %1006 = vmatprep.mubr.bf16.mxu0 0
      %1007 = vmatmul.mubr.bf16.gmra.mxu0 %v701
      %v1008 = vpop.f32.mrf.mxu0
      %v1009 = vadd.f32 %v848, %v1008
      %v1010 = vpop.f32.mrf.mxu0
      %v1011 = vpop.f32.mrf.mxu0
      %v1012 = vadd.f32 %v851, %v1011
      %v1013 = vpop.f32.mrf.mxu0
      %1014 = vmatprep.mubr.bf16.mxu0 0
      %1015 = vmatmul.mubr.bf16.gmra.mxu0 %v704
      %v1016 = vpop.f32.mrf.mxu0
      %v1017 = vadd.f32 %v856, %v1016
      %v1018 = vpop.f32.mrf.mxu0
      %v1019 = vpop.f32.mrf.mxu0
      %v1020 = vadd.f32 %v859, %v1019
      %v1021 = vpop.f32.mrf.mxu0
      %1022 = vmatprep.mubr.bf16.mxu0 0
      %1023 = vmatmul.mubr.bf16.gmra.mxu0 %v707
      %v1024 = vpop.f32.mrf.mxu0
      %v1025 = vadd.f32 %v864, %v1024
      %v1026 = vpop.f32.mrf.mxu0
      %v1027 = vpop.f32.mrf.mxu0
      %v1028 = vadd.f32 %v867, %v1027
      %v1029 = vpop.f32.mrf.mxu0
      %1030 = vdwg.mxu0
      %v1031 = vld [vmem:[%s3] sm:$0x1]
      %v1033 = vlaneseq
      %v1034 = vshrl.u32 %v1033, 7
      %v1035 = vsub.s32 0, %v1034
      %v1036 = vrot.slane %v1031, %v1035
      %v1038 = vmax.f32 %v905, %v1036
      %v1039 = vmax.f32 %v908, %v1036
      %v1040 = vmax.f32 %v913, %v1036
      %v1041 = vmax.f32 %v916, %v1036
      %v1042 = vmax.f32 %v921, %v1036
      %v1043 = vmax.f32 %v924, %v1036
      %v1044 = vmax.f32 %v929, %v1036
      %v1045 = vmax.f32 %v932, %v1036
      %v1046 = vmax.f32 %v937, %v1036
      %v1047 = vmax.f32 %v940, %v1036
      %v1048 = vmax.f32 %v945, %v1036
      %v1049 = vmax.f32 %v948, %v1036
      %v1050 = vmax.f32 %v953, %v1036
      %v1051 = vmax.f32 %v956, %v1036
      %v1052 = vmax.f32 %v961, %v1036
      %v1053 = vmax.f32 %v964, %v1036
      %v1054 = vmax.f32 %v969, %v1036
      %v1055 = vmax.f32 %v972, %v1036
      %v1056 = vmax.f32 %v977, %v1036
      %v1057 = vmax.f32 %v980, %v1036
      %v1058 = vmax.f32 %v985, %v1036
      %v1059 = vmax.f32 %v988, %v1036
      %v1060 = vmax.f32 %v993, %v1036
      %v1061 = vmax.f32 %v996, %v1036
      %v1062 = vmax.f32 %v1001, %v1036
      %v1063 = vmax.f32 %v1004, %v1036
      %v1064 = vmax.f32 %v1009, %v1036
      %v1065 = vmax.f32 %v1012, %v1036
      %v1066 = vmax.f32 %v1017, %v1036
      %v1067 = vmax.f32 %v1020, %v1036
      %v1068 = vmax.f32 %v1025, %v1036
      %v1069 = vmax.f32 %v1028, %v1036
      %1070 = vst [vmem:[%s202] sm:$0xff] %v1038
      %1071 = vst [vmem:[%s202 + $0x8] sm:$0xff] %v1039
      %1072 = vst [vmem:[%s202 + $0x10] sm:$0xff] %v1040
      %1073 = vst [vmem:[%s202 + $0x18] sm:$0xff] %v1041
      %1074 = vst [vmem:[%s202 + $0x20] sm:$0xff] %v1042
      %1075 = vst [vmem:[%s202 + $0x28] sm:$0xff] %v1043
      %1076 = vst [vmem:[%s202 + $0x30] sm:$0xff] %v1044
      %1077 = vst [vmem:[%s202 + $0x38] sm:$0xff] %v1045
      %1078 = vst [vmem:[%s202 + $0x40] sm:$0xff] %v1046
      %1079 = vst [vmem:[%s202 + $0x48] sm:$0xff] %v1047
      %1080 = vst [vmem:[%s202 + $0x50] sm:$0xff] %v1048
      %1081 = vst [vmem:[%s202 + $0x58] sm:$0xff] %v1049
      %1082 = vst [vmem:[%s202 + $0x60] sm:$0xff] %v1050
      %1083 = vst [vmem:[%s202 + $0x68] sm:$0xff] %v1051
      %1084 = vst [vmem:[%s202 + $0x70] sm:$0xff] %v1052
      %1085 = vst [vmem:[%s202 + $0x78] sm:$0xff] %v1053
      %1086 = vst [vmem:[%s202 + $0x80] sm:$0xff] %v1054
      %1087 = vst [vmem:[%s202 + $0x88] sm:$0xff] %v1055
      %1088 = vst [vmem:[%s202 + $0x90] sm:$0xff] %v1056
      %1089 = vst [vmem:[%s202 + $0x98] sm:$0xff] %v1057
      %1090 = vst [vmem:[%s202 + $0xa0] sm:$0xff] %v1058
      %1091 = vst [vmem:[%s202 + $0xa8] sm:$0xff] %v1059
      %1092 = vst [vmem:[%s202 + $0xb0] sm:$0xff] %v1060
      %1093 = vst [vmem:[%s202 + $0xb8] sm:$0xff] %v1061
      %1094 = vst [vmem:[%s202 + $0xc0] sm:$0xff] %v1062
      %1095 = vst [vmem:[%s202 + $0xc8] sm:$0xff] %v1063
      %1096 = vst [vmem:[%s202 + $0xd0] sm:$0xff] %v1064
      %1097 = vst [vmem:[%s202 + $0xd8] sm:$0xff] %v1065
      %1098 = vst [vmem:[%s202 + $0xe0] sm:$0xff] %v1066
      %1099 = vst [vmem:[%s202 + $0xe8] sm:$0xff] %v1067
      %1100 = vst [vmem:[%s202 + $0xf0] sm:$0xff] %v1068
      %1101 = vst [vmem:[%s202 + $0xf8] sm:$0xff] %v1069
      %s1102 = smul.u32 32, %s15
      %p1103 = scmp.lt.s32.totalorder %s1102, 63
      %s1104 = scalar_select %p1103, %s1102, 63
      %s1105 = smul.addr %s1104, 8
      %s1106 = scalar_lea.vmem %s4, %s1105
      // Predicated region
      $region37: #{traj_predictor_forward.16} parent=35 // pred_check
        %p1107 = pneg %p122
      $region38: #{traj_predictor_forward.16} parent=35 // pred_check_branch
        %1109 = sbr.rel (%p1107) target = $region40
      $region39: #{traj_predictor_forward.16} parent=35 // pred_region
        %s1110 = smul.u32 32, %s15
      $region40: #{traj_predictor_forward.16} parent=35 // pred_fallthru
        _
    $region36: #{traj_predictor_forward.16} parent=5 // pred_fallthru
      _
    %p1111 = scmp.le.s32.totalorder 2, %s10
    // Predicated region
    $region41: #{traj_predictor_forward.16} parent=5 // pred_check
      %p1112 = pneg %p1111
    $region42: #{traj_predictor_forward.16} parent=5 // pred_check_branch
      %1114 = sbr.rel (%p1112) target = $region44
    $region43: #{traj_predictor_forward.16} parent=5 // pred_region
      %s1115 = ssub.s32 %s10, 2
      // Predicated region
      $region45: #{traj_predictor_forward.16} parent=43 // pred_check
        %p1116 = pneg %p128
      $region46: #{traj_predictor_forward.16} parent=43 // pred_check_branch
        %1118 = sbr.rel (%p1116) target = $region48
      $region47: #{traj_predictor_forward.16} parent=43 // pred_region
        %s1119 = smul.u32 32, %s16
        %p1120 = scmp.lt.s32.totalorder %s1119, 63
        %s1121 = scalar_select %p1120, %s1119, 63
        %s1122 = smul.addr %s1121, 8
        %s1123 = scalar_lea.vmem %s4, %s1122
      $region48: #{traj_predictor_forward.16} parent=43 // pred_fallthru
        _
    $region44: #{traj_predictor_forward.16} parent=5 // pred_fallthru
      _
  $region6: #{traj_predictor_forward.16} parent=0 // loop_footer
    %s14 = sadd.s32 1, %s10
  $region7: #{traj_predictor_forward.16} parent=0 // loop_footer_branch
    %9 = sbr.rel target = $region3
  $region8: #{traj_predictor_forward.16} parent=0 // loop_exit
    _

// kernel: traj_predictor_forward.17
$region0: #{traj_predictor_forward.17}
  #allocation0 [shape = 'u32[]', space=smem, size = 0x4, offset = 0x4, fixed_abs, tag = 'smem constant byte address 0x4 - core index']
  #allocation1 [shape = 'u32[144,128]{1,0:T(1,128)}', space=vmem, size = 0x12000, scoped, tag = 'internal scratch']
  %s0 = inlined_call_operand.vmem [shape: bf16[128,512], index: 0, kind: input, shape index: {}]
  %s1 = inlined_call_operand.vmem [shape: bf16[512,128], index: 1, kind: input, shape index: {}]
  %s2 = inlined_call_operand.vmem [shape: f32[1,128], index: 2, kind: input, shape index: {}]
  %s3 = inlined_call_operand.vmem [shape: f32[1,128], index: 3, kind: input, shape index: {}]
  %s4 = inlined_call_operand.vmem [shape: f32[128,128], index: 4, kind: output, shape index: {}]
  %s5 = sld [smem:[#allocation0]]
  $region26: #{traj_predictor_forward.17} parent=0
    _
  %s7 = ssub.s32 1, %s5
  %s8 = scalar_select 0, %s7, %s5
  // Predicated region
  $region2: #{traj_predictor_forward.17} parent=0 // pred_check
    _
  $region3: #{traj_predictor_forward.17} parent=0 // pred_check_branch
    %10 = sbr.rel (0) target = $region5
  $region4: #{traj_predictor_forward.17} parent=0 // pred_region
    _
  $region5: #{traj_predictor_forward.17} parent=0 // pred_fallthru
    _
  // Predicated region
  $region6: #{traj_predictor_forward.17} parent=0 // pred_check
    _
  $region7: #{traj_predictor_forward.17} parent=0 // pred_check_branch
    %12 = sbr.rel (0) target = $region9
  $region8: #{traj_predictor_forward.17} parent=0 // pred_region
    _
  $region9: #{traj_predictor_forward.17} parent=0 // pred_fallthru
    _
  // Predicated region
  $region10: #{traj_predictor_forward.17} parent=0 // pred_check
    _
  $region11: #{traj_predictor_forward.17} parent=0 // pred_check_branch
    %14 = sbr.rel (0) target = $region13
  $region12: #{traj_predictor_forward.17} parent=0 // pred_region
    _
  $region13: #{traj_predictor_forward.17} parent=0 // pred_fallthru
    _
  // Predicated region
  $region14: #{traj_predictor_forward.17} parent=0 // pred_check
    _
  $region15: #{traj_predictor_forward.17} parent=0 // pred_check_branch
    %16 = sbr.rel (0) target = $region17
  $region16: #{traj_predictor_forward.17} parent=0 // pred_region
    _
  $region17: #{traj_predictor_forward.17} parent=0 // pred_fallthru
    _
  %v18 = vld [vmem:[%s0] sm:$0xff]
  %v19 = vld [vmem:[%s0 + $0x8] sm:$0xff]
  %v20 = vld [vmem:[%s0 + $0x10] sm:$0xff]
  %v21 = vld [vmem:[%s0 + $0x18] sm:$0xff]
  %v22 = vld [vmem:[%s0 + $0x20] sm:$0xff]
  %v23 = vld [vmem:[%s0 + $0x28] sm:$0xff]
  %v24 = vld [vmem:[%s0 + $0x30] sm:$0xff]
  %v25 = vld [vmem:[%s0 + $0x38] sm:$0xff]
  %v26 = vld [vmem:[%s0 + $0x40] sm:$0xff]
  %v27 = vld [vmem:[%s0 + $0x48] sm:$0xff]
  %v28 = vld [vmem:[%s0 + $0x50] sm:$0xff]
  %v29 = vld [vmem:[%s0 + $0x58] sm:$0xff]
  %v30 = vld [vmem:[%s0 + $0x60] sm:$0xff]
  %v31 = vld [vmem:[%s0 + $0x68] sm:$0xff]
  %v32 = vld [vmem:[%s0 + $0x70] sm:$0xff]
  %v33 = vld [vmem:[%s0 + $0x78] sm:$0xff]
  %v34 = vld [vmem:[%s0 + $0x80] sm:$0xff]
  %v35 = vld [vmem:[%s0 + $0x88] sm:$0xff]
  %v36 = vld [vmem:[%s0 + $0x90] sm:$0xff]
  %v37 = vld [vmem:[%s0 + $0x98] sm:$0xff]
  %v38 = vld [vmem:[%s0 + $0xa0] sm:$0xff]
  %v39 = vld [vmem:[%s0 + $0xa8] sm:$0xff]
  %v40 = vld [vmem:[%s0 + $0xb0] sm:$0xff]
  %v41 = vld [vmem:[%s0 + $0xb8] sm:$0xff]
  %v42 = vld [vmem:[%s0 + $0xc0] sm:$0xff]
  %v43 = vld [vmem:[%s0 + $0xc8] sm:$0xff]
  %v44 = vld [vmem:[%s0 + $0xd0] sm:$0xff]
  %v45 = vld [vmem:[%s0 + $0xd8] sm:$0xff]
  %v46 = vld [vmem:[%s0 + $0xe0] sm:$0xff]
  %v47 = vld [vmem:[%s0 + $0xe8] sm:$0xff]
  %v48 = vld [vmem:[%s0 + $0xf0] sm:$0xff]
  %v49 = vld [vmem:[%s0 + $0xf8] sm:$0xff]
  %v50 = vld [vmem:[%s1] sm:$0xf]
  %v51 = vld [vmem:[%s1 + $0x4] sm:$0xf]
  %v52 = vld [vmem:[%s1 + $0x8] sm:$0xf]
  %v53 = vld [vmem:[%s1 + $0xc] sm:$0xf]
  %v54 = vld [vmem:[%s1 + $0x10] sm:$0xf]
  %v55 = vld [vmem:[%s1 + $0x14] sm:$0xf]
  %v56 = vld [vmem:[%s1 + $0x18] sm:$0xf]
  %v57 = vld [vmem:[%s1 + $0x1c] sm:$0xf]
  %v58 = vld [vmem:[%s1 + $0x20] sm:$0xf]
  %v59 = vld [vmem:[%s1 + $0x24] sm:$0xf]
  %v60 = vld [vmem:[%s1 + $0x28] sm:$0xf]
  %v61 = vld [vmem:[%s1 + $0x2c] sm:$0xf]
  %v62 = vld [vmem:[%s1 + $0x30] sm:$0xf]
  %v63 = vld [vmem:[%s1 + $0x34] sm:$0xf]
  %v64 = vld [vmem:[%s1 + $0x38] sm:$0xf]
  %v65 = vld [vmem:[%s1 + $0x3c] sm:$0xf]
  %v66 = vld [vmem:[%s1 + $0x40] sm:$0xf]
  %v67 = vld [vmem:[%s1 + $0x44] sm:$0xf]
  %v68 = vld [vmem:[%s1 + $0x48] sm:$0xf]
  %v69 = vld [vmem:[%s1 + $0x4c] sm:$0xf]
  %v70 = vld [vmem:[%s1 + $0x50] sm:$0xf]
  %v71 = vld [vmem:[%s1 + $0x54] sm:$0xf]
  %v72 = vld [vmem:[%s1 + $0x58] sm:$0xf]
  %v73 = vld [vmem:[%s1 + $0x5c] sm:$0xf]
  %v74 = vld [vmem:[%s1 + $0x60] sm:$0xf]
  %v75 = vld [vmem:[%s1 + $0x64] sm:$0xf]
  %v76 = vld [vmem:[%s1 + $0x68] sm:$0xf]
  %v77 = vld [vmem:[%s1 + $0x6c] sm:$0xf]
  %v78 = vld [vmem:[%s1 + $0x70] sm:$0xf]
  %v79 = vld [vmem:[%s1 + $0x74] sm:$0xf]
  %v80 = vld [vmem:[%s1 + $0x78] sm:$0xf]
  %v81 = vld [vmem:[%s1 + $0x7c] sm:$0xf]
  %v82 = vld [vmem:[%s1 + $0x80] sm:$0xf]
  %v83 = vld [vmem:[%s1 + $0x84] sm:$0xf]
  %v84 = vld [vmem:[%s1 + $0x88] sm:$0xf]
  %v85 = vld [vmem:[%s1 + $0x8c] sm:$0xf]
  %v86 = vld [vmem:[%s1 + $0x90] sm:$0xf]
  %v87 = vld [vmem:[%s1 + $0x94] sm:$0xf]
  %v88 = vld [vmem:[%s1 + $0x98] sm:$0xf]
  %v89 = vld [vmem:[%s1 + $0x9c] sm:$0xf]
  %v90 = vld [vmem:[%s1 + $0xa0] sm:$0xf]
  %v91 = vld [vmem:[%s1 + $0xa4] sm:$0xf]
  %v92 = vld [vmem:[%s1 + $0xa8] sm:$0xf]
  %v93 = vld [vmem:[%s1 + $0xac] sm:$0xf]
  %v94 = vld [vmem:[%s1 + $0xb0] sm:$0xf]
  %v95 = vld [vmem:[%s1 + $0xb4] sm:$0xf]
  %v96 = vld [vmem:[%s1 + $0xb8] sm:$0xf]
  %v97 = vld [vmem:[%s1 + $0xbc] sm:$0xf]
  %v98 = vld [vmem:[%s1 + $0xc0] sm:$0xf]
  %v99 = vld [vmem:[%s1 + $0xc4] sm:$0xf]
  %v100 = vld [vmem:[%s1 + $0xc8] sm:$0xf]
  %v101 = vld [vmem:[%s1 + $0xcc] sm:$0xf]
  %v102 = vld [vmem:[%s1 + $0xd0] sm:$0xf]
  %v103 = vld [vmem:[%s1 + $0xd4] sm:$0xf]
  %v104 = vld [vmem:[%s1 + $0xd8] sm:$0xf]
  %v105 = vld [vmem:[%s1 + $0xdc] sm:$0xf]
  %v106 = vld [vmem:[%s1 + $0xe0] sm:$0xf]
  %v107 = vld [vmem:[%s1 + $0xe4] sm:$0xf]
  %v108 = vld [vmem:[%s1 + $0xe8] sm:$0xf]
  %v109 = vld [vmem:[%s1 + $0xec] sm:$0xf]
  %v110 = vld [vmem:[%s1 + $0xf0] sm:$0xf]
  %v111 = vld [vmem:[%s1 + $0xf4] sm:$0xf]
  %v112 = vld [vmem:[%s1 + $0xf8] sm:$0xf]
  %v113 = vld [vmem:[%s1 + $0xfc] sm:$0xf]
  %v114 = vld [vmem:[%s2] sm:$0x1]
  %v116 = vlaneseq
  %v117 = vshrl.u32 %v116, 7
  %v118 = vsub.s32 0, %v117
  %v119 = vrot.slane %v114, %v118
  %v153 = vunpack.c.l.b16 %v18
  %v154 = vunpack.c.h.b16 %v18
  %v155 = vunpack.c.l.b16 %v19
  %v156 = vunpack.c.h.b16 %v19
  %v157 = vunpack.c.l.b16 %v20
  %v158 = vunpack.c.h.b16 %v20
  %v159 = vunpack.c.l.b16 %v21
  %v160 = vunpack.c.h.b16 %v21
  %v161 = vunpack.c.l.b16 %v22
  %v162 = vunpack.c.h.b16 %v22
  %v163 = vunpack.c.l.b16 %v23
  %v164 = vunpack.c.h.b16 %v23
  %v165 = vunpack.c.l.b16 %v24
  %v166 = vunpack.c.h.b16 %v24
  %v167 = vunpack.c.l.b16 %v25
  %v168 = vunpack.c.h.b16 %v25
  %v169 = vunpack.c.l.b16 %v26
  %v170 = vunpack.c.h.b16 %v26
  %v171 = vunpack.c.l.b16 %v27
  %v172 = vunpack.c.h.b16 %v27
  %v173 = vunpack.c.l.b16 %v28
  %v174 = vunpack.c.h.b16 %v28
  %v175 = vunpack.c.l.b16 %v29
  %v176 = vunpack.c.h.b16 %v29
  %v177 = vunpack.c.l.b16 %v30
  %v178 = vunpack.c.h.b16 %v30
  %v179 = vunpack.c.l.b16 %v31
  %v180 = vunpack.c.h.b16 %v31
  %v181 = vunpack.c.l.b16 %v32
  %v182 = vunpack.c.h.b16 %v32
  %v183 = vunpack.c.l.b16 %v33
  %v184 = vunpack.c.h.b16 %v33
  %v185 = vunpack.c.l.b16 %v34
  %v186 = vunpack.c.h.b16 %v34
  %v187 = vunpack.c.l.b16 %v35
  %v188 = vunpack.c.h.b16 %v35
  %v189 = vunpack.c.l.b16 %v36
  %v190 = vunpack.c.h.b16 %v36
  %v191 = vunpack.c.l.b16 %v37
  %v192 = vunpack.c.h.b16 %v37
  %v193 = vunpack.c.l.b16 %v38
  %v194 = vunpack.c.h.b16 %v38
  %v195 = vunpack.c.l.b16 %v39
  %v196 = vunpack.c.h.b16 %v39
  %v197 = vunpack.c.l.b16 %v40
  %v198 = vunpack.c.h.b16 %v40
  %v199 = vunpack.c.l.b16 %v41
  %v200 = vunpack.c.h.b16 %v41
  %v201 = vunpack.c.l.b16 %v42
  %v202 = vunpack.c.h.b16 %v42
  %v203 = vunpack.c.l.b16 %v43
  %v204 = vunpack.c.h.b16 %v43
  %v205 = vunpack.c.l.b16 %v44
  %v206 = vunpack.c.h.b16 %v44
  %v207 = vunpack.c.l.b16 %v45
  %v208 = vunpack.c.h.b16 %v45
  %v209 = vunpack.c.l.b16 %v46
  %v210 = vunpack.c.h.b16 %v46
  %v211 = vunpack.c.l.b16 %v47
  %v212 = vunpack.c.h.b16 %v47
  %v213 = vunpack.c.l.b16 %v48
  %v214 = vunpack.c.h.b16 %v48
  %v215 = vunpack.c.l.b16 %v49
  %v216 = vunpack.c.h.b16 %v49
  %v217 = vpack.c.b16 %v157, %v153
  %v218 = vpack.c.b16 %v158, %v154
  %v219 = vpack.c.b16 %v159, %v155
  %v220 = vpack.c.b16 %v160, %v156
  %v221 = vpack.c.b16 %v165, %v161
  %v222 = vpack.c.b16 %v166, %v162
  %v223 = vpack.c.b16 %v167, %v163
  %v224 = vpack.c.b16 %v168, %v164
  %v225 = vpack.c.b16 %v173, %v169
  %v226 = vpack.c.b16 %v174, %v170
  %v227 = vpack.c.b16 %v175, %v171
  %v228 = vpack.c.b16 %v176, %v172
  %v229 = vpack.c.b16 %v181, %v177
  %v230 = vpack.c.b16 %v182, %v178
  %v231 = vpack.c.b16 %v183, %v179
  %v232 = vpack.c.b16 %v184, %v180
  %v233 = vpack.c.b16 %v189, %v185
  %v234 = vpack.c.b16 %v190, %v186
  %v235 = vpack.c.b16 %v191, %v187
  %v236 = vpack.c.b16 %v192, %v188
  %v237 = vpack.c.b16 %v197, %v193
  %v238 = vpack.c.b16 %v198, %v194
  %v239 = vpack.c.b16 %v199, %v195
  %v240 = vpack.c.b16 %v200, %v196
  %v241 = vpack.c.b16 %v205, %v201
  %v242 = vpack.c.b16 %v206, %v202
  %v243 = vpack.c.b16 %v207, %v203
  %v244 = vpack.c.b16 %v208, %v204
  %v245 = vpack.c.b16 %v213, %v209
  %v246 = vpack.c.b16 %v214, %v210
  %v247 = vpack.c.b16 %v215, %v211
  %v248 = vpack.c.b16 %v216, %v212
  %v345 = vunpack.c.l.b16 %v50
  %v346 = vunpack.c.l.b16 %v51
  %v347 = vunpack.c.l.b16 %v52
  %v348 = vunpack.c.l.b16 %v53
  %v349 = vunpack.c.l.b16 %v54
  %v350 = vunpack.c.l.b16 %v55
  %v351 = vunpack.c.l.b16 %v56
  %v352 = vunpack.c.l.b16 %v57
  %v353 = vunpack.c.l.b16 %v58
  %v354 = vunpack.c.l.b16 %v59
  %v355 = vunpack.c.l.b16 %v60
  %v356 = vunpack.c.l.b16 %v61
  %v357 = vunpack.c.l.b16 %v62
  %v358 = vunpack.c.l.b16 %v63
  %v359 = vunpack.c.l.b16 %v64
  %v360 = vunpack.c.l.b16 %v65
  %v361 = vunpack.c.l.b16 %v66
  %v362 = vunpack.c.l.b16 %v67
  %v363 = vunpack.c.l.b16 %v68
  %v364 = vunpack.c.l.b16 %v69
  %v365 = vunpack.c.l.b16 %v70
  %v366 = vunpack.c.l.b16 %v71
  %v367 = vunpack.c.l.b16 %v72
  %v368 = vunpack.c.l.b16 %v73
  %v369 = vunpack.c.l.b16 %v74
  %v370 = vunpack.c.l.b16 %v75
  %v371 = vunpack.c.l.b16 %v76
  %v372 = vunpack.c.l.b16 %v77
  %v373 = vunpack.c.l.b16 %v78
  %v374 = vunpack.c.l.b16 %v79
  %v375 = vunpack.c.l.b16 %v80
  %v376 = vunpack.c.l.b16 %v81
  %v377 = vunpack.c.l.b16 %v82
  %v378 = vunpack.c.l.b16 %v83
  %v379 = vunpack.c.l.b16 %v84
  %v380 = vunpack.c.l.b16 %v85
  %v381 = vunpack.c.l.b16 %v86
  %v382 = vunpack.c.l.b16 %v87
  %v383 = vunpack.c.l.b16 %v88
  %v384 = vunpack.c.l.b16 %v89
  %v385 = vunpack.c.l.b16 %v90
  %v386 = vunpack.c.l.b16 %v91
  %v387 = vunpack.c.l.b16 %v92
  %v388 = vunpack.c.l.b16 %v93
  %v389 = vunpack.c.l.b16 %v94
  %v390 = vunpack.c.l.b16 %v95
  %v391 = vunpack.c.l.b16 %v96
  %v392 = vunpack.c.l.b16 %v97
  %v393 = vunpack.c.l.b16 %v98
  %v394 = vunpack.c.l.b16 %v99
  %v395 = vunpack.c.l.b16 %v100
  %v396 = vunpack.c.l.b16 %v101
  %v397 = vunpack.c.l.b16 %v102
  %v398 = vunpack.c.l.b16 %v103
  %v399 = vunpack.c.l.b16 %v104
  %v400 = vunpack.c.l.b16 %v105
  %v401 = vunpack.c.l.b16 %v106
  %v402 = vunpack.c.l.b16 %v107
  %v403 = vunpack.c.l.b16 %v108
  %v404 = vunpack.c.l.b16 %v109
  %v405 = vunpack.c.l.b16 %v110
  %v406 = vunpack.c.l.b16 %v111
  %v407 = vunpack.c.l.b16 %v112
  %v408 = vunpack.c.l.b16 %v113
  %v409 = vpack.c.b16 %v346, %v345
  %v410 = vpack.c.b16 %v348, %v347
  %v411 = vpack.c.b16 %v350, %v349
  %v412 = vpack.c.b16 %v352, %v351
  %v413 = vpack.c.b16 %v354, %v353
  %v414 = vpack.c.b16 %v356, %v355
  %v415 = vpack.c.b16 %v358, %v357
  %v416 = vpack.c.b16 %v360, %v359
  %v417 = vpack.c.b16 %v362, %v361
  %v418 = vpack.c.b16 %v364, %v363
  %v419 = vpack.c.b16 %v366, %v365
  %v420 = vpack.c.b16 %v368, %v367
  %v421 = vpack.c.b16 %v370, %v369
  %v422 = vpack.c.b16 %v372, %v371
  %v423 = vpack.c.b16 %v374, %v373
  %v424 = vpack.c.b16 %v376, %v375
  %v425 = vpack.c.b16 %v378, %v377
  %v426 = vpack.c.b16 %v380, %v379
  %v427 = vpack.c.b16 %v382, %v381
  %v428 = vpack.c.b16 %v384, %v383
  %v429 = vpack.c.b16 %v386, %v385
  %v430 = vpack.c.b16 %v388, %v387
  %v431 = vpack.c.b16 %v390, %v389
  %v432 = vpack.c.b16 %v392, %v391
  %v433 = vpack.c.b16 %v394, %v393
  %v434 = vpack.c.b16 %v396, %v395
  %v435 = vpack.c.b16 %v398, %v397
  %v436 = vpack.c.b16 %v400, %v399
  %v437 = vpack.c.b16 %v402, %v401
  %v438 = vpack.c.b16 %v404, %v403
  %v439 = vpack.c.b16 %v406, %v405
  %v440 = vpack.c.b16 %v408, %v407
  %473 = vmatprep.subr.bf16.mxu0 0
  %474 = vmatpush1.bf16.msra.mxu0 %v416
  %475 = vmatprep.subr.bf16.mxu0 0
  %476 = vmatpush1.bf16.msra.mxu0 %v415
  %477 = vmatprep.subr.bf16.mxu0 0
  %478 = vmatpush1.bf16.msra.mxu0 %v414
  %479 = vmatprep.subr.bf16.mxu0 0
  %480 = vmatpush1.bf16.msra.mxu0 %v413
  %481 = vmatprep.subr.bf16.mxu0 0
  %482 = vmatpush1.bf16.msra.mxu0 %v412
  %483 = vmatprep.subr.bf16.mxu0 0
  %484 = vmatpush1.bf16.msra.mxu0 %v411
  %485 = vmatprep.subr.bf16.mxu0 0
  %486 = vmatpush1.bf16.msra.mxu0 %v410
  %487 = vmatprep.subr.bf16.mxu0 0
  %488 = vmatpush1.bf16.msra.mxu0 %v409
  %489 = vmatprep.subr.bf16.mxu0 0
  %490 = vmatpush2.bf16.msra.mxu0 %v424
  %491 = vmatprep.subr.bf16.mxu0 0
  %492 = vmatpush2.bf16.msra.mxu0 %v423
  %493 = vmatprep.subr.bf16.mxu0 0
  %494 = vmatpush2.bf16.msra.mxu0 %v422
  %495 = vmatprep.subr.bf16.mxu0 0
  %496 = vmatpush2.bf16.msra.mxu0 %v421
  %497 = vmatprep.subr.bf16.mxu0 0
  %498 = vmatpush2.bf16.msra.mxu0 %v420
  %499 = vmatprep.subr.bf16.mxu0 0
  %500 = vmatpush2.bf16.msra.mxu0 %v419
  %501 = vmatprep.subr.bf16.mxu0 0
  %502 = vmatpush2.bf16.msra.mxu0 %v418
  %503 = vmatprep.subr.bf16.mxu0 0
  %504 = vmatpush2.bf16.msra.mxu0 %v417
  %505 = vmatprep.mubr.bf16.mxu0 %v218
  %506 = vmatmul.mubr.bf16.gmra.mxu0 %v217
  %v507 = vpop.f32.mrf.mxu0
  %v508 = vadd.f32 %v119, %v507
  %v509 = vpop.f32.mrf.mxu0
  %v510 = vpop.f32.mrf.mxu0
  %v511 = vadd.f32 %v119, %v510
  %v512 = vpop.f32.mrf.mxu0
  %513 = vmatprep.mubr.bf16.mxu0 %v222
  %514 = vmatmul.mubr.bf16.gmra.mxu0 %v221
  %v515 = vpop.f32.mrf.mxu0
  %v516 = vadd.f32 %v119, %v515
  %v517 = vpop.f32.mrf.mxu0
  %v518 = vpop.f32.mrf.mxu0
  %v519 = vadd.f32 %v119, %v518
  %v520 = vpop.f32.mrf.mxu0
  %521 = vmatprep.mubr.bf16.mxu0 %v226
  %522 = vmatmul.mubr.bf16.gmra.mxu0 %v225
  %v523 = vpop.f32.mrf.mxu0
  %v524 = vadd.f32 %v119, %v523
  %v525 = vpop.f32.mrf.mxu0
  %v526 = vpop.f32.mrf.mxu0
  %v527 = vadd.f32 %v119, %v526
  %v528 = vpop.f32.mrf.mxu0
  %529 = vmatprep.mubr.bf16.mxu0 %v230
  %530 = vmatmul.mubr.bf16.gmra.mxu0 %v229
  %v531 = vpop.f32.mrf.mxu0
  %v532 = vadd.f32 %v119, %v531
  %v533 = vpop.f32.mrf.mxu0
  %v534 = vpop.f32.mrf.mxu0
  %v535 = vadd.f32 %v119, %v534
  %v536 = vpop.f32.mrf.mxu0
  %537 = vmatprep.mubr.bf16.mxu0 %v234
  %538 = vmatmul.mubr.bf16.gmra.mxu0 %v233
  %v539 = vpop.f32.mrf.mxu0
  %v540 = vadd.f32 %v119, %v539
  %v541 = vpop.f32.mrf.mxu0
  %v542 = vpop.f32.mrf.mxu0
  %v543 = vadd.f32 %v119, %v542
  %v544 = vpop.f32.mrf.mxu0
  %545 = vmatprep.mubr.bf16.mxu0 %v238
  %546 = vmatmul.mubr.bf16.gmra.mxu0 %v237
  %v547 = vpop.f32.mrf.mxu0
  %v548 = vadd.f32 %v119, %v547
  %v549 = vpop.f32.mrf.mxu0
  %v550 = vpop.f32.mrf.mxu0
  %v551 = vadd.f32 %v119, %v550
  %v552 = vpop.f32.mrf.mxu0
  %553 = vmatprep.mubr.bf16.mxu0 %v242
  %554 = vmatmul.mubr.bf16.gmra.mxu0 %v241
  %v555 = vpop.f32.mrf.mxu0
  %v556 = vadd.f32 %v119, %v555
  %v557 = vpop.f32.mrf.mxu0
  %v558 = vpop.f32.mrf.mxu0
  %v559 = vadd.f32 %v119, %v558
  %v560 = vpop.f32.mrf.mxu0
  %561 = vmatprep.mubr.bf16.mxu0 %v246
  %562 = vmatmul.mubr.bf16.gmra.mxu0 %v245
  %v563 = vpop.f32.mrf.mxu0
  %v564 = vadd.f32 %v119, %v563
  %v565 = vpop.f32.mrf.mxu0
  %v566 = vpop.f32.mrf.mxu0
  %v567 = vadd.f32 %v119, %v566
  %v568 = vpop.f32.mrf.mxu0
  %569 = vdwg.mxu0
  %570 = vmatprep.subr.bf16.mxu0 0
  %571 = vmatpush1.bf16.msra.mxu0 %v432
  %572 = vmatprep.subr.bf16.mxu0 0
  %573 = vmatpush1.bf16.msra.mxu0 %v431
  %574 = vmatprep.subr.bf16.mxu0 0
  %575 = vmatpush1.bf16.msra.mxu0 %v430
  %576 = vmatprep.subr.bf16.mxu0 0
  %577 = vmatpush1.bf16.msra.mxu0 %v429
  %578 = vmatprep.subr.bf16.mxu0 0
  %579 = vmatpush1.bf16.msra.mxu0 %v428
  %580 = vmatprep.subr.bf16.mxu0 0
  %581 = vmatpush1.bf16.msra.mxu0 %v427
  %582 = vmatprep.subr.bf16.mxu0 0
  %583 = vmatpush1.bf16.msra.mxu0 %v426
  %584 = vmatprep.subr.bf16.mxu0 0
  %585 = vmatpush1.bf16.msra.mxu0 %v425
  %586 = vmatprep.subr.bf16.mxu0 0
  %587 = vmatpush2.bf16.msra.mxu0 %v440
  %588 = vmatprep.subr.bf16.mxu0 0
  %589 = vmatpush2.bf16.msra.mxu0 %v439
  %590 = vmatprep.subr.bf16.mxu0 0
  %591 = vmatpush2.bf16.msra.mxu0 %v438
  %592 = vmatprep.subr.bf16.mxu0 0
  %593 = vmatpush2.bf16.msra.mxu0 %v437
  %594 = vmatprep.subr.bf16.mxu0 0
  %595 = vmatpush2.bf16.msra.mxu0 %v436
  %596 = vmatprep.subr.bf16.mxu0 0
  %597 = vmatpush2.bf16.msra.mxu0 %v435
  %598 = vmatprep.subr.bf16.mxu0 0
  %599 = vmatpush2.bf16.msra.mxu0 %v434
  %600 = vmatprep.subr.bf16.mxu0 0
  %601 = vmatpush2.bf16.msra.mxu0 %v433
  %602 = vmatprep.mubr.bf16.mxu0 %v220
  %603 = vmatmul.mubr.bf16.gmra.mxu0 %v219
  %v604 = vpop.f32.mrf.mxu0
  %v605 = vadd.f32 %v508, %v604
  %v606 = vpop.f32.mrf.mxu0
  %v607 = vpop.f32.mrf.mxu0
  %v608 = vadd.f32 %v511, %v607
  %v609 = vpop.f32.mrf.mxu0
  %610 = vmatprep.mubr.bf16.mxu0 %v224
  %611 = vmatmul.mubr.bf16.gmra.mxu0 %v223
  %v612 = vpop.f32.mrf.mxu0
  %v613 = vadd.f32 %v516, %v612
  %v614 = vpop.f32.mrf.mxu0
  %v615 = vpop.f32.mrf.mxu0
  %v616 = vadd.f32 %v519, %v615
  %v617 = vpop.f32.mrf.mxu0
  %618 = vmatprep.mubr.bf16.mxu0 %v228
  %619 = vmatmul.mubr.bf16.gmra.mxu0 %v227
  %v620 = vpop.f32.mrf.mxu0
  %v621 = vadd.f32 %v524, %v620
  %v622 = vpop.f32.mrf.mxu0
  %v623 = vpop.f32.mrf.mxu0
  %v624 = vadd.f32 %v527, %v623
  %v625 = vpop.f32.mrf.mxu0
  %626 = vmatprep.mubr.bf16.mxu0 %v232
  %627 = vmatmul.mubr.bf16.gmra.mxu0 %v231
  %v628 = vpop.f32.mrf.mxu0
  %v629 = vadd.f32 %v532, %v628
  %v630 = vpop.f32.mrf.mxu0
  %v631 = vpop.f32.mrf.mxu0
  %v632 = vadd.f32 %v535, %v631
  %v633 = vpop.f32.mrf.mxu0
  %634 = vmatprep.mubr.bf16.mxu0 %v236
  %635 = vmatmul.mubr.bf16.gmra.mxu0 %v235
  %v636 = vpop.f32.mrf.mxu0
  %v637 = vadd.f32 %v540, %v636
  %v638 = vpop.f32.mrf.mxu0
  %v639 = vpop.f32.mrf.mxu0
  %v640 = vadd.f32 %v543, %v639
  %v641 = vpop.f32.mrf.mxu0
  %642 = vmatprep.mubr.bf16.mxu0 %v240
  %643 = vmatmul.mubr.bf16.gmra.mxu0 %v239
  %v644 = vpop.f32.mrf.mxu0
  %v645 = vadd.f32 %v548, %v644
  %v646 = vpop.f32.mrf.mxu0
  %v647 = vpop.f32.mrf.mxu0
  %v648 = vadd.f32 %v551, %v647
  %v649 = vpop.f32.mrf.mxu0
  %650 = vmatprep.mubr.bf16.mxu0 %v244
  %651 = vmatmul.mubr.bf16.gmra.mxu0 %v243
  %v652 = vpop.f32.mrf.mxu0
  %v653 = vadd.f32 %v556, %v652
  %v654 = vpop.f32.mrf.mxu0
  %v655 = vpop.f32.mrf.mxu0
  %v656 = vadd.f32 %v559, %v655
  %v657 = vpop.f32.mrf.mxu0
  %658 = vmatprep.mubr.bf16.mxu0 %v248
  %659 = vmatmul.mubr.bf16.gmra.mxu0 %v247
  %v660 = vpop.f32.mrf.mxu0
  %v661 = vadd.f32 %v564, %v660
  %v662 = vpop.f32.mrf.mxu0
  %v663 = vpop.f32.mrf.mxu0
  %v664 = vadd.f32 %v567, %v663
  %v665 = vpop.f32.mrf.mxu0
  %666 = vdwg.mxu0
  %v667 = vld [vmem:[%s3] sm:$0x1]
  %v669 = vlaneseq
  %v670 = vshrl.u32 %v669, 7
  %v671 = vsub.s32 0, %v670
  %v672 = vrot.slane %v667, %v671
  %v674 = vmax.f32 %v605, %v672
  %v675 = vmax.f32 %v608, %v672
  %v676 = vmax.f32 %v613, %v672
  %v677 = vmax.f32 %v616, %v672
  %v678 = vmax.f32 %v621, %v672
  %v679 = vmax.f32 %v624, %v672
  %v680 = vmax.f32 %v629, %v672
  %v681 = vmax.f32 %v632, %v672
  %v682 = vmax.f32 %v637, %v672
  %v683 = vmax.f32 %v640, %v672
  %v684 = vmax.f32 %v645, %v672
  %v685 = vmax.f32 %v648, %v672
  %v686 = vmax.f32 %v653, %v672
  %v687 = vmax.f32 %v656, %v672
  %v688 = vmax.f32 %v661, %v672
  %v689 = vmax.f32 %v664, %v672
  %690 = vst [vmem:[%s4] sm:$0xff] %v674
  %691 = vst [vmem:[%s4 + $0x8] sm:$0xff] %v675
  %692 = vst [vmem:[%s4 + $0x10] sm:$0xff] %v676
  %693 = vst [vmem:[%s4 + $0x18] sm:$0xff] %v677
  %694 = vst [vmem:[%s4 + $0x20] sm:$0xff] %v678
  %695 = vst [vmem:[%s4 + $0x28] sm:$0xff] %v679
  %696 = vst [vmem:[%s4 + $0x30] sm:$0xff] %v680
  %697 = vst [vmem:[%s4 + $0x38] sm:$0xff] %v681
  %698 = vst [vmem:[%s4 + $0x40] sm:$0xff] %v682
  %699 = vst [vmem:[%s4 + $0x48] sm:$0xff] %v683
  %700 = vst [vmem:[%s4 + $0x50] sm:$0xff] %v684
  %701 = vst [vmem:[%s4 + $0x58] sm:$0xff] %v685
  %702 = vst [vmem:[%s4 + $0x60] sm:$0xff] %v686
  %703 = vst [vmem:[%s4 + $0x68] sm:$0xff] %v687
  %704 = vst [vmem:[%s4 + $0x70] sm:$0xff] %v688
  %705 = vst [vmem:[%s4 + $0x78] sm:$0xff] %v689
  // Predicated region
  $region18: #{traj_predictor_forward.17} parent=0 // pred_check
    _
  $region19: #{traj_predictor_forward.17} parent=0 // pred_check_branch
    %707 = sbr.rel (0) target = $region21
  $region20: #{traj_predictor_forward.17} parent=0 // pred_region
    _
  $region21: #{traj_predictor_forward.17} parent=0 // pred_fallthru
    _
  // Predicated region
  $region22: #{traj_predictor_forward.17} parent=0 // pred_check
    _
  $region23: #{traj_predictor_forward.17} parent=0 // pred_check_branch
    %709 = sbr.rel (0) target = $region25
  $region24: #{traj_predictor_forward.17} parent=0 // pred_region
    _
  $region25: #{traj_predictor_forward.17} parent=0 // pred_fallthru
    _

// kernel: traj_predictor_forward.18
$region0: #{traj_predictor_forward.18}
  #allocation0 [shape = 'u32[]', space=smem, size = 0x4, offset = 0x4, fixed_abs, tag = 'smem constant byte address 0x4 - core index']
  #allocation1 [shape = 'u32[144,128]{1,0:T(1,128)}', space=vmem, size = 0x12000, scoped, tag = 'internal scratch']
  %s0 = inlined_call_operand.vmem [shape: bf16[128,288], index: 0, kind: input, shape index: {}]
  %s1 = inlined_call_operand.vmem [shape: bf16[288,128], index: 1, kind: input, shape index: {}]
  %s2 = inlined_call_operand.vmem [shape: f32[1,128], index: 2, kind: input, shape index: {}]
  %s3 = inlined_call_operand.vmem [shape: f32[1,128], index: 3, kind: input, shape index: {}]
  %s4 = inlined_call_operand.vmem [shape: f32[128,128], index: 4, kind: output, shape index: {}]
  %s5 = sld [smem:[#allocation0]]
  $region26: #{traj_predictor_forward.18} parent=0
    _
  %s7 = ssub.s32 1, %s5
  %s8 = scalar_select 0, %s7, %s5
  // Predicated region
  $region2: #{traj_predictor_forward.18} parent=0 // pred_check
    _
  $region3: #{traj_predictor_forward.18} parent=0 // pred_check_branch
    %10 = sbr.rel (0) target = $region5
  $region4: #{traj_predictor_forward.18} parent=0 // pred_region
    _
  $region5: #{traj_predictor_forward.18} parent=0 // pred_fallthru
    _
  // Predicated region
  $region6: #{traj_predictor_forward.18} parent=0 // pred_check
    _
  $region7: #{traj_predictor_forward.18} parent=0 // pred_check_branch
    %12 = sbr.rel (0) target = $region9
  $region8: #{traj_predictor_forward.18} parent=0 // pred_region
    _
  $region9: #{traj_predictor_forward.18} parent=0 // pred_fallthru
    _
  // Predicated region
  $region10: #{traj_predictor_forward.18} parent=0 // pred_check
    _
  $region11: #{traj_predictor_forward.18} parent=0 // pred_check_branch
    %14 = sbr.rel (0) target = $region13
  $region12: #{traj_predictor_forward.18} parent=0 // pred_region
    _
  $region13: #{traj_predictor_forward.18} parent=0 // pred_fallthru
    _
  // Predicated region
  $region14: #{traj_predictor_forward.18} parent=0 // pred_check
    _
  $region15: #{traj_predictor_forward.18} parent=0 // pred_check_branch
    %16 = sbr.rel (0) target = $region17
  $region16: #{traj_predictor_forward.18} parent=0 // pred_region
    _
  $region17: #{traj_predictor_forward.18} parent=0 // pred_fallthru
    _
  %v18 = vld [vmem:[%s0] sm:$0xff]
  %v19 = vld [vmem:[%s0 + $0x8] sm:$0xf]
  %v20 = vld [vmem:[%s0 + $0xc] sm:$0xff]
  %v21 = vld [vmem:[%s0 + $0x14] sm:$0xf]
  %v22 = vld [vmem:[%s0 + $0x18] sm:$0xff]
  %v23 = vld [vmem:[%s0 + $0x20] sm:$0xf]
  %v24 = vld [vmem:[%s0 + $0x24] sm:$0xff]
  %v25 = vld [vmem:[%s0 + $0x2c] sm:$0xf]
  %v26 = vld [vmem:[%s0 + $0x30] sm:$0xff]
  %v27 = vld [vmem:[%s0 + $0x38] sm:$0xf]
  %v28 = vld [vmem:[%s0 + $0x3c] sm:$0xff]
  %v29 = vld [vmem:[%s0 + $0x44] sm:$0xf]
  %v30 = vld [vmem:[%s0 + $0x48] sm:$0xff]
  %v31 = vld [vmem:[%s0 + $0x50] sm:$0xf]
  %v32 = vld [vmem:[%s0 + $0x54] sm:$0xff]
  %v33 = vld [vmem:[%s0 + $0x5c] sm:$0xf]
  %v34 = vld [vmem:[%s0 + $0x60] sm:$0xff]
  %v35 = vld [vmem:[%s0 + $0x68] sm:$0xf]
  %v36 = vld [vmem:[%s0 + $0x6c] sm:$0xff]
  %v37 = vld [vmem:[%s0 + $0x74] sm:$0xf]
  %v38 = vld [vmem:[%s0 + $0x78] sm:$0xff]
  %v39 = vld [vmem:[%s0 + $0x80] sm:$0xf]
  %v40 = vld [vmem:[%s0 + $0x84] sm:$0xff]
  %v41 = vld [vmem:[%s0 + $0x8c] sm:$0xf]
  %v42 = vld [vmem:[%s0 + $0x90] sm:$0xff]
  %v43 = vld [vmem:[%s0 + $0x98] sm:$0xf]
  %v44 = vld [vmem:[%s0 + $0x9c] sm:$0xff]
  %v45 = vld [vmem:[%s0 + $0xa4] sm:$0xf]
  %v46 = vld [vmem:[%s0 + $0xa8] sm:$0xff]
  %v47 = vld [vmem:[%s0 + $0xb0] sm:$0xf]
  %v48 = vld [vmem:[%s0 + $0xb4] sm:$0xff]
  %v49 = vld [vmem:[%s0 + $0xbc] sm:$0xf]
  %v50 = vld [vmem:[%s1] sm:$0xf]
  %v51 = vld [vmem:[%s1 + $0x4] sm:$0xf]
  %v52 = vld [vmem:[%s1 + $0x8] sm:$0xf]
  %v53 = vld [vmem:[%s1 + $0xc] sm:$0xf]
  %v54 = vld [vmem:[%s1 + $0x10] sm:$0xf]
  %v55 = vld [vmem:[%s1 + $0x14] sm:$0xf]
  %v56 = vld [vmem:[%s1 + $0x18] sm:$0xf]
  %v57 = vld [vmem:[%s1 + $0x1c] sm:$0xf]
  %v58 = vld [vmem:[%s1 + $0x20] sm:$0xf]
  %v59 = vld [vmem:[%s1 + $0x24] sm:$0xf]
  %v60 = vld [vmem:[%s1 + $0x28] sm:$0xf]
  %v61 = vld [vmem:[%s1 + $0x2c] sm:$0xf]
  %v62 = vld [vmem:[%s1 + $0x30] sm:$0xf]
  %v63 = vld [vmem:[%s1 + $0x34] sm:$0xf]
  %v64 = vld [vmem:[%s1 + $0x38] sm:$0xf]
  %v65 = vld [vmem:[%s1 + $0x3c] sm:$0xf]
  %v66 = vld [vmem:[%s1 + $0x40] sm:$0xf]
  %v67 = vld [vmem:[%s1 + $0x44] sm:$0xf]
  %v68 = vld [vmem:[%s1 + $0x48] sm:$0xf]
  %v69 = vld [vmem:[%s1 + $0x4c] sm:$0xf]
  %v70 = vld [vmem:[%s1 + $0x50] sm:$0xf]
  %v71 = vld [vmem:[%s1 + $0x54] sm:$0xf]
  %v72 = vld [vmem:[%s1 + $0x58] sm:$0xf]
  %v73 = vld [vmem:[%s1 + $0x5c] sm:$0xf]
  %v74 = vld [vmem:[%s1 + $0x60] sm:$0xf]
  %v75 = vld [vmem:[%s1 + $0x64] sm:$0xf]
  %v76 = vld [vmem:[%s1 + $0x68] sm:$0xf]
  %v77 = vld [vmem:[%s1 + $0x6c] sm:$0xf]
  %v78 = vld [vmem:[%s1 + $0x70] sm:$0xf]
  %v79 = vld [vmem:[%s1 + $0x74] sm:$0xf]
  %v80 = vld [vmem:[%s1 + $0x78] sm:$0xf]
  %v81 = vld [vmem:[%s1 + $0x7c] sm:$0xf]
  %v82 = vld [vmem:[%s1 + $0x80] sm:$0xf]
  %v83 = vld [vmem:[%s1 + $0x84] sm:$0xf]
  %v84 = vld [vmem:[%s1 + $0x88] sm:$0xf]
  %v85 = vld [vmem:[%s1 + $0x8c] sm:$0xf]
  %v86 = vld [vmem:[%s2] sm:$0x1]
  %v88 = vlaneseq
  %v89 = vshrl.u32 %v88, 7
  %v90 = vsub.s32 0, %v89
  %v91 = vrot.slane %v86, %v90
  %v125 = vunpack.c.l.b16 %v18
  %v126 = vunpack.c.h.b16 %v18
  %v127 = vunpack.c.l.b16 %v19
  %v128 = vunpack.c.l.b16 %v20
  %v129 = vunpack.c.h.b16 %v20
  %v130 = vunpack.c.l.b16 %v21
  %v131 = vunpack.c.l.b16 %v22
  %v132 = vunpack.c.h.b16 %v22
  %v133 = vunpack.c.l.b16 %v23
  %v134 = vunpack.c.l.b16 %v24
  %v135 = vunpack.c.h.b16 %v24
  %v136 = vunpack.c.l.b16 %v25
  %v137 = vunpack.c.l.b16 %v26
  %v138 = vunpack.c.h.b16 %v26
  %v139 = vunpack.c.l.b16 %v27
  %v140 = vunpack.c.l.b16 %v28
  %v141 = vunpack.c.h.b16 %v28
  %v142 = vunpack.c.l.b16 %v29
  %v143 = vunpack.c.l.b16 %v30
  %v144 = vunpack.c.h.b16 %v30
  %v145 = vunpack.c.l.b16 %v31
  %v146 = vunpack.c.l.b16 %v32
  %v147 = vunpack.c.h.b16 %v32
  %v148 = vunpack.c.l.b16 %v33
  %v149 = vunpack.c.l.b16 %v34
  %v150 = vunpack.c.h.b16 %v34
  %v151 = vunpack.c.l.b16 %v35
  %v152 = vunpack.c.l.b16 %v36
  %v153 = vunpack.c.h.b16 %v36
  %v154 = vunpack.c.l.b16 %v37
  %v155 = vunpack.c.l.b16 %v38
  %v156 = vunpack.c.h.b16 %v38
  %v157 = vunpack.c.l.b16 %v39
  %v158 = vunpack.c.l.b16 %v40
  %v159 = vunpack.c.h.b16 %v40
  %v160 = vunpack.c.l.b16 %v41
  %v161 = vunpack.c.l.b16 %v42
  %v162 = vunpack.c.h.b16 %v42
  %v163 = vunpack.c.l.b16 %v43
  %v164 = vunpack.c.l.b16 %v44
  %v165 = vunpack.c.h.b16 %v44
  %v166 = vunpack.c.l.b16 %v45
  %v167 = vunpack.c.l.b16 %v46
  %v168 = vunpack.c.h.b16 %v46
  %v169 = vunpack.c.l.b16 %v47
  %v170 = vunpack.c.l.b16 %v48
  %v171 = vunpack.c.h.b16 %v48
  %v172 = vunpack.c.l.b16 %v49
  %v173 = vpack.c.b16 %v128, %v125
  %v174 = vpack.c.b16 %v129, %v126
  %v175 = vpack.c.b16 %v130, %v127
  %v176 = vpack.c.b16 %v134, %v131
  %v177 = vpack.c.b16 %v135, %v132
  %v178 = vpack.c.b16 %v136, %v133
  %v179 = vpack.c.b16 %v140, %v137
  %v180 = vpack.c.b16 %v141, %v138
  %v181 = vpack.c.b16 %v142, %v139
  %v182 = vpack.c.b16 %v146, %v143
  %v183 = vpack.c.b16 %v147, %v144
  %v184 = vpack.c.b16 %v148, %v145
  %v185 = vpack.c.b16 %v152, %v149
  %v186 = vpack.c.b16 %v153, %v150
  %v187 = vpack.c.b16 %v154, %v151
  %v188 = vpack.c.b16 %v158, %v155
  %v189 = vpack.c.b16 %v159, %v156
  %v190 = vpack.c.b16 %v160, %v157
  %v191 = vpack.c.b16 %v164, %v161
  %v192 = vpack.c.b16 %v165, %v162
  %v193 = vpack.c.b16 %v166, %v163
  %v194 = vpack.c.b16 %v170, %v167
  %v195 = vpack.c.b16 %v171, %v168
  %v196 = vpack.c.b16 %v172, %v169
  %v249 = vunpack.c.l.b16 %v50
  %v250 = vunpack.c.l.b16 %v51
  %v251 = vunpack.c.l.b16 %v52
  %v252 = vunpack.c.l.b16 %v53
  %v253 = vunpack.c.l.b16 %v54
  %v254 = vunpack.c.l.b16 %v55
  %v255 = vunpack.c.l.b16 %v56
  %v256 = vunpack.c.l.b16 %v57
  %v257 = vunpack.c.l.b16 %v58
  %v258 = vunpack.c.l.b16 %v59
  %v259 = vunpack.c.l.b16 %v60
  %v260 = vunpack.c.l.b16 %v61
  %v261 = vunpack.c.l.b16 %v62
  %v262 = vunpack.c.l.b16 %v63
  %v263 = vunpack.c.l.b16 %v64
  %v264 = vunpack.c.l.b16 %v65
  %v265 = vunpack.c.l.b16 %v66
  %v266 = vunpack.c.l.b16 %v67
  %v267 = vunpack.c.l.b16 %v68
  %v268 = vunpack.c.l.b16 %v69
  %v269 = vunpack.c.l.b16 %v70
  %v270 = vunpack.c.l.b16 %v71
  %v271 = vunpack.c.l.b16 %v72
  %v272 = vunpack.c.l.b16 %v73
  %v273 = vunpack.c.l.b16 %v74
  %v274 = vunpack.c.l.b16 %v75
  %v275 = vunpack.c.l.b16 %v76
  %v276 = vunpack.c.l.b16 %v77
  %v277 = vunpack.c.l.b16 %v78
  %v278 = vunpack.c.l.b16 %v79
  %v279 = vunpack.c.l.b16 %v80
  %v280 = vunpack.c.l.b16 %v81
  %v281 = vunpack.c.l.b16 %v82
  %v282 = vunpack.c.l.b16 %v83
  %v283 = vunpack.c.l.b16 %v84
  %v284 = vunpack.c.l.b16 %v85
  %v285 = vpack.c.b16 %v250, %v249
  %v286 = vpack.c.b16 %v252, %v251
  %v287 = vpack.c.b16 %v254, %v253
  %v288 = vpack.c.b16 %v256, %v255
  %v289 = vpack.c.b16 %v258, %v257
  %v290 = vpack.c.b16 %v260, %v259
  %v291 = vpack.c.b16 %v262, %v261
  %v292 = vpack.c.b16 %v264, %v263
  %v293 = vpack.c.b16 %v266, %v265
  %v294 = vpack.c.b16 %v268, %v267
  %v295 = vpack.c.b16 %v270, %v269
  %v296 = vpack.c.b16 %v272, %v271
  %v297 = vpack.c.b16 %v274, %v273
  %v298 = vpack.c.b16 %v276, %v275
  %v299 = vpack.c.b16 %v278, %v277
  %v300 = vpack.c.b16 %v280, %v279
  %v301 = vpack.c.b16 %v282, %v281
  %v302 = vpack.c.b16 %v284, %v283
  %vm321 = vcmask 261120
  %v323 = vsel %vm321, %v175, 0
  %v326 = vsel %vm321, %v178, 0
  %v329 = vsel %vm321, %v181, 0
  %v332 = vsel %vm321, %v184, 0
  %v335 = vsel %vm321, %v187, 0
  %v338 = vsel %vm321, %v190, 0
  %v341 = vsel %vm321, %v193, 0
  %v344 = vsel %vm321, %v196, 0
  %346 = vmatprep.subr.bf16.mxu0 0
  %347 = vmatpush1.bf16.msra.mxu0 %v292
  %348 = vmatprep.subr.bf16.mxu0 0
  %349 = vmatpush1.bf16.msra.mxu0 %v291
  %350 = vmatprep.subr.bf16.mxu0 0
  %351 = vmatpush1.bf16.msra.mxu0 %v290
  %352 = vmatprep.subr.bf16.mxu0 0
  %353 = vmatpush1.bf16.msra.mxu0 %v289
  %354 = vmatprep.subr.bf16.mxu0 0
  %355 = vmatpush1.bf16.msra.mxu0 %v288
  %356 = vmatprep.subr.bf16.mxu0 0
  %357 = vmatpush1.bf16.msra.mxu0 %v287
  %358 = vmatprep.subr.bf16.mxu0 0
  %359 = vmatpush1.bf16.msra.mxu0 %v286
  %360 = vmatprep.subr.bf16.mxu0 0
  %361 = vmatpush1.bf16.msra.mxu0 %v285
  %362 = vmatprep.subr.bf16.mxu0 0
  %363 = vmatpush2.bf16.msra.mxu0 %v300
  %364 = vmatprep.subr.bf16.mxu0 0
  %365 = vmatpush2.bf16.msra.mxu0 %v299
  %366 = vmatprep.subr.bf16.mxu0 0
  %367 = vmatpush2.bf16.msra.mxu0 %v298
  %368 = vmatprep.subr.bf16.mxu0 0
  %369 = vmatpush2.bf16.msra.mxu0 %v297
  %370 = vmatprep.subr.bf16.mxu0 0
  %371 = vmatpush2.bf16.msra.mxu0 %v296
  %372 = vmatprep.subr.bf16.mxu0 0
  %373 = vmatpush2.bf16.msra.mxu0 %v295
  %374 = vmatprep.subr.bf16.mxu0 0
  %375 = vmatpush2.bf16.msra.mxu0 %v294
  %376 = vmatprep.subr.bf16.mxu0 0
  %377 = vmatpush2.bf16.msra.mxu0 %v293
  %378 = vmatprep.mubr.bf16.mxu0 %v174
  %379 = vmatmul.mubr.bf16.gmra.mxu0 %v173
  %v380 = vpop.f32.mrf.mxu0
  %v381 = vadd.f32 %v91, %v380
  %v382 = vpop.f32.mrf.mxu0
  %v383 = vpop.f32.mrf.mxu0
  %v384 = vadd.f32 %v91, %v383
  %v385 = vpop.f32.mrf.mxu0
  %386 = vmatprep.mubr.bf16.mxu0 %v177
  %387 = vmatmul.mubr.bf16.gmra.mxu0 %v176
  %v388 = vpop.f32.mrf.mxu0
  %v389 = vadd.f32 %v91, %v388
  %v390 = vpop.f32.mrf.mxu0
  %v391 = vpop.f32.mrf.mxu0
  %v392 = vadd.f32 %v91, %v391
  %v393 = vpop.f32.mrf.mxu0
  %394 = vmatprep.mubr.bf16.mxu0 %v180
  %395 = vmatmul.mubr.bf16.gmra.mxu0 %v179
  %v396 = vpop.f32.mrf.mxu0
  %v397 = vadd.f32 %v91, %v396
  %v398 = vpop.f32.mrf.mxu0
  %v399 = vpop.f32.mrf.mxu0
  %v400 = vadd.f32 %v91, %v399
  %v401 = vpop.f32.mrf.mxu0
  %402 = vmatprep.mubr.bf16.mxu0 %v183
  %403 = vmatmul.mubr.bf16.gmra.mxu0 %v182
  %v404 = vpop.f32.mrf.mxu0
  %v405 = vadd.f32 %v91, %v404
  %v406 = vpop.f32.mrf.mxu0
  %v407 = vpop.f32.mrf.mxu0
  %v408 = vadd.f32 %v91, %v407
  %v409 = vpop.f32.mrf.mxu0
  %410 = vmatprep.mubr.bf16.mxu0 %v186
  %411 = vmatmul.mubr.bf16.gmra.mxu0 %v185
  %v412 = vpop.f32.mrf.mxu0
  %v413 = vadd.f32 %v91, %v412
  %v414 = vpop.f32.mrf.mxu0
  %v415 = vpop.f32.mrf.mxu0
  %v416 = vadd.f32 %v91, %v415
  %v417 = vpop.f32.mrf.mxu0
  %418 = vmatprep.mubr.bf16.mxu0 %v189
  %419 = vmatmul.mubr.bf16.gmra.mxu0 %v188
  %v420 = vpop.f32.mrf.mxu0
  %v421 = vadd.f32 %v91, %v420
  %v422 = vpop.f32.mrf.mxu0
  %v423 = vpop.f32.mrf.mxu0
  %v424 = vadd.f32 %v91, %v423
  %v425 = vpop.f32.mrf.mxu0
  %426 = vmatprep.mubr.bf16.mxu0 %v192
  %427 = vmatmul.mubr.bf16.gmra.mxu0 %v191
  %v428 = vpop.f32.mrf.mxu0
  %v429 = vadd.f32 %v91, %v428
  %v430 = vpop.f32.mrf.mxu0
  %v431 = vpop.f32.mrf.mxu0
  %v432 = vadd.f32 %v91, %v431
  %v433 = vpop.f32.mrf.mxu0
  %434 = vmatprep.mubr.bf16.mxu0 %v195
  %435 = vmatmul.mubr.bf16.gmra.mxu0 %v194
  %v436 = vpop.f32.mrf.mxu0
  %v437 = vadd.f32 %v91, %v436
  %v438 = vpop.f32.mrf.mxu0
  %v439 = vpop.f32.mrf.mxu0
  %v440 = vadd.f32 %v91, %v439
  %v441 = vpop.f32.mrf.mxu0
  %442 = vdwg.mxu0
  %443 = vmatprep.subr.bf16.mxu0 0
  %444 = vmatpush1.bf16.msra.mxu0 0
  %445 = vmatprep.subr.bf16.mxu0 0
  %446 = vmatpush1.bf16.msra.mxu0 0
  %447 = vmatprep.subr.bf16.mxu0 0
  %448 = vmatpush1.bf16.msra.mxu0 0
  %449 = vmatprep.subr.bf16.mxu0 0
  %450 = vmatpush1.bf16.msra.mxu0 0
  %451 = vmatprep.subr.bf16.mxu0 0
  %452 = vmatpush1.bf16.msra.mxu0 0
  %453 = vmatprep.subr.bf16.mxu0 0
  %454 = vmatpush1.bf16.msra.mxu0 0
  %455 = vmatprep.subr.bf16.mxu0 0
  %456 = vmatpush1.bf16.msra.mxu0 %v302
  %457 = vmatprep.subr.bf16.mxu0 0
  %458 = vmatpush1.bf16.msra.mxu0 %v301
  %459 = vmatprep.subr.bf16.mxu0 0
  %460 = vmatpush2.bf16.msra.mxu0 0
  %461 = vmatprep.subr.bf16.mxu0 0
  %462 = vmatpush2.bf16.msra.mxu0 0
  %463 = vmatprep.subr.bf16.mxu0 0
  %464 = vmatpush2.bf16.msra.mxu0 0
  %465 = vmatprep.subr.bf16.mxu0 0
  %466 = vmatpush2.bf16.msra.mxu0 0
  %467 = vmatprep.subr.bf16.mxu0 0
  %468 = vmatpush2.bf16.msra.mxu0 0
  %469 = vmatprep.subr.bf16.mxu0 0
  %470 = vmatpush2.bf16.msra.mxu0 0
  %471 = vmatprep.subr.bf16.mxu0 0
  %472 = vmatpush2.bf16.msra.mxu0 0
  %473 = vmatprep.subr.bf16.mxu0 0
  %474 = vmatpush2.bf16.msra.mxu0 0
  %475 = vmatprep.mubr.bf16.mxu0 0
  %476 = vmatmul.mubr.bf16.gmra.mxu0 %v323
  %v477 = vpop.f32.mrf.mxu0
  %v478 = vadd.f32 %v381, %v477
  %v479 = vpop.f32.mrf.mxu0
  %v480 = vpop.f32.mrf.mxu0
  %v481 = vadd.f32 %v384, %v480
  %v482 = vpop.f32.mrf.mxu0
  %483 = vmatprep.mubr.bf16.mxu0 0
  %484 = vmatmul.mubr.bf16.gmra.mxu0 %v326
  %v485 = vpop.f32.mrf.mxu0
  %v486 = vadd.f32 %v389, %v485
  %v487 = vpop.f32.mrf.mxu0
  %v488 = vpop.f32.mrf.mxu0
  %v489 = vadd.f32 %v392, %v488
  %v490 = vpop.f32.mrf.mxu0
  %491 = vmatprep.mubr.bf16.mxu0 0
  %492 = vmatmul.mubr.bf16.gmra.mxu0 %v329
  %v493 = vpop.f32.mrf.mxu0
  %v494 = vadd.f32 %v397, %v493
  %v495 = vpop.f32.mrf.mxu0
  %v496 = vpop.f32.mrf.mxu0
  %v497 = vadd.f32 %v400, %v496
  %v498 = vpop.f32.mrf.mxu0
  %499 = vmatprep.mubr.bf16.mxu0 0
  %500 = vmatmul.mubr.bf16.gmra.mxu0 %v332
  %v501 = vpop.f32.mrf.mxu0
  %v502 = vadd.f32 %v405, %v501
  %v503 = vpop.f32.mrf.mxu0
  %v504 = vpop.f32.mrf.mxu0
  %v505 = vadd.f32 %v408, %v504
  %v506 = vpop.f32.mrf.mxu0
  %507 = vmatprep.mubr.bf16.mxu0 0
  %508 = vmatmul.mubr.bf16.gmra.mxu0 %v335
  %v509 = vpop.f32.mrf.mxu0
  %v510 = vadd.f32 %v413, %v509
  %v511 = vpop.f32.mrf.mxu0
  %v512 = vpop.f32.mrf.mxu0
  %v513 = vadd.f32 %v416, %v512
  %v514 = vpop.f32.mrf.mxu0
  %515 = vmatprep.mubr.bf16.mxu0 0
  %516 = vmatmul.mubr.bf16.gmra.mxu0 %v338
  %v517 = vpop.f32.mrf.mxu0
  %v518 = vadd.f32 %v421, %v517
  %v519 = vpop.f32.mrf.mxu0
  %v520 = vpop.f32.mrf.mxu0
  %v521 = vadd.f32 %v424, %v520
  %v522 = vpop.f32.mrf.mxu0
  %523 = vmatprep.mubr.bf16.mxu0 0
  %524 = vmatmul.mubr.bf16.gmra.mxu0 %v341
  %v525 = vpop.f32.mrf.mxu0
  %v526 = vadd.f32 %v429, %v525
  %v527 = vpop.f32.mrf.mxu0
  %v528 = vpop.f32.mrf.mxu0
  %v529 = vadd.f32 %v432, %v528
  %v530 = vpop.f32.mrf.mxu0
  %531 = vmatprep.mubr.bf16.mxu0 0
  %532 = vmatmul.mubr.bf16.gmra.mxu0 %v344
  %v533 = vpop.f32.mrf.mxu0
  %v534 = vadd.f32 %v437, %v533
  %v535 = vpop.f32.mrf.mxu0
  %v536 = vpop.f32.mrf.mxu0
  %v537 = vadd.f32 %v440, %v536
  %v538 = vpop.f32.mrf.mxu0
  %539 = vdwg.mxu0
  %v540 = vld [vmem:[%s3] sm:$0x1]
  %v542 = vlaneseq
  %v543 = vshrl.u32 %v542, 7
  %v544 = vsub.s32 0, %v543
  %v545 = vrot.slane %v540, %v544
  %v547 = vmax.f32 %v478, %v545
  %v548 = vmax.f32 %v481, %v545
  %v549 = vmax.f32 %v486, %v545
  %v550 = vmax.f32 %v489, %v545
  %v551 = vmax.f32 %v494, %v545
  %v552 = vmax.f32 %v497, %v545
  %v553 = vmax.f32 %v502, %v545
  %v554 = vmax.f32 %v505, %v545
  %v555 = vmax.f32 %v510, %v545
  %v556 = vmax.f32 %v513, %v545
  %v557 = vmax.f32 %v518, %v545
  %v558 = vmax.f32 %v521, %v545
  %v559 = vmax.f32 %v526, %v545
  %v560 = vmax.f32 %v529, %v545
  %v561 = vmax.f32 %v534, %v545
  %v562 = vmax.f32 %v537, %v545
  %563 = vst [vmem:[%s4] sm:$0xff] %v547
  %564 = vst [vmem:[%s4 + $0x8] sm:$0xff] %v548
  %565 = vst [vmem:[%s4 + $0x10] sm:$0xff] %v549
  %566 = vst [vmem:[%s4 + $0x18] sm:$0xff] %v550
  %567 = vst [vmem:[%s4 + $0x20] sm:$0xff] %v551
  %568 = vst [vmem:[%s4 + $0x28] sm:$0xff] %v552
  %569 = vst [vmem:[%s4 + $0x30] sm:$0xff] %v553
  %570 = vst [vmem:[%s4 + $0x38] sm:$0xff] %v554
  %571 = vst [vmem:[%s4 + $0x40] sm:$0xff] %v555
  %572 = vst [vmem:[%s4 + $0x48] sm:$0xff] %v556
  %573 = vst [vmem:[%s4 + $0x50] sm:$0xff] %v557
  %574 = vst [vmem:[%s4 + $0x58] sm:$0xff] %v558
  %575 = vst [vmem:[%s4 + $0x60] sm:$0xff] %v559
  %576 = vst [vmem:[%s4 + $0x68] sm:$0xff] %v560
  %577 = vst [vmem:[%s4 + $0x70] sm:$0xff] %v561
  %578 = vst [vmem:[%s4 + $0x78] sm:$0xff] %v562
  // Predicated region
  $region18: #{traj_predictor_forward.18} parent=0 // pred_check
    _
  $region19: #{traj_predictor_forward.18} parent=0 // pred_check_branch
    %580 = sbr.rel (0) target = $region21
  $region20: #{traj_predictor_forward.18} parent=0 // pred_region
    _
  $region21: #{traj_predictor_forward.18} parent=0 // pred_fallthru
    _
  // Predicated region
  $region22: #{traj_predictor_forward.18} parent=0 // pred_check
    _
  $region23: #{traj_predictor_forward.18} parent=0 // pred_check_branch
    %582 = sbr.rel (0) target = $region25
  $region24: #{traj_predictor_forward.18} parent=0 // pred_region
    _
  $region25: #{traj_predictor_forward.18} parent=0 // pred_fallthru
    _

// kernel: traj_predictor_forward.19
$region0: #{traj_predictor_forward.19}
  #allocation0 [shape = 'u32[]', space=smem, size = 0x4, offset = 0x4, fixed_abs, tag = 'smem constant byte address 0x4 - core index']
  #allocation1 [shape = 'u32[144,128]{1,0:T(1,128)}', space=vmem, size = 0x12000, scoped, tag = 'internal scratch']
  %s0 = inlined_call_operand.vmem [shape: bf16[32,512], index: 0, kind: input, shape index: {}]
  %s1 = inlined_call_operand.vmem [shape: bf16[512,128], index: 1, kind: input, shape index: {}]
  %s2 = inlined_call_operand.vmem [shape: f32[1,128], index: 2, kind: input, shape index: {}]
  %s3 = inlined_call_operand.vmem [shape: f32[1,128], index: 3, kind: input, shape index: {}]
  %s4 = inlined_call_operand.vmem [shape: f32[32,128], index: 4, kind: output, shape index: {}]
  %s5 = sld [smem:[#allocation0]]
  $region26: #{traj_predictor_forward.19} parent=0
    _
  %s7 = ssub.s32 1, %s5
  %s8 = scalar_select 0, %s7, %s5
  // Predicated region
  $region2: #{traj_predictor_forward.19} parent=0 // pred_check
    _
  $region3: #{traj_predictor_forward.19} parent=0 // pred_check_branch
    %10 = sbr.rel (0) target = $region5
  $region4: #{traj_predictor_forward.19} parent=0 // pred_region
    _
  $region5: #{traj_predictor_forward.19} parent=0 // pred_fallthru
    _
  // Predicated region
  $region6: #{traj_predictor_forward.19} parent=0 // pred_check
    _
  $region7: #{traj_predictor_forward.19} parent=0 // pred_check_branch
    %12 = sbr.rel (0) target = $region9
  $region8: #{traj_predictor_forward.19} parent=0 // pred_region
    _
  $region9: #{traj_predictor_forward.19} parent=0 // pred_fallthru
    _
  // Predicated region
  $region10: #{traj_predictor_forward.19} parent=0 // pred_check
    _
  $region11: #{traj_predictor_forward.19} parent=0 // pred_check_branch
    %14 = sbr.rel (0) target = $region13
  $region12: #{traj_predictor_forward.19} parent=0 // pred_region
    _
  $region13: #{traj_predictor_forward.19} parent=0 // pred_fallthru
    _
  // Predicated region
  $region14: #{traj_predictor_forward.19} parent=0 // pred_check
    _
  $region15: #{traj_predictor_forward.19} parent=0 // pred_check_branch
    %16 = sbr.rel (0) target = $region17
  $region16: #{traj_predictor_forward.19} parent=0 // pred_region
    _
  $region17: #{traj_predictor_forward.19} parent=0 // pred_fallthru
    _
  %v18 = vld [vmem:[%s0] sm:$0xff]
  %v19 = vld [vmem:[%s0 + $0x8] sm:$0xff]
  %v20 = vld [vmem:[%s0 + $0x10] sm:$0xff]
  %v21 = vld [vmem:[%s0 + $0x18] sm:$0xff]
  %v22 = vld [vmem:[%s0 + $0x20] sm:$0xff]
  %v23 = vld [vmem:[%s0 + $0x28] sm:$0xff]
  %v24 = vld [vmem:[%s0 + $0x30] sm:$0xff]
  %v25 = vld [vmem:[%s0 + $0x38] sm:$0xff]
  %v26 = vld [vmem:[%s1] sm:$0xf]
  %v27 = vld [vmem:[%s1 + $0x4] sm:$0xf]
  %v28 = vld [vmem:[%s1 + $0x8] sm:$0xf]
  %v29 = vld [vmem:[%s1 + $0xc] sm:$0xf]
  %v30 = vld [vmem:[%s1 + $0x10] sm:$0xf]
  %v31 = vld [vmem:[%s1 + $0x14] sm:$0xf]
  %v32 = vld [vmem:[%s1 + $0x18] sm:$0xf]
  %v33 = vld [vmem:[%s1 + $0x1c] sm:$0xf]
  %v34 = vld [vmem:[%s1 + $0x20] sm:$0xf]
  %v35 = vld [vmem:[%s1 + $0x24] sm:$0xf]
  %v36 = vld [vmem:[%s1 + $0x28] sm:$0xf]
  %v37 = vld [vmem:[%s1 + $0x2c] sm:$0xf]
  %v38 = vld [vmem:[%s1 + $0x30] sm:$0xf]
  %v39 = vld [vmem:[%s1 + $0x34] sm:$0xf]
  %v40 = vld [vmem:[%s1 + $0x38] sm:$0xf]
  %v41 = vld [vmem:[%s1 + $0x3c] sm:$0xf]
  %v42 = vld [vmem:[%s1 + $0x40] sm:$0xf]
  %v43 = vld [vmem:[%s1 + $0x44] sm:$0xf]
  %v44 = vld [vmem:[%s1 + $0x48] sm:$0xf]
  %v45 = vld [vmem:[%s1 + $0x4c] sm:$0xf]
  %v46 = vld [vmem:[%s1 + $0x50] sm:$0xf]
  %v47 = vld [vmem:[%s1 + $0x54] sm:$0xf]
  %v48 = vld [vmem:[%s1 + $0x58] sm:$0xf]
  %v49 = vld [vmem:[%s1 + $0x5c] sm:$0xf]
  %v50 = vld [vmem:[%s1 + $0x60] sm:$0xf]
  %v51 = vld [vmem:[%s1 + $0x64] sm:$0xf]
  %v52 = vld [vmem:[%s1 + $0x68] sm:$0xf]
  %v53 = vld [vmem:[%s1 + $0x6c] sm:$0xf]
  %v54 = vld [vmem:[%s1 + $0x70] sm:$0xf]
  %v55 = vld [vmem:[%s1 + $0x74] sm:$0xf]
  %v56 = vld [vmem:[%s1 + $0x78] sm:$0xf]
  %v57 = vld [vmem:[%s1 + $0x7c] sm:$0xf]
  %v58 = vld [vmem:[%s1 + $0x80] sm:$0xf]
  %v59 = vld [vmem:[%s1 + $0x84] sm:$0xf]
  %v60 = vld [vmem:[%s1 + $0x88] sm:$0xf]
  %v61 = vld [vmem:[%s1 + $0x8c] sm:$0xf]
  %v62 = vld [vmem:[%s1 + $0x90] sm:$0xf]
  %v63 = vld [vmem:[%s1 + $0x94] sm:$0xf]
  %v64 = vld [vmem:[%s1 + $0x98] sm:$0xf]
  %v65 = vld [vmem:[%s1 + $0x9c] sm:$0xf]
  %v66 = vld [vmem:[%s1 + $0xa0] sm:$0xf]
  %v67 = vld [vmem:[%s1 + $0xa4] sm:$0xf]
  %v68 = vld [vmem:[%s1 + $0xa8] sm:$0xf]
  %v69 = vld [vmem:[%s1 + $0xac] sm:$0xf]
  %v70 = vld [vmem:[%s1 + $0xb0] sm:$0xf]
  %v71 = vld [vmem:[%s1 + $0xb4] sm:$0xf]
  %v72 = vld [vmem:[%s1 + $0xb8] sm:$0xf]
  %v73 = vld [vmem:[%s1 + $0xbc] sm:$0xf]
  %v74 = vld [vmem:[%s1 + $0xc0] sm:$0xf]
  %v75 = vld [vmem:[%s1 + $0xc4] sm:$0xf]
  %v76 = vld [vmem:[%s1 + $0xc8] sm:$0xf]
  %v77 = vld [vmem:[%s1 + $0xcc] sm:$0xf]
  %v78 = vld [vmem:[%s1 + $0xd0] sm:$0xf]
  %v79 = vld [vmem:[%s1 + $0xd4] sm:$0xf]
  %v80 = vld [vmem:[%s1 + $0xd8] sm:$0xf]
  %v81 = vld [vmem:[%s1 + $0xdc] sm:$0xf]
  %v82 = vld [vmem:[%s1 + $0xe0] sm:$0xf]
  %v83 = vld [vmem:[%s1 + $0xe4] sm:$0xf]
  %v84 = vld [vmem:[%s1 + $0xe8] sm:$0xf]
  %v85 = vld [vmem:[%s1 + $0xec] sm:$0xf]
  %v86 = vld [vmem:[%s1 + $0xf0] sm:$0xf]
  %v87 = vld [vmem:[%s1 + $0xf4] sm:$0xf]
  %v88 = vld [vmem:[%s1 + $0xf8] sm:$0xf]
  %v89 = vld [vmem:[%s1 + $0xfc] sm:$0xf]
  %v90 = vld [vmem:[%s2] sm:$0x1]
  %v92 = vlaneseq
  %v93 = vshrl.u32 %v92, 7
  %v94 = vsub.s32 0, %v93
  %v95 = vrot.slane %v90, %v94
  %v105 = vunpack.c.l.b16 %v18
  %v106 = vunpack.c.h.b16 %v18
  %v107 = vunpack.c.l.b16 %v19
  %v108 = vunpack.c.h.b16 %v19
  %v109 = vunpack.c.l.b16 %v20
  %v110 = vunpack.c.h.b16 %v20
  %v111 = vunpack.c.l.b16 %v21
  %v112 = vunpack.c.h.b16 %v21
  %v113 = vunpack.c.l.b16 %v22
  %v114 = vunpack.c.h.b16 %v22
  %v115 = vunpack.c.l.b16 %v23
  %v116 = vunpack.c.h.b16 %v23
  %v117 = vunpack.c.l.b16 %v24
  %v118 = vunpack.c.h.b16 %v24
  %v119 = vunpack.c.l.b16 %v25
  %v120 = vunpack.c.h.b16 %v25
  %v121 = vpack.c.b16 %v109, %v105
  %v122 = vpack.c.b16 %v110, %v106
  %v123 = vpack.c.b16 %v111, %v107
  %v124 = vpack.c.b16 %v112, %v108
  %v125 = vpack.c.b16 %v117, %v113
  %v126 = vpack.c.b16 %v118, %v114
  %v127 = vpack.c.b16 %v119, %v115
  %v128 = vpack.c.b16 %v120, %v116
  %v201 = vunpack.c.l.b16 %v26
  %v202 = vunpack.c.l.b16 %v27
  %v203 = vunpack.c.l.b16 %v28
  %v204 = vunpack.c.l.b16 %v29
  %v205 = vunpack.c.l.b16 %v30
  %v206 = vunpack.c.l.b16 %v31
  %v207 = vunpack.c.l.b16 %v32
  %v208 = vunpack.c.l.b16 %v33
  %v209 = vunpack.c.l.b16 %v34
  %v210 = vunpack.c.l.b16 %v35
  %v211 = vunpack.c.l.b16 %v36
  %v212 = vunpack.c.l.b16 %v37
  %v213 = vunpack.c.l.b16 %v38
  %v214 = vunpack.c.l.b16 %v39
  %v215 = vunpack.c.l.b16 %v40
  %v216 = vunpack.c.l.b16 %v41
  %v217 = vunpack.c.l.b16 %v42
  %v218 = vunpack.c.l.b16 %v43
  %v219 = vunpack.c.l.b16 %v44
  %v220 = vunpack.c.l.b16 %v45
  %v221 = vunpack.c.l.b16 %v46
  %v222 = vunpack.c.l.b16 %v47
  %v223 = vunpack.c.l.b16 %v48
  %v224 = vunpack.c.l.b16 %v49
  %v225 = vunpack.c.l.b16 %v50
  %v226 = vunpack.c.l.b16 %v51
  %v227 = vunpack.c.l.b16 %v52
  %v228 = vunpack.c.l.b16 %v53
  %v229 = vunpack.c.l.b16 %v54
  %v230 = vunpack.c.l.b16 %v55
  %v231 = vunpack.c.l.b16 %v56
  %v232 = vunpack.c.l.b16 %v57
  %v233 = vunpack.c.l.b16 %v58
  %v234 = vunpack.c.l.b16 %v59
  %v235 = vunpack.c.l.b16 %v60
  %v236 = vunpack.c.l.b16 %v61
  %v237 = vunpack.c.l.b16 %v62
  %v238 = vunpack.c.l.b16 %v63
  %v239 = vunpack.c.l.b16 %v64
  %v240 = vunpack.c.l.b16 %v65
  %v241 = vunpack.c.l.b16 %v66
  %v242 = vunpack.c.l.b16 %v67
  %v243 = vunpack.c.l.b16 %v68
  %v244 = vunpack.c.l.b16 %v69
  %v245 = vunpack.c.l.b16 %v70
  %v246 = vunpack.c.l.b16 %v71
  %v247 = vunpack.c.l.b16 %v72
  %v248 = vunpack.c.l.b16 %v73
  %v249 = vunpack.c.l.b16 %v74
  %v250 = vunpack.c.l.b16 %v75
  %v251 = vunpack.c.l.b16 %v76
  %v252 = vunpack.c.l.b16 %v77
  %v253 = vunpack.c.l.b16 %v78
  %v254 = vunpack.c.l.b16 %v79
  %v255 = vunpack.c.l.b16 %v80
  %v256 = vunpack.c.l.b16 %v81
  %v257 = vunpack.c.l.b16 %v82
  %v258 = vunpack.c.l.b16 %v83
  %v259 = vunpack.c.l.b16 %v84
  %v260 = vunpack.c.l.b16 %v85
  %v261 = vunpack.c.l.b16 %v86
  %v262 = vunpack.c.l.b16 %v87
  %v263 = vunpack.c.l.b16 %v88
  %v264 = vunpack.c.l.b16 %v89
  %v265 = vpack.c.b16 %v202, %v201
  %v266 = vpack.c.b16 %v204, %v203
  %v267 = vpack.c.b16 %v206, %v205
  %v268 = vpack.c.b16 %v208, %v207
  %v269 = vpack.c.b16 %v210, %v209
  %v270 = vpack.c.b16 %v212, %v211
  %v271 = vpack.c.b16 %v214, %v213
  %v272 = vpack.c.b16 %v216, %v215
  %v273 = vpack.c.b16 %v218, %v217
  %v274 = vpack.c.b16 %v220, %v219
  %v275 = vpack.c.b16 %v222, %v221
  %v276 = vpack.c.b16 %v224, %v223
  %v277 = vpack.c.b16 %v226, %v225
  %v278 = vpack.c.b16 %v228, %v227
  %v279 = vpack.c.b16 %v230, %v229
  %v280 = vpack.c.b16 %v232, %v231
  %v281 = vpack.c.b16 %v234, %v233
  %v282 = vpack.c.b16 %v236, %v235
  %v283 = vpack.c.b16 %v238, %v237
  %v284 = vpack.c.b16 %v240, %v239
  %v285 = vpack.c.b16 %v242, %v241
  %v286 = vpack.c.b16 %v244, %v243
  %v287 = vpack.c.b16 %v246, %v245
  %v288 = vpack.c.b16 %v248, %v247
  %v289 = vpack.c.b16 %v250, %v249
  %v290 = vpack.c.b16 %v252, %v251
  %v291 = vpack.c.b16 %v254, %v253
  %v292 = vpack.c.b16 %v256, %v255
  %v293 = vpack.c.b16 %v258, %v257
  %v294 = vpack.c.b16 %v260, %v259
  %v295 = vpack.c.b16 %v262, %v261
  %v296 = vpack.c.b16 %v264, %v263
  %329 = vmatprep.subr.bf16.mxu0 0
  %330 = vmatpush1.bf16.msra.mxu0 %v272
  %331 = vmatprep.subr.bf16.mxu0 0
  %332 = vmatpush1.bf16.msra.mxu0 %v271
  %333 = vmatprep.subr.bf16.mxu0 0
  %334 = vmatpush1.bf16.msra.mxu0 %v270
  %335 = vmatprep.subr.bf16.mxu0 0
  %336 = vmatpush1.bf16.msra.mxu0 %v269
  %337 = vmatprep.subr.bf16.mxu0 0
  %338 = vmatpush1.bf16.msra.mxu0 %v268
  %339 = vmatprep.subr.bf16.mxu0 0
  %340 = vmatpush1.bf16.msra.mxu0 %v267
  %341 = vmatprep.subr.bf16.mxu0 0
  %342 = vmatpush1.bf16.msra.mxu0 %v266
  %343 = vmatprep.subr.bf16.mxu0 0
  %344 = vmatpush1.bf16.msra.mxu0 %v265
  %345 = vmatprep.subr.bf16.mxu0 0
  %346 = vmatpush2.bf16.msra.mxu0 %v280
  %347 = vmatprep.subr.bf16.mxu0 0
  %348 = vmatpush2.bf16.msra.mxu0 %v279
  %349 = vmatprep.subr.bf16.mxu0 0
  %350 = vmatpush2.bf16.msra.mxu0 %v278
  %351 = vmatprep.subr.bf16.mxu0 0
  %352 = vmatpush2.bf16.msra.mxu0 %v277
  %353 = vmatprep.subr.bf16.mxu0 0
  %354 = vmatpush2.bf16.msra.mxu0 %v276
  %355 = vmatprep.subr.bf16.mxu0 0
  %356 = vmatpush2.bf16.msra.mxu0 %v275
  %357 = vmatprep.subr.bf16.mxu0 0
  %358 = vmatpush2.bf16.msra.mxu0 %v274
  %359 = vmatprep.subr.bf16.mxu0 0
  %360 = vmatpush2.bf16.msra.mxu0 %v273
  %361 = vmatprep.mubr.bf16.mxu0 %v122
  %362 = vmatmul.mubr.bf16.gmra.mxu0 %v121
  %v363 = vpop.f32.mrf.mxu0
  %v364 = vadd.f32 %v95, %v363
  %v365 = vpop.f32.mrf.mxu0
  %v366 = vpop.f32.mrf.mxu0
  %v367 = vadd.f32 %v95, %v366
  %v368 = vpop.f32.mrf.mxu0
  %369 = vmatprep.mubr.bf16.mxu0 %v126
  %370 = vmatmul.mubr.bf16.gmra.mxu0 %v125
  %v371 = vpop.f32.mrf.mxu0
  %v372 = vadd.f32 %v95, %v371
  %v373 = vpop.f32.mrf.mxu0
  %v374 = vpop.f32.mrf.mxu0
  %v375 = vadd.f32 %v95, %v374
  %v376 = vpop.f32.mrf.mxu0
  %377 = vdwg.mxu0
  %378 = vmatprep.subr.bf16.mxu0 0
  %379 = vmatpush1.bf16.msra.mxu0 %v288
  %380 = vmatprep.subr.bf16.mxu0 0
  %381 = vmatpush1.bf16.msra.mxu0 %v287
  %382 = vmatprep.subr.bf16.mxu0 0
  %383 = vmatpush1.bf16.msra.mxu0 %v286
  %384 = vmatprep.subr.bf16.mxu0 0
  %385 = vmatpush1.bf16.msra.mxu0 %v285
  %386 = vmatprep.subr.bf16.mxu0 0
  %387 = vmatpush1.bf16.msra.mxu0 %v284
  %388 = vmatprep.subr.bf16.mxu0 0
  %389 = vmatpush1.bf16.msra.mxu0 %v283
  %390 = vmatprep.subr.bf16.mxu0 0
  %391 = vmatpush1.bf16.msra.mxu0 %v282
  %392 = vmatprep.subr.bf16.mxu0 0
  %393 = vmatpush1.bf16.msra.mxu0 %v281
  %394 = vmatprep.subr.bf16.mxu0 0
  %395 = vmatpush2.bf16.msra.mxu0 %v296
  %396 = vmatprep.subr.bf16.mxu0 0
  %397 = vmatpush2.bf16.msra.mxu0 %v295
  %398 = vmatprep.subr.bf16.mxu0 0
  %399 = vmatpush2.bf16.msra.mxu0 %v294
  %400 = vmatprep.subr.bf16.mxu0 0
  %401 = vmatpush2.bf16.msra.mxu0 %v293
  %402 = vmatprep.subr.bf16.mxu0 0
  %403 = vmatpush2.bf16.msra.mxu0 %v292
  %404 = vmatprep.subr.bf16.mxu0 0
  %405 = vmatpush2.bf16.msra.mxu0 %v291
  %406 = vmatprep.subr.bf16.mxu0 0
  %407 = vmatpush2.bf16.msra.mxu0 %v290
  %408 = vmatprep.subr.bf16.mxu0 0
  %409 = vmatpush2.bf16.msra.mxu0 %v289
  %410 = vmatprep.mubr.bf16.mxu0 %v124
  %411 = vmatmul.mubr.bf16.gmra.mxu0 %v123
  %v412 = vpop.f32.mrf.mxu0
  %v413 = vadd.f32 %v364, %v412
  %v414 = vpop.f32.mrf.mxu0
  %v415 = vpop.f32.mrf.mxu0
  %v416 = vadd.f32 %v367, %v415
  %v417 = vpop.f32.mrf.mxu0
  %418 = vmatprep.mubr.bf16.mxu0 %v128
  %419 = vmatmul.mubr.bf16.gmra.mxu0 %v127
  %v420 = vpop.f32.mrf.mxu0
  %v421 = vadd.f32 %v372, %v420
  %v422 = vpop.f32.mrf.mxu0
  %v423 = vpop.f32.mrf.mxu0
  %v424 = vadd.f32 %v375, %v423
  %v425 = vpop.f32.mrf.mxu0
  %426 = vdwg.mxu0
  %v427 = vld [vmem:[%s3] sm:$0x1]
  %v429 = vlaneseq
  %v430 = vshrl.u32 %v429, 7
  %v431 = vsub.s32 0, %v430
  %v432 = vrot.slane %v427, %v431
  %v434 = vmax.f32 %v413, %v432
  %v435 = vmax.f32 %v416, %v432
  %v436 = vmax.f32 %v421, %v432
  %v437 = vmax.f32 %v424, %v432
  %438 = vst [vmem:[%s4] sm:$0xff] %v434
  %439 = vst [vmem:[%s4 + $0x8] sm:$0xff] %v435
  %440 = vst [vmem:[%s4 + $0x10] sm:$0xff] %v436
  %441 = vst [vmem:[%s4 + $0x18] sm:$0xff] %v437
  // Predicated region
  $region18: #{traj_predictor_forward.19} parent=0 // pred_check
    _
  $region19: #{traj_predictor_forward.19} parent=0 // pred_check_branch
    %443 = sbr.rel (0) target = $region21
  $region20: #{traj_predictor_forward.19} parent=0 // pred_region
    _
  $region21: #{traj_predictor_forward.19} parent=0 // pred_fallthru
    _
  // Predicated region
  $region22: #{traj_predictor_forward.19} parent=0 // pred_check
    _
  $region23: #{traj_predictor_forward.19} parent=0 // pred_check_branch
    %445 = sbr.rel (0) target = $region25
  $region24: #{traj_predictor_forward.19} parent=0 // pred_region
    _
  $region25: #{traj_predictor_forward.19} parent=0 // pred_fallthru
    _

// kernel: traj_predictor_forward.20
$region0: #{traj_predictor_forward.20}
  #allocation0 [shape = 'u32[]', space=smem, size = 0x4, offset = 0x4, fixed_abs, tag = 'smem constant byte address 0x4 - core index']
  #allocation1 [shape = 'u32[144,128]{1,0:T(1,128)}', space=vmem, size = 0x12000, scoped, tag = 'internal scratch']
  %s0 = inlined_call_operand.vmem [shape: bf16[32,576], index: 0, kind: input, shape index: {}]
  %s1 = inlined_call_operand.vmem [shape: bf16[576,128], index: 1, kind: input, shape index: {}]
  %s2 = inlined_call_operand.vmem [shape: f32[1,128], index: 2, kind: input, shape index: {}]
  %s3 = inlined_call_operand.vmem [shape: f32[1,128], index: 3, kind: input, shape index: {}]
  %s4 = inlined_call_operand.vmem [shape: f32[32,128], index: 4, kind: output, shape index: {}]
  %s5 = sld [smem:[#allocation0]]
  $region26: #{traj_predictor_forward.20} parent=0
    _
  %s7 = ssub.s32 1, %s5
  %s8 = scalar_select 0, %s7, %s5
  // Predicated region
  $region2: #{traj_predictor_forward.20} parent=0 // pred_check
    _
  $region3: #{traj_predictor_forward.20} parent=0 // pred_check_branch
    %10 = sbr.rel (0) target = $region5
  $region4: #{traj_predictor_forward.20} parent=0 // pred_region
    _
  $region5: #{traj_predictor_forward.20} parent=0 // pred_fallthru
    _
  // Predicated region
  $region6: #{traj_predictor_forward.20} parent=0 // pred_check
    _
  $region7: #{traj_predictor_forward.20} parent=0 // pred_check_branch
    %12 = sbr.rel (0) target = $region9
  $region8: #{traj_predictor_forward.20} parent=0 // pred_region
    _
  $region9: #{traj_predictor_forward.20} parent=0 // pred_fallthru
    _
  // Predicated region
  $region10: #{traj_predictor_forward.20} parent=0 // pred_check
    _
  $region11: #{traj_predictor_forward.20} parent=0 // pred_check_branch
    %14 = sbr.rel (0) target = $region13
  $region12: #{traj_predictor_forward.20} parent=0 // pred_region
    _
  $region13: #{traj_predictor_forward.20} parent=0 // pred_fallthru
    _
  // Predicated region
  $region14: #{traj_predictor_forward.20} parent=0 // pred_check
    _
  $region15: #{traj_predictor_forward.20} parent=0 // pred_check_branch
    %16 = sbr.rel (0) target = $region17
  $region16: #{traj_predictor_forward.20} parent=0 // pred_region
    _
  $region17: #{traj_predictor_forward.20} parent=0 // pred_fallthru
    _
  %v18 = vld [vmem:[%s0] sm:$0xff]
  %v19 = vld [vmem:[%s0 + $0x8] sm:$0xff]
  %v20 = vld [vmem:[%s0 + $0x10] sm:$0xf]
  %v21 = vld [vmem:[%s0 + $0x14] sm:$0xff]
  %v22 = vld [vmem:[%s0 + $0x1c] sm:$0xff]
  %v23 = vld [vmem:[%s0 + $0x24] sm:$0xf]
  %v24 = vld [vmem:[%s0 + $0x28] sm:$0xff]
  %v25 = vld [vmem:[%s0 + $0x30] sm:$0xff]
  %v26 = vld [vmem:[%s0 + $0x38] sm:$0xf]
  %v27 = vld [vmem:[%s0 + $0x3c] sm:$0xff]
  %v28 = vld [vmem:[%s0 + $0x44] sm:$0xff]
  %v29 = vld [vmem:[%s0 + $0x4c] sm:$0xf]
  %v30 = vld [vmem:[%s1] sm:$0xf]
  %v31 = vld [vmem:[%s1 + $0x4] sm:$0xf]
  %v32 = vld [vmem:[%s1 + $0x8] sm:$0xf]
  %v33 = vld [vmem:[%s1 + $0xc] sm:$0xf]
  %v34 = vld [vmem:[%s1 + $0x10] sm:$0xf]
  %v35 = vld [vmem:[%s1 + $0x14] sm:$0xf]
  %v36 = vld [vmem:[%s1 + $0x18] sm:$0xf]
  %v37 = vld [vmem:[%s1 + $0x1c] sm:$0xf]
  %v38 = vld [vmem:[%s1 + $0x20] sm:$0xf]
  %v39 = vld [vmem:[%s1 + $0x24] sm:$0xf]
  %v40 = vld [vmem:[%s1 + $0x28] sm:$0xf]
  %v41 = vld [vmem:[%s1 + $0x2c] sm:$0xf]
  %v42 = vld [vmem:[%s1 + $0x30] sm:$0xf]
  %v43 = vld [vmem:[%s1 + $0x34] sm:$0xf]
  %v44 = vld [vmem:[%s1 + $0x38] sm:$0xf]
  %v45 = vld [vmem:[%s1 + $0x3c] sm:$0xf]
  %v46 = vld [vmem:[%s1 + $0x40] sm:$0xf]
  %v47 = vld [vmem:[%s1 + $0x44] sm:$0xf]
  %v48 = vld [vmem:[%s1 + $0x48] sm:$0xf]
  %v49 = vld [vmem:[%s1 + $0x4c] sm:$0xf]
  %v50 = vld [vmem:[%s1 + $0x50] sm:$0xf]
  %v51 = vld [vmem:[%s1 + $0x54] sm:$0xf]
  %v52 = vld [vmem:[%s1 + $0x58] sm:$0xf]
  %v53 = vld [vmem:[%s1 + $0x5c] sm:$0xf]
  %v54 = vld [vmem:[%s1 + $0x60] sm:$0xf]
  %v55 = vld [vmem:[%s1 + $0x64] sm:$0xf]
  %v56 = vld [vmem:[%s1 + $0x68] sm:$0xf]
  %v57 = vld [vmem:[%s1 + $0x6c] sm:$0xf]
  %v58 = vld [vmem:[%s1 + $0x70] sm:$0xf]
  %v59 = vld [vmem:[%s1 + $0x74] sm:$0xf]
  %v60 = vld [vmem:[%s1 + $0x78] sm:$0xf]
  %v61 = vld [vmem:[%s1 + $0x7c] sm:$0xf]
  %v62 = vld [vmem:[%s1 + $0x80] sm:$0xf]
  %v63 = vld [vmem:[%s1 + $0x84] sm:$0xf]
  %v64 = vld [vmem:[%s1 + $0x88] sm:$0xf]
  %v65 = vld [vmem:[%s1 + $0x8c] sm:$0xf]
  %v66 = vld [vmem:[%s1 + $0x90] sm:$0xf]
  %v67 = vld [vmem:[%s1 + $0x94] sm:$0xf]
  %v68 = vld [vmem:[%s1 + $0x98] sm:$0xf]
  %v69 = vld [vmem:[%s1 + $0x9c] sm:$0xf]
  %v70 = vld [vmem:[%s1 + $0xa0] sm:$0xf]
  %v71 = vld [vmem:[%s1 + $0xa4] sm:$0xf]
  %v72 = vld [vmem:[%s1 + $0xa8] sm:$0xf]
  %v73 = vld [vmem:[%s1 + $0xac] sm:$0xf]
  %v74 = vld [vmem:[%s1 + $0xb0] sm:$0xf]
  %v75 = vld [vmem:[%s1 + $0xb4] sm:$0xf]
  %v76 = vld [vmem:[%s1 + $0xb8] sm:$0xf]
  %v77 = vld [vmem:[%s1 + $0xbc] sm:$0xf]
  %v78 = vld [vmem:[%s1 + $0xc0] sm:$0xf]
  %v79 = vld [vmem:[%s1 + $0xc4] sm:$0xf]
  %v80 = vld [vmem:[%s1 + $0xc8] sm:$0xf]
  %v81 = vld [vmem:[%s1 + $0xcc] sm:$0xf]
  %v82 = vld [vmem:[%s1 + $0xd0] sm:$0xf]
  %v83 = vld [vmem:[%s1 + $0xd4] sm:$0xf]
  %v84 = vld [vmem:[%s1 + $0xd8] sm:$0xf]
  %v85 = vld [vmem:[%s1 + $0xdc] sm:$0xf]
  %v86 = vld [vmem:[%s1 + $0xe0] sm:$0xf]
  %v87 = vld [vmem:[%s1 + $0xe4] sm:$0xf]
  %v88 = vld [vmem:[%s1 + $0xe8] sm:$0xf]
  %v89 = vld [vmem:[%s1 + $0xec] sm:$0xf]
  %v90 = vld [vmem:[%s1 + $0xf0] sm:$0xf]
  %v91 = vld [vmem:[%s1 + $0xf4] sm:$0xf]
  %v92 = vld [vmem:[%s1 + $0xf8] sm:$0xf]
  %v93 = vld [vmem:[%s1 + $0xfc] sm:$0xf]
  %v94 = vld [vmem:[%s1 + $0x100] sm:$0xf]
  %v95 = vld [vmem:[%s1 + $0x104] sm:$0xf]
  %v96 = vld [vmem:[%s1 + $0x108] sm:$0xf]
  %v97 = vld [vmem:[%s1 + $0x10c] sm:$0xf]
  %v98 = vld [vmem:[%s1 + $0x110] sm:$0xf]
  %v99 = vld [vmem:[%s1 + $0x114] sm:$0xf]
  %v100 = vld [vmem:[%s1 + $0x118] sm:$0xf]
  %v101 = vld [vmem:[%s1 + $0x11c] sm:$0xf]
  %v102 = vld [vmem:[%s2] sm:$0x1]
  %v104 = vlaneseq
  %v105 = vshrl.u32 %v104, 7
  %v106 = vsub.s32 0, %v105
  %v107 = vrot.slane %v102, %v106
  %v121 = vunpack.c.l.b16 %v18
  %v122 = vunpack.c.h.b16 %v18
  %v123 = vunpack.c.l.b16 %v19
  %v124 = vunpack.c.h.b16 %v19
  %v125 = vunpack.c.l.b16 %v20
  %v126 = vunpack.c.l.b16 %v21
  %v127 = vunpack.c.h.b16 %v21
  %v128 = vunpack.c.l.b16 %v22
  %v129 = vunpack.c.h.b16 %v22
  %v130 = vunpack.c.l.b16 %v23
  %v131 = vunpack.c.l.b16 %v24
  %v132 = vunpack.c.h.b16 %v24
  %v133 = vunpack.c.l.b16 %v25
  %v134 = vunpack.c.h.b16 %v25
  %v135 = vunpack.c.l.b16 %v26
  %v136 = vunpack.c.l.b16 %v27
  %v137 = vunpack.c.h.b16 %v27
  %v138 = vunpack.c.l.b16 %v28
  %v139 = vunpack.c.h.b16 %v28
  %v140 = vunpack.c.l.b16 %v29
  %v141 = vpack.c.b16 %v126, %v121
  %v142 = vpack.c.b16 %v127, %v122
  %v143 = vpack.c.b16 %v128, %v123
  %v144 = vpack.c.b16 %v129, %v124
  %v145 = vpack.c.b16 %v130, %v125
  %v146 = vpack.c.b16 %v136, %v131
  %v147 = vpack.c.b16 %v137, %v132
  %v148 = vpack.c.b16 %v138, %v133
  %v149 = vpack.c.b16 %v139, %v134
  %v150 = vpack.c.b16 %v140, %v135
  %v231 = vunpack.c.l.b16 %v30
  %v232 = vunpack.c.l.b16 %v31
  %v233 = vunpack.c.l.b16 %v32
  %v234 = vunpack.c.l.b16 %v33
  %v235 = vunpack.c.l.b16 %v34
  %v236 = vunpack.c.l.b16 %v35
  %v237 = vunpack.c.l.b16 %v36
  %v238 = vunpack.c.l.b16 %v37
  %v239 = vunpack.c.l.b16 %v38
  %v240 = vunpack.c.l.b16 %v39
  %v241 = vunpack.c.l.b16 %v40
  %v242 = vunpack.c.l.b16 %v41
  %v243 = vunpack.c.l.b16 %v42
  %v244 = vunpack.c.l.b16 %v43
  %v245 = vunpack.c.l.b16 %v44
  %v246 = vunpack.c.l.b16 %v45
  %v247 = vunpack.c.l.b16 %v46
  %v248 = vunpack.c.l.b16 %v47
  %v249 = vunpack.c.l.b16 %v48
  %v250 = vunpack.c.l.b16 %v49
  %v251 = vunpack.c.l.b16 %v50
  %v252 = vunpack.c.l.b16 %v51
  %v253 = vunpack.c.l.b16 %v52
  %v254 = vunpack.c.l.b16 %v53
  %v255 = vunpack.c.l.b16 %v54
  %v256 = vunpack.c.l.b16 %v55
  %v257 = vunpack.c.l.b16 %v56
  %v258 = vunpack.c.l.b16 %v57
  %v259 = vunpack.c.l.b16 %v58
  %v260 = vunpack.c.l.b16 %v59
  %v261 = vunpack.c.l.b16 %v60
  %v262 = vunpack.c.l.b16 %v61
  %v263 = vunpack.c.l.b16 %v62
  %v264 = vunpack.c.l.b16 %v63
  %v265 = vunpack.c.l.b16 %v64
  %v266 = vunpack.c.l.b16 %v65
  %v267 = vunpack.c.l.b16 %v66
  %v268 = vunpack.c.l.b16 %v67
  %v269 = vunpack.c.l.b16 %v68
  %v270 = vunpack.c.l.b16 %v69
  %v271 = vunpack.c.l.b16 %v70
  %v272 = vunpack.c.l.b16 %v71
  %v273 = vunpack.c.l.b16 %v72
  %v274 = vunpack.c.l.b16 %v73
  %v275 = vunpack.c.l.b16 %v74
  %v276 = vunpack.c.l.b16 %v75
  %v277 = vunpack.c.l.b16 %v76
  %v278 = vunpack.c.l.b16 %v77
  %v279 = vunpack.c.l.b16 %v78
  %v280 = vunpack.c.l.b16 %v79
  %v281 = vunpack.c.l.b16 %v80
  %v282 = vunpack.c.l.b16 %v81
  %v283 = vunpack.c.l.b16 %v82
  %v284 = vunpack.c.l.b16 %v83
  %v285 = vunpack.c.l.b16 %v84
  %v286 = vunpack.c.l.b16 %v85
  %v287 = vunpack.c.l.b16 %v86
  %v288 = vunpack.c.l.b16 %v87
  %v289 = vunpack.c.l.b16 %v88
  %v290 = vunpack.c.l.b16 %v89
  %v291 = vunpack.c.l.b16 %v90
  %v292 = vunpack.c.l.b16 %v91
  %v293 = vunpack.c.l.b16 %v92
  %v294 = vunpack.c.l.b16 %v93
  %v295 = vunpack.c.l.b16 %v94
  %v296 = vunpack.c.l.b16 %v95
  %v297 = vunpack.c.l.b16 %v96
  %v298 = vunpack.c.l.b16 %v97
  %v299 = vunpack.c.l.b16 %v98
  %v300 = vunpack.c.l.b16 %v99
  %v301 = vunpack.c.l.b16 %v100
  %v302 = vunpack.c.l.b16 %v101
  %v303 = vpack.c.b16 %v232, %v231
  %v304 = vpack.c.b16 %v234, %v233
  %v305 = vpack.c.b16 %v236, %v235
  %v306 = vpack.c.b16 %v238, %v237
  %v307 = vpack.c.b16 %v240, %v239
  %v308 = vpack.c.b16 %v242, %v241
  %v309 = vpack.c.b16 %v244, %v243
  %v310 = vpack.c.b16 %v246, %v245
  %v311 = vpack.c.b16 %v248, %v247
  %v312 = vpack.c.b16 %v250, %v249
  %v313 = vpack.c.b16 %v252, %v251
  %v314 = vpack.c.b16 %v254, %v253
  %v315 = vpack.c.b16 %v256, %v255
  %v316 = vpack.c.b16 %v258, %v257
  %v317 = vpack.c.b16 %v260, %v259
  %v318 = vpack.c.b16 %v262, %v261
  %v319 = vpack.c.b16 %v264, %v263
  %v320 = vpack.c.b16 %v266, %v265
  %v321 = vpack.c.b16 %v268, %v267
  %v322 = vpack.c.b16 %v270, %v269
  %v323 = vpack.c.b16 %v272, %v271
  %v324 = vpack.c.b16 %v274, %v273
  %v325 = vpack.c.b16 %v276, %v275
  %v326 = vpack.c.b16 %v278, %v277
  %v327 = vpack.c.b16 %v280, %v279
  %v328 = vpack.c.b16 %v282, %v281
  %v329 = vpack.c.b16 %v284, %v283
  %v330 = vpack.c.b16 %v286, %v285
  %v331 = vpack.c.b16 %v288, %v287
  %v332 = vpack.c.b16 %v290, %v289
  %v333 = vpack.c.b16 %v292, %v291
  %v334 = vpack.c.b16 %v294, %v293
  %v335 = vpack.c.b16 %v296, %v295
  %v336 = vpack.c.b16 %v298, %v297
  %v337 = vpack.c.b16 %v300, %v299
  %v338 = vpack.c.b16 %v302, %v301
  %vm375 = vcmask 523264
  %v377 = vsel %vm375, %v145, 0
  %v380 = vsel %vm375, %v150, 0
  %382 = vmatprep.subr.bf16.mxu0 0
  %383 = vmatpush1.bf16.msra.mxu0 %v310
  %384 = vmatprep.subr.bf16.mxu0 0
  %385 = vmatpush1.bf16.msra.mxu0 %v309
  %386 = vmatprep.subr.bf16.mxu0 0
  %387 = vmatpush1.bf16.msra.mxu0 %v308
  %388 = vmatprep.subr.bf16.mxu0 0
  %389 = vmatpush1.bf16.msra.mxu0 %v307
  %390 = vmatprep.subr.bf16.mxu0 0
  %391 = vmatpush1.bf16.msra.mxu0 %v306
  %392 = vmatprep.subr.bf16.mxu0 0
  %393 = vmatpush1.bf16.msra.mxu0 %v305
  %394 = vmatprep.subr.bf16.mxu0 0
  %395 = vmatpush1.bf16.msra.mxu0 %v304
  %396 = vmatprep.subr.bf16.mxu0 0
  %397 = vmatpush1.bf16.msra.mxu0 %v303
  %398 = vmatprep.subr.bf16.mxu0 0
  %399 = vmatpush2.bf16.msra.mxu0 %v318
  %400 = vmatprep.subr.bf16.mxu0 0
  %401 = vmatpush2.bf16.msra.mxu0 %v317
  %402 = vmatprep.subr.bf16.mxu0 0
  %403 = vmatpush2.bf16.msra.mxu0 %v316
  %404 = vmatprep.subr.bf16.mxu0 0
  %405 = vmatpush2.bf16.msra.mxu0 %v315
  %406 = vmatprep.subr.bf16.mxu0 0
  %407 = vmatpush2.bf16.msra.mxu0 %v314
  %408 = vmatprep.subr.bf16.mxu0 0
  %409 = vmatpush2.bf16.msra.mxu0 %v313
  %410 = vmatprep.subr.bf16.mxu0 0
  %411 = vmatpush2.bf16.msra.mxu0 %v312
  %412 = vmatprep.subr.bf16.mxu0 0
  %413 = vmatpush2.bf16.msra.mxu0 %v311
  %414 = vmatprep.mubr.bf16.mxu0 %v142
  %415 = vmatmul.mubr.bf16.gmra.mxu0 %v141
  %v416 = vpop.f32.mrf.mxu0
  %v417 = vadd.f32 %v107, %v416
  %v418 = vpop.f32.mrf.mxu0
  %v419 = vpop.f32.mrf.mxu0
  %v420 = vadd.f32 %v107, %v419
  %v421 = vpop.f32.mrf.mxu0
  %422 = vmatprep.mubr.bf16.mxu0 %v147
  %423 = vmatmul.mubr.bf16.gmra.mxu0 %v146
  %v424 = vpop.f32.mrf.mxu0
  %v425 = vadd.f32 %v107, %v424
  %v426 = vpop.f32.mrf.mxu0
  %v427 = vpop.f32.mrf.mxu0
  %v428 = vadd.f32 %v107, %v427
  %v429 = vpop.f32.mrf.mxu0
  %430 = vdwg.mxu0
  %431 = vmatprep.subr.bf16.mxu0 0
  %432 = vmatpush1.bf16.msra.mxu0 %v326
  %433 = vmatprep.subr.bf16.mxu0 0
  %434 = vmatpush1.bf16.msra.mxu0 %v325
  %435 = vmatprep.subr.bf16.mxu0 0
  %436 = vmatpush1.bf16.msra.mxu0 %v324
  %437 = vmatprep.subr.bf16.mxu0 0
  %438 = vmatpush1.bf16.msra.mxu0 %v323
  %439 = vmatprep.subr.bf16.mxu0 0
  %440 = vmatpush1.bf16.msra.mxu0 %v322
  %441 = vmatprep.subr.bf16.mxu0 0
  %442 = vmatpush1.bf16.msra.mxu0 %v321
  %443 = vmatprep.subr.bf16.mxu0 0
  %444 = vmatpush1.bf16.msra.mxu0 %v320
  %445 = vmatprep.subr.bf16.mxu0 0
  %446 = vmatpush1.bf16.msra.mxu0 %v319
  %447 = vmatprep.subr.bf16.mxu0 0
  %448 = vmatpush2.bf16.msra.mxu0 %v334
  %449 = vmatprep.subr.bf16.mxu0 0
  %450 = vmatpush2.bf16.msra.mxu0 %v333
  %451 = vmatprep.subr.bf16.mxu0 0
  %452 = vmatpush2.bf16.msra.mxu0 %v332
  %453 = vmatprep.subr.bf16.mxu0 0
  %454 = vmatpush2.bf16.msra.mxu0 %v331
  %455 = vmatprep.subr.bf16.mxu0 0
  %456 = vmatpush2.bf16.msra.mxu0 %v330
  %457 = vmatprep.subr.bf16.mxu0 0
  %458 = vmatpush2.bf16.msra.mxu0 %v329
  %459 = vmatprep.subr.bf16.mxu0 0
  %460 = vmatpush2.bf16.msra.mxu0 %v328
  %461 = vmatprep.subr.bf16.mxu0 0
  %462 = vmatpush2.bf16.msra.mxu0 %v327
  %463 = vmatprep.mubr.bf16.mxu0 %v144
  %464 = vmatmul.mubr.bf16.gmra.mxu0 %v143
  %v465 = vpop.f32.mrf.mxu0
  %v466 = vadd.f32 %v417, %v465
  %v467 = vpop.f32.mrf.mxu0
  %v468 = vpop.f32.mrf.mxu0
  %v469 = vadd.f32 %v420, %v468
  %v470 = vpop.f32.mrf.mxu0
  %471 = vmatprep.mubr.bf16.mxu0 %v149
  %472 = vmatmul.mubr.bf16.gmra.mxu0 %v148
  %v473 = vpop.f32.mrf.mxu0
  %v474 = vadd.f32 %v425, %v473
  %v475 = vpop.f32.mrf.mxu0
  %v476 = vpop.f32.mrf.mxu0
  %v477 = vadd.f32 %v428, %v476
  %v478 = vpop.f32.mrf.mxu0
  %479 = vdwg.mxu0
  %480 = vmatprep.subr.bf16.mxu0 0
  %481 = vmatpush1.bf16.msra.mxu0 0
  %482 = vmatprep.subr.bf16.mxu0 0
  %483 = vmatpush1.bf16.msra.mxu0 0
  %484 = vmatprep.subr.bf16.mxu0 0
  %485 = vmatpush1.bf16.msra.mxu0 0
  %486 = vmatprep.subr.bf16.mxu0 0
  %487 = vmatpush1.bf16.msra.mxu0 0
  %488 = vmatprep.subr.bf16.mxu0 0
  %489 = vmatpush1.bf16.msra.mxu0 %v338
  %490 = vmatprep.subr.bf16.mxu0 0
  %491 = vmatpush1.bf16.msra.mxu0 %v337
  %492 = vmatprep.subr.bf16.mxu0 0
  %493 = vmatpush1.bf16.msra.mxu0 %v336
  %494 = vmatprep.subr.bf16.mxu0 0
  %495 = vmatpush1.bf16.msra.mxu0 %v335
  %496 = vmatprep.subr.bf16.mxu0 0
  %497 = vmatpush2.bf16.msra.mxu0 0
  %498 = vmatprep.subr.bf16.mxu0 0
  %499 = vmatpush2.bf16.msra.mxu0 0
  %500 = vmatprep.subr.bf16.mxu0 0
  %501 = vmatpush2.bf16.msra.mxu0 0
  %502 = vmatprep.subr.bf16.mxu0 0
  %503 = vmatpush2.bf16.msra.mxu0 0
  %504 = vmatprep.subr.bf16.mxu0 0
  %505 = vmatpush2.bf16.msra.mxu0 0
  %506 = vmatprep.subr.bf16.mxu0 0
  %507 = vmatpush2.bf16.msra.mxu0 0
  %508 = vmatprep.subr.bf16.mxu0 0
  %509 = vmatpush2.bf16.msra.mxu0 0
  %510 = vmatprep.subr.bf16.mxu0 0
  %511 = vmatpush2.bf16.msra.mxu0 0
  %512 = vmatprep.mubr.bf16.mxu0 0
  %513 = vmatmul.mubr.bf16.gmra.mxu0 %v377
  %v514 = vpop.f32.mrf.mxu0
  %v515 = vadd.f32 %v466, %v514
  %v516 = vpop.f32.mrf.mxu0
  %v517 = vpop.f32.mrf.mxu0
  %v518 = vadd.f32 %v469, %v517
  %v519 = vpop.f32.mrf.mxu0
  %520 = vmatprep.mubr.bf16.mxu0 0
  %521 = vmatmul.mubr.bf16.gmra.mxu0 %v380
  %v522 = vpop.f32.mrf.mxu0
  %v523 = vadd.f32 %v474, %v522
  %v524 = vpop.f32.mrf.mxu0
  %v525 = vpop.f32.mrf.mxu0
  %v526 = vadd.f32 %v477, %v525
  %v527 = vpop.f32.mrf.mxu0
  %528 = vdwg.mxu0
  %v529 = vld [vmem:[%s3] sm:$0x1]
  %v531 = vlaneseq
  %v532 = vshrl.u32 %v531, 7
  %v533 = vsub.s32 0, %v532
  %v534 = vrot.slane %v529, %v533
  %v536 = vmax.f32 %v515, %v534
  %v537 = vmax.f32 %v518, %v534
  %v538 = vmax.f32 %v523, %v534
  %v539 = vmax.f32 %v526, %v534
  %540 = vst [vmem:[%s4] sm:$0xff] %v536
  %541 = vst [vmem:[%s4 + $0x8] sm:$0xff] %v537
  %542 = vst [vmem:[%s4 + $0x10] sm:$0xff] %v538
  %543 = vst [vmem:[%s4 + $0x18] sm:$0xff] %v539
  // Predicated region
  $region18: #{traj_predictor_forward.20} parent=0 // pred_check
    _
  $region19: #{traj_predictor_forward.20} parent=0 // pred_check_branch
    %545 = sbr.rel (0) target = $region21
  $region20: #{traj_predictor_forward.20} parent=0 // pred_region
    _
  $region21: #{traj_predictor_forward.20} parent=0 // pred_fallthru
    _
  // Predicated region
  $region22: #{traj_predictor_forward.20} parent=0 // pred_check
    _
  $region23: #{traj_predictor_forward.20} parent=0 // pred_check_branch
    %547 = sbr.rel (0) target = $region25
  $region24: #{traj_predictor_forward.20} parent=0 // pred_region
    _
  $region25: #{traj_predictor_forward.20} parent=0 // pred_fallthru
    _

// kernel: traj_predictor_forward.21
$region0: #{traj_predictor_forward.21}
  #allocation0 [shape = 'u32[]', space=smem, size = 0x4, offset = 0x4, fixed_abs, tag = 'smem constant byte address 0x4 - core index']
  #allocation1 [shape = 'u32[144,128]{1,0:T(1,128)}', space=vmem, size = 0x12000, scoped, tag = 'internal scratch']
  %s0 = inlined_call_operand.vmem [shape: bf16[8,1024], index: 0, kind: input, shape index: {}]
  %s1 = inlined_call_operand.vmem [shape: bf16[1024,128], index: 1, kind: input, shape index: {}]
  %s2 = inlined_call_operand.vmem [shape: f32[1,128], index: 2, kind: input, shape index: {}]
  %s3 = inlined_call_operand.vmem [shape: f32[1,128], index: 3, kind: input, shape index: {}]
  %s4 = inlined_call_operand.vmem [shape: f32[8,128], index: 4, kind: output, shape index: {}]
  %s5 = sld [smem:[#allocation0]]
  $region26: #{traj_predictor_forward.21} parent=0
    _
  %s7 = ssub.s32 1, %s5
  %s8 = scalar_select 0, %s7, %s5
  // Predicated region
  $region2: #{traj_predictor_forward.21} parent=0 // pred_check
    _
  $region3: #{traj_predictor_forward.21} parent=0 // pred_check_branch
    %10 = sbr.rel (0) target = $region5
  $region4: #{traj_predictor_forward.21} parent=0 // pred_region
    _
  $region5: #{traj_predictor_forward.21} parent=0 // pred_fallthru
    _
  // Predicated region
  $region6: #{traj_predictor_forward.21} parent=0 // pred_check
    _
  $region7: #{traj_predictor_forward.21} parent=0 // pred_check_branch
    %12 = sbr.rel (0) target = $region9
  $region8: #{traj_predictor_forward.21} parent=0 // pred_region
    _
  $region9: #{traj_predictor_forward.21} parent=0 // pred_fallthru
    _
  // Predicated region
  $region10: #{traj_predictor_forward.21} parent=0 // pred_check
    _
  $region11: #{traj_predictor_forward.21} parent=0 // pred_check_branch
    %14 = sbr.rel (0) target = $region13
  $region12: #{traj_predictor_forward.21} parent=0 // pred_region
    _
  $region13: #{traj_predictor_forward.21} parent=0 // pred_fallthru
    _
  // Predicated region
  $region14: #{traj_predictor_forward.21} parent=0 // pred_check
    _
  $region15: #{traj_predictor_forward.21} parent=0 // pred_check_branch
    %16 = sbr.rel (0) target = $region17
  $region16: #{traj_predictor_forward.21} parent=0 // pred_region
    _
  $region17: #{traj_predictor_forward.21} parent=0 // pred_fallthru
    _
  %v18 = vld [vmem:[%s0] sm:$0xff]
  %v19 = vld [vmem:[%s0 + $0x8] sm:$0xff]
  %v20 = vld [vmem:[%s0 + $0x10] sm:$0xff]
  %v21 = vld [vmem:[%s0 + $0x18] sm:$0xff]
  %v22 = vld [vmem:[%s1] sm:$0xf]
  %v23 = vld [vmem:[%s1 + $0x4] sm:$0xf]
  %v24 = vld [vmem:[%s1 + $0x8] sm:$0xf]
  %v25 = vld [vmem:[%s1 + $0xc] sm:$0xf]
  %v26 = vld [vmem:[%s1 + $0x10] sm:$0xf]
  %v27 = vld [vmem:[%s1 + $0x14] sm:$0xf]
  %v28 = vld [vmem:[%s1 + $0x18] sm:$0xf]
  %v29 = vld [vmem:[%s1 + $0x1c] sm:$0xf]
  %v30 = vld [vmem:[%s1 + $0x20] sm:$0xf]
  %v31 = vld [vmem:[%s1 + $0x24] sm:$0xf]
  %v32 = vld [vmem:[%s1 + $0x28] sm:$0xf]
  %v33 = vld [vmem:[%s1 + $0x2c] sm:$0xf]
  %v34 = vld [vmem:[%s1 + $0x30] sm:$0xf]
  %v35 = vld [vmem:[%s1 + $0x34] sm:$0xf]
  %v36 = vld [vmem:[%s1 + $0x38] sm:$0xf]
  %v37 = vld [vmem:[%s1 + $0x3c] sm:$0xf]
  %v38 = vld [vmem:[%s1 + $0x40] sm:$0xf]
  %v39 = vld [vmem:[%s1 + $0x44] sm:$0xf]
  %v40 = vld [vmem:[%s1 + $0x48] sm:$0xf]
  %v41 = vld [vmem:[%s1 + $0x4c] sm:$0xf]
  %v42 = vld [vmem:[%s1 + $0x50] sm:$0xf]
  %v43 = vld [vmem:[%s1 + $0x54] sm:$0xf]
  %v44 = vld [vmem:[%s1 + $0x58] sm:$0xf]
  %v45 = vld [vmem:[%s1 + $0x5c] sm:$0xf]
  %v46 = vld [vmem:[%s1 + $0x60] sm:$0xf]
  %v47 = vld [vmem:[%s1 + $0x64] sm:$0xf]
  %v48 = vld [vmem:[%s1 + $0x68] sm:$0xf]
  %v49 = vld [vmem:[%s1 + $0x6c] sm:$0xf]
  %v50 = vld [vmem:[%s1 + $0x70] sm:$0xf]
  %v51 = vld [vmem:[%s1 + $0x74] sm:$0xf]
  %v52 = vld [vmem:[%s1 + $0x78] sm:$0xf]
  %v53 = vld [vmem:[%s1 + $0x7c] sm:$0xf]
  %v54 = vld [vmem:[%s1 + $0x80] sm:$0xf]
  %v55 = vld [vmem:[%s1 + $0x84] sm:$0xf]
  %v56 = vld [vmem:[%s1 + $0x88] sm:$0xf]
  %v57 = vld [vmem:[%s1 + $0x8c] sm:$0xf]
  %v58 = vld [vmem:[%s1 + $0x90] sm:$0xf]
  %v59 = vld [vmem:[%s1 + $0x94] sm:$0xf]
  %v60 = vld [vmem:[%s1 + $0x98] sm:$0xf]
  %v61 = vld [vmem:[%s1 + $0x9c] sm:$0xf]
  %v62 = vld [vmem:[%s1 + $0xa0] sm:$0xf]
  %v63 = vld [vmem:[%s1 + $0xa4] sm:$0xf]
  %v64 = vld [vmem:[%s1 + $0xa8] sm:$0xf]
  %v65 = vld [vmem:[%s1 + $0xac] sm:$0xf]
  %v66 = vld [vmem:[%s1 + $0xb0] sm:$0xf]
  %v67 = vld [vmem:[%s1 + $0xb4] sm:$0xf]
  %v68 = vld [vmem:[%s1 + $0xb8] sm:$0xf]
  %v69 = vld [vmem:[%s1 + $0xbc] sm:$0xf]
  %v70 = vld [vmem:[%s1 + $0xc0] sm:$0xf]
  %v71 = vld [vmem:[%s1 + $0xc4] sm:$0xf]
  %v72 = vld [vmem:[%s1 + $0xc8] sm:$0xf]
  %v73 = vld [vmem:[%s1 + $0xcc] sm:$0xf]
  %v74 = vld [vmem:[%s1 + $0xd0] sm:$0xf]
  %v75 = vld [vmem:[%s1 + $0xd4] sm:$0xf]
  %v76 = vld [vmem:[%s1 + $0xd8] sm:$0xf]
  %v77 = vld [vmem:[%s1 + $0xdc] sm:$0xf]
  %v78 = vld [vmem:[%s1 + $0xe0] sm:$0xf]
  %v79 = vld [vmem:[%s1 + $0xe4] sm:$0xf]
  %v80 = vld [vmem:[%s1 + $0xe8] sm:$0xf]
  %v81 = vld [vmem:[%s1 + $0xec] sm:$0xf]
  %v82 = vld [vmem:[%s1 + $0xf0] sm:$0xf]
  %v83 = vld [vmem:[%s1 + $0xf4] sm:$0xf]
  %v84 = vld [vmem:[%s1 + $0xf8] sm:$0xf]
  %v85 = vld [vmem:[%s1 + $0xfc] sm:$0xf]
  %v86 = vld [vmem:[%s1 + $0x100] sm:$0xf]
  %v87 = vld [vmem:[%s1 + $0x104] sm:$0xf]
  %v88 = vld [vmem:[%s1 + $0x108] sm:$0xf]
  %v89 = vld [vmem:[%s1 + $0x10c] sm:$0xf]
  %v90 = vld [vmem:[%s1 + $0x110] sm:$0xf]
  %v91 = vld [vmem:[%s1 + $0x114] sm:$0xf]
  %v92 = vld [vmem:[%s1 + $0x118] sm:$0xf]
  %v93 = vld [vmem:[%s1 + $0x11c] sm:$0xf]
  %v94 = vld [vmem:[%s1 + $0x120] sm:$0xf]
  %v95 = vld [vmem:[%s1 + $0x124] sm:$0xf]
  %v96 = vld [vmem:[%s1 + $0x128] sm:$0xf]
  %v97 = vld [vmem:[%s1 + $0x12c] sm:$0xf]
  %v98 = vld [vmem:[%s1 + $0x130] sm:$0xf]
  %v99 = vld [vmem:[%s1 + $0x134] sm:$0xf]
  %v100 = vld [vmem:[%s1 + $0x138] sm:$0xf]
  %v101 = vld [vmem:[%s1 + $0x13c] sm:$0xf]
  %v102 = vld [vmem:[%s1 + $0x140] sm:$0xf]
  %v103 = vld [vmem:[%s1 + $0x144] sm:$0xf]
  %v104 = vld [vmem:[%s1 + $0x148] sm:$0xf]
  %v105 = vld [vmem:[%s1 + $0x14c] sm:$0xf]
  %v106 = vld [vmem:[%s1 + $0x150] sm:$0xf]
  %v107 = vld [vmem:[%s1 + $0x154] sm:$0xf]
  %v108 = vld [vmem:[%s1 + $0x158] sm:$0xf]
  %v109 = vld [vmem:[%s1 + $0x15c] sm:$0xf]
  %v110 = vld [vmem:[%s1 + $0x160] sm:$0xf]
  %v111 = vld [vmem:[%s1 + $0x164] sm:$0xf]
  %v112 = vld [vmem:[%s1 + $0x168] sm:$0xf]
  %v113 = vld [vmem:[%s1 + $0x16c] sm:$0xf]
  %v114 = vld [vmem:[%s1 + $0x170] sm:$0xf]
  %v115 = vld [vmem:[%s1 + $0x174] sm:$0xf]
  %v116 = vld [vmem:[%s1 + $0x178] sm:$0xf]
  %v117 = vld [vmem:[%s1 + $0x17c] sm:$0xf]
  %v118 = vld [vmem:[%s1 + $0x180] sm:$0xf]
  %v119 = vld [vmem:[%s1 + $0x184] sm:$0xf]
  %v120 = vld [vmem:[%s1 + $0x188] sm:$0xf]
  %v121 = vld [vmem:[%s1 + $0x18c] sm:$0xf]
  %v122 = vld [vmem:[%s1 + $0x190] sm:$0xf]
  %v123 = vld [vmem:[%s1 + $0x194] sm:$0xf]
  %v124 = vld [vmem:[%s1 + $0x198] sm:$0xf]
  %v125 = vld [vmem:[%s1 + $0x19c] sm:$0xf]
  %v126 = vld [vmem:[%s1 + $0x1a0] sm:$0xf]
  %v127 = vld [vmem:[%s1 + $0x1a4] sm:$0xf]
  %v128 = vld [vmem:[%s1 + $0x1a8] sm:$0xf]
  %v129 = vld [vmem:[%s1 + $0x1ac] sm:$0xf]
  %v130 = vld [vmem:[%s1 + $0x1b0] sm:$0xf]
  %v131 = vld [vmem:[%s1 + $0x1b4] sm:$0xf]
  %v132 = vld [vmem:[%s1 + $0x1b8] sm:$0xf]
  %v133 = vld [vmem:[%s1 + $0x1bc] sm:$0xf]
  %v134 = vld [vmem:[%s1 + $0x1c0] sm:$0xf]
  %v135 = vld [vmem:[%s1 + $0x1c4] sm:$0xf]
  %v136 = vld [vmem:[%s1 + $0x1c8] sm:$0xf]
  %v137 = vld [vmem:[%s1 + $0x1cc] sm:$0xf]
  %v138 = vld [vmem:[%s1 + $0x1d0] sm:$0xf]
  %v139 = vld [vmem:[%s1 + $0x1d4] sm:$0xf]
  %v140 = vld [vmem:[%s1 + $0x1d8] sm:$0xf]
  %v141 = vld [vmem:[%s1 + $0x1dc] sm:$0xf]
  %v142 = vld [vmem:[%s1 + $0x1e0] sm:$0xf]
  %v143 = vld [vmem:[%s1 + $0x1e4] sm:$0xf]
  %v144 = vld [vmem:[%s1 + $0x1e8] sm:$0xf]
  %v145 = vld [vmem:[%s1 + $0x1ec] sm:$0xf]
  %v146 = vld [vmem:[%s1 + $0x1f0] sm:$0xf]
  %v147 = vld [vmem:[%s1 + $0x1f4] sm:$0xf]
  %v148 = vld [vmem:[%s1 + $0x1f8] sm:$0xf]
  %v149 = vld [vmem:[%s1 + $0x1fc] sm:$0xf]
  %v150 = vld [vmem:[%s2] sm:$0x1]
  %v152 = vlaneseq
  %v153 = vshrl.u32 %v152, 7
  %v154 = vsub.s32 0, %v153
  %v155 = vrot.slane %v150, %v154
  %v161 = vunpack.c.l.b16 %v18
  %v162 = vunpack.c.h.b16 %v18
  %v163 = vunpack.c.l.b16 %v19
  %v164 = vunpack.c.h.b16 %v19
  %v165 = vunpack.c.l.b16 %v20
  %v166 = vunpack.c.h.b16 %v20
  %v167 = vunpack.c.l.b16 %v21
  %v168 = vunpack.c.h.b16 %v21
  %v169 = vpack.c.b16 %v161, %v161
  %v170 = vpack.c.b16 %v162, %v162
  %v171 = vpack.c.b16 %v163, %v163
  %v172 = vpack.c.b16 %v164, %v164
  %v173 = vpack.c.b16 %v165, %v165
  %v174 = vpack.c.b16 %v166, %v166
  %v175 = vpack.c.b16 %v167, %v167
  %v176 = vpack.c.b16 %v168, %v168
  %v313 = vunpack.c.l.b16 %v22
  %v314 = vunpack.c.l.b16 %v23
  %v315 = vunpack.c.l.b16 %v24
  %v316 = vunpack.c.l.b16 %v25
  %v317 = vunpack.c.l.b16 %v26
  %v318 = vunpack.c.l.b16 %v27
  %v319 = vunpack.c.l.b16 %v28
  %v320 = vunpack.c.l.b16 %v29
  %v321 = vunpack.c.l.b16 %v30
  %v322 = vunpack.c.l.b16 %v31
  %v323 = vunpack.c.l.b16 %v32
  %v324 = vunpack.c.l.b16 %v33
  %v325 = vunpack.c.l.b16 %v34
  %v326 = vunpack.c.l.b16 %v35
  %v327 = vunpack.c.l.b16 %v36
  %v328 = vunpack.c.l.b16 %v37
  %v329 = vunpack.c.l.b16 %v38
  %v330 = vunpack.c.l.b16 %v39
  %v331 = vunpack.c.l.b16 %v40
  %v332 = vunpack.c.l.b16 %v41
  %v333 = vunpack.c.l.b16 %v42
  %v334 = vunpack.c.l.b16 %v43
  %v335 = vunpack.c.l.b16 %v44
  %v336 = vunpack.c.l.b16 %v45
  %v337 = vunpack.c.l.b16 %v46
  %v338 = vunpack.c.l.b16 %v47
  %v339 = vunpack.c.l.b16 %v48
  %v340 = vunpack.c.l.b16 %v49
  %v341 = vunpack.c.l.b16 %v50
  %v342 = vunpack.c.l.b16 %v51
  %v343 = vunpack.c.l.b16 %v52
  %v344 = vunpack.c.l.b16 %v53
  %v345 = vunpack.c.l.b16 %v54
  %v346 = vunpack.c.l.b16 %v55
  %v347 = vunpack.c.l.b16 %v56
  %v348 = vunpack.c.l.b16 %v57
  %v349 = vunpack.c.l.b16 %v58
  %v350 = vunpack.c.l.b16 %v59
  %v351 = vunpack.c.l.b16 %v60
  %v352 = vunpack.c.l.b16 %v61
  %v353 = vunpack.c.l.b16 %v62
  %v354 = vunpack.c.l.b16 %v63
  %v355 = vunpack.c.l.b16 %v64
  %v356 = vunpack.c.l.b16 %v65
  %v357 = vunpack.c.l.b16 %v66
  %v358 = vunpack.c.l.b16 %v67
  %v359 = vunpack.c.l.b16 %v68
  %v360 = vunpack.c.l.b16 %v69
  %v361 = vunpack.c.l.b16 %v70
  %v362 = vunpack.c.l.b16 %v71
  %v363 = vunpack.c.l.b16 %v72
  %v364 = vunpack.c.l.b16 %v73
  %v365 = vunpack.c.l.b16 %v74
  %v366 = vunpack.c.l.b16 %v75
  %v367 = vunpack.c.l.b16 %v76
  %v368 = vunpack.c.l.b16 %v77
  %v369 = vunpack.c.l.b16 %v78
  %v370 = vunpack.c.l.b16 %v79
  %v371 = vunpack.c.l.b16 %v80
  %v372 = vunpack.c.l.b16 %v81
  %v373 = vunpack.c.l.b16 %v82
  %v374 = vunpack.c.l.b16 %v83
  %v375 = vunpack.c.l.b16 %v84
  %v376 = vunpack.c.l.b16 %v85
  %v377 = vunpack.c.l.b16 %v86
  %v378 = vunpack.c.l.b16 %v87
  %v379 = vunpack.c.l.b16 %v88
  %v380 = vunpack.c.l.b16 %v89
  %v381 = vunpack.c.l.b16 %v90
  %v382 = vunpack.c.l.b16 %v91
  %v383 = vunpack.c.l.b16 %v92
  %v384 = vunpack.c.l.b16 %v93
  %v385 = vunpack.c.l.b16 %v94
  %v386 = vunpack.c.l.b16 %v95
  %v387 = vunpack.c.l.b16 %v96
  %v388 = vunpack.c.l.b16 %v97
  %v389 = vunpack.c.l.b16 %v98
  %v390 = vunpack.c.l.b16 %v99
  %v391 = vunpack.c.l.b16 %v100
  %v392 = vunpack.c.l.b16 %v101
  %v393 = vunpack.c.l.b16 %v102
  %v394 = vunpack.c.l.b16 %v103
  %v395 = vunpack.c.l.b16 %v104
  %v396 = vunpack.c.l.b16 %v105
  %v397 = vunpack.c.l.b16 %v106
  %v398 = vunpack.c.l.b16 %v107
  %v399 = vunpack.c.l.b16 %v108
  %v400 = vunpack.c.l.b16 %v109
  %v401 = vunpack.c.l.b16 %v110
  %v402 = vunpack.c.l.b16 %v111
  %v403 = vunpack.c.l.b16 %v112
  %v404 = vunpack.c.l.b16 %v113
  %v405 = vunpack.c.l.b16 %v114
  %v406 = vunpack.c.l.b16 %v115
  %v407 = vunpack.c.l.b16 %v116
  %v408 = vunpack.c.l.b16 %v117
  %v409 = vunpack.c.l.b16 %v118
  %v410 = vunpack.c.l.b16 %v119
  %v411 = vunpack.c.l.b16 %v120
  %v412 = vunpack.c.l.b16 %v121
  %v413 = vunpack.c.l.b16 %v122
  %v414 = vunpack.c.l.b16 %v123
  %v415 = vunpack.c.l.b16 %v124
  %v416 = vunpack.c.l.b16 %v125
  %v417 = vunpack.c.l.b16 %v126
  %v418 = vunpack.c.l.b16 %v127
  %v419 = vunpack.c.l.b16 %v128
  %v420 = vunpack.c.l.b16 %v129
  %v421 = vunpack.c.l.b16 %v130
  %v422 = vunpack.c.l.b16 %v131
  %v423 = vunpack.c.l.b16 %v132
  %v424 = vunpack.c.l.b16 %v133
  %v425 = vunpack.c.l.b16 %v134
  %v426 = vunpack.c.l.b16 %v135
  %v427 = vunpack.c.l.b16 %v136
  %v428 = vunpack.c.l.b16 %v137
  %v429 = vunpack.c.l.b16 %v138
  %v430 = vunpack.c.l.b16 %v139
  %v431 = vunpack.c.l.b16 %v140
  %v432 = vunpack.c.l.b16 %v141
  %v433 = vunpack.c.l.b16 %v142
  %v434 = vunpack.c.l.b16 %v143
  %v435 = vunpack.c.l.b16 %v144
  %v436 = vunpack.c.l.b16 %v145
  %v437 = vunpack.c.l.b16 %v146
  %v438 = vunpack.c.l.b16 %v147
  %v439 = vunpack.c.l.b16 %v148
  %v440 = vunpack.c.l.b16 %v149
  %v441 = vpack.c.b16 %v314, %v313
  %v442 = vpack.c.b16 %v316, %v315
  %v443 = vpack.c.b16 %v318, %v317
  %v444 = vpack.c.b16 %v320, %v319
  %v445 = vpack.c.b16 %v322, %v321
  %v446 = vpack.c.b16 %v324, %v323
  %v447 = vpack.c.b16 %v326, %v325
  %v448 = vpack.c.b16 %v328, %v327
  %v449 = vpack.c.b16 %v330, %v329
  %v450 = vpack.c.b16 %v332, %v331
  %v451 = vpack.c.b16 %v334, %v333
  %v452 = vpack.c.b16 %v336, %v335
  %v453 = vpack.c.b16 %v338, %v337
  %v454 = vpack.c.b16 %v340, %v339
  %v455 = vpack.c.b16 %v342, %v341
  %v456 = vpack.c.b16 %v344, %v343
  %v457 = vpack.c.b16 %v346, %v345
  %v458 = vpack.c.b16 %v348, %v347
  %v459 = vpack.c.b16 %v350, %v349
  %v460 = vpack.c.b16 %v352, %v351
  %v461 = vpack.c.b16 %v354, %v353
  %v462 = vpack.c.b16 %v356, %v355
  %v463 = vpack.c.b16 %v358, %v357
  %v464 = vpack.c.b16 %v360, %v359
  %v465 = vpack.c.b16 %v362, %v361
  %v466 = vpack.c.b16 %v364, %v363
  %v467 = vpack.c.b16 %v366, %v365
  %v468 = vpack.c.b16 %v368, %v367
  %v469 = vpack.c.b16 %v370, %v369
  %v470 = vpack.c.b16 %v372, %v371
  %v471 = vpack.c.b16 %v374, %v373
  %v472 = vpack.c.b16 %v376, %v375
  %v473 = vpack.c.b16 %v378, %v377
  %v474 = vpack.c.b16 %v380, %v379
  %v475 = vpack.c.b16 %v382, %v381
  %v476 = vpack.c.b16 %v384, %v383
  %v477 = vpack.c.b16 %v386, %v385
  %v478 = vpack.c.b16 %v388, %v387
  %v479 = vpack.c.b16 %v390, %v389
  %v480 = vpack.c.b16 %v392, %v391
  %v481 = vpack.c.b16 %v394, %v393
  %v482 = vpack.c.b16 %v396, %v395
  %v483 = vpack.c.b16 %v398, %v397
  %v484 = vpack.c.b16 %v400, %v399
  %v485 = vpack.c.b16 %v402, %v401
  %v486 = vpack.c.b16 %v404, %v403
  %v487 = vpack.c.b16 %v406, %v405
  %v488 = vpack.c.b16 %v408, %v407
  %v489 = vpack.c.b16 %v410, %v409
  %v490 = vpack.c.b16 %v412, %v411
  %v491 = vpack.c.b16 %v414, %v413
  %v492 = vpack.c.b16 %v416, %v415
  %v493 = vpack.c.b16 %v418, %v417
  %v494 = vpack.c.b16 %v420, %v419
  %v495 = vpack.c.b16 %v422, %v421
  %v496 = vpack.c.b16 %v424, %v423
  %v497 = vpack.c.b16 %v426, %v425
  %v498 = vpack.c.b16 %v428, %v427
  %v499 = vpack.c.b16 %v430, %v429
  %v500 = vpack.c.b16 %v432, %v431
  %v501 = vpack.c.b16 %v434, %v433
  %v502 = vpack.c.b16 %v436, %v435
  %v503 = vpack.c.b16 %v438, %v437
  %v504 = vpack.c.b16 %v440, %v439
  %569 = vmatprep.subr.bf16.mxu0 0
  %570 = vmatpush1.bf16.msra.mxu0 %v448
  %571 = vmatprep.subr.bf16.mxu0 0
  %572 = vmatpush1.bf16.msra.mxu0 %v447
  %573 = vmatprep.subr.bf16.mxu0 0
  %574 = vmatpush1.bf16.msra.mxu0 %v446
  %575 = vmatprep.subr.bf16.mxu0 0
  %576 = vmatpush1.bf16.msra.mxu0 %v445
  %577 = vmatprep.subr.bf16.mxu0 0
  %578 = vmatpush1.bf16.msra.mxu0 %v444
  %579 = vmatprep.subr.bf16.mxu0 0
  %580 = vmatpush1.bf16.msra.mxu0 %v443
  %581 = vmatprep.subr.bf16.mxu0 0
  %582 = vmatpush1.bf16.msra.mxu0 %v442
  %583 = vmatprep.subr.bf16.mxu0 0
  %584 = vmatpush1.bf16.msra.mxu0 %v441
  %585 = vmatprep.subr.bf16.mxu0 0
  %586 = vmatpush2.bf16.msra.mxu0 %v456
  %587 = vmatprep.subr.bf16.mxu0 0
  %588 = vmatpush2.bf16.msra.mxu0 %v455
  %589 = vmatprep.subr.bf16.mxu0 0
  %590 = vmatpush2.bf16.msra.mxu0 %v454
  %591 = vmatprep.subr.bf16.mxu0 0
  %592 = vmatpush2.bf16.msra.mxu0 %v453
  %593 = vmatprep.subr.bf16.mxu0 0
  %594 = vmatpush2.bf16.msra.mxu0 %v452
  %595 = vmatprep.subr.bf16.mxu0 0
  %596 = vmatpush2.bf16.msra.mxu0 %v451
  %597 = vmatprep.subr.bf16.mxu0 0
  %598 = vmatpush2.bf16.msra.mxu0 %v450
  %599 = vmatprep.subr.bf16.mxu0 0
  %600 = vmatpush2.bf16.msra.mxu0 %v449
  %601 = vmatprep.mubr.bf16.mxu0 %v170
  %602 = vmatmul.mubr.bf16.gmra.mxu0 %v169
  %v603 = vpop.f32.mrf.mxu0
  %v604 = vadd.f32 %v155, %v603
  %v605 = vpop.f32.mrf.mxu0
  %v606 = vpop.f32.mrf.mxu0
  %v607 = vpop.f32.mrf.mxu0
  %608 = vdwg.mxu0
  %609 = vmatprep.subr.bf16.mxu0 0
  %610 = vmatpush1.bf16.msra.mxu0 %v464
  %611 = vmatprep.subr.bf16.mxu0 0
  %612 = vmatpush1.bf16.msra.mxu0 %v463
  %613 = vmatprep.subr.bf16.mxu0 0
  %614 = vmatpush1.bf16.msra.mxu0 %v462
  %615 = vmatprep.subr.bf16.mxu0 0
  %616 = vmatpush1.bf16.msra.mxu0 %v461
  %617 = vmatprep.subr.bf16.mxu0 0
  %618 = vmatpush1.bf16.msra.mxu0 %v460
  %619 = vmatprep.subr.bf16.mxu0 0
  %620 = vmatpush1.bf16.msra.mxu0 %v459
  %621 = vmatprep.subr.bf16.mxu0 0
  %622 = vmatpush1.bf16.msra.mxu0 %v458
  %623 = vmatprep.subr.bf16.mxu0 0
  %624 = vmatpush1.bf16.msra.mxu0 %v457
  %625 = vmatprep.subr.bf16.mxu0 0
  %626 = vmatpush2.bf16.msra.mxu0 %v472
  %627 = vmatprep.subr.bf16.mxu0 0
  %628 = vmatpush2.bf16.msra.mxu0 %v471
  %629 = vmatprep.subr.bf16.mxu0 0
  %630 = vmatpush2.bf16.msra.mxu0 %v470
  %631 = vmatprep.subr.bf16.mxu0 0
  %632 = vmatpush2.bf16.msra.mxu0 %v469
  %633 = vmatprep.subr.bf16.mxu0 0
  %634 = vmatpush2.bf16.msra.mxu0 %v468
  %635 = vmatprep.subr.bf16.mxu0 0
  %636 = vmatpush2.bf16.msra.mxu0 %v467
  %637 = vmatprep.subr.bf16.mxu0 0
  %638 = vmatpush2.bf16.msra.mxu0 %v466
  %639 = vmatprep.subr.bf16.mxu0 0
  %640 = vmatpush2.bf16.msra.mxu0 %v465
  %641 = vmatprep.mubr.bf16.mxu0 %v172
  %642 = vmatmul.mubr.bf16.gmra.mxu0 %v171
  %v643 = vpop.f32.mrf.mxu0
  %v644 = vadd.f32 %v604, %v643
  %v645 = vpop.f32.mrf.mxu0
  %v646 = vpop.f32.mrf.mxu0
  %v647 = vpop.f32.mrf.mxu0
  %648 = vdwg.mxu0
  %649 = vmatprep.subr.bf16.mxu0 0
  %650 = vmatpush1.bf16.msra.mxu0 %v480
  %651 = vmatprep.subr.bf16.mxu0 0
  %652 = vmatpush1.bf16.msra.mxu0 %v479
  %653 = vmatprep.subr.bf16.mxu0 0
  %654 = vmatpush1.bf16.msra.mxu0 %v478
  %655 = vmatprep.subr.bf16.mxu0 0
  %656 = vmatpush1.bf16.msra.mxu0 %v477
  %657 = vmatprep.subr.bf16.mxu0 0
  %658 = vmatpush1.bf16.msra.mxu0 %v476
  %659 = vmatprep.subr.bf16.mxu0 0
  %660 = vmatpush1.bf16.msra.mxu0 %v475
  %661 = vmatprep.subr.bf16.mxu0 0
  %662 = vmatpush1.bf16.msra.mxu0 %v474
  %663 = vmatprep.subr.bf16.mxu0 0
  %664 = vmatpush1.bf16.msra.mxu0 %v473
  %665 = vmatprep.subr.bf16.mxu0 0
  %666 = vmatpush2.bf16.msra.mxu0 %v488
  %667 = vmatprep.subr.bf16.mxu0 0
  %668 = vmatpush2.bf16.msra.mxu0 %v487
  %669 = vmatprep.subr.bf16.mxu0 0
  %670 = vmatpush2.bf16.msra.mxu0 %v486
  %671 = vmatprep.subr.bf16.mxu0 0
  %672 = vmatpush2.bf16.msra.mxu0 %v485
  %673 = vmatprep.subr.bf16.mxu0 0
  %674 = vmatpush2.bf16.msra.mxu0 %v484
  %675 = vmatprep.subr.bf16.mxu0 0
  %676 = vmatpush2.bf16.msra.mxu0 %v483
  %677 = vmatprep.subr.bf16.mxu0 0
  %678 = vmatpush2.bf16.msra.mxu0 %v482
  %679 = vmatprep.subr.bf16.mxu0 0
  %680 = vmatpush2.bf16.msra.mxu0 %v481
  %681 = vmatprep.mubr.bf16.mxu0 %v174
  %682 = vmatmul.mubr.bf16.gmra.mxu0 %v173
  %v683 = vpop.f32.mrf.mxu0
  %v684 = vadd.f32 %v644, %v683
  %v685 = vpop.f32.mrf.mxu0
  %v686 = vpop.f32.mrf.mxu0
  %v687 = vpop.f32.mrf.mxu0
  %688 = vdwg.mxu0
  %689 = vmatprep.subr.bf16.mxu0 0
  %690 = vmatpush1.bf16.msra.mxu0 %v496
  %691 = vmatprep.subr.bf16.mxu0 0
  %692 = vmatpush1.bf16.msra.mxu0 %v495
  %693 = vmatprep.subr.bf16.mxu0 0
  %694 = vmatpush1.bf16.msra.mxu0 %v494
  %695 = vmatprep.subr.bf16.mxu0 0
  %696 = vmatpush1.bf16.msra.mxu0 %v493
  %697 = vmatprep.subr.bf16.mxu0 0
  %698 = vmatpush1.bf16.msra.mxu0 %v492
  %699 = vmatprep.subr.bf16.mxu0 0
  %700 = vmatpush1.bf16.msra.mxu0 %v491
  %701 = vmatprep.subr.bf16.mxu0 0
  %702 = vmatpush1.bf16.msra.mxu0 %v490
  %703 = vmatprep.subr.bf16.mxu0 0
  %704 = vmatpush1.bf16.msra.mxu0 %v489
  %705 = vmatprep.subr.bf16.mxu0 0
  %706 = vmatpush2.bf16.msra.mxu0 %v504
  %707 = vmatprep.subr.bf16.mxu0 0
  %708 = vmatpush2.bf16.msra.mxu0 %v503
  %709 = vmatprep.subr.bf16.mxu0 0
  %710 = vmatpush2.bf16.msra.mxu0 %v502
  %711 = vmatprep.subr.bf16.mxu0 0
  %712 = vmatpush2.bf16.msra.mxu0 %v501
  %713 = vmatprep.subr.bf16.mxu0 0
  %714 = vmatpush2.bf16.msra.mxu0 %v500
  %715 = vmatprep.subr.bf16.mxu0 0
  %716 = vmatpush2.bf16.msra.mxu0 %v499
  %717 = vmatprep.subr.bf16.mxu0 0
  %718 = vmatpush2.bf16.msra.mxu0 %v498
  %719 = vmatprep.subr.bf16.mxu0 0
  %720 = vmatpush2.bf16.msra.mxu0 %v497
  %721 = vmatprep.mubr.bf16.mxu0 %v176
  %722 = vmatmul.mubr.bf16.gmra.mxu0 %v175
  %v723 = vpop.f32.mrf.mxu0
  %v724 = vadd.f32 %v684, %v723
  %v725 = vpop.f32.mrf.mxu0
  %v726 = vpop.f32.mrf.mxu0
  %v727 = vpop.f32.mrf.mxu0
  %728 = vdwg.mxu0
  %v729 = vld [vmem:[%s3] sm:$0x1]
  %v731 = vlaneseq
  %v732 = vshrl.u32 %v731, 7
  %v733 = vsub.s32 0, %v732
  %v734 = vrot.slane %v729, %v733
  %v736 = vmax.f32 %v724, %v734
  %737 = vst [vmem:[%s4] sm:$0xff] %v736
  // Predicated region
  $region18: #{traj_predictor_forward.21} parent=0 // pred_check
    _
  $region19: #{traj_predictor_forward.21} parent=0 // pred_check_branch
    %739 = sbr.rel (0) target = $region21
  $region20: #{traj_predictor_forward.21} parent=0 // pred_region
    _
  $region21: #{traj_predictor_forward.21} parent=0 // pred_fallthru
    _
  // Predicated region
  $region22: #{traj_predictor_forward.21} parent=0 // pred_check
    _
  $region23: #{traj_predictor_forward.21} parent=0 // pred_check_branch
    %741 = sbr.rel (0) target = $region25
  $region24: #{traj_predictor_forward.21} parent=0 // pred_region
    _
  $region25: #{traj_predictor_forward.21} parent=0 // pred_fallthru
    _

// kernel: traj_predictor_forward.22
$region0: #{traj_predictor_forward.22}
  #allocation0 [shape = 'u32[]', space=smem, size = 0x4, offset = 0x4, fixed_abs, tag = 'smem constant byte address 0x4 - core index']
  #allocation1 [shape = 'u32[144,128]{1,0:T(1,128)}', space=vmem, size = 0x12000, scoped, tag = 'internal scratch']
  %s0 = inlined_call_operand.vmem [shape: bf16[8,1152], index: 0, kind: input, shape index: {}]
  %s1 = inlined_call_operand.vmem [shape: bf16[1152,128], index: 1, kind: input, shape index: {}]
  %s2 = inlined_call_operand.vmem [shape: f32[1,128], index: 2, kind: input, shape index: {}]
  %s3 = inlined_call_operand.vmem [shape: f32[1,128], index: 3, kind: input, shape index: {}]
  %s4 = inlined_call_operand.vmem [shape: f32[8,128], index: 4, kind: output, shape index: {}]
  %s5 = sld [smem:[#allocation0]]
  $region26: #{traj_predictor_forward.22} parent=0
    _
  %s7 = ssub.s32 1, %s5
  %s8 = scalar_select 0, %s7, %s5
  // Predicated region
  $region2: #{traj_predictor_forward.22} parent=0 // pred_check
    _
  $region3: #{traj_predictor_forward.22} parent=0 // pred_check_branch
    %10 = sbr.rel (0) target = $region5
  $region4: #{traj_predictor_forward.22} parent=0 // pred_region
    _
  $region5: #{traj_predictor_forward.22} parent=0 // pred_fallthru
    _
  // Predicated region
  $region6: #{traj_predictor_forward.22} parent=0 // pred_check
    _
  $region7: #{traj_predictor_forward.22} parent=0 // pred_check_branch
    %12 = sbr.rel (0) target = $region9
  $region8: #{traj_predictor_forward.22} parent=0 // pred_region
    _
  $region9: #{traj_predictor_forward.22} parent=0 // pred_fallthru
    _
  // Predicated region
  $region10: #{traj_predictor_forward.22} parent=0 // pred_check
    _
  $region11: #{traj_predictor_forward.22} parent=0 // pred_check_branch
    %14 = sbr.rel (0) target = $region13
  $region12: #{traj_predictor_forward.22} parent=0 // pred_region
    _
  $region13: #{traj_predictor_forward.22} parent=0 // pred_fallthru
    _
  // Predicated region
  $region14: #{traj_predictor_forward.22} parent=0 // pred_check
    _
  $region15: #{traj_predictor_forward.22} parent=0 // pred_check_branch
    %16 = sbr.rel (0) target = $region17
  $region16: #{traj_predictor_forward.22} parent=0 // pred_region
    _
  $region17: #{traj_predictor_forward.22} parent=0 // pred_fallthru
    _
  %v18 = vld [vmem:[%s0] sm:$0xff]
  %v19 = vld [vmem:[%s0 + $0x8] sm:$0xff]
  %v20 = vld [vmem:[%s0 + $0x10] sm:$0xff]
  %v21 = vld [vmem:[%s0 + $0x18] sm:$0xff]
  %v22 = vld [vmem:[%s0 + $0x20] sm:$0xf]
  %v23 = vld [vmem:[%s1] sm:$0xf]
  %v24 = vld [vmem:[%s1 + $0x4] sm:$0xf]
  %v25 = vld [vmem:[%s1 + $0x8] sm:$0xf]
  %v26 = vld [vmem:[%s1 + $0xc] sm:$0xf]
  %v27 = vld [vmem:[%s1 + $0x10] sm:$0xf]
  %v28 = vld [vmem:[%s1 + $0x14] sm:$0xf]
  %v29 = vld [vmem:[%s1 + $0x18] sm:$0xf]
  %v30 = vld [vmem:[%s1 + $0x1c] sm:$0xf]
  %v31 = vld [vmem:[%s1 + $0x20] sm:$0xf]
  %v32 = vld [vmem:[%s1 + $0x24] sm:$0xf]
  %v33 = vld [vmem:[%s1 + $0x28] sm:$0xf]
  %v34 = vld [vmem:[%s1 + $0x2c] sm:$0xf]
  %v35 = vld [vmem:[%s1 + $0x30] sm:$0xf]
  %v36 = vld [vmem:[%s1 + $0x34] sm:$0xf]
  %v37 = vld [vmem:[%s1 + $0x38] sm:$0xf]
  %v38 = vld [vmem:[%s1 + $0x3c] sm:$0xf]
  %v39 = vld [vmem:[%s1 + $0x40] sm:$0xf]
  %v40 = vld [vmem:[%s1 + $0x44] sm:$0xf]
  %v41 = vld [vmem:[%s1 + $0x48] sm:$0xf]
  %v42 = vld [vmem:[%s1 + $0x4c] sm:$0xf]
  %v43 = vld [vmem:[%s1 + $0x50] sm:$0xf]
  %v44 = vld [vmem:[%s1 + $0x54] sm:$0xf]
  %v45 = vld [vmem:[%s1 + $0x58] sm:$0xf]
  %v46 = vld [vmem:[%s1 + $0x5c] sm:$0xf]
  %v47 = vld [vmem:[%s1 + $0x60] sm:$0xf]
  %v48 = vld [vmem:[%s1 + $0x64] sm:$0xf]
  %v49 = vld [vmem:[%s1 + $0x68] sm:$0xf]
  %v50 = vld [vmem:[%s1 + $0x6c] sm:$0xf]
  %v51 = vld [vmem:[%s1 + $0x70] sm:$0xf]
  %v52 = vld [vmem:[%s1 + $0x74] sm:$0xf]
  %v53 = vld [vmem:[%s1 + $0x78] sm:$0xf]
  %v54 = vld [vmem:[%s1 + $0x7c] sm:$0xf]
  %v55 = vld [vmem:[%s1 + $0x80] sm:$0xf]
  %v56 = vld [vmem:[%s1 + $0x84] sm:$0xf]
  %v57 = vld [vmem:[%s1 + $0x88] sm:$0xf]
  %v58 = vld [vmem:[%s1 + $0x8c] sm:$0xf]
  %v59 = vld [vmem:[%s1 + $0x90] sm:$0xf]
  %v60 = vld [vmem:[%s1 + $0x94] sm:$0xf]
  %v61 = vld [vmem:[%s1 + $0x98] sm:$0xf]
  %v62 = vld [vmem:[%s1 + $0x9c] sm:$0xf]
  %v63 = vld [vmem:[%s1 + $0xa0] sm:$0xf]
  %v64 = vld [vmem:[%s1 + $0xa4] sm:$0xf]
  %v65 = vld [vmem:[%s1 + $0xa8] sm:$0xf]
  %v66 = vld [vmem:[%s1 + $0xac] sm:$0xf]
  %v67 = vld [vmem:[%s1 + $0xb0] sm:$0xf]
  %v68 = vld [vmem:[%s1 + $0xb4] sm:$0xf]
  %v69 = vld [vmem:[%s1 + $0xb8] sm:$0xf]
  %v70 = vld [vmem:[%s1 + $0xbc] sm:$0xf]
  %v71 = vld [vmem:[%s1 + $0xc0] sm:$0xf]
  %v72 = vld [vmem:[%s1 + $0xc4] sm:$0xf]
  %v73 = vld [vmem:[%s1 + $0xc8] sm:$0xf]
  %v74 = vld [vmem:[%s1 + $0xcc] sm:$0xf]
  %v75 = vld [vmem:[%s1 + $0xd0] sm:$0xf]
  %v76 = vld [vmem:[%s1 + $0xd4] sm:$0xf]
  %v77 = vld [vmem:[%s1 + $0xd8] sm:$0xf]
  %v78 = vld [vmem:[%s1 + $0xdc] sm:$0xf]
  %v79 = vld [vmem:[%s1 + $0xe0] sm:$0xf]
  %v80 = vld [vmem:[%s1 + $0xe4] sm:$0xf]
  %v81 = vld [vmem:[%s1 + $0xe8] sm:$0xf]
  %v82 = vld [vmem:[%s1 + $0xec] sm:$0xf]
  %v83 = vld [vmem:[%s1 + $0xf0] sm:$0xf]
  %v84 = vld [vmem:[%s1 + $0xf4] sm:$0xf]
  %v85 = vld [vmem:[%s1 + $0xf8] sm:$0xf]
  %v86 = vld [vmem:[%s1 + $0xfc] sm:$0xf]
  %v87 = vld [vmem:[%s1 + $0x100] sm:$0xf]
  %v88 = vld [vmem:[%s1 + $0x104] sm:$0xf]
  %v89 = vld [vmem:[%s1 + $0x108] sm:$0xf]
  %v90 = vld [vmem:[%s1 + $0x10c] sm:$0xf]
  %v91 = vld [vmem:[%s1 + $0x110] sm:$0xf]
  %v92 = vld [vmem:[%s1 + $0x114] sm:$0xf]
  %v93 = vld [vmem:[%s1 + $0x118] sm:$0xf]
  %v94 = vld [vmem:[%s1 + $0x11c] sm:$0xf]
  %v95 = vld [vmem:[%s1 + $0x120] sm:$0xf]
  %v96 = vld [vmem:[%s1 + $0x124] sm:$0xf]
  %v97 = vld [vmem:[%s1 + $0x128] sm:$0xf]
  %v98 = vld [vmem:[%s1 + $0x12c] sm:$0xf]
  %v99 = vld [vmem:[%s1 + $0x130] sm:$0xf]
  %v100 = vld [vmem:[%s1 + $0x134] sm:$0xf]
  %v101 = vld [vmem:[%s1 + $0x138] sm:$0xf]
  %v102 = vld [vmem:[%s1 + $0x13c] sm:$0xf]
  %v103 = vld [vmem:[%s1 + $0x140] sm:$0xf]
  %v104 = vld [vmem:[%s1 + $0x144] sm:$0xf]
  %v105 = vld [vmem:[%s1 + $0x148] sm:$0xf]
  %v106 = vld [vmem:[%s1 + $0x14c] sm:$0xf]
  %v107 = vld [vmem:[%s1 + $0x150] sm:$0xf]
  %v108 = vld [vmem:[%s1 + $0x154] sm:$0xf]
  %v109 = vld [vmem:[%s1 + $0x158] sm:$0xf]
  %v110 = vld [vmem:[%s1 + $0x15c] sm:$0xf]
  %v111 = vld [vmem:[%s1 + $0x160] sm:$0xf]
  %v112 = vld [vmem:[%s1 + $0x164] sm:$0xf]
  %v113 = vld [vmem:[%s1 + $0x168] sm:$0xf]
  %v114 = vld [vmem:[%s1 + $0x16c] sm:$0xf]
  %v115 = vld [vmem:[%s1 + $0x170] sm:$0xf]
  %v116 = vld [vmem:[%s1 + $0x174] sm:$0xf]
  %v117 = vld [vmem:[%s1 + $0x178] sm:$0xf]
  %v118 = vld [vmem:[%s1 + $0x17c] sm:$0xf]
  %v119 = vld [vmem:[%s1 + $0x180] sm:$0xf]
  %v120 = vld [vmem:[%s1 + $0x184] sm:$0xf]
  %v121 = vld [vmem:[%s1 + $0x188] sm:$0xf]
  %v122 = vld [vmem:[%s1 + $0x18c] sm:$0xf]
  %v123 = vld [vmem:[%s1 + $0x190] sm:$0xf]
  %v124 = vld [vmem:[%s1 + $0x194] sm:$0xf]
  %v125 = vld [vmem:[%s1 + $0x198] sm:$0xf]
  %v126 = vld [vmem:[%s1 + $0x19c] sm:$0xf]
  %v127 = vld [vmem:[%s1 + $0x1a0] sm:$0xf]
  %v128 = vld [vmem:[%s1 + $0x1a4] sm:$0xf]
  %v129 = vld [vmem:[%s1 + $0x1a8] sm:$0xf]
  %v130 = vld [vmem:[%s1 + $0x1ac] sm:$0xf]
  %v131 = vld [vmem:[%s1 + $0x1b0] sm:$0xf]
  %v132 = vld [vmem:[%s1 + $0x1b4] sm:$0xf]
  %v133 = vld [vmem:[%s1 + $0x1b8] sm:$0xf]
  %v134 = vld [vmem:[%s1 + $0x1bc] sm:$0xf]
  %v135 = vld [vmem:[%s1 + $0x1c0] sm:$0xf]
  %v136 = vld [vmem:[%s1 + $0x1c4] sm:$0xf]
  %v137 = vld [vmem:[%s1 + $0x1c8] sm:$0xf]
  %v138 = vld [vmem:[%s1 + $0x1cc] sm:$0xf]
  %v139 = vld [vmem:[%s1 + $0x1d0] sm:$0xf]
  %v140 = vld [vmem:[%s1 + $0x1d4] sm:$0xf]
  %v141 = vld [vmem:[%s1 + $0x1d8] sm:$0xf]
  %v142 = vld [vmem:[%s1 + $0x1dc] sm:$0xf]
  %v143 = vld [vmem:[%s1 + $0x1e0] sm:$0xf]
  %v144 = vld [vmem:[%s1 + $0x1e4] sm:$0xf]
  %v145 = vld [vmem:[%s1 + $0x1e8] sm:$0xf]
  %v146 = vld [vmem:[%s1 + $0x1ec] sm:$0xf]
  %v147 = vld [vmem:[%s1 + $0x1f0] sm:$0xf]
  %v148 = vld [vmem:[%s1 + $0x1f4] sm:$0xf]
  %v149 = vld [vmem:[%s1 + $0x1f8] sm:$0xf]
  %v150 = vld [vmem:[%s1 + $0x1fc] sm:$0xf]
  %v151 = vld [vmem:[%s1 + $0x200] sm:$0xf]
  %v152 = vld [vmem:[%s1 + $0x204] sm:$0xf]
  %v153 = vld [vmem:[%s1 + $0x208] sm:$0xf]
  %v154 = vld [vmem:[%s1 + $0x20c] sm:$0xf]
  %v155 = vld [vmem:[%s1 + $0x210] sm:$0xf]
  %v156 = vld [vmem:[%s1 + $0x214] sm:$0xf]
  %v157 = vld [vmem:[%s1 + $0x218] sm:$0xf]
  %v158 = vld [vmem:[%s1 + $0x21c] sm:$0xf]
  %v159 = vld [vmem:[%s1 + $0x220] sm:$0xf]
  %v160 = vld [vmem:[%s1 + $0x224] sm:$0xf]
  %v161 = vld [vmem:[%s1 + $0x228] sm:$0xf]
  %v162 = vld [vmem:[%s1 + $0x22c] sm:$0xf]
  %v163 = vld [vmem:[%s1 + $0x230] sm:$0xf]
  %v164 = vld [vmem:[%s1 + $0x234] sm:$0xf]
  %v165 = vld [vmem:[%s1 + $0x238] sm:$0xf]
  %v166 = vld [vmem:[%s1 + $0x23c] sm:$0xf]
  %v167 = vld [vmem:[%s2] sm:$0x1]
  %v169 = vlaneseq
  %v170 = vshrl.u32 %v169, 7
  %v171 = vsub.s32 0, %v170
  %v172 = vrot.slane %v167, %v171
  %v179 = vunpack.c.l.b16 %v18
  %v180 = vunpack.c.h.b16 %v18
  %v181 = vunpack.c.l.b16 %v19
  %v182 = vunpack.c.h.b16 %v19
  %v183 = vunpack.c.l.b16 %v20
  %v184 = vunpack.c.h.b16 %v20
  %v185 = vunpack.c.l.b16 %v21
  %v186 = vunpack.c.h.b16 %v21
  %v187 = vunpack.c.l.b16 %v22
  %v188 = vpack.c.b16 %v179, %v179
  %v189 = vpack.c.b16 %v180, %v180
  %v190 = vpack.c.b16 %v181, %v181
  %v191 = vpack.c.b16 %v182, %v182
  %v192 = vpack.c.b16 %v183, %v183
  %v193 = vpack.c.b16 %v184, %v184
  %v194 = vpack.c.b16 %v185, %v185
  %v195 = vpack.c.b16 %v186, %v186
  %v196 = vpack.c.b16 %v187, %v187
  %v350 = vunpack.c.l.b16 %v23
  %v351 = vunpack.c.l.b16 %v24
  %v352 = vunpack.c.l.b16 %v25
  %v353 = vunpack.c.l.b16 %v26
  %v354 = vunpack.c.l.b16 %v27
  %v355 = vunpack.c.l.b16 %v28
  %v356 = vunpack.c.l.b16 %v29
  %v357 = vunpack.c.l.b16 %v30
  %v358 = vunpack.c.l.b16 %v31
  %v359 = vunpack.c.l.b16 %v32
  %v360 = vunpack.c.l.b16 %v33
  %v361 = vunpack.c.l.b16 %v34
  %v362 = vunpack.c.l.b16 %v35
  %v363 = vunpack.c.l.b16 %v36
  %v364 = vunpack.c.l.b16 %v37
  %v365 = vunpack.c.l.b16 %v38
  %v366 = vunpack.c.l.b16 %v39
  %v367 = vunpack.c.l.b16 %v40
  %v368 = vunpack.c.l.b16 %v41
  %v369 = vunpack.c.l.b16 %v42
  %v370 = vunpack.c.l.b16 %v43
  %v371 = vunpack.c.l.b16 %v44
  %v372 = vunpack.c.l.b16 %v45
  %v373 = vunpack.c.l.b16 %v46
  %v374 = vunpack.c.l.b16 %v47
  %v375 = vunpack.c.l.b16 %v48
  %v376 = vunpack.c.l.b16 %v49
  %v377 = vunpack.c.l.b16 %v50
  %v378 = vunpack.c.l.b16 %v51
  %v379 = vunpack.c.l.b16 %v52
  %v380 = vunpack.c.l.b16 %v53
  %v381 = vunpack.c.l.b16 %v54
  %v382 = vunpack.c.l.b16 %v55
  %v383 = vunpack.c.l.b16 %v56
  %v384 = vunpack.c.l.b16 %v57
  %v385 = vunpack.c.l.b16 %v58
  %v386 = vunpack.c.l.b16 %v59
  %v387 = vunpack.c.l.b16 %v60
  %v388 = vunpack.c.l.b16 %v61
  %v389 = vunpack.c.l.b16 %v62
  %v390 = vunpack.c.l.b16 %v63
  %v391 = vunpack.c.l.b16 %v64
  %v392 = vunpack.c.l.b16 %v65
  %v393 = vunpack.c.l.b16 %v66
  %v394 = vunpack.c.l.b16 %v67
  %v395 = vunpack.c.l.b16 %v68
  %v396 = vunpack.c.l.b16 %v69
  %v397 = vunpack.c.l.b16 %v70
  %v398 = vunpack.c.l.b16 %v71
  %v399 = vunpack.c.l.b16 %v72
  %v400 = vunpack.c.l.b16 %v73
  %v401 = vunpack.c.l.b16 %v74
  %v402 = vunpack.c.l.b16 %v75
  %v403 = vunpack.c.l.b16 %v76
  %v404 = vunpack.c.l.b16 %v77
  %v405 = vunpack.c.l.b16 %v78
  %v406 = vunpack.c.l.b16 %v79
  %v407 = vunpack.c.l.b16 %v80
  %v408 = vunpack.c.l.b16 %v81
  %v409 = vunpack.c.l.b16 %v82
  %v410 = vunpack.c.l.b16 %v83
  %v411 = vunpack.c.l.b16 %v84
  %v412 = vunpack.c.l.b16 %v85
  %v413 = vunpack.c.l.b16 %v86
  %v414 = vunpack.c.l.b16 %v87
  %v415 = vunpack.c.l.b16 %v88
  %v416 = vunpack.c.l.b16 %v89
  %v417 = vunpack.c.l.b16 %v90
  %v418 = vunpack.c.l.b16 %v91
  %v419 = vunpack.c.l.b16 %v92
  %v420 = vunpack.c.l.b16 %v93
  %v421 = vunpack.c.l.b16 %v94
  %v422 = vunpack.c.l.b16 %v95
  %v423 = vunpack.c.l.b16 %v96
  %v424 = vunpack.c.l.b16 %v97
  %v425 = vunpack.c.l.b16 %v98
  %v426 = vunpack.c.l.b16 %v99
  %v427 = vunpack.c.l.b16 %v100
  %v428 = vunpack.c.l.b16 %v101
  %v429 = vunpack.c.l.b16 %v102
  %v430 = vunpack.c.l.b16 %v103
  %v431 = vunpack.c.l.b16 %v104
  %v432 = vunpack.c.l.b16 %v105
  %v433 = vunpack.c.l.b16 %v106
  %v434 = vunpack.c.l.b16 %v107
  %v435 = vunpack.c.l.b16 %v108
  %v436 = vunpack.c.l.b16 %v109
  %v437 = vunpack.c.l.b16 %v110
  %v438 = vunpack.c.l.b16 %v111
  %v439 = vunpack.c.l.b16 %v112
  %v440 = vunpack.c.l.b16 %v113
  %v441 = vunpack.c.l.b16 %v114
  %v442 = vunpack.c.l.b16 %v115
  %v443 = vunpack.c.l.b16 %v116
  %v444 = vunpack.c.l.b16 %v117
  %v445 = vunpack.c.l.b16 %v118
  %v446 = vunpack.c.l.b16 %v119
  %v447 = vunpack.c.l.b16 %v120
  %v448 = vunpack.c.l.b16 %v121
  %v449 = vunpack.c.l.b16 %v122
  %v450 = vunpack.c.l.b16 %v123
  %v451 = vunpack.c.l.b16 %v124
  %v452 = vunpack.c.l.b16 %v125
  %v453 = vunpack.c.l.b16 %v126
  %v454 = vunpack.c.l.b16 %v127
  %v455 = vunpack.c.l.b16 %v128
  %v456 = vunpack.c.l.b16 %v129
  %v457 = vunpack.c.l.b16 %v130
  %v458 = vunpack.c.l.b16 %v131
  %v459 = vunpack.c.l.b16 %v132
  %v460 = vunpack.c.l.b16 %v133
  %v461 = vunpack.c.l.b16 %v134
  %v462 = vunpack.c.l.b16 %v135
  %v463 = vunpack.c.l.b16 %v136
  %v464 = vunpack.c.l.b16 %v137
  %v465 = vunpack.c.l.b16 %v138
  %v466 = vunpack.c.l.b16 %v139
  %v467 = vunpack.c.l.b16 %v140
  %v468 = vunpack.c.l.b16 %v141
  %v469 = vunpack.c.l.b16 %v142
  %v470 = vunpack.c.l.b16 %v143
  %v471 = vunpack.c.l.b16 %v144
  %v472 = vunpack.c.l.b16 %v145
  %v473 = vunpack.c.l.b16 %v146
  %v474 = vunpack.c.l.b16 %v147
  %v475 = vunpack.c.l.b16 %v148
  %v476 = vunpack.c.l.b16 %v149
  %v477 = vunpack.c.l.b16 %v150
  %v478 = vunpack.c.l.b16 %v151
  %v479 = vunpack.c.l.b16 %v152
  %v480 = vunpack.c.l.b16 %v153
  %v481 = vunpack.c.l.b16 %v154
  %v482 = vunpack.c.l.b16 %v155
  %v483 = vunpack.c.l.b16 %v156
  %v484 = vunpack.c.l.b16 %v157
  %v485 = vunpack.c.l.b16 %v158
  %v486 = vunpack.c.l.b16 %v159
  %v487 = vunpack.c.l.b16 %v160
  %v488 = vunpack.c.l.b16 %v161
  %v489 = vunpack.c.l.b16 %v162
  %v490 = vunpack.c.l.b16 %v163
  %v491 = vunpack.c.l.b16 %v164
  %v492 = vunpack.c.l.b16 %v165
  %v493 = vunpack.c.l.b16 %v166
  %v494 = vpack.c.b16 %v351, %v350
  %v495 = vpack.c.b16 %v353, %v352
  %v496 = vpack.c.b16 %v355, %v354
  %v497 = vpack.c.b16 %v357, %v356
  %v498 = vpack.c.b16 %v359, %v358
  %v499 = vpack.c.b16 %v361, %v360
  %v500 = vpack.c.b16 %v363, %v362
  %v501 = vpack.c.b16 %v365, %v364
  %v502 = vpack.c.b16 %v367, %v366
  %v503 = vpack.c.b16 %v369, %v368
  %v504 = vpack.c.b16 %v371, %v370
  %v505 = vpack.c.b16 %v373, %v372
  %v506 = vpack.c.b16 %v375, %v374
  %v507 = vpack.c.b16 %v377, %v376
  %v508 = vpack.c.b16 %v379, %v378
  %v509 = vpack.c.b16 %v381, %v380
  %v510 = vpack.c.b16 %v383, %v382
  %v511 = vpack.c.b16 %v385, %v384
  %v512 = vpack.c.b16 %v387, %v386
  %v513 = vpack.c.b16 %v389, %v388
  %v514 = vpack.c.b16 %v391, %v390
  %v515 = vpack.c.b16 %v393, %v392
  %v516 = vpack.c.b16 %v395, %v394
  %v517 = vpack.c.b16 %v397, %v396
  %v518 = vpack.c.b16 %v399, %v398
  %v519 = vpack.c.b16 %v401, %v400
  %v520 = vpack.c.b16 %v403, %v402
  %v521 = vpack.c.b16 %v405, %v404
  %v522 = vpack.c.b16 %v407, %v406
  %v523 = vpack.c.b16 %v409, %v408
  %v524 = vpack.c.b16 %v411, %v410
  %v525 = vpack.c.b16 %v413, %v412
  %v526 = vpack.c.b16 %v415, %v414
  %v527 = vpack.c.b16 %v417, %v416
  %v528 = vpack.c.b16 %v419, %v418
  %v529 = vpack.c.b16 %v421, %v420
  %v530 = vpack.c.b16 %v423, %v422
  %v531 = vpack.c.b16 %v425, %v424
  %v532 = vpack.c.b16 %v427, %v426
  %v533 = vpack.c.b16 %v429, %v428
  %v534 = vpack.c.b16 %v431, %v430
  %v535 = vpack.c.b16 %v433, %v432
  %v536 = vpack.c.b16 %v435, %v434
  %v537 = vpack.c.b16 %v437, %v436
  %v538 = vpack.c.b16 %v439, %v438
  %v539 = vpack.c.b16 %v441, %v440
  %v540 = vpack.c.b16 %v443, %v442
  %v541 = vpack.c.b16 %v445, %v444
  %v542 = vpack.c.b16 %v447, %v446
  %v543 = vpack.c.b16 %v449, %v448
  %v544 = vpack.c.b16 %v451, %v450
  %v545 = vpack.c.b16 %v453, %v452
  %v546 = vpack.c.b16 %v455, %v454
  %v547 = vpack.c.b16 %v457, %v456
  %v548 = vpack.c.b16 %v459, %v458
  %v549 = vpack.c.b16 %v461, %v460
  %v550 = vpack.c.b16 %v463, %v462
  %v551 = vpack.c.b16 %v465, %v464
  %v552 = vpack.c.b16 %v467, %v466
  %v553 = vpack.c.b16 %v469, %v468
  %v554 = vpack.c.b16 %v471, %v470
  %v555 = vpack.c.b16 %v473, %v472
  %v556 = vpack.c.b16 %v475, %v474
  %v557 = vpack.c.b16 %v477, %v476
  %v558 = vpack.c.b16 %v479, %v478
  %v559 = vpack.c.b16 %v481, %v480
  %v560 = vpack.c.b16 %v483, %v482
  %v561 = vpack.c.b16 %v485, %v484
  %v562 = vpack.c.b16 %v487, %v486
  %v563 = vpack.c.b16 %v489, %v488
  %v564 = vpack.c.b16 %v491, %v490
  %v565 = vpack.c.b16 %v493, %v492
  %638 = vmatprep.subr.bf16.mxu0 0
  %639 = vmatpush1.bf16.msra.mxu0 %v501
  %640 = vmatprep.subr.bf16.mxu0 0
  %641 = vmatpush1.bf16.msra.mxu0 %v500
  %642 = vmatprep.subr.bf16.mxu0 0
  %643 = vmatpush1.bf16.msra.mxu0 %v499
  %644 = vmatprep.subr.bf16.mxu0 0
  %645 = vmatpush1.bf16.msra.mxu0 %v498
  %646 = vmatprep.subr.bf16.mxu0 0
  %647 = vmatpush1.bf16.msra.mxu0 %v497
  %648 = vmatprep.subr.bf16.mxu0 0
  %649 = vmatpush1.bf16.msra.mxu0 %v496
  %650 = vmatprep.subr.bf16.mxu0 0
  %651 = vmatpush1.bf16.msra.mxu0 %v495
  %652 = vmatprep.subr.bf16.mxu0 0
  %653 = vmatpush1.bf16.msra.mxu0 %v494
  %654 = vmatprep.subr.bf16.mxu0 0
  %655 = vmatpush2.bf16.msra.mxu0 %v509
  %656 = vmatprep.subr.bf16.mxu0 0
  %657 = vmatpush2.bf16.msra.mxu0 %v508
  %658 = vmatprep.subr.bf16.mxu0 0
  %659 = vmatpush2.bf16.msra.mxu0 %v507
  %660 = vmatprep.subr.bf16.mxu0 0
  %661 = vmatpush2.bf16.msra.mxu0 %v506
  %662 = vmatprep.subr.bf16.mxu0 0
  %663 = vmatpush2.bf16.msra.mxu0 %v505
  %664 = vmatprep.subr.bf16.mxu0 0
  %665 = vmatpush2.bf16.msra.mxu0 %v504
  %666 = vmatprep.subr.bf16.mxu0 0
  %667 = vmatpush2.bf16.msra.mxu0 %v503
  %668 = vmatprep.subr.bf16.mxu0 0
  %669 = vmatpush2.bf16.msra.mxu0 %v502
  %670 = vmatprep.mubr.bf16.mxu0 %v189
  %671 = vmatmul.mubr.bf16.gmra.mxu0 %v188
  %v672 = vpop.f32.mrf.mxu0
  %v673 = vadd.f32 %v172, %v672
  %v674 = vpop.f32.mrf.mxu0
  %v675 = vpop.f32.mrf.mxu0
  %v676 = vpop.f32.mrf.mxu0
  %677 = vdwg.mxu0
  %678 = vmatprep.subr.bf16.mxu0 0
  %679 = vmatpush1.bf16.msra.mxu0 %v517
  %680 = vmatprep.subr.bf16.mxu0 0
  %681 = vmatpush1.bf16.msra.mxu0 %v516
  %682 = vmatprep.subr.bf16.mxu0 0
  %683 = vmatpush1.bf16.msra.mxu0 %v515
  %684 = vmatprep.subr.bf16.mxu0 0
  %685 = vmatpush1.bf16.msra.mxu0 %v514
  %686 = vmatprep.subr.bf16.mxu0 0
  %687 = vmatpush1.bf16.msra.mxu0 %v513
  %688 = vmatprep.subr.bf16.mxu0 0
  %689 = vmatpush1.bf16.msra.mxu0 %v512
  %690 = vmatprep.subr.bf16.mxu0 0
  %691 = vmatpush1.bf16.msra.mxu0 %v511
  %692 = vmatprep.subr.bf16.mxu0 0
  %693 = vmatpush1.bf16.msra.mxu0 %v510
  %694 = vmatprep.subr.bf16.mxu0 0
  %695 = vmatpush2.bf16.msra.mxu0 %v525
  %696 = vmatprep.subr.bf16.mxu0 0
  %697 = vmatpush2.bf16.msra.mxu0 %v524
  %698 = vmatprep.subr.bf16.mxu0 0
  %699 = vmatpush2.bf16.msra.mxu0 %v523
  %700 = vmatprep.subr.bf16.mxu0 0
  %701 = vmatpush2.bf16.msra.mxu0 %v522
  %702 = vmatprep.subr.bf16.mxu0 0
  %703 = vmatpush2.bf16.msra.mxu0 %v521
  %704 = vmatprep.subr.bf16.mxu0 0
  %705 = vmatpush2.bf16.msra.mxu0 %v520
  %706 = vmatprep.subr.bf16.mxu0 0
  %707 = vmatpush2.bf16.msra.mxu0 %v519
  %708 = vmatprep.subr.bf16.mxu0 0
  %709 = vmatpush2.bf16.msra.mxu0 %v518
  %710 = vmatprep.mubr.bf16.mxu0 %v191
  %711 = vmatmul.mubr.bf16.gmra.mxu0 %v190
  %v712 = vpop.f32.mrf.mxu0
  %v713 = vadd.f32 %v673, %v712
  %v714 = vpop.f32.mrf.mxu0
  %v715 = vpop.f32.mrf.mxu0
  %v716 = vpop.f32.mrf.mxu0
  %717 = vdwg.mxu0
  %718 = vmatprep.subr.bf16.mxu0 0
  %719 = vmatpush1.bf16.msra.mxu0 %v533
  %720 = vmatprep.subr.bf16.mxu0 0
  %721 = vmatpush1.bf16.msra.mxu0 %v532
  %722 = vmatprep.subr.bf16.mxu0 0
  %723 = vmatpush1.bf16.msra.mxu0 %v531
  %724 = vmatprep.subr.bf16.mxu0 0
  %725 = vmatpush1.bf16.msra.mxu0 %v530
  %726 = vmatprep.subr.bf16.mxu0 0
  %727 = vmatpush1.bf16.msra.mxu0 %v529
  %728 = vmatprep.subr.bf16.mxu0 0
  %729 = vmatpush1.bf16.msra.mxu0 %v528
  %730 = vmatprep.subr.bf16.mxu0 0
  %731 = vmatpush1.bf16.msra.mxu0 %v527
  %732 = vmatprep.subr.bf16.mxu0 0
  %733 = vmatpush1.bf16.msra.mxu0 %v526
  %734 = vmatprep.subr.bf16.mxu0 0
  %735 = vmatpush2.bf16.msra.mxu0 %v541
  %736 = vmatprep.subr.bf16.mxu0 0
  %737 = vmatpush2.bf16.msra.mxu0 %v540
  %738 = vmatprep.subr.bf16.mxu0 0
  %739 = vmatpush2.bf16.msra.mxu0 %v539
  %740 = vmatprep.subr.bf16.mxu0 0
  %741 = vmatpush2.bf16.msra.mxu0 %v538
  %742 = vmatprep.subr.bf16.mxu0 0
  %743 = vmatpush2.bf16.msra.mxu0 %v537
  %744 = vmatprep.subr.bf16.mxu0 0
  %745 = vmatpush2.bf16.msra.mxu0 %v536
  %746 = vmatprep.subr.bf16.mxu0 0
  %747 = vmatpush2.bf16.msra.mxu0 %v535
  %748 = vmatprep.subr.bf16.mxu0 0
  %749 = vmatpush2.bf16.msra.mxu0 %v534
  %750 = vmatprep.mubr.bf16.mxu0 %v193
  %751 = vmatmul.mubr.bf16.gmra.mxu0 %v192
  %v752 = vpop.f32.mrf.mxu0
  %v753 = vadd.f32 %v713, %v752
  %v754 = vpop.f32.mrf.mxu0
  %v755 = vpop.f32.mrf.mxu0
  %v756 = vpop.f32.mrf.mxu0
  %757 = vdwg.mxu0
  %758 = vmatprep.subr.bf16.mxu0 0
  %759 = vmatpush1.bf16.msra.mxu0 %v549
  %760 = vmatprep.subr.bf16.mxu0 0
  %761 = vmatpush1.bf16.msra.mxu0 %v548
  %762 = vmatprep.subr.bf16.mxu0 0
  %763 = vmatpush1.bf16.msra.mxu0 %v547
  %764 = vmatprep.subr.bf16.mxu0 0
  %765 = vmatpush1.bf16.msra.mxu0 %v546
  %766 = vmatprep.subr.bf16.mxu0 0
  %767 = vmatpush1.bf16.msra.mxu0 %v545
  %768 = vmatprep.subr.bf16.mxu0 0
  %769 = vmatpush1.bf16.msra.mxu0 %v544
  %770 = vmatprep.subr.bf16.mxu0 0
  %771 = vmatpush1.bf16.msra.mxu0 %v543
  %772 = vmatprep.subr.bf16.mxu0 0
  %773 = vmatpush1.bf16.msra.mxu0 %v542
  %774 = vmatprep.subr.bf16.mxu0 0
  %775 = vmatpush2.bf16.msra.mxu0 %v557
  %776 = vmatprep.subr.bf16.mxu0 0
  %777 = vmatpush2.bf16.msra.mxu0 %v556
  %778 = vmatprep.subr.bf16.mxu0 0
  %779 = vmatpush2.bf16.msra.mxu0 %v555
  %780 = vmatprep.subr.bf16.mxu0 0
  %781 = vmatpush2.bf16.msra.mxu0 %v554
  %782 = vmatprep.subr.bf16.mxu0 0
  %783 = vmatpush2.bf16.msra.mxu0 %v553
  %784 = vmatprep.subr.bf16.mxu0 0
  %785 = vmatpush2.bf16.msra.mxu0 %v552
  %786 = vmatprep.subr.bf16.mxu0 0
  %787 = vmatpush2.bf16.msra.mxu0 %v551
  %788 = vmatprep.subr.bf16.mxu0 0
  %789 = vmatpush2.bf16.msra.mxu0 %v550
  %790 = vmatprep.mubr.bf16.mxu0 %v195
  %791 = vmatmul.mubr.bf16.gmra.mxu0 %v194
  %v792 = vpop.f32.mrf.mxu0
  %v793 = vadd.f32 %v753, %v792
  %v794 = vpop.f32.mrf.mxu0
  %v795 = vpop.f32.mrf.mxu0
  %v796 = vpop.f32.mrf.mxu0
  %797 = vdwg.mxu0
  %798 = vmatprep.subr.bf16.mxu0 0
  %799 = vmatpush1.bf16.msra.mxu0 %v565
  %800 = vmatprep.subr.bf16.mxu0 0
  %801 = vmatpush1.bf16.msra.mxu0 %v564
  %802 = vmatprep.subr.bf16.mxu0 0
  %803 = vmatpush1.bf16.msra.mxu0 %v563
  %804 = vmatprep.subr.bf16.mxu0 0
  %805 = vmatpush1.bf16.msra.mxu0 %v562
  %806 = vmatprep.subr.bf16.mxu0 0
  %807 = vmatpush1.bf16.msra.mxu0 %v561
  %808 = vmatprep.subr.bf16.mxu0 0
  %809 = vmatpush1.bf16.msra.mxu0 %v560
  %810 = vmatprep.subr.bf16.mxu0 0
  %811 = vmatpush1.bf16.msra.mxu0 %v559
  %812 = vmatprep.subr.bf16.mxu0 0
  %813 = vmatpush1.bf16.msra.mxu0 %v558
  %814 = vmatprep.subr.bf16.mxu0 0
  %815 = vmatpush2.bf16.msra.mxu0 0
  %816 = vmatprep.subr.bf16.mxu0 0
  %817 = vmatpush2.bf16.msra.mxu0 0
  %818 = vmatprep.subr.bf16.mxu0 0
  %819 = vmatpush2.bf16.msra.mxu0 0
  %820 = vmatprep.subr.bf16.mxu0 0
  %821 = vmatpush2.bf16.msra.mxu0 0
  %822 = vmatprep.subr.bf16.mxu0 0
  %823 = vmatpush2.bf16.msra.mxu0 0
  %824 = vmatprep.subr.bf16.mxu0 0
  %825 = vmatpush2.bf16.msra.mxu0 0
  %826 = vmatprep.subr.bf16.mxu0 0
  %827 = vmatpush2.bf16.msra.mxu0 0
  %828 = vmatprep.subr.bf16.mxu0 0
  %829 = vmatpush2.bf16.msra.mxu0 0
  %830 = vmatprep.mubr.bf16.mxu0 0
  %831 = vmatmul.mubr.bf16.gmra.mxu0 %v196
  %v832 = vpop.f32.mrf.mxu0
  %v833 = vadd.f32 %v793, %v832
  %v834 = vpop.f32.mrf.mxu0
  %v835 = vpop.f32.mrf.mxu0
  %v836 = vpop.f32.mrf.mxu0
  %837 = vdwg.mxu0
  %v838 = vld [vmem:[%s3] sm:$0x1]
  %v840 = vlaneseq
  %v841 = vshrl.u32 %v840, 7
  %v842 = vsub.s32 0, %v841
  %v843 = vrot.slane %v838, %v842
  %v845 = vmax.f32 %v833, %v843
  %846 = vst [vmem:[%s4] sm:$0xff] %v845
  // Predicated region
  $region18: #{traj_predictor_forward.22} parent=0 // pred_check
    _
  $region19: #{traj_predictor_forward.22} parent=0 // pred_check_branch
    %848 = sbr.rel (0) target = $region21
  $region20: #{traj_predictor_forward.22} parent=0 // pred_region
    _
  $region21: #{traj_predictor_forward.22} parent=0 // pred_fallthru
    _
  // Predicated region
  $region22: #{traj_predictor_forward.22} parent=0 // pred_check
    _
  $region23: #{traj_predictor_forward.22} parent=0 // pred_check_branch
    %850 = sbr.rel (0) target = $region25
  $region24: #{traj_predictor_forward.22} parent=0 // pred_region
    _
  $region25: #{traj_predictor_forward.22} parent=0 // pred_fallthru
    _

// kernel: traj_predictor_forward.23
$region0: #{traj_predictor_forward.23}
  #allocation0 [shape = 'u32[]', space=smem, size = 0x4, offset = 0x4, fixed_abs, tag = 'smem constant byte address 0x4 - core index']
  #allocation1 [shape = 'u32[144,128]{1,0:T(1,128)}', space=vmem, size = 0x12000, scoped, tag = 'internal scratch']
  %s0 = inlined_call_operand.vmem [shape: bf16[8,1152], index: 0, kind: input, shape index: {}]
  %s1 = inlined_call_operand.vmem [shape: bf16[1152,384], index: 1, kind: input, shape index: {}]
  %s2 = inlined_call_operand.vmem [shape: f32[1,384], index: 2, kind: input, shape index: {}]
  %s3 = inlined_call_operand.vmem [shape: f32[1,384], index: 3, kind: input, shape index: {}]
  %s4 = inlined_call_operand.vmem [shape: f32[8,384], index: 4, kind: output, shape index: {}]
  %s5 = sld [smem:[#allocation0]]
  $region26: #{traj_predictor_forward.23} parent=0
    _
  %s7 = ssub.s32 1, %s5
  %s8 = scalar_select 0, %s7, %s5
  // Predicated region
  $region2: #{traj_predictor_forward.23} parent=0 // pred_check
    _
  $region3: #{traj_predictor_forward.23} parent=0 // pred_check_branch
    %10 = sbr.rel (0) target = $region5
  $region4: #{traj_predictor_forward.23} parent=0 // pred_region
    _
  $region5: #{traj_predictor_forward.23} parent=0 // pred_fallthru
    _
  // Predicated region
  $region6: #{traj_predictor_forward.23} parent=0 // pred_check
    _
  $region7: #{traj_predictor_forward.23} parent=0 // pred_check_branch
    %12 = sbr.rel (0) target = $region9
  $region8: #{traj_predictor_forward.23} parent=0 // pred_region
    _
  $region9: #{traj_predictor_forward.23} parent=0 // pred_fallthru
    _
  // Predicated region
  $region10: #{traj_predictor_forward.23} parent=0 // pred_check
    _
  $region11: #{traj_predictor_forward.23} parent=0 // pred_check_branch
    %14 = sbr.rel (0) target = $region13
  $region12: #{traj_predictor_forward.23} parent=0 // pred_region
    _
  $region13: #{traj_predictor_forward.23} parent=0 // pred_fallthru
    _
  // Predicated region
  $region14: #{traj_predictor_forward.23} parent=0 // pred_check
    _
  $region15: #{traj_predictor_forward.23} parent=0 // pred_check_branch
    %16 = sbr.rel (0) target = $region17
  $region16: #{traj_predictor_forward.23} parent=0 // pred_region
    _
  $region17: #{traj_predictor_forward.23} parent=0 // pred_fallthru
    _
  %v18 = vld [vmem:[%s0] sm:$0xff]
  %v19 = vld [vmem:[%s0 + $0x8] sm:$0xff]
  %v20 = vld [vmem:[%s0 + $0x10] sm:$0xff]
  %v21 = vld [vmem:[%s0 + $0x18] sm:$0xff]
  %v22 = vld [vmem:[%s0 + $0x20] sm:$0xf]
  %v23 = vld [vmem:[%s1] sm:$0xff]
  %v24 = vld [vmem:[%s1 + $0x8] sm:$0xf]
  %v25 = vld [vmem:[%s1 + $0xc] sm:$0xff]
  %v26 = vld [vmem:[%s1 + $0x14] sm:$0xf]
  %v27 = vld [vmem:[%s1 + $0x18] sm:$0xff]
  %v28 = vld [vmem:[%s1 + $0x20] sm:$0xf]
  %v29 = vld [vmem:[%s1 + $0x24] sm:$0xff]
  %v30 = vld [vmem:[%s1 + $0x2c] sm:$0xf]
  %v31 = vld [vmem:[%s1 + $0x30] sm:$0xff]
  %v32 = vld [vmem:[%s1 + $0x38] sm:$0xf]
  %v33 = vld [vmem:[%s1 + $0x3c] sm:$0xff]
  %v34 = vld [vmem:[%s1 + $0x44] sm:$0xf]
  %v35 = vld [vmem:[%s1 + $0x48] sm:$0xff]
  %v36 = vld [vmem:[%s1 + $0x50] sm:$0xf]
  %v37 = vld [vmem:[%s1 + $0x54] sm:$0xff]
  %v38 = vld [vmem:[%s1 + $0x5c] sm:$0xf]
  %v39 = vld [vmem:[%s1 + $0x60] sm:$0xff]
  %v40 = vld [vmem:[%s1 + $0x68] sm:$0xf]
  %v41 = vld [vmem:[%s1 + $0x6c] sm:$0xff]
  %v42 = vld [vmem:[%s1 + $0x74] sm:$0xf]
  %v43 = vld [vmem:[%s1 + $0x78] sm:$0xff]
  %v44 = vld [vmem:[%s1 + $0x80] sm:$0xf]
  %v45 = vld [vmem:[%s1 + $0x84] sm:$0xff]
  %v46 = vld [vmem:[%s1 + $0x8c] sm:$0xf]
  %v47 = vld [vmem:[%s1 + $0x90] sm:$0xff]
  %v48 = vld [vmem:[%s1 + $0x98] sm:$0xf]
  %v49 = vld [vmem:[%s1 + $0x9c] sm:$0xff]
  %v50 = vld [vmem:[%s1 + $0xa4] sm:$0xf]
  %v51 = vld [vmem:[%s1 + $0xa8] sm:$0xff]
  %v52 = vld [vmem:[%s1 + $0xb0] sm:$0xf]
  %v53 = vld [vmem:[%s1 + $0xb4] sm:$0xff]
  %v54 = vld [vmem:[%s1 + $0xbc] sm:$0xf]
  %v55 = vld [vmem:[%s1 + $0xc0] sm:$0xff]
  %v56 = vld [vmem:[%s1 + $0xc8] sm:$0xf]
  %v57 = vld [vmem:[%s1 + $0xcc] sm:$0xff]
  %v58 = vld [vmem:[%s1 + $0xd4] sm:$0xf]
  %v59 = vld [vmem:[%s1 + $0xd8] sm:$0xff]
  %v60 = vld [vmem:[%s1 + $0xe0] sm:$0xf]
  %v61 = vld [vmem:[%s1 + $0xe4] sm:$0xff]
  %v62 = vld [vmem:[%s1 + $0xec] sm:$0xf]
  %v63 = vld [vmem:[%s1 + $0xf0] sm:$0xff]
  %v64 = vld [vmem:[%s1 + $0xf8] sm:$0xf]
  %v65 = vld [vmem:[%s1 + $0xfc] sm:$0xff]
  %v66 = vld [vmem:[%s1 + $0x104] sm:$0xf]
  %v67 = vld [vmem:[%s1 + $0x108] sm:$0xff]
  %v68 = vld [vmem:[%s1 + $0x110] sm:$0xf]
  %v69 = vld [vmem:[%s1 + $0x114] sm:$0xff]
  %v70 = vld [vmem:[%s1 + $0x11c] sm:$0xf]
  %v71 = vld [vmem:[%s1 + $0x120] sm:$0xff]
  %v72 = vld [vmem:[%s1 + $0x128] sm:$0xf]
  %v73 = vld [vmem:[%s1 + $0x12c] sm:$0xff]
  %v74 = vld [vmem:[%s1 + $0x134] sm:$0xf]
  %v75 = vld [vmem:[%s1 + $0x138] sm:$0xff]
  %v76 = vld [vmem:[%s1 + $0x140] sm:$0xf]
  %v77 = vld [vmem:[%s1 + $0x144] sm:$0xff]
  %v78 = vld [vmem:[%s1 + $0x14c] sm:$0xf]
  %v79 = vld [vmem:[%s1 + $0x150] sm:$0xff]
  %v80 = vld [vmem:[%s1 + $0x158] sm:$0xf]
  %v81 = vld [vmem:[%s1 + $0x15c] sm:$0xff]
  %v82 = vld [vmem:[%s1 + $0x164] sm:$0xf]
  %v83 = vld [vmem:[%s1 + $0x168] sm:$0xff]
  %v84 = vld [vmem:[%s1 + $0x170] sm:$0xf]
  %v85 = vld [vmem:[%s1 + $0x174] sm:$0xff]
  %v86 = vld [vmem:[%s1 + $0x17c] sm:$0xf]
  %v87 = vld [vmem:[%s1 + $0x180] sm:$0xff]
  %v88 = vld [vmem:[%s1 + $0x188] sm:$0xf]
  %v89 = vld [vmem:[%s1 + $0x18c] sm:$0xff]
  %v90 = vld [vmem:[%s1 + $0x194] sm:$0xf]
  %v91 = vld [vmem:[%s1 + $0x198] sm:$0xff]
  %v92 = vld [vmem:[%s1 + $0x1a0] sm:$0xf]
  %v93 = vld [vmem:[%s1 + $0x1a4] sm:$0xff]
  %v94 = vld [vmem:[%s1 + $0x1ac] sm:$0xf]
  %v95 = vld [vmem:[%s1 + $0x1b0] sm:$0xff]
  %v96 = vld [vmem:[%s1 + $0x1b8] sm:$0xf]
  %v97 = vld [vmem:[%s1 + $0x1bc] sm:$0xff]
  %v98 = vld [vmem:[%s1 + $0x1c4] sm:$0xf]
  %v99 = vld [vmem:[%s1 + $0x1c8] sm:$0xff]
  %v100 = vld [vmem:[%s1 + $0x1d0] sm:$0xf]
  %v101 = vld [vmem:[%s1 + $0x1d4] sm:$0xff]
  %v102 = vld [vmem:[%s1 + $0x1dc] sm:$0xf]
  %v103 = vld [vmem:[%s1 + $0x1e0] sm:$0xff]
  %v104 = vld [vmem:[%s1 + $0x1e8] sm:$0xf]
  %v105 = vld [vmem:[%s1 + $0x1ec] sm:$0xff]
  %v106 = vld [vmem:[%s1 + $0x1f4] sm:$0xf]
  %v107 = vld [vmem:[%s1 + $0x1f8] sm:$0xff]
  %v108 = vld [vmem:[%s1 + $0x200] sm:$0xf]
  %v109 = vld [vmem:[%s1 + $0x204] sm:$0xff]
  %v110 = vld [vmem:[%s1 + $0x20c] sm:$0xf]
  %v111 = vld [vmem:[%s1 + $0x210] sm:$0xff]
  %v112 = vld [vmem:[%s1 + $0x218] sm:$0xf]
  %v113 = vld [vmem:[%s1 + $0x21c] sm:$0xff]
  %v114 = vld [vmem:[%s1 + $0x224] sm:$0xf]
  %v115 = vld [vmem:[%s1 + $0x228] sm:$0xff]
  %v116 = vld [vmem:[%s1 + $0x230] sm:$0xf]
  %v117 = vld [vmem:[%s1 + $0x234] sm:$0xff]
  %v118 = vld [vmem:[%s1 + $0x23c] sm:$0xf]
  %v119 = vld [vmem:[%s1 + $0x240] sm:$0xff]
  %v120 = vld [vmem:[%s1 + $0x248] sm:$0xf]
  %v121 = vld [vmem:[%s1 + $0x24c] sm:$0xff]
  %v122 = vld [vmem:[%s1 + $0x254] sm:$0xf]
  %v123 = vld [vmem:[%s1 + $0x258] sm:$0xff]
  %v124 = vld [vmem:[%s1 + $0x260] sm:$0xf]
  %v125 = vld [vmem:[%s1 + $0x264] sm:$0xff]
  %v126 = vld [vmem:[%s1 + $0x26c] sm:$0xf]
  %v127 = vld [vmem:[%s1 + $0x270] sm:$0xff]
  %v128 = vld [vmem:[%s1 + $0x278] sm:$0xf]
  %v129 = vld [vmem:[%s1 + $0x27c] sm:$0xff]
  %v130 = vld [vmem:[%s1 + $0x284] sm:$0xf]
  %v131 = vld [vmem:[%s1 + $0x288] sm:$0xff]
  %v132 = vld [vmem:[%s1 + $0x290] sm:$0xf]
  %v133 = vld [vmem:[%s1 + $0x294] sm:$0xff]
  %v134 = vld [vmem:[%s1 + $0x29c] sm:$0xf]
  %v135 = vld [vmem:[%s1 + $0x2a0] sm:$0xff]
  %v136 = vld [vmem:[%s1 + $0x2a8] sm:$0xf]
  %v137 = vld [vmem:[%s1 + $0x2ac] sm:$0xff]
  %v138 = vld [vmem:[%s1 + $0x2b4] sm:$0xf]
  %v139 = vld [vmem:[%s1 + $0x2b8] sm:$0xff]
  %v140 = vld [vmem:[%s1 + $0x2c0] sm:$0xf]
  %v141 = vld [vmem:[%s1 + $0x2c4] sm:$0xff]
  %v142 = vld [vmem:[%s1 + $0x2cc] sm:$0xf]
  %v143 = vld [vmem:[%s1 + $0x2d0] sm:$0xff]
  %v144 = vld [vmem:[%s1 + $0x2d8] sm:$0xf]
  %v145 = vld [vmem:[%s1 + $0x2dc] sm:$0xff]
  %v146 = vld [vmem:[%s1 + $0x2e4] sm:$0xf]
  %v147 = vld [vmem:[%s1 + $0x2e8] sm:$0xff]
  %v148 = vld [vmem:[%s1 + $0x2f0] sm:$0xf]
  %v149 = vld [vmem:[%s1 + $0x2f4] sm:$0xff]
  %v150 = vld [vmem:[%s1 + $0x2fc] sm:$0xf]
  %v151 = vld [vmem:[%s1 + $0x300] sm:$0xff]
  %v152 = vld [vmem:[%s1 + $0x308] sm:$0xf]
  %v153 = vld [vmem:[%s1 + $0x30c] sm:$0xff]
  %v154 = vld [vmem:[%s1 + $0x314] sm:$0xf]
  %v155 = vld [vmem:[%s1 + $0x318] sm:$0xff]
  %v156 = vld [vmem:[%s1 + $0x320] sm:$0xf]
  %v157 = vld [vmem:[%s1 + $0x324] sm:$0xff]
  %v158 = vld [vmem:[%s1 + $0x32c] sm:$0xf]
  %v159 = vld [vmem:[%s1 + $0x330] sm:$0xff]
  %v160 = vld [vmem:[%s1 + $0x338] sm:$0xf]
  %v161 = vld [vmem:[%s1 + $0x33c] sm:$0xff]
  %v162 = vld [vmem:[%s1 + $0x344] sm:$0xf]
  %v163 = vld [vmem:[%s1 + $0x348] sm:$0xff]
  %v164 = vld [vmem:[%s1 + $0x350] sm:$0xf]
  %v165 = vld [vmem:[%s1 + $0x354] sm:$0xff]
  %v166 = vld [vmem:[%s1 + $0x35c] sm:$0xf]
  %v167 = vld [vmem:[%s1 + $0x360] sm:$0xff]
  %v168 = vld [vmem:[%s1 + $0x368] sm:$0xf]
  %v169 = vld [vmem:[%s1 + $0x36c] sm:$0xff]
  %v170 = vld [vmem:[%s1 + $0x374] sm:$0xf]
  %v171 = vld [vmem:[%s1 + $0x378] sm:$0xff]
  %v172 = vld [vmem:[%s1 + $0x380] sm:$0xf]
  %v173 = vld [vmem:[%s1 + $0x384] sm:$0xff]
  %v174 = vld [vmem:[%s1 + $0x38c] sm:$0xf]
  %v175 = vld [vmem:[%s1 + $0x390] sm:$0xff]
  %v176 = vld [vmem:[%s1 + $0x398] sm:$0xf]
  %v177 = vld [vmem:[%s1 + $0x39c] sm:$0xff]
  %v178 = vld [vmem:[%s1 + $0x3a4] sm:$0xf]
  %v179 = vld [vmem:[%s1 + $0x3a8] sm:$0xff]
  %v180 = vld [vmem:[%s1 + $0x3b0] sm:$0xf]
  %v181 = vld [vmem:[%s1 + $0x3b4] sm:$0xff]
  %v182 = vld [vmem:[%s1 + $0x3bc] sm:$0xf]
  %v183 = vld [vmem:[%s1 + $0x3c0] sm:$0xff]
  %v184 = vld [vmem:[%s1 + $0x3c8] sm:$0xf]
  %v185 = vld [vmem:[%s1 + $0x3cc] sm:$0xff]
  %v186 = vld [vmem:[%s1 + $0x3d4] sm:$0xf]
  %v187 = vld [vmem:[%s1 + $0x3d8] sm:$0xff]
  %v188 = vld [vmem:[%s1 + $0x3e0] sm:$0xf]
  %v189 = vld [vmem:[%s1 + $0x3e4] sm:$0xff]
  %v190 = vld [vmem:[%s1 + $0x3ec] sm:$0xf]
  %v191 = vld [vmem:[%s1 + $0x3f0] sm:$0xff]
  %v192 = vld [vmem:[%s1 + $0x3f8] sm:$0xf]
  %v193 = vld [vmem:[%s1 + $0x3fc] sm:$0xff]
  %v194 = vld [vmem:[%s1 + $0x404] sm:$0xf]
  %v195 = vld [vmem:[%s1 + $0x408] sm:$0xff]
  %v196 = vld [vmem:[%s1 + $0x410] sm:$0xf]
  %v197 = vld [vmem:[%s1 + $0x414] sm:$0xff]
  %v198 = vld [vmem:[%s1 + $0x41c] sm:$0xf]
  %v199 = vld [vmem:[%s1 + $0x420] sm:$0xff]
  %v200 = vld [vmem:[%s1 + $0x428] sm:$0xf]
  %v201 = vld [vmem:[%s1 + $0x42c] sm:$0xff]
  %v202 = vld [vmem:[%s1 + $0x434] sm:$0xf]
  %v203 = vld [vmem:[%s1 + $0x438] sm:$0xff]
  %v204 = vld [vmem:[%s1 + $0x440] sm:$0xf]
  %v205 = vld [vmem:[%s1 + $0x444] sm:$0xff]
  %v206 = vld [vmem:[%s1 + $0x44c] sm:$0xf]
  %v207 = vld [vmem:[%s1 + $0x450] sm:$0xff]
  %v208 = vld [vmem:[%s1 + $0x458] sm:$0xf]
  %v209 = vld [vmem:[%s1 + $0x45c] sm:$0xff]
  %v210 = vld [vmem:[%s1 + $0x464] sm:$0xf]
  %v211 = vld [vmem:[%s1 + $0x468] sm:$0xff]
  %v212 = vld [vmem:[%s1 + $0x470] sm:$0xf]
  %v213 = vld [vmem:[%s1 + $0x474] sm:$0xff]
  %v214 = vld [vmem:[%s1 + $0x47c] sm:$0xf]
  %v215 = vld [vmem:[%s1 + $0x480] sm:$0xff]
  %v216 = vld [vmem:[%s1 + $0x488] sm:$0xf]
  %v217 = vld [vmem:[%s1 + $0x48c] sm:$0xff]
  %v218 = vld [vmem:[%s1 + $0x494] sm:$0xf]
  %v219 = vld [vmem:[%s1 + $0x498] sm:$0xff]
  %v220 = vld [vmem:[%s1 + $0x4a0] sm:$0xf]
  %v221 = vld [vmem:[%s1 + $0x4a4] sm:$0xff]
  %v222 = vld [vmem:[%s1 + $0x4ac] sm:$0xf]
  %v223 = vld [vmem:[%s1 + $0x4b0] sm:$0xff]
  %v224 = vld [vmem:[%s1 + $0x4b8] sm:$0xf]
  %v225 = vld [vmem:[%s1 + $0x4bc] sm:$0xff]
  %v226 = vld [vmem:[%s1 + $0x4c4] sm:$0xf]
  %v227 = vld [vmem:[%s1 + $0x4c8] sm:$0xff]
  %v228 = vld [vmem:[%s1 + $0x4d0] sm:$0xf]
  %v229 = vld [vmem:[%s1 + $0x4d4] sm:$0xff]
  %v230 = vld [vmem:[%s1 + $0x4dc] sm:$0xf]
  %v231 = vld [vmem:[%s1 + $0x4e0] sm:$0xff]
  %v232 = vld [vmem:[%s1 + $0x4e8] sm:$0xf]
  %v233 = vld [vmem:[%s1 + $0x4ec] sm:$0xff]
  %v234 = vld [vmem:[%s1 + $0x4f4] sm:$0xf]
  %v235 = vld [vmem:[%s1 + $0x4f8] sm:$0xff]
  %v236 = vld [vmem:[%s1 + $0x500] sm:$0xf]
  %v237 = vld [vmem:[%s1 + $0x504] sm:$0xff]
  %v238 = vld [vmem:[%s1 + $0x50c] sm:$0xf]
  %v239 = vld [vmem:[%s1 + $0x510] sm:$0xff]
  %v240 = vld [vmem:[%s1 + $0x518] sm:$0xf]
  %v241 = vld [vmem:[%s1 + $0x51c] sm:$0xff]
  %v242 = vld [vmem:[%s1 + $0x524] sm:$0xf]
  %v243 = vld [vmem:[%s1 + $0x528] sm:$0xff]
  %v244 = vld [vmem:[%s1 + $0x530] sm:$0xf]
  %v245 = vld [vmem:[%s1 + $0x534] sm:$0xff]
  %v246 = vld [vmem:[%s1 + $0x53c] sm:$0xf]
  %v247 = vld [vmem:[%s1 + $0x540] sm:$0xff]
  %v248 = vld [vmem:[%s1 + $0x548] sm:$0xf]
  %v249 = vld [vmem:[%s1 + $0x54c] sm:$0xff]
  %v250 = vld [vmem:[%s1 + $0x554] sm:$0xf]
  %v251 = vld [vmem:[%s1 + $0x558] sm:$0xff]
  %v252 = vld [vmem:[%s1 + $0x560] sm:$0xf]
  %v253 = vld [vmem:[%s1 + $0x564] sm:$0xff]
  %v254 = vld [vmem:[%s1 + $0x56c] sm:$0xf]
  %v255 = vld [vmem:[%s1 + $0x570] sm:$0xff]
  %v256 = vld [vmem:[%s1 + $0x578] sm:$0xf]
  %v257 = vld [vmem:[%s1 + $0x57c] sm:$0xff]
  %v258 = vld [vmem:[%s1 + $0x584] sm:$0xf]
  %v259 = vld [vmem:[%s1 + $0x588] sm:$0xff]
  %v260 = vld [vmem:[%s1 + $0x590] sm:$0xf]
  %v261 = vld [vmem:[%s1 + $0x594] sm:$0xff]
  %v262 = vld [vmem:[%s1 + $0x59c] sm:$0xf]
  %v263 = vld [vmem:[%s1 + $0x5a0] sm:$0xff]
  %v264 = vld [vmem:[%s1 + $0x5a8] sm:$0xf]
  %v265 = vld [vmem:[%s1 + $0x5ac] sm:$0xff]
  %v266 = vld [vmem:[%s1 + $0x5b4] sm:$0xf]
  %v267 = vld [vmem:[%s1 + $0x5b8] sm:$0xff]
  %v268 = vld [vmem:[%s1 + $0x5c0] sm:$0xf]
  %v269 = vld [vmem:[%s1 + $0x5c4] sm:$0xff]
  %v270 = vld [vmem:[%s1 + $0x5cc] sm:$0xf]
  %v271 = vld [vmem:[%s1 + $0x5d0] sm:$0xff]
  %v272 = vld [vmem:[%s1 + $0x5d8] sm:$0xf]
  %v273 = vld [vmem:[%s1 + $0x5dc] sm:$0xff]
  %v274 = vld [vmem:[%s1 + $0x5e4] sm:$0xf]
  %v275 = vld [vmem:[%s1 + $0x5e8] sm:$0xff]
  %v276 = vld [vmem:[%s1 + $0x5f0] sm:$0xf]
  %v277 = vld [vmem:[%s1 + $0x5f4] sm:$0xff]
  %v278 = vld [vmem:[%s1 + $0x5fc] sm:$0xf]
  %v279 = vld [vmem:[%s1 + $0x600] sm:$0xff]
  %v280 = vld [vmem:[%s1 + $0x608] sm:$0xf]
  %v281 = vld [vmem:[%s1 + $0x60c] sm:$0xff]
  %v282 = vld [vmem:[%s1 + $0x614] sm:$0xf]
  %v283 = vld [vmem:[%s1 + $0x618] sm:$0xff]
  %v284 = vld [vmem:[%s1 + $0x620] sm:$0xf]
  %v285 = vld [vmem:[%s1 + $0x624] sm:$0xff]
  %v286 = vld [vmem:[%s1 + $0x62c] sm:$0xf]
  %v287 = vld [vmem:[%s1 + $0x630] sm:$0xff]
  %v288 = vld [vmem:[%s1 + $0x638] sm:$0xf]
  %v289 = vld [vmem:[%s1 + $0x63c] sm:$0xff]
  %v290 = vld [vmem:[%s1 + $0x644] sm:$0xf]
  %v291 = vld [vmem:[%s1 + $0x648] sm:$0xff]
  %v292 = vld [vmem:[%s1 + $0x650] sm:$0xf]
  %v293 = vld [vmem:[%s1 + $0x654] sm:$0xff]
  %v294 = vld [vmem:[%s1 + $0x65c] sm:$0xf]
  %v295 = vld [vmem:[%s1 + $0x660] sm:$0xff]
  %v296 = vld [vmem:[%s1 + $0x668] sm:$0xf]
  %v297 = vld [vmem:[%s1 + $0x66c] sm:$0xff]
  %v298 = vld [vmem:[%s1 + $0x674] sm:$0xf]
  %v299 = vld [vmem:[%s1 + $0x678] sm:$0xff]
  %v300 = vld [vmem:[%s1 + $0x680] sm:$0xf]
  %v301 = vld [vmem:[%s1 + $0x684] sm:$0xff]
  %v302 = vld [vmem:[%s1 + $0x68c] sm:$0xf]
  %v303 = vld [vmem:[%s1 + $0x690] sm:$0xff]
  %v304 = vld [vmem:[%s1 + $0x698] sm:$0xf]
  %v305 = vld [vmem:[%s1 + $0x69c] sm:$0xff]
  %v306 = vld [vmem:[%s1 + $0x6a4] sm:$0xf]
  %v307 = vld [vmem:[%s1 + $0x6a8] sm:$0xff]
  %v308 = vld [vmem:[%s1 + $0x6b0] sm:$0xf]
  %v309 = vld [vmem:[%s1 + $0x6b4] sm:$0xff]
  %v310 = vld [vmem:[%s1 + $0x6bc] sm:$0xf]
  %v311 = vld [vmem:[%s2] sm:$0x7]
  %v313 = vlaneseq
  %v314 = vshrl.u32 %v313, 7
  %v315 = vsub.s32 0, %v314
  %v316 = vrot.slane %v311, %v315
  %v317 = vlaneseq
  %v318 = vshrl.u32 %v317, 7
  %v319 = vsub.s32 1, %v318
  %v320 = vrot.slane %v311, %v319
  %v321 = vlaneseq
  %v322 = vshrl.u32 %v321, 7
  %v323 = vsub.s32 2, %v322
  %v324 = vrot.slane %v311, %v323
  %v333 = vunpack.c.l.b16 %v18
  %v334 = vunpack.c.h.b16 %v18
  %v335 = vunpack.c.l.b16 %v19
  %v336 = vunpack.c.h.b16 %v19
  %v337 = vunpack.c.l.b16 %v20
  %v338 = vunpack.c.h.b16 %v20
  %v339 = vunpack.c.l.b16 %v21
  %v340 = vunpack.c.h.b16 %v21
  %v341 = vunpack.c.l.b16 %v22
  %v342 = vpack.c.b16 %v333, %v333
  %v343 = vpack.c.b16 %v334, %v334
  %v344 = vpack.c.b16 %v335, %v335
  %v345 = vpack.c.b16 %v336, %v336
  %v346 = vpack.c.b16 %v337, %v337
  %v347 = vpack.c.b16 %v338, %v338
  %v348 = vpack.c.b16 %v339, %v339
  %v349 = vpack.c.b16 %v340, %v340
  %v350 = vpack.c.b16 %v341, %v341
  %v648 = vunpack.c.l.b16 %v23
  %v649 = vunpack.c.h.b16 %v23
  %v650 = vunpack.c.l.b16 %v24
  %v651 = vunpack.c.l.b16 %v25
  %v652 = vunpack.c.h.b16 %v25
  %v653 = vunpack.c.l.b16 %v26
  %v654 = vunpack.c.l.b16 %v27
  %v655 = vunpack.c.h.b16 %v27
  %v656 = vunpack.c.l.b16 %v28
  %v657 = vunpack.c.l.b16 %v29
  %v658 = vunpack.c.h.b16 %v29
  %v659 = vunpack.c.l.b16 %v30
  %v660 = vunpack.c.l.b16 %v31
  %v661 = vunpack.c.h.b16 %v31
  %v662 = vunpack.c.l.b16 %v32
  %v663 = vunpack.c.l.b16 %v33
  %v664 = vunpack.c.h.b16 %v33
  %v665 = vunpack.c.l.b16 %v34
  %v666 = vunpack.c.l.b16 %v35
  %v667 = vunpack.c.h.b16 %v35
  %v668 = vunpack.c.l.b16 %v36
  %v669 = vunpack.c.l.b16 %v37
  %v670 = vunpack.c.h.b16 %v37
  %v671 = vunpack.c.l.b16 %v38
  %v672 = vunpack.c.l.b16 %v39
  %v673 = vunpack.c.h.b16 %v39
  %v674 = vunpack.c.l.b16 %v40
  %v675 = vunpack.c.l.b16 %v41
  %v676 = vunpack.c.h.b16 %v41
  %v677 = vunpack.c.l.b16 %v42
  %v678 = vunpack.c.l.b16 %v43
  %v679 = vunpack.c.h.b16 %v43
  %v680 = vunpack.c.l.b16 %v44
  %v681 = vunpack.c.l.b16 %v45
  %v682 = vunpack.c.h.b16 %v45
  %v683 = vunpack.c.l.b16 %v46
  %v684 = vunpack.c.l.b16 %v47
  %v685 = vunpack.c.h.b16 %v47
  %v686 = vunpack.c.l.b16 %v48
  %v687 = vunpack.c.l.b16 %v49
  %v688 = vunpack.c.h.b16 %v49
  %v689 = vunpack.c.l.b16 %v50
  %v690 = vunpack.c.l.b16 %v51
  %v691 = vunpack.c.h.b16 %v51
  %v692 = vunpack.c.l.b16 %v52
  %v693 = vunpack.c.l.b16 %v53
  %v694 = vunpack.c.h.b16 %v53
  %v695 = vunpack.c.l.b16 %v54
  %v696 = vunpack.c.l.b16 %v55
  %v697 = vunpack.c.h.b16 %v55
  %v698 = vunpack.c.l.b16 %v56
  %v699 = vunpack.c.l.b16 %v57
  %v700 = vunpack.c.h.b16 %v57
  %v701 = vunpack.c.l.b16 %v58
  %v702 = vunpack.c.l.b16 %v59
  %v703 = vunpack.c.h.b16 %v59
  %v704 = vunpack.c.l.b16 %v60
  %v705 = vunpack.c.l.b16 %v61
  %v706 = vunpack.c.h.b16 %v61
  %v707 = vunpack.c.l.b16 %v62
  %v708 = vunpack.c.l.b16 %v63
  %v709 = vunpack.c.h.b16 %v63
  %v710 = vunpack.c.l.b16 %v64
  %v711 = vunpack.c.l.b16 %v65
  %v712 = vunpack.c.h.b16 %v65
  %v713 = vunpack.c.l.b16 %v66
  %v714 = vunpack.c.l.b16 %v67
  %v715 = vunpack.c.h.b16 %v67
  %v716 = vunpack.c.l.b16 %v68
  %v717 = vunpack.c.l.b16 %v69
  %v718 = vunpack.c.h.b16 %v69
  %v719 = vunpack.c.l.b16 %v70
  %v720 = vunpack.c.l.b16 %v71
  %v721 = vunpack.c.h.b16 %v71
  %v722 = vunpack.c.l.b16 %v72
  %v723 = vunpack.c.l.b16 %v73
  %v724 = vunpack.c.h.b16 %v73
  %v725 = vunpack.c.l.b16 %v74
  %v726 = vunpack.c.l.b16 %v75
  %v727 = vunpack.c.h.b16 %v75
  %v728 = vunpack.c.l.b16 %v76
  %v729 = vunpack.c.l.b16 %v77
  %v730 = vunpack.c.h.b16 %v77
  %v731 = vunpack.c.l.b16 %v78
  %v732 = vunpack.c.l.b16 %v79
  %v733 = vunpack.c.h.b16 %v79
  %v734 = vunpack.c.l.b16 %v80
  %v735 = vunpack.c.l.b16 %v81
  %v736 = vunpack.c.h.b16 %v81
  %v737 = vunpack.c.l.b16 %v82
  %v738 = vunpack.c.l.b16 %v83
  %v739 = vunpack.c.h.b16 %v83
  %v740 = vunpack.c.l.b16 %v84
  %v741 = vunpack.c.l.b16 %v85
  %v742 = vunpack.c.h.b16 %v85
  %v743 = vunpack.c.l.b16 %v86
  %v744 = vunpack.c.l.b16 %v87
  %v745 = vunpack.c.h.b16 %v87
  %v746 = vunpack.c.l.b16 %v88
  %v747 = vunpack.c.l.b16 %v89
  %v748 = vunpack.c.h.b16 %v89
  %v749 = vunpack.c.l.b16 %v90
  %v750 = vunpack.c.l.b16 %v91
  %v751 = vunpack.c.h.b16 %v91
  %v752 = vunpack.c.l.b16 %v92
  %v753 = vunpack.c.l.b16 %v93
  %v754 = vunpack.c.h.b16 %v93
  %v755 = vunpack.c.l.b16 %v94
  %v756 = vunpack.c.l.b16 %v95
  %v757 = vunpack.c.h.b16 %v95
  %v758 = vunpack.c.l.b16 %v96
  %v759 = vunpack.c.l.b16 %v97
  %v760 = vunpack.c.h.b16 %v97
  %v761 = vunpack.c.l.b16 %v98
  %v762 = vunpack.c.l.b16 %v99
  %v763 = vunpack.c.h.b16 %v99
  %v764 = vunpack.c.l.b16 %v100
  %v765 = vunpack.c.l.b16 %v101
  %v766 = vunpack.c.h.b16 %v101
  %v767 = vunpack.c.l.b16 %v102
  %v768 = vunpack.c.l.b16 %v103
  %v769 = vunpack.c.h.b16 %v103
  %v770 = vunpack.c.l.b16 %v104
  %v771 = vunpack.c.l.b16 %v105
  %v772 = vunpack.c.h.b16 %v105
  %v773 = vunpack.c.l.b16 %v106
  %v774 = vunpack.c.l.b16 %v107
  %v775 = vunpack.c.h.b16 %v107
  %v776 = vunpack.c.l.b16 %v108
  %v777 = vunpack.c.l.b16 %v109
  %v778 = vunpack.c.h.b16 %v109
  %v779 = vunpack.c.l.b16 %v110
  %v780 = vunpack.c.l.b16 %v111
  %v781 = vunpack.c.h.b16 %v111
  %v782 = vunpack.c.l.b16 %v112
  %v783 = vunpack.c.l.b16 %v113
  %v784 = vunpack.c.h.b16 %v113
  %v785 = vunpack.c.l.b16 %v114
  %v786 = vunpack.c.l.b16 %v115
  %v787 = vunpack.c.h.b16 %v115
  %v788 = vunpack.c.l.b16 %v116
  %v789 = vunpack.c.l.b16 %v117
  %v790 = vunpack.c.h.b16 %v117
  %v791 = vunpack.c.l.b16 %v118
  %v792 = vunpack.c.l.b16 %v119
  %v793 = vunpack.c.h.b16 %v119
  %v794 = vunpack.c.l.b16 %v120
  %v795 = vunpack.c.l.b16 %v121
  %v796 = vunpack.c.h.b16 %v121
  %v797 = vunpack.c.l.b16 %v122
  %v798 = vunpack.c.l.b16 %v123
  %v799 = vunpack.c.h.b16 %v123
  %v800 = vunpack.c.l.b16 %v124
  %v801 = vunpack.c.l.b16 %v125
  %v802 = vunpack.c.h.b16 %v125
  %v803 = vunpack.c.l.b16 %v126
  %v804 = vunpack.c.l.b16 %v127
  %v805 = vunpack.c.h.b16 %v127
  %v806 = vunpack.c.l.b16 %v128
  %v807 = vunpack.c.l.b16 %v129
  %v808 = vunpack.c.h.b16 %v129
  %v809 = vunpack.c.l.b16 %v130
  %v810 = vunpack.c.l.b16 %v131
  %v811 = vunpack.c.h.b16 %v131
  %v812 = vunpack.c.l.b16 %v132
  %v813 = vunpack.c.l.b16 %v133
  %v814 = vunpack.c.h.b16 %v133
  %v815 = vunpack.c.l.b16 %v134
  %v816 = vunpack.c.l.b16 %v135
  %v817 = vunpack.c.h.b16 %v135
  %v818 = vunpack.c.l.b16 %v136
  %v819 = vunpack.c.l.b16 %v137
  %v820 = vunpack.c.h.b16 %v137
  %v821 = vunpack.c.l.b16 %v138
  %v822 = vunpack.c.l.b16 %v139
  %v823 = vunpack.c.h.b16 %v139
  %v824 = vunpack.c.l.b16 %v140
  %v825 = vunpack.c.l.b16 %v141
  %v826 = vunpack.c.h.b16 %v141
  %v827 = vunpack.c.l.b16 %v142
  %v828 = vunpack.c.l.b16 %v143
  %v829 = vunpack.c.h.b16 %v143
  %v830 = vunpack.c.l.b16 %v144
  %v831 = vunpack.c.l.b16 %v145
  %v832 = vunpack.c.h.b16 %v145
  %v833 = vunpack.c.l.b16 %v146
  %v834 = vunpack.c.l.b16 %v147
  %v835 = vunpack.c.h.b16 %v147
  %v836 = vunpack.c.l.b16 %v148
  %v837 = vunpack.c.l.b16 %v149
  %v838 = vunpack.c.h.b16 %v149
  %v839 = vunpack.c.l.b16 %v150
  %v840 = vunpack.c.l.b16 %v151
  %v841 = vunpack.c.h.b16 %v151
  %v842 = vunpack.c.l.b16 %v152
  %v843 = vunpack.c.l.b16 %v153
  %v844 = vunpack.c.h.b16 %v153
  %v845 = vunpack.c.l.b16 %v154
  %v846 = vunpack.c.l.b16 %v155
  %v847 = vunpack.c.h.b16 %v155
  %v848 = vunpack.c.l.b16 %v156
  %v849 = vunpack.c.l.b16 %v157
  %v850 = vunpack.c.h.b16 %v157
  %v851 = vunpack.c.l.b16 %v158
  %v852 = vunpack.c.l.b16 %v159
  %v853 = vunpack.c.h.b16 %v159
  %v854 = vunpack.c.l.b16 %v160
  %v855 = vunpack.c.l.b16 %v161
  %v856 = vunpack.c.h.b16 %v161
  %v857 = vunpack.c.l.b16 %v162
  %v858 = vunpack.c.l.b16 %v163
  %v859 = vunpack.c.h.b16 %v163
  %v860 = vunpack.c.l.b16 %v164
  %v861 = vunpack.c.l.b16 %v165
  %v862 = vunpack.c.h.b16 %v165
  %v863 = vunpack.c.l.b16 %v166
  %v864 = vunpack.c.l.b16 %v167
  %v865 = vunpack.c.h.b16 %v167
  %v866 = vunpack.c.l.b16 %v168
  %v867 = vunpack.c.l.b16 %v169
  %v868 = vunpack.c.h.b16 %v169
  %v869 = vunpack.c.l.b16 %v170
  %v870 = vunpack.c.l.b16 %v171
  %v871 = vunpack.c.h.b16 %v171
  %v872 = vunpack.c.l.b16 %v172
  %v873 = vunpack.c.l.b16 %v173
  %v874 = vunpack.c.h.b16 %v173
  %v875 = vunpack.c.l.b16 %v174
  %v876 = vunpack.c.l.b16 %v175
  %v877 = vunpack.c.h.b16 %v175
  %v878 = vunpack.c.l.b16 %v176
  %v879 = vunpack.c.l.b16 %v177
  %v880 = vunpack.c.h.b16 %v177
  %v881 = vunpack.c.l.b16 %v178
  %v882 = vunpack.c.l.b16 %v179
  %v883 = vunpack.c.h.b16 %v179
  %v884 = vunpack.c.l.b16 %v180
  %v885 = vunpack.c.l.b16 %v181
  %v886 = vunpack.c.h.b16 %v181
  %v887 = vunpack.c.l.b16 %v182
  %v888 = vunpack.c.l.b16 %v183
  %v889 = vunpack.c.h.b16 %v183
  %v890 = vunpack.c.l.b16 %v184
  %v891 = vunpack.c.l.b16 %v185
  %v892 = vunpack.c.h.b16 %v185
  %v893 = vunpack.c.l.b16 %v186
  %v894 = vunpack.c.l.b16 %v187
  %v895 = vunpack.c.h.b16 %v187
  %v896 = vunpack.c.l.b16 %v188
  %v897 = vunpack.c.l.b16 %v189
  %v898 = vunpack.c.h.b16 %v189
  %v899 = vunpack.c.l.b16 %v190
  %v900 = vunpack.c.l.b16 %v191
  %v901 = vunpack.c.h.b16 %v191
  %v902 = vunpack.c.l.b16 %v192
  %v903 = vunpack.c.l.b16 %v193
  %v904 = vunpack.c.h.b16 %v193
  %v905 = vunpack.c.l.b16 %v194
  %v906 = vunpack.c.l.b16 %v195
  %v907 = vunpack.c.h.b16 %v195
  %v908 = vunpack.c.l.b16 %v196
  %v909 = vunpack.c.l.b16 %v197
  %v910 = vunpack.c.h.b16 %v197
  %v911 = vunpack.c.l.b16 %v198
  %v912 = vunpack.c.l.b16 %v199
  %v913 = vunpack.c.h.b16 %v199
  %v914 = vunpack.c.l.b16 %v200
  %v915 = vunpack.c.l.b16 %v201
  %v916 = vunpack.c.h.b16 %v201
  %v917 = vunpack.c.l.b16 %v202
  %v918 = vunpack.c.l.b16 %v203
  %v919 = vunpack.c.h.b16 %v203
  %v920 = vunpack.c.l.b16 %v204
  %v921 = vunpack.c.l.b16 %v205
  %v922 = vunpack.c.h.b16 %v205
  %v923 = vunpack.c.l.b16 %v206
  %v924 = vunpack.c.l.b16 %v207
  %v925 = vunpack.c.h.b16 %v207
  %v926 = vunpack.c.l.b16 %v208
  %v927 = vunpack.c.l.b16 %v209
  %v928 = vunpack.c.h.b16 %v209
  %v929 = vunpack.c.l.b16 %v210
  %v930 = vunpack.c.l.b16 %v211
  %v931 = vunpack.c.h.b16 %v211
  %v932 = vunpack.c.l.b16 %v212
  %v933 = vunpack.c.l.b16 %v213
  %v934 = vunpack.c.h.b16 %v213
  %v935 = vunpack.c.l.b16 %v214
  %v936 = vunpack.c.l.b16 %v215
  %v937 = vunpack.c.h.b16 %v215
  %v938 = vunpack.c.l.b16 %v216
  %v939 = vunpack.c.l.b16 %v217
  %v940 = vunpack.c.h.b16 %v217
  %v941 = vunpack.c.l.b16 %v218
  %v942 = vunpack.c.l.b16 %v219
  %v943 = vunpack.c.h.b16 %v219
  %v944 = vunpack.c.l.b16 %v220
  %v945 = vunpack.c.l.b16 %v221
  %v946 = vunpack.c.h.b16 %v221
  %v947 = vunpack.c.l.b16 %v222
  %v948 = vunpack.c.l.b16 %v223
  %v949 = vunpack.c.h.b16 %v223
  %v950 = vunpack.c.l.b16 %v224
  %v951 = vunpack.c.l.b16 %v225
  %v952 = vunpack.c.h.b16 %v225
  %v953 = vunpack.c.l.b16 %v226
  %v954 = vunpack.c.l.b16 %v227
  %v955 = vunpack.c.h.b16 %v227
  %v956 = vunpack.c.l.b16 %v228
  %v957 = vunpack.c.l.b16 %v229
  %v958 = vunpack.c.h.b16 %v229
  %v959 = vunpack.c.l.b16 %v230
  %v960 = vunpack.c.l.b16 %v231
  %v961 = vunpack.c.h.b16 %v231
  %v962 = vunpack.c.l.b16 %v232
  %v963 = vunpack.c.l.b16 %v233
  %v964 = vunpack.c.h.b16 %v233
  %v965 = vunpack.c.l.b16 %v234
  %v966 = vunpack.c.l.b16 %v235
  %v967 = vunpack.c.h.b16 %v235
  %v968 = vunpack.c.l.b16 %v236
  %v969 = vunpack.c.l.b16 %v237
  %v970 = vunpack.c.h.b16 %v237
  %v971 = vunpack.c.l.b16 %v238
  %v972 = vunpack.c.l.b16 %v239
  %v973 = vunpack.c.h.b16 %v239
  %v974 = vunpack.c.l.b16 %v240
  %v975 = vunpack.c.l.b16 %v241
  %v976 = vunpack.c.h.b16 %v241
  %v977 = vunpack.c.l.b16 %v242
  %v978 = vunpack.c.l.b16 %v243
  %v979 = vunpack.c.h.b16 %v243
  %v980 = vunpack.c.l.b16 %v244
  %v981 = vunpack.c.l.b16 %v245
  %v982 = vunpack.c.h.b16 %v245
  %v983 = vunpack.c.l.b16 %v246
  %v984 = vunpack.c.l.b16 %v247
  %v985 = vunpack.c.h.b16 %v247
  %v986 = vunpack.c.l.b16 %v248
  %v987 = vunpack.c.l.b16 %v249
  %v988 = vunpack.c.h.b16 %v249
  %v989 = vunpack.c.l.b16 %v250
  %v990 = vunpack.c.l.b16 %v251
  %v991 = vunpack.c.h.b16 %v251
  %v992 = vunpack.c.l.b16 %v252
  %v993 = vunpack.c.l.b16 %v253
  %v994 = vunpack.c.h.b16 %v253
  %v995 = vunpack.c.l.b16 %v254
  %v996 = vunpack.c.l.b16 %v255
  %v997 = vunpack.c.h.b16 %v255
  %v998 = vunpack.c.l.b16 %v256
  %v999 = vunpack.c.l.b16 %v257
  %v1000 = vunpack.c.h.b16 %v257
  %v1001 = vunpack.c.l.b16 %v258
  %v1002 = vunpack.c.l.b16 %v259
  %v1003 = vunpack.c.h.b16 %v259
  %v1004 = vunpack.c.l.b16 %v260
  %v1005 = vunpack.c.l.b16 %v261
  %v1006 = vunpack.c.h.b16 %v261
  %v1007 = vunpack.c.l.b16 %v262
  %v1008 = vunpack.c.l.b16 %v263
  %v1009 = vunpack.c.h.b16 %v263
  %v1010 = vunpack.c.l.b16 %v264
  %v1011 = vunpack.c.l.b16 %v265
  %v1012 = vunpack.c.h.b16 %v265
  %v1013 = vunpack.c.l.b16 %v266
  %v1014 = vunpack.c.l.b16 %v267
  %v1015 = vunpack.c.h.b16 %v267
  %v1016 = vunpack.c.l.b16 %v268
  %v1017 = vunpack.c.l.b16 %v269
  %v1018 = vunpack.c.h.b16 %v269
  %v1019 = vunpack.c.l.b16 %v270
  %v1020 = vunpack.c.l.b16 %v271
  %v1021 = vunpack.c.h.b16 %v271
  %v1022 = vunpack.c.l.b16 %v272
  %v1023 = vunpack.c.l.b16 %v273
  %v1024 = vunpack.c.h.b16 %v273
  %v1025 = vunpack.c.l.b16 %v274
  %v1026 = vunpack.c.l.b16 %v275
  %v1027 = vunpack.c.h.b16 %v275
  %v1028 = vunpack.c.l.b16 %v276
  %v1029 = vunpack.c.l.b16 %v277
  %v1030 = vunpack.c.h.b16 %v277
  %v1031 = vunpack.c.l.b16 %v278
  %v1032 = vunpack.c.l.b16 %v279
  %v1033 = vunpack.c.h.b16 %v279
  %v1034 = vunpack.c.l.b16 %v280
  %v1035 = vunpack.c.l.b16 %v281
  %v1036 = vunpack.c.h.b16 %v281
  %v1037 = vunpack.c.l.b16 %v282
  %v1038 = vunpack.c.l.b16 %v283
  %v1039 = vunpack.c.h.b16 %v283
  %v1040 = vunpack.c.l.b16 %v284
  %v1041 = vunpack.c.l.b16 %v285
  %v1042 = vunpack.c.h.b16 %v285
  %v1043 = vunpack.c.l.b16 %v286
  %v1044 = vunpack.c.l.b16 %v287
  %v1045 = vunpack.c.h.b16 %v287
  %v1046 = vunpack.c.l.b16 %v288
  %v1047 = vunpack.c.l.b16 %v289
  %v1048 = vunpack.c.h.b16 %v289
  %v1049 = vunpack.c.l.b16 %v290
  %v1050 = vunpack.c.l.b16 %v291
  %v1051 = vunpack.c.h.b16 %v291
  %v1052 = vunpack.c.l.b16 %v292
  %v1053 = vunpack.c.l.b16 %v293
  %v1054 = vunpack.c.h.b16 %v293
  %v1055 = vunpack.c.l.b16 %v294
  %v1056 = vunpack.c.l.b16 %v295
  %v1057 = vunpack.c.h.b16 %v295
  %v1058 = vunpack.c.l.b16 %v296
  %v1059 = vunpack.c.l.b16 %v297
  %v1060 = vunpack.c.h.b16 %v297
  %v1061 = vunpack.c.l.b16 %v298
  %v1062 = vunpack.c.l.b16 %v299
  %v1063 = vunpack.c.h.b16 %v299
  %v1064 = vunpack.c.l.b16 %v300
  %v1065 = vunpack.c.l.b16 %v301
  %v1066 = vunpack.c.h.b16 %v301
  %v1067 = vunpack.c.l.b16 %v302
  %v1068 = vunpack.c.l.b16 %v303
  %v1069 = vunpack.c.h.b16 %v303
  %v1070 = vunpack.c.l.b16 %v304
  %v1071 = vunpack.c.l.b16 %v305
  %v1072 = vunpack.c.h.b16 %v305
  %v1073 = vunpack.c.l.b16 %v306
  %v1074 = vunpack.c.l.b16 %v307
  %v1075 = vunpack.c.h.b16 %v307
  %v1076 = vunpack.c.l.b16 %v308
  %v1077 = vunpack.c.l.b16 %v309
  %v1078 = vunpack.c.h.b16 %v309
  %v1079 = vunpack.c.l.b16 %v310
  %v1080 = vpack.c.b16 %v651, %v648
  %v1081 = vpack.c.b16 %v652, %v649
  %v1082 = vpack.c.b16 %v653, %v650
  %v1083 = vpack.c.b16 %v657, %v654
  %v1084 = vpack.c.b16 %v658, %v655
  %v1085 = vpack.c.b16 %v659, %v656
  %v1086 = vpack.c.b16 %v663, %v660
  %v1087 = vpack.c.b16 %v664, %v661
  %v1088 = vpack.c.b16 %v665, %v662
  %v1089 = vpack.c.b16 %v669, %v666
  %v1090 = vpack.c.b16 %v670, %v667
  %v1091 = vpack.c.b16 %v671, %v668
  %v1092 = vpack.c.b16 %v675, %v672
  %v1093 = vpack.c.b16 %v676, %v673
  %v1094 = vpack.c.b16 %v677, %v674
  %v1095 = vpack.c.b16 %v681, %v678
  %v1096 = vpack.c.b16 %v682, %v679
  %v1097 = vpack.c.b16 %v683, %v680
  %v1098 = vpack.c.b16 %v687, %v684
  %v1099 = vpack.c.b16 %v688, %v685
  %v1100 = vpack.c.b16 %v689, %v686
  %v1101 = vpack.c.b16 %v693, %v690
  %v1102 = vpack.c.b16 %v694, %v691
  %v1103 = vpack.c.b16 %v695, %v692
  %v1104 = vpack.c.b16 %v699, %v696
  %v1105 = vpack.c.b16 %v700, %v697
  %v1106 = vpack.c.b16 %v701, %v698
  %v1107 = vpack.c.b16 %v705, %v702
  %v1108 = vpack.c.b16 %v706, %v703
  %v1109 = vpack.c.b16 %v707, %v704
  %v1110 = vpack.c.b16 %v711, %v708
  %v1111 = vpack.c.b16 %v712, %v709
  %v1112 = vpack.c.b16 %v713, %v710
  %v1113 = vpack.c.b16 %v717, %v714
  %v1114 = vpack.c.b16 %v718, %v715
  %v1115 = vpack.c.b16 %v719, %v716
  %v1116 = vpack.c.b16 %v723, %v720
  %v1117 = vpack.c.b16 %v724, %v721
  %v1118 = vpack.c.b16 %v725, %v722
  %v1119 = vpack.c.b16 %v729, %v726
  %v1120 = vpack.c.b16 %v730, %v727
  %v1121 = vpack.c.b16 %v731, %v728
  %v1122 = vpack.c.b16 %v735, %v732
  %v1123 = vpack.c.b16 %v736, %v733
  %v1124 = vpack.c.b16 %v737, %v734
  %v1125 = vpack.c.b16 %v741, %v738
  %v1126 = vpack.c.b16 %v742, %v739
  %v1127 = vpack.c.b16 %v743, %v740
  %v1128 = vpack.c.b16 %v747, %v744
  %v1129 = vpack.c.b16 %v748, %v745
  %v1130 = vpack.c.b16 %v749, %v746
  %v1131 = vpack.c.b16 %v753, %v750
  %v1132 = vpack.c.b16 %v754, %v751
  %v1133 = vpack.c.b16 %v755, %v752
  %v1134 = vpack.c.b16 %v759, %v756
  %v1135 = vpack.c.b16 %v760, %v757
  %v1136 = vpack.c.b16 %v761, %v758
  %v1137 = vpack.c.b16 %v765, %v762
  %v1138 = vpack.c.b16 %v766, %v763
  %v1139 = vpack.c.b16 %v767, %v764
  %v1140 = vpack.c.b16 %v771, %v768
  %v1141 = vpack.c.b16 %v772, %v769
  %v1142 = vpack.c.b16 %v773, %v770
  %v1143 = vpack.c.b16 %v777, %v774
  %v1144 = vpack.c.b16 %v778, %v775
  %v1145 = vpack.c.b16 %v779, %v776
  %v1146 = vpack.c.b16 %v783, %v780
  %v1147 = vpack.c.b16 %v784, %v781
  %v1148 = vpack.c.b16 %v785, %v782
  %v1149 = vpack.c.b16 %v789, %v786
  %v1150 = vpack.c.b16 %v790, %v787
  %v1151 = vpack.c.b16 %v791, %v788
  %v1152 = vpack.c.b16 %v795, %v792
  %v1153 = vpack.c.b16 %v796, %v793
  %v1154 = vpack.c.b16 %v797, %v794
  %v1155 = vpack.c.b16 %v801, %v798
  %v1156 = vpack.c.b16 %v802, %v799
  %v1157 = vpack.c.b16 %v803, %v800
  %v1158 = vpack.c.b16 %v807, %v804
  %v1159 = vpack.c.b16 %v808, %v805
  %v1160 = vpack.c.b16 %v809, %v806
  %v1161 = vpack.c.b16 %v813, %v810
  %v1162 = vpack.c.b16 %v814, %v811
  %v1163 = vpack.c.b16 %v815, %v812
  %v1164 = vpack.c.b16 %v819, %v816
  %v1165 = vpack.c.b16 %v820, %v817
  %v1166 = vpack.c.b16 %v821, %v818
  %v1167 = vpack.c.b16 %v825, %v822
  %v1168 = vpack.c.b16 %v826, %v823
  %v1169 = vpack.c.b16 %v827, %v824
  %v1170 = vpack.c.b16 %v831, %v828
  %v1171 = vpack.c.b16 %v832, %v829
  %v1172 = vpack.c.b16 %v833, %v830
  %v1173 = vpack.c.b16 %v837, %v834
  %v1174 = vpack.c.b16 %v838, %v835
  %v1175 = vpack.c.b16 %v839, %v836
  %v1176 = vpack.c.b16 %v843, %v840
  %v1177 = vpack.c.b16 %v844, %v841
  %v1178 = vpack.c.b16 %v845, %v842
  %v1179 = vpack.c.b16 %v849, %v846
  %v1180 = vpack.c.b16 %v850, %v847
  %v1181 = vpack.c.b16 %v851, %v848
  %v1182 = vpack.c.b16 %v855, %v852
  %v1183 = vpack.c.b16 %v856, %v853
  %v1184 = vpack.c.b16 %v857, %v854
  %v1185 = vpack.c.b16 %v861, %v858
  %v1186 = vpack.c.b16 %v862, %v859
  %v1187 = vpack.c.b16 %v863, %v860
  %v1188 = vpack.c.b16 %v867, %v864
  %v1189 = vpack.c.b16 %v868, %v865
  %v1190 = vpack.c.b16 %v869, %v866
  %v1191 = vpack.c.b16 %v873, %v870
  %v1192 = vpack.c.b16 %v874, %v871
  %v1193 = vpack.c.b16 %v875, %v872
  %v1194 = vpack.c.b16 %v879, %v876
  %v1195 = vpack.c.b16 %v880, %v877
  %v1196 = vpack.c.b16 %v881, %v878
  %v1197 = vpack.c.b16 %v885, %v882
  %v1198 = vpack.c.b16 %v886, %v883
  %v1199 = vpack.c.b16 %v887, %v884
  %v1200 = vpack.c.b16 %v891, %v888
  %v1201 = vpack.c.b16 %v892, %v889
  %v1202 = vpack.c.b16 %v893, %v890
  %v1203 = vpack.c.b16 %v897, %v894
  %v1204 = vpack.c.b16 %v898, %v895
  %v1205 = vpack.c.b16 %v899, %v896
  %v1206 = vpack.c.b16 %v903, %v900
  %v1207 = vpack.c.b16 %v904, %v901
  %v1208 = vpack.c.b16 %v905, %v902
  %v1209 = vpack.c.b16 %v909, %v906
  %v1210 = vpack.c.b16 %v910, %v907
  %v1211 = vpack.c.b16 %v911, %v908
  %v1212 = vpack.c.b16 %v915, %v912
  %v1213 = vpack.c.b16 %v916, %v913
  %v1214 = vpack.c.b16 %v917, %v914
  %v1215 = vpack.c.b16 %v921, %v918
  %v1216 = vpack.c.b16 %v922, %v919
  %v1217 = vpack.c.b16 %v923, %v920
  %v1218 = vpack.c.b16 %v927, %v924
  %v1219 = vpack.c.b16 %v928, %v925
  %v1220 = vpack.c.b16 %v929, %v926
  %v1221 = vpack.c.b16 %v933, %v930
  %v1222 = vpack.c.b16 %v934, %v931
  %v1223 = vpack.c.b16 %v935, %v932
  %v1224 = vpack.c.b16 %v939, %v936
  %v1225 = vpack.c.b16 %v940, %v937
  %v1226 = vpack.c.b16 %v941, %v938
  %v1227 = vpack.c.b16 %v945, %v942
  %v1228 = vpack.c.b16 %v946, %v943
  %v1229 = vpack.c.b16 %v947, %v944
  %v1230 = vpack.c.b16 %v951, %v948
  %v1231 = vpack.c.b16 %v952, %v949
  %v1232 = vpack.c.b16 %v953, %v950
  %v1233 = vpack.c.b16 %v957, %v954
  %v1234 = vpack.c.b16 %v958, %v955
  %v1235 = vpack.c.b16 %v959, %v956
  %v1236 = vpack.c.b16 %v963, %v960
  %v1237 = vpack.c.b16 %v964, %v961
  %v1238 = vpack.c.b16 %v965, %v962
  %v1239 = vpack.c.b16 %v969, %v966
  %v1240 = vpack.c.b16 %v970, %v967
  %v1241 = vpack.c.b16 %v971, %v968
  %v1242 = vpack.c.b16 %v975, %v972
  %v1243 = vpack.c.b16 %v976, %v973
  %v1244 = vpack.c.b16 %v977, %v974
  %v1245 = vpack.c.b16 %v981, %v978
  %v1246 = vpack.c.b16 %v982, %v979
  %v1247 = vpack.c.b16 %v983, %v980
  %v1248 = vpack.c.b16 %v987, %v984
  %v1249 = vpack.c.b16 %v988, %v985
  %v1250 = vpack.c.b16 %v989, %v986
  %v1251 = vpack.c.b16 %v993, %v990
  %v1252 = vpack.c.b16 %v994, %v991
  %v1253 = vpack.c.b16 %v995, %v992
  %v1254 = vpack.c.b16 %v999, %v996
  %v1255 = vpack.c.b16 %v1000, %v997
  %v1256 = vpack.c.b16 %v1001, %v998
  %v1257 = vpack.c.b16 %v1005, %v1002
  %v1258 = vpack.c.b16 %v1006, %v1003
  %v1259 = vpack.c.b16 %v1007, %v1004
  %v1260 = vpack.c.b16 %v1011, %v1008
  %v1261 = vpack.c.b16 %v1012, %v1009
  %v1262 = vpack.c.b16 %v1013, %v1010
  %v1263 = vpack.c.b16 %v1017, %v1014
  %v1264 = vpack.c.b16 %v1018, %v1015
  %v1265 = vpack.c.b16 %v1019, %v1016
  %v1266 = vpack.c.b16 %v1023, %v1020
  %v1267 = vpack.c.b16 %v1024, %v1021
  %v1268 = vpack.c.b16 %v1025, %v1022
  %v1269 = vpack.c.b16 %v1029, %v1026
  %v1270 = vpack.c.b16 %v1030, %v1027
  %v1271 = vpack.c.b16 %v1031, %v1028
  %v1272 = vpack.c.b16 %v1035, %v1032
  %v1273 = vpack.c.b16 %v1036, %v1033
  %v1274 = vpack.c.b16 %v1037, %v1034
  %v1275 = vpack.c.b16 %v1041, %v1038
  %v1276 = vpack.c.b16 %v1042, %v1039
  %v1277 = vpack.c.b16 %v1043, %v1040
  %v1278 = vpack.c.b16 %v1047, %v1044
  %v1279 = vpack.c.b16 %v1048, %v1045
  %v1280 = vpack.c.b16 %v1049, %v1046
  %v1281 = vpack.c.b16 %v1053, %v1050
  %v1282 = vpack.c.b16 %v1054, %v1051
  %v1283 = vpack.c.b16 %v1055, %v1052
  %v1284 = vpack.c.b16 %v1059, %v1056
  %v1285 = vpack.c.b16 %v1060, %v1057
  %v1286 = vpack.c.b16 %v1061, %v1058
  %v1287 = vpack.c.b16 %v1065, %v1062
  %v1288 = vpack.c.b16 %v1066, %v1063
  %v1289 = vpack.c.b16 %v1067, %v1064
  %v1290 = vpack.c.b16 %v1071, %v1068
  %v1291 = vpack.c.b16 %v1072, %v1069
  %v1292 = vpack.c.b16 %v1073, %v1070
  %v1293 = vpack.c.b16 %v1077, %v1074
  %v1294 = vpack.c.b16 %v1078, %v1075
  %v1295 = vpack.c.b16 %v1079, %v1076
  %1512 = vmatprep.subr.bf16.mxu0 %v1102
  %1513 = vmatpush1.bf16.msra.mxu0 %v1101
  %1514 = vmatprep.subr.bf16.mxu0 %v1099
  %1515 = vmatpush1.bf16.msra.mxu0 %v1098
  %1516 = vmatprep.subr.bf16.mxu0 %v1096
  %1517 = vmatpush1.bf16.msra.mxu0 %v1095
  %1518 = vmatprep.subr.bf16.mxu0 %v1093
  %1519 = vmatpush1.bf16.msra.mxu0 %v1092
  %1520 = vmatprep.subr.bf16.mxu0 %v1090
  %1521 = vmatpush1.bf16.msra.mxu0 %v1089
  %1522 = vmatprep.subr.bf16.mxu0 %v1087
  %1523 = vmatpush1.bf16.msra.mxu0 %v1086
  %1524 = vmatprep.subr.bf16.mxu0 %v1084
  %1525 = vmatpush1.bf16.msra.mxu0 %v1083
  %1526 = vmatprep.subr.bf16.mxu0 %v1081
  %1527 = vmatpush1.bf16.msra.mxu0 %v1080
  %1528 = vmatprep.subr.bf16.mxu0 %v1126
  %1529 = vmatpush2.bf16.msra.mxu0 %v1125
  %1530 = vmatprep.subr.bf16.mxu0 %v1123
  %1531 = vmatpush2.bf16.msra.mxu0 %v1122
  %1532 = vmatprep.subr.bf16.mxu0 %v1120
  %1533 = vmatpush2.bf16.msra.mxu0 %v1119
  %1534 = vmatprep.subr.bf16.mxu0 %v1117
  %1535 = vmatpush2.bf16.msra.mxu0 %v1116
  %1536 = vmatprep.subr.bf16.mxu0 %v1114
  %1537 = vmatpush2.bf16.msra.mxu0 %v1113
  %1538 = vmatprep.subr.bf16.mxu0 %v1111
  %1539 = vmatpush2.bf16.msra.mxu0 %v1110
  %1540 = vmatprep.subr.bf16.mxu0 %v1108
  %1541 = vmatpush2.bf16.msra.mxu0 %v1107
  %1542 = vmatprep.subr.bf16.mxu0 %v1105
  %1543 = vmatpush2.bf16.msra.mxu0 %v1104
  %1544 = vmatprep.mubr.bf16.mxu0 %v343
  %1545 = vmatmul.mubr.bf16.gmra.mxu0 %v342
  %v1546 = vpop.f32.mrf.mxu0
  %v1547 = vadd.f32 %v316, %v1546
  %v1548 = vpop.f32.mrf.mxu0
  %v1549 = vadd.f32 %v320, %v1548
  %v1550 = vpop.f32.mrf.mxu0
  %v1551 = vpop.f32.mrf.mxu0
  %1552 = vdwg.mxu0
  %1553 = vmatprep.subr.bf16.mxu0 %v1150
  %1554 = vmatpush1.bf16.msra.mxu0 %v1149
  %1555 = vmatprep.subr.bf16.mxu0 %v1147
  %1556 = vmatpush1.bf16.msra.mxu0 %v1146
  %1557 = vmatprep.subr.bf16.mxu0 %v1144
  %1558 = vmatpush1.bf16.msra.mxu0 %v1143
  %1559 = vmatprep.subr.bf16.mxu0 %v1141
  %1560 = vmatpush1.bf16.msra.mxu0 %v1140
  %1561 = vmatprep.subr.bf16.mxu0 %v1138
  %1562 = vmatpush1.bf16.msra.mxu0 %v1137
  %1563 = vmatprep.subr.bf16.mxu0 %v1135
  %1564 = vmatpush1.bf16.msra.mxu0 %v1134
  %1565 = vmatprep.subr.bf16.mxu0 %v1132
  %1566 = vmatpush1.bf16.msra.mxu0 %v1131
  %1567 = vmatprep.subr.bf16.mxu0 %v1129
  %1568 = vmatpush1.bf16.msra.mxu0 %v1128
  %1569 = vmatprep.subr.bf16.mxu0 %v1174
  %1570 = vmatpush2.bf16.msra.mxu0 %v1173
  %1571 = vmatprep.subr.bf16.mxu0 %v1171
  %1572 = vmatpush2.bf16.msra.mxu0 %v1170
  %1573 = vmatprep.subr.bf16.mxu0 %v1168
  %1574 = vmatpush2.bf16.msra.mxu0 %v1167
  %1575 = vmatprep.subr.bf16.mxu0 %v1165
  %1576 = vmatpush2.bf16.msra.mxu0 %v1164
  %1577 = vmatprep.subr.bf16.mxu0 %v1162
  %1578 = vmatpush2.bf16.msra.mxu0 %v1161
  %1579 = vmatprep.subr.bf16.mxu0 %v1159
  %1580 = vmatpush2.bf16.msra.mxu0 %v1158
  %1581 = vmatprep.subr.bf16.mxu0 %v1156
  %1582 = vmatpush2.bf16.msra.mxu0 %v1155
  %1583 = vmatprep.subr.bf16.mxu0 %v1153
  %1584 = vmatpush2.bf16.msra.mxu0 %v1152
  %1585 = vmatprep.mubr.bf16.mxu0 %v345
  %1586 = vmatmul.mubr.bf16.gmra.mxu0 %v344
  %v1587 = vpop.f32.mrf.mxu0
  %v1588 = vadd.f32 %v1547, %v1587
  %v1589 = vpop.f32.mrf.mxu0
  %v1590 = vadd.f32 %v1549, %v1589
  %v1591 = vpop.f32.mrf.mxu0
  %v1592 = vpop.f32.mrf.mxu0
  %1593 = vdwg.mxu0
  %1594 = vmatprep.subr.bf16.mxu0 %v1198
  %1595 = vmatpush1.bf16.msra.mxu0 %v1197
  %1596 = vmatprep.subr.bf16.mxu0 %v1195
  %1597 = vmatpush1.bf16.msra.mxu0 %v1194
  %1598 = vmatprep.subr.bf16.mxu0 %v1192
  %1599 = vmatpush1.bf16.msra.mxu0 %v1191
  %1600 = vmatprep.subr.bf16.mxu0 %v1189
  %1601 = vmatpush1.bf16.msra.mxu0 %v1188
  %1602 = vmatprep.subr.bf16.mxu0 %v1186
  %1603 = vmatpush1.bf16.msra.mxu0 %v1185
  %1604 = vmatprep.subr.bf16.mxu0 %v1183
  %1605 = vmatpush1.bf16.msra.mxu0 %v1182
  %1606 = vmatprep.subr.bf16.mxu0 %v1180
  %1607 = vmatpush1.bf16.msra.mxu0 %v1179
  %1608 = vmatprep.subr.bf16.mxu0 %v1177
  %1609 = vmatpush1.bf16.msra.mxu0 %v1176
  %1610 = vmatprep.subr.bf16.mxu0 %v1222
  %1611 = vmatpush2.bf16.msra.mxu0 %v1221
  %1612 = vmatprep.subr.bf16.mxu0 %v1219
  %1613 = vmatpush2.bf16.msra.mxu0 %v1218
  %1614 = vmatprep.subr.bf16.mxu0 %v1216
  %1615 = vmatpush2.bf16.msra.mxu0 %v1215
  %1616 = vmatprep.subr.bf16.mxu0 %v1213
  %1617 = vmatpush2.bf16.msra.mxu0 %v1212
  %1618 = vmatprep.subr.bf16.mxu0 %v1210
  %1619 = vmatpush2.bf16.msra.mxu0 %v1209
  %1620 = vmatprep.subr.bf16.mxu0 %v1207
  %1621 = vmatpush2.bf16.msra.mxu0 %v1206
  %1622 = vmatprep.subr.bf16.mxu0 %v1204
  %1623 = vmatpush2.bf16.msra.mxu0 %v1203
  %1624 = vmatprep.subr.bf16.mxu0 %v1201
  %1625 = vmatpush2.bf16.msra.mxu0 %v1200
  %1626 = vmatprep.mubr.bf16.mxu0 %v347
  %1627 = vmatmul.mubr.bf16.gmra.mxu0 %v346
  %v1628 = vpop.f32.mrf.mxu0
  %v1629 = vadd.f32 %v1588, %v1628
  %v1630 = vpop.f32.mrf.mxu0
  %v1631 = vadd.f32 %v1590, %v1630
  %v1632 = vpop.f32.mrf.mxu0
  %v1633 = vpop.f32.mrf.mxu0
  %1634 = vdwg.mxu0
  %1635 = vmatprep.subr.bf16.mxu0 %v1246
  %1636 = vmatpush1.bf16.msra.mxu0 %v1245
  %1637 = vmatprep.subr.bf16.mxu0 %v1243
  %1638 = vmatpush1.bf16.msra.mxu0 %v1242
  %1639 = vmatprep.subr.bf16.mxu0 %v1240
  %1640 = vmatpush1.bf16.msra.mxu0 %v1239
  %1641 = vmatprep.subr.bf16.mxu0 %v1237
  %1642 = vmatpush1.bf16.msra.mxu0 %v1236
  %1643 = vmatprep.subr.bf16.mxu0 %v1234
  %1644 = vmatpush1.bf16.msra.mxu0 %v1233
  %1645 = vmatprep.subr.bf16.mxu0 %v1231
  %1646 = vmatpush1.bf16.msra.mxu0 %v1230
  %1647 = vmatprep.subr.bf16.mxu0 %v1228
  %1648 = vmatpush1.bf16.msra.mxu0 %v1227
  %1649 = vmatprep.subr.bf16.mxu0 %v1225
  %1650 = vmatpush1.bf16.msra.mxu0 %v1224
  %1651 = vmatprep.subr.bf16.mxu0 %v1270
  %1652 = vmatpush2.bf16.msra.mxu0 %v1269
  %1653 = vmatprep.subr.bf16.mxu0 %v1267
  %1654 = vmatpush2.bf16.msra.mxu0 %v1266
  %1655 = vmatprep.subr.bf16.mxu0 %v1264
  %1656 = vmatpush2.bf16.msra.mxu0 %v1263
  %1657 = vmatprep.subr.bf16.mxu0 %v1261
  %1658 = vmatpush2.bf16.msra.mxu0 %v1260
  %1659 = vmatprep.subr.bf16.mxu0 %v1258
  %1660 = vmatpush2.bf16.msra.mxu0 %v1257
  %1661 = vmatprep.subr.bf16.mxu0 %v1255
  %1662 = vmatpush2.bf16.msra.mxu0 %v1254
  %1663 = vmatprep.subr.bf16.mxu0 %v1252
  %1664 = vmatpush2.bf16.msra.mxu0 %v1251
  %1665 = vmatprep.subr.bf16.mxu0 %v1249
  %1666 = vmatpush2.bf16.msra.mxu0 %v1248
  %1667 = vmatprep.mubr.bf16.mxu0 %v349
  %1668 = vmatmul.mubr.bf16.gmra.mxu0 %v348
  %v1669 = vpop.f32.mrf.mxu0
  %v1670 = vadd.f32 %v1629, %v1669
  %v1671 = vpop.f32.mrf.mxu0
  %v1672 = vadd.f32 %v1631, %v1671
  %v1673 = vpop.f32.mrf.mxu0
  %v1674 = vpop.f32.mrf.mxu0
  %1675 = vdwg.mxu0
  %1676 = vmatprep.subr.bf16.mxu0 %v1294
  %1677 = vmatpush1.bf16.msra.mxu0 %v1293
  %1678 = vmatprep.subr.bf16.mxu0 %v1291
  %1679 = vmatpush1.bf16.msra.mxu0 %v1290
  %1680 = vmatprep.subr.bf16.mxu0 %v1288
  %1681 = vmatpush1.bf16.msra.mxu0 %v1287
  %1682 = vmatprep.subr.bf16.mxu0 %v1285
  %1683 = vmatpush1.bf16.msra.mxu0 %v1284
  %1684 = vmatprep.subr.bf16.mxu0 %v1282
  %1685 = vmatpush1.bf16.msra.mxu0 %v1281
  %1686 = vmatprep.subr.bf16.mxu0 %v1279
  %1687 = vmatpush1.bf16.msra.mxu0 %v1278
  %1688 = vmatprep.subr.bf16.mxu0 %v1276
  %1689 = vmatpush1.bf16.msra.mxu0 %v1275
  %1690 = vmatprep.subr.bf16.mxu0 %v1273
  %1691 = vmatpush1.bf16.msra.mxu0 %v1272
  %1692 = vmatprep.subr.bf16.mxu0 0
  %1693 = vmatpush2.bf16.msra.mxu0 0
  %1694 = vmatprep.subr.bf16.mxu0 0
  %1695 = vmatpush2.bf16.msra.mxu0 0
  %1696 = vmatprep.subr.bf16.mxu0 0
  %1697 = vmatpush2.bf16.msra.mxu0 0
  %1698 = vmatprep.subr.bf16.mxu0 0
  %1699 = vmatpush2.bf16.msra.mxu0 0
  %1700 = vmatprep.subr.bf16.mxu0 0
  %1701 = vmatpush2.bf16.msra.mxu0 0
  %1702 = vmatprep.subr.bf16.mxu0 0
  %1703 = vmatpush2.bf16.msra.mxu0 0
  %1704 = vmatprep.subr.bf16.mxu0 0
  %1705 = vmatpush2.bf16.msra.mxu0 0
  %1706 = vmatprep.subr.bf16.mxu0 0
  %1707 = vmatpush2.bf16.msra.mxu0 0
  %1708 = vmatprep.mubr.bf16.mxu0 0
  %1709 = vmatmul.mubr.bf16.gmra.mxu0 %v350
  %v1710 = vpop.f32.mrf.mxu0
  %v1711 = vadd.f32 %v1670, %v1710
  %v1712 = vpop.f32.mrf.mxu0
  %v1713 = vadd.f32 %v1672, %v1712
  %v1714 = vpop.f32.mrf.mxu0
  %v1715 = vpop.f32.mrf.mxu0
  %1716 = vdwg.mxu0
  %1717 = vmatprep.subr.bf16.mxu0 0
  %1718 = vmatpush1.bf16.msra.mxu0 %v1103
  %1719 = vmatprep.subr.bf16.mxu0 0
  %1720 = vmatpush1.bf16.msra.mxu0 %v1100
  %1721 = vmatprep.subr.bf16.mxu0 0
  %1722 = vmatpush1.bf16.msra.mxu0 %v1097
  %1723 = vmatprep.subr.bf16.mxu0 0
  %1724 = vmatpush1.bf16.msra.mxu0 %v1094
  %1725 = vmatprep.subr.bf16.mxu0 0
  %1726 = vmatpush1.bf16.msra.mxu0 %v1091
  %1727 = vmatprep.subr.bf16.mxu0 0
  %1728 = vmatpush1.bf16.msra.mxu0 %v1088
  %1729 = vmatprep.subr.bf16.mxu0 0
  %1730 = vmatpush1.bf16.msra.mxu0 %v1085
  %1731 = vmatprep.subr.bf16.mxu0 0
  %1732 = vmatpush1.bf16.msra.mxu0 %v1082
  %1733 = vmatprep.subr.bf16.mxu0 0
  %1734 = vmatpush2.bf16.msra.mxu0 %v1127
  %1735 = vmatprep.subr.bf16.mxu0 0
  %1736 = vmatpush2.bf16.msra.mxu0 %v1124
  %1737 = vmatprep.subr.bf16.mxu0 0
  %1738 = vmatpush2.bf16.msra.mxu0 %v1121
  %1739 = vmatprep.subr.bf16.mxu0 0
  %1740 = vmatpush2.bf16.msra.mxu0 %v1118
  %1741 = vmatprep.subr.bf16.mxu0 0
  %1742 = vmatpush2.bf16.msra.mxu0 %v1115
  %1743 = vmatprep.subr.bf16.mxu0 0
  %1744 = vmatpush2.bf16.msra.mxu0 %v1112
  %1745 = vmatprep.subr.bf16.mxu0 0
  %1746 = vmatpush2.bf16.msra.mxu0 %v1109
  %1747 = vmatprep.subr.bf16.mxu0 0
  %1748 = vmatpush2.bf16.msra.mxu0 %v1106
  %1749 = vmatprep.mubr.bf16.mxu0 %v343
  %1750 = vmatmul.mubr.bf16.gmra.mxu0 %v342
  %v1751 = vpop.f32.mrf.mxu0
  %v1752 = vadd.f32 %v324, %v1751
  %v1753 = vpop.f32.mrf.mxu0
  %v1754 = vpop.f32.mrf.mxu0
  %v1755 = vpop.f32.mrf.mxu0
  %1756 = vdwg.mxu0
  %1757 = vmatprep.subr.bf16.mxu0 0
  %1758 = vmatpush1.bf16.msra.mxu0 %v1151
  %1759 = vmatprep.subr.bf16.mxu0 0
  %1760 = vmatpush1.bf16.msra.mxu0 %v1148
  %1761 = vmatprep.subr.bf16.mxu0 0
  %1762 = vmatpush1.bf16.msra.mxu0 %v1145
  %1763 = vmatprep.subr.bf16.mxu0 0
  %1764 = vmatpush1.bf16.msra.mxu0 %v1142
  %1765 = vmatprep.subr.bf16.mxu0 0
  %1766 = vmatpush1.bf16.msra.mxu0 %v1139
  %1767 = vmatprep.subr.bf16.mxu0 0
  %1768 = vmatpush1.bf16.msra.mxu0 %v1136
  %1769 = vmatprep.subr.bf16.mxu0 0
  %1770 = vmatpush1.bf16.msra.mxu0 %v1133
  %1771 = vmatprep.subr.bf16.mxu0 0
  %1772 = vmatpush1.bf16.msra.mxu0 %v1130
  %1773 = vmatprep.subr.bf16.mxu0 0
  %1774 = vmatpush2.bf16.msra.mxu0 %v1175
  %1775 = vmatprep.subr.bf16.mxu0 0
  %1776 = vmatpush2.bf16.msra.mxu0 %v1172
  %1777 = vmatprep.subr.bf16.mxu0 0
  %1778 = vmatpush2.bf16.msra.mxu0 %v1169
  %1779 = vmatprep.subr.bf16.mxu0 0
  %1780 = vmatpush2.bf16.msra.mxu0 %v1166
  %1781 = vmatprep.subr.bf16.mxu0 0
  %1782 = vmatpush2.bf16.msra.mxu0 %v1163
  %1783 = vmatprep.subr.bf16.mxu0 0
  %1784 = vmatpush2.bf16.msra.mxu0 %v1160
  %1785 = vmatprep.subr.bf16.mxu0 0
  %1786 = vmatpush2.bf16.msra.mxu0 %v1157
  %1787 = vmatprep.subr.bf16.mxu0 0
  %1788 = vmatpush2.bf16.msra.mxu0 %v1154
  %1789 = vmatprep.mubr.bf16.mxu0 %v345
  %1790 = vmatmul.mubr.bf16.gmra.mxu0 %v344
  %v1791 = vpop.f32.mrf.mxu0
  %v1792 = vadd.f32 %v1752, %v1791
  %v1793 = vpop.f32.mrf.mxu0
  %v1794 = vpop.f32.mrf.mxu0
  %v1795 = vpop.f32.mrf.mxu0
  %1796 = vdwg.mxu0
  %1797 = vmatprep.subr.bf16.mxu0 0
  %1798 = vmatpush1.bf16.msra.mxu0 %v1199
  %1799 = vmatprep.subr.bf16.mxu0 0
  %1800 = vmatpush1.bf16.msra.mxu0 %v1196
  %1801 = vmatprep.subr.bf16.mxu0 0
  %1802 = vmatpush1.bf16.msra.mxu0 %v1193
  %1803 = vmatprep.subr.bf16.mxu0 0
  %1804 = vmatpush1.bf16.msra.mxu0 %v1190
  %1805 = vmatprep.subr.bf16.mxu0 0
  %1806 = vmatpush1.bf16.msra.mxu0 %v1187
  %1807 = vmatprep.subr.bf16.mxu0 0
  %1808 = vmatpush1.bf16.msra.mxu0 %v1184
  %1809 = vmatprep.subr.bf16.mxu0 0
  %1810 = vmatpush1.bf16.msra.mxu0 %v1181
  %1811 = vmatprep.subr.bf16.mxu0 0
  %1812 = vmatpush1.bf16.msra.mxu0 %v1178
  %1813 = vmatprep.subr.bf16.mxu0 0
  %1814 = vmatpush2.bf16.msra.mxu0 %v1223
  %1815 = vmatprep.subr.bf16.mxu0 0
  %1816 = vmatpush2.bf16.msra.mxu0 %v1220
  %1817 = vmatprep.subr.bf16.mxu0 0
  %1818 = vmatpush2.bf16.msra.mxu0 %v1217
  %1819 = vmatprep.subr.bf16.mxu0 0
  %1820 = vmatpush2.bf16.msra.mxu0 %v1214
  %1821 = vmatprep.subr.bf16.mxu0 0
  %1822 = vmatpush2.bf16.msra.mxu0 %v1211
  %1823 = vmatprep.subr.bf16.mxu0 0
  %1824 = vmatpush2.bf16.msra.mxu0 %v1208
  %1825 = vmatprep.subr.bf16.mxu0 0
  %1826 = vmatpush2.bf16.msra.mxu0 %v1205
  %1827 = vmatprep.subr.bf16.mxu0 0
  %1828 = vmatpush2.bf16.msra.mxu0 %v1202
  %1829 = vmatprep.mubr.bf16.mxu0 %v347
  %1830 = vmatmul.mubr.bf16.gmra.mxu0 %v346
  %v1831 = vpop.f32.mrf.mxu0
  %v1832 = vadd.f32 %v1792, %v1831
  %v1833 = vpop.f32.mrf.mxu0
  %v1834 = vpop.f32.mrf.mxu0
  %v1835 = vpop.f32.mrf.mxu0
  %1836 = vdwg.mxu0
  %1837 = vmatprep.subr.bf16.mxu0 0
  %1838 = vmatpush1.bf16.msra.mxu0 %v1247
  %1839 = vmatprep.subr.bf16.mxu0 0
  %1840 = vmatpush1.bf16.msra.mxu0 %v1244
  %1841 = vmatprep.subr.bf16.mxu0 0
  %1842 = vmatpush1.bf16.msra.mxu0 %v1241
  %1843 = vmatprep.subr.bf16.mxu0 0
  %1844 = vmatpush1.bf16.msra.mxu0 %v1238
  %1845 = vmatprep.subr.bf16.mxu0 0
  %1846 = vmatpush1.bf16.msra.mxu0 %v1235
  %1847 = vmatprep.subr.bf16.mxu0 0
  %1848 = vmatpush1.bf16.msra.mxu0 %v1232
  %1849 = vmatprep.subr.bf16.mxu0 0
  %1850 = vmatpush1.bf16.msra.mxu0 %v1229
  %1851 = vmatprep.subr.bf16.mxu0 0
  %1852 = vmatpush1.bf16.msra.mxu0 %v1226
  %1853 = vmatprep.subr.bf16.mxu0 0
  %1854 = vmatpush2.bf16.msra.mxu0 %v1271
  %1855 = vmatprep.subr.bf16.mxu0 0
  %1856 = vmatpush2.bf16.msra.mxu0 %v1268
  %1857 = vmatprep.subr.bf16.mxu0 0
  %1858 = vmatpush2.bf16.msra.mxu0 %v1265
  %1859 = vmatprep.subr.bf16.mxu0 0
  %1860 = vmatpush2.bf16.msra.mxu0 %v1262
  %1861 = vmatprep.subr.bf16.mxu0 0
  %1862 = vmatpush2.bf16.msra.mxu0 %v1259
  %1863 = vmatprep.subr.bf16.mxu0 0
  %1864 = vmatpush2.bf16.msra.mxu0 %v1256
  %1865 = vmatprep.subr.bf16.mxu0 0
  %1866 = vmatpush2.bf16.msra.mxu0 %v1253
  %1867 = vmatprep.subr.bf16.mxu0 0
  %1868 = vmatpush2.bf16.msra.mxu0 %v1250
  %1869 = vmatprep.mubr.bf16.mxu0 %v349
  %1870 = vmatmul.mubr.bf16.gmra.mxu0 %v348
  %v1871 = vpop.f32.mrf.mxu0
  %v1872 = vadd.f32 %v1832, %v1871
  %v1873 = vpop.f32.mrf.mxu0
  %v1874 = vpop.f32.mrf.mxu0
  %v1875 = vpop.f32.mrf.mxu0
  %1876 = vdwg.mxu0
  %1877 = vmatprep.subr.bf16.mxu0 0
  %1878 = vmatpush1.bf16.msra.mxu0 %v1295
  %1879 = vmatprep.subr.bf16.mxu0 0
  %1880 = vmatpush1.bf16.msra.mxu0 %v1292
  %1881 = vmatprep.subr.bf16.mxu0 0
  %1882 = vmatpush1.bf16.msra.mxu0 %v1289
  %1883 = vmatprep.subr.bf16.mxu0 0
  %1884 = vmatpush1.bf16.msra.mxu0 %v1286
  %1885 = vmatprep.subr.bf16.mxu0 0
  %1886 = vmatpush1.bf16.msra.mxu0 %v1283
  %1887 = vmatprep.subr.bf16.mxu0 0
  %1888 = vmatpush1.bf16.msra.mxu0 %v1280
  %1889 = vmatprep.subr.bf16.mxu0 0
  %1890 = vmatpush1.bf16.msra.mxu0 %v1277
  %1891 = vmatprep.subr.bf16.mxu0 0
  %1892 = vmatpush1.bf16.msra.mxu0 %v1274
  %1893 = vmatprep.subr.bf16.mxu0 0
  %1894 = vmatpush2.bf16.msra.mxu0 0
  %1895 = vmatprep.subr.bf16.mxu0 0
  %1896 = vmatpush2.bf16.msra.mxu0 0
  %1897 = vmatprep.subr.bf16.mxu0 0
  %1898 = vmatpush2.bf16.msra.mxu0 0
  %1899 = vmatprep.subr.bf16.mxu0 0
  %1900 = vmatpush2.bf16.msra.mxu0 0
  %1901 = vmatprep.subr.bf16.mxu0 0
  %1902 = vmatpush2.bf16.msra.mxu0 0
  %1903 = vmatprep.subr.bf16.mxu0 0
  %1904 = vmatpush2.bf16.msra.mxu0 0
  %1905 = vmatprep.subr.bf16.mxu0 0
  %1906 = vmatpush2.bf16.msra.mxu0 0
  %1907 = vmatprep.subr.bf16.mxu0 0
  %1908 = vmatpush2.bf16.msra.mxu0 0
  %1909 = vmatprep.mubr.bf16.mxu0 0
  %1910 = vmatmul.mubr.bf16.gmra.mxu0 %v350
  %v1911 = vpop.f32.mrf.mxu0
  %v1912 = vadd.f32 %v1872, %v1911
  %v1913 = vpop.f32.mrf.mxu0
  %v1914 = vpop.f32.mrf.mxu0
  %v1915 = vpop.f32.mrf.mxu0
  %1916 = vdwg.mxu0
  %v1917 = vld [vmem:[%s3] sm:$0x7]
  %v1919 = vlaneseq
  %v1920 = vshrl.u32 %v1919, 7
  %v1921 = vsub.s32 0, %v1920
  %v1922 = vrot.slane %v1917, %v1921
  %v1923 = vlaneseq
  %v1924 = vshrl.u32 %v1923, 7
  %v1925 = vsub.s32 1, %v1924
  %v1926 = vrot.slane %v1917, %v1925
  %v1927 = vlaneseq
  %v1928 = vshrl.u32 %v1927, 7
  %v1929 = vsub.s32 2, %v1928
  %v1930 = vrot.slane %v1917, %v1929
  %v1934 = vmax.f32 %v1711, %v1922
  %v1935 = vmax.f32 %v1713, %v1926
  %v1936 = vmax.f32 %v1912, %v1930
  %1937 = vst [vmem:[%s4] sm:$0xff] %v1934
  %1938 = vst [vmem:[%s4 + $0x8] sm:$0xff] %v1935
  %1939 = vst [vmem:[%s4 + $0x10] sm:$0xff] %v1936
  // Predicated region
  $region18: #{traj_predictor_forward.23} parent=0 // pred_check
    _
  $region19: #{traj_predictor_forward.23} parent=0 // pred_check_branch
    %1941 = sbr.rel (0) target = $region21
  $region20: #{traj_predictor_forward.23} parent=0 // pred_region
    _
  $region21: #{traj_predictor_forward.23} parent=0 // pred_fallthru
    _
  // Predicated region
  $region22: #{traj_predictor_forward.23} parent=0 // pred_check
    _
  $region23: #{traj_predictor_forward.23} parent=0 // pred_check_branch
    %1943 = sbr.rel (0) target = $region25
  $region24: #{traj_predictor_forward.23} parent=0 // pred_region
    _
  $region25: #{traj_predictor_forward.23} parent=0 // pred_fallthru
    _

// kernel: traj_predictor_forward.24
$region0: #{traj_predictor_forward.24}
  #allocation0 [shape = 'u32[]', space=smem, size = 0x4, offset = 0x4, fixed_abs, tag = 'smem constant byte address 0x4 - core index']
  #allocation1 [shape = 'u32[144,128]{1,0:T(1,128)}', space=vmem, size = 0x12000, scoped, tag = 'internal scratch']
  %s0 = inlined_call_operand.vmem [shape: bf16[8,27], index: 0, kind: input, shape index: {}]
  %s1 = inlined_call_operand.vmem [shape: bf16[27,128], index: 1, kind: input, shape index: {}]
  %s2 = inlined_call_operand.vmem [shape: f32[1,128], index: 2, kind: input, shape index: {}]
  %s3 = inlined_call_operand.vmem [shape: f32[1,128], index: 3, kind: input, shape index: {}]
  %s4 = inlined_call_operand.vmem [shape: f32[8,128], index: 4, kind: output, shape index: {}]
  %s5 = sld [smem:[#allocation0]]
  $region26: #{traj_predictor_forward.24} parent=0
    _
  %s7 = ssub.s32 1, %s5
  %s8 = scalar_select 0, %s7, %s5
  // Predicated region
  $region2: #{traj_predictor_forward.24} parent=0 // pred_check
    _
  $region3: #{traj_predictor_forward.24} parent=0 // pred_check_branch
    %10 = sbr.rel (0) target = $region5
  $region4: #{traj_predictor_forward.24} parent=0 // pred_region
    _
  $region5: #{traj_predictor_forward.24} parent=0 // pred_fallthru
    _
  // Predicated region
  $region6: #{traj_predictor_forward.24} parent=0 // pred_check
    _
  $region7: #{traj_predictor_forward.24} parent=0 // pred_check_branch
    %12 = sbr.rel (0) target = $region9
  $region8: #{traj_predictor_forward.24} parent=0 // pred_region
    _
  $region9: #{traj_predictor_forward.24} parent=0 // pred_fallthru
    _
  // Predicated region
  $region10: #{traj_predictor_forward.24} parent=0 // pred_check
    _
  $region11: #{traj_predictor_forward.24} parent=0 // pred_check_branch
    %14 = sbr.rel (0) target = $region13
  $region12: #{traj_predictor_forward.24} parent=0 // pred_region
    _
  $region13: #{traj_predictor_forward.24} parent=0 // pred_fallthru
    _
  // Predicated region
  $region14: #{traj_predictor_forward.24} parent=0 // pred_check
    _
  $region15: #{traj_predictor_forward.24} parent=0 // pred_check_branch
    %16 = sbr.rel (0) target = $region17
  $region16: #{traj_predictor_forward.24} parent=0 // pred_region
    _
  $region17: #{traj_predictor_forward.24} parent=0 // pred_fallthru
    _
  %v18 = vld [vmem:[%s0] sm:$0xf]
  %v19 = vld [vmem:[%s1] sm:$0xf]
  %v20 = vld [vmem:[%s1 + $0x4] sm:$0xf]
  %v21 = vld [vmem:[%s1 + $0x8] sm:$0xf]
  %v22 = vld [vmem:[%s1 + $0xc] sm:$0x3]
  %v23 = vld [vmem:[%s2] sm:$0x1]
  %v25 = vlaneseq
  %v26 = vshrl.u32 %v25, 7
  %v27 = vsub.s32 0, %v26
  %v28 = vrot.slane %v23, %v27
  %v34 = vunpack.c.l.b16 %v19
  %v35 = vunpack.c.l.b16 %v20
  %v36 = vunpack.c.l.b16 %v21
  %v37 = vunpack.c.l.b16 %v22
  %v38 = vpack.c.b16 %v35, %v34
  %v39 = vpack.c.b16 %v37, %v36
  %vm41 = vcmask 220160
  %v43 = vsel %vm41, %v18, 0
  %vm45 = vcmask 1044480
  %vm46 = vcmask 1045504
  %v47 = vsel %vm45, 4294967295, 65535
  %v48 = vsel %vm46, %v47, 0
  %v50 = vand.u32 %v39, %v48
  %52 = vmatprep.subr.bf16.mxu0 0
  %53 = vmatpush1.bf16.msra.mxu0 0
  %54 = vmatprep.subr.bf16.mxu0 0
  %55 = vmatpush1.bf16.msra.mxu0 0
  %56 = vmatprep.subr.bf16.mxu0 0
  %57 = vmatpush1.bf16.msra.mxu0 0
  %58 = vmatprep.subr.bf16.mxu0 0
  %59 = vmatpush1.bf16.msra.mxu0 0
  %60 = vmatprep.subr.bf16.mxu0 0
  %61 = vmatpush1.bf16.msra.mxu0 0
  %62 = vmatprep.subr.bf16.mxu0 0
  %63 = vmatpush1.bf16.msra.mxu0 0
  %64 = vmatprep.subr.bf16.mxu0 0
  %65 = vmatpush1.bf16.msra.mxu0 %v50
  %66 = vmatprep.subr.bf16.mxu0 0
  %67 = vmatpush1.bf16.msra.mxu0 %v38
  %68 = vmatprep.subr.bf16.mxu0 0
  %69 = vmatpush2.bf16.msra.mxu0 0
  %70 = vmatprep.subr.bf16.mxu0 0
  %71 = vmatpush2.bf16.msra.mxu0 0
  %72 = vmatprep.subr.bf16.mxu0 0
  %73 = vmatpush2.bf16.msra.mxu0 0
  %74 = vmatprep.subr.bf16.mxu0 0
  %75 = vmatpush2.bf16.msra.mxu0 0
  %76 = vmatprep.subr.bf16.mxu0 0
  %77 = vmatpush2.bf16.msra.mxu0 0
  %78 = vmatprep.subr.bf16.mxu0 0
  %79 = vmatpush2.bf16.msra.mxu0 0
  %80 = vmatprep.subr.bf16.mxu0 0
  %81 = vmatpush2.bf16.msra.mxu0 0
  %82 = vmatprep.subr.bf16.mxu0 0
  %83 = vmatpush2.bf16.msra.mxu0 0
  %84 = vmatprep.mubr.bf16.mxu0 0
  %85 = vmatmul.mubr.bf16.gmra.mxu0 %v43
  %v86 = vpop.f32.mrf.mxu0
  %v87 = vadd.f32 %v28, %v86
  %v88 = vpop.f32.mrf.mxu0
  %v89 = vpop.f32.mrf.mxu0
  %v90 = vpop.f32.mrf.mxu0
  %91 = vdwg.mxu0
  %v92 = vld [vmem:[%s3] sm:$0x1]
  %v94 = vlaneseq
  %v95 = vshrl.u32 %v94, 7
  %v96 = vsub.s32 0, %v95
  %v97 = vrot.slane %v92, %v96
  %v99 = vmax.f32 %v87, %v97
  %v100 = vxor.u32 %v99, 2147483648
  %v101 = vmul.f32 %v100, 1.442695
  %v102 = vpow.pop %v101
  %v103 = vadd.f32 %v102, 1.0
  %v104 = vrcp.pop %v103
  %v105 = vmul.f32 1.0, %v104
  %106 = vst [vmem:[%s4] sm:$0xff] %v105
  // Predicated region
  $region18: #{traj_predictor_forward.24} parent=0 // pred_check
    _
  $region19: #{traj_predictor_forward.24} parent=0 // pred_check_branch
    %108 = sbr.rel (0) target = $region21
  $region20: #{traj_predictor_forward.24} parent=0 // pred_region
    _
  $region21: #{traj_predictor_forward.24} parent=0 // pred_fallthru
    _
  // Predicated region
  $region22: #{traj_predictor_forward.24} parent=0 // pred_check
    _
  $region23: #{traj_predictor_forward.24} parent=0 // pred_check_branch
    %110 = sbr.rel (0) target = $region25
  $region24: #{traj_predictor_forward.24} parent=0 // pred_region
    _
  $region25: #{traj_predictor_forward.24} parent=0 // pred_fallthru
    _

// kernel: traj_predictor_forward.25
$region0: #{traj_predictor_forward.25}
  #allocation0 [shape = 'u32[]', space=smem, size = 0x4, offset = 0x4, fixed_abs, tag = 'smem constant byte address 0x4 - core index']
  #allocation1 [shape = 'u32[144,128]{1,0:T(1,128)}', space=vmem, size = 0x12000, scoped, tag = 'internal scratch']
  %s0 = inlined_call_operand.vmem [shape: bf16[32,603], index: 0, kind: input, shape index: {}]
  %s1 = inlined_call_operand.vmem [shape: bf16[603,256], index: 1, kind: input, shape index: {}]
  %s2 = inlined_call_operand.vmem [shape: f32[1,256], index: 2, kind: input, shape index: {}]
  %s3 = inlined_call_operand.vmem [shape: f32[1,256], index: 3, kind: input, shape index: {}]
  %s4 = inlined_call_operand.vmem [shape: f32[32,256], index: 4, kind: output, shape index: {}]
  %s5 = sld [smem:[#allocation0]]
  $region26: #{traj_predictor_forward.25} parent=0
    _
  %s7 = ssub.s32 1, %s5
  %s8 = scalar_select 0, %s7, %s5
  // Predicated region
  $region2: #{traj_predictor_forward.25} parent=0 // pred_check
    _
  $region3: #{traj_predictor_forward.25} parent=0 // pred_check_branch
    %10 = sbr.rel (0) target = $region5
  $region4: #{traj_predictor_forward.25} parent=0 // pred_region
    _
  $region5: #{traj_predictor_forward.25} parent=0 // pred_fallthru
    _
  // Predicated region
  $region6: #{traj_predictor_forward.25} parent=0 // pred_check
    _
  $region7: #{traj_predictor_forward.25} parent=0 // pred_check_branch
    %12 = sbr.rel (0) target = $region9
  $region8: #{traj_predictor_forward.25} parent=0 // pred_region
    _
  $region9: #{traj_predictor_forward.25} parent=0 // pred_fallthru
    _
  // Predicated region
  $region10: #{traj_predictor_forward.25} parent=0 // pred_check
    _
  $region11: #{traj_predictor_forward.25} parent=0 // pred_check_branch
    %14 = sbr.rel (0) target = $region13
  $region12: #{traj_predictor_forward.25} parent=0 // pred_region
    _
  $region13: #{traj_predictor_forward.25} parent=0 // pred_fallthru
    _
  // Predicated region
  $region14: #{traj_predictor_forward.25} parent=0 // pred_check
    _
  $region15: #{traj_predictor_forward.25} parent=0 // pred_check_branch
    %16 = sbr.rel (0) target = $region17
  $region16: #{traj_predictor_forward.25} parent=0 // pred_region
    _
  $region17: #{traj_predictor_forward.25} parent=0 // pred_fallthru
    _
  %v18 = vld [vmem:[%s0] sm:$0xff]
  %v19 = vld [vmem:[%s0 + $0x8] sm:$0xff]
  %v20 = vld [vmem:[%s0 + $0x10] sm:$0xf]
  %v21 = vld [vmem:[%s0 + $0x14] sm:$0xff]
  %v22 = vld [vmem:[%s0 + $0x1c] sm:$0xff]
  %v23 = vld [vmem:[%s0 + $0x24] sm:$0xf]
  %v24 = vld [vmem:[%s0 + $0x28] sm:$0xff]
  %v25 = vld [vmem:[%s0 + $0x30] sm:$0xff]
  %v26 = vld [vmem:[%s0 + $0x38] sm:$0xf]
  %v27 = vld [vmem:[%s0 + $0x3c] sm:$0xff]
  %v28 = vld [vmem:[%s0 + $0x44] sm:$0xff]
  %v29 = vld [vmem:[%s0 + $0x4c] sm:$0xf]
  %v30 = vld [vmem:[%s1] sm:$0xff]
  %v31 = vld [vmem:[%s1 + $0x8] sm:$0xff]
  %v32 = vld [vmem:[%s1 + $0x10] sm:$0xff]
  %v33 = vld [vmem:[%s1 + $0x18] sm:$0xff]
  %v34 = vld [vmem:[%s1 + $0x20] sm:$0xff]
  %v35 = vld [vmem:[%s1 + $0x28] sm:$0xff]
  %v36 = vld [vmem:[%s1 + $0x30] sm:$0xff]
  %v37 = vld [vmem:[%s1 + $0x38] sm:$0xff]
  %v38 = vld [vmem:[%s1 + $0x40] sm:$0xff]
  %v39 = vld [vmem:[%s1 + $0x48] sm:$0xff]
  %v40 = vld [vmem:[%s1 + $0x50] sm:$0xff]
  %v41 = vld [vmem:[%s1 + $0x58] sm:$0xff]
  %v42 = vld [vmem:[%s1 + $0x60] sm:$0xff]
  %v43 = vld [vmem:[%s1 + $0x68] sm:$0xff]
  %v44 = vld [vmem:[%s1 + $0x70] sm:$0xff]
  %v45 = vld [vmem:[%s1 + $0x78] sm:$0xff]
  %v46 = vld [vmem:[%s1 + $0x80] sm:$0xff]
  %v47 = vld [vmem:[%s1 + $0x88] sm:$0xff]
  %v48 = vld [vmem:[%s1 + $0x90] sm:$0xff]
  %v49 = vld [vmem:[%s1 + $0x98] sm:$0xff]
  %v50 = vld [vmem:[%s1 + $0xa0] sm:$0xff]
  %v51 = vld [vmem:[%s1 + $0xa8] sm:$0xff]
  %v52 = vld [vmem:[%s1 + $0xb0] sm:$0xff]
  %v53 = vld [vmem:[%s1 + $0xb8] sm:$0xff]
  %v54 = vld [vmem:[%s1 + $0xc0] sm:$0xff]
  %v55 = vld [vmem:[%s1 + $0xc8] sm:$0xff]
  %v56 = vld [vmem:[%s1 + $0xd0] sm:$0xff]
  %v57 = vld [vmem:[%s1 + $0xd8] sm:$0xff]
  %v58 = vld [vmem:[%s1 + $0xe0] sm:$0xff]
  %v59 = vld [vmem:[%s1 + $0xe8] sm:$0xff]
  %v60 = vld [vmem:[%s1 + $0xf0] sm:$0xff]
  %v61 = vld [vmem:[%s1 + $0xf8] sm:$0xff]
  %v62 = vld [vmem:[%s1 + $0x100] sm:$0xff]
  %v63 = vld [vmem:[%s1 + $0x108] sm:$0xff]
  %v64 = vld [vmem:[%s1 + $0x110] sm:$0xff]
  %v65 = vld [vmem:[%s1 + $0x118] sm:$0xff]
  %v66 = vld [vmem:[%s1 + $0x120] sm:$0xff]
  %v67 = vld [vmem:[%s1 + $0x128] sm:$0xff]
  %v68 = vld [vmem:[%s1 + $0x130] sm:$0xff]
  %v69 = vld [vmem:[%s1 + $0x138] sm:$0xff]
  %v70 = vld [vmem:[%s1 + $0x140] sm:$0xff]
  %v71 = vld [vmem:[%s1 + $0x148] sm:$0xff]
  %v72 = vld [vmem:[%s1 + $0x150] sm:$0xff]
  %v73 = vld [vmem:[%s1 + $0x158] sm:$0xff]
  %v74 = vld [vmem:[%s1 + $0x160] sm:$0xff]
  %v75 = vld [vmem:[%s1 + $0x168] sm:$0xff]
  %v76 = vld [vmem:[%s1 + $0x170] sm:$0xff]
  %v77 = vld [vmem:[%s1 + $0x178] sm:$0xff]
  %v78 = vld [vmem:[%s1 + $0x180] sm:$0xff]
  %v79 = vld [vmem:[%s1 + $0x188] sm:$0xff]
  %v80 = vld [vmem:[%s1 + $0x190] sm:$0xff]
  %v81 = vld [vmem:[%s1 + $0x198] sm:$0xff]
  %v82 = vld [vmem:[%s1 + $0x1a0] sm:$0xff]
  %v83 = vld [vmem:[%s1 + $0x1a8] sm:$0xff]
  %v84 = vld [vmem:[%s1 + $0x1b0] sm:$0xff]
  %v85 = vld [vmem:[%s1 + $0x1b8] sm:$0xff]
  %v86 = vld [vmem:[%s1 + $0x1c0] sm:$0xff]
  %v87 = vld [vmem:[%s1 + $0x1c8] sm:$0xff]
  %v88 = vld [vmem:[%s1 + $0x1d0] sm:$0xff]
  %v89 = vld [vmem:[%s1 + $0x1d8] sm:$0xff]
  %v90 = vld [vmem:[%s1 + $0x1e0] sm:$0xff]
  %v91 = vld [vmem:[%s1 + $0x1e8] sm:$0xff]
  %v92 = vld [vmem:[%s1 + $0x1f0] sm:$0xff]
  %v93 = vld [vmem:[%s1 + $0x1f8] sm:$0xff]
  %v94 = vld [vmem:[%s1 + $0x200] sm:$0xff]
  %v95 = vld [vmem:[%s1 + $0x208] sm:$0xff]
  %v96 = vld [vmem:[%s1 + $0x210] sm:$0xff]
  %v97 = vld [vmem:[%s1 + $0x218] sm:$0xff]
  %v98 = vld [vmem:[%s1 + $0x220] sm:$0xff]
  %v99 = vld [vmem:[%s1 + $0x228] sm:$0xff]
  %v100 = vld [vmem:[%s1 + $0x230] sm:$0xff]
  %v101 = vld [vmem:[%s1 + $0x238] sm:$0xff]
  %v102 = vld [vmem:[%s1 + $0x240] sm:$0xff]
  %v103 = vld [vmem:[%s1 + $0x248] sm:$0xff]
  %v104 = vld [vmem:[%s1 + $0x250] sm:$0xff]
  %v105 = vld [vmem:[%s1 + $0x258] sm:$0x33]
  %v106 = vld [vmem:[%s2] sm:$0x3]
  %v108 = vlaneseq
  %v109 = vshrl.u32 %v108, 7
  %v110 = vsub.s32 0, %v109
  %v111 = vrot.slane %v106, %v110
  %v112 = vlaneseq
  %v113 = vshrl.u32 %v112, 7
  %v114 = vsub.s32 1, %v113
  %v115 = vrot.slane %v106, %v114
  %v130 = vunpack.c.l.b16 %v18
  %v131 = vunpack.c.h.b16 %v18
  %v132 = vunpack.c.l.b16 %v19
  %v133 = vunpack.c.h.b16 %v19
  %v134 = vunpack.c.l.b16 %v20
  %v135 = vunpack.c.l.b16 %v21
  %v136 = vunpack.c.h.b16 %v21
  %v137 = vunpack.c.l.b16 %v22
  %v138 = vunpack.c.h.b16 %v22
  %v139 = vunpack.c.l.b16 %v23
  %v140 = vunpack.c.l.b16 %v24
  %v141 = vunpack.c.h.b16 %v24
  %v142 = vunpack.c.l.b16 %v25
  %v143 = vunpack.c.h.b16 %v25
  %v144 = vunpack.c.l.b16 %v26
  %v145 = vunpack.c.l.b16 %v27
  %v146 = vunpack.c.h.b16 %v27
  %v147 = vunpack.c.l.b16 %v28
  %v148 = vunpack.c.h.b16 %v28
  %v149 = vunpack.c.l.b16 %v29
  %v150 = vpack.c.b16 %v135, %v130
  %v151 = vpack.c.b16 %v136, %v131
  %v152 = vpack.c.b16 %v137, %v132
  %v153 = vpack.c.b16 %v138, %v133
  %v154 = vpack.c.b16 %v139, %v134
  %v155 = vpack.c.b16 %v145, %v140
  %v156 = vpack.c.b16 %v146, %v141
  %v157 = vpack.c.b16 %v147, %v142
  %v158 = vpack.c.b16 %v148, %v143
  %v159 = vpack.c.b16 %v149, %v144
  %v244 = vunpack.c.l.b16 %v30
  %v245 = vunpack.c.h.b16 %v30
  %v246 = vunpack.c.l.b16 %v31
  %v247 = vunpack.c.h.b16 %v31
  %v248 = vunpack.c.l.b16 %v32
  %v249 = vunpack.c.h.b16 %v32
  %v250 = vunpack.c.l.b16 %v33
  %v251 = vunpack.c.h.b16 %v33
  %v252 = vunpack.c.l.b16 %v34
  %v253 = vunpack.c.h.b16 %v34
  %v254 = vunpack.c.l.b16 %v35
  %v255 = vunpack.c.h.b16 %v35
  %v256 = vunpack.c.l.b16 %v36
  %v257 = vunpack.c.h.b16 %v36
  %v258 = vunpack.c.l.b16 %v37
  %v259 = vunpack.c.h.b16 %v37
  %v260 = vunpack.c.l.b16 %v38
  %v261 = vunpack.c.h.b16 %v38
  %v262 = vunpack.c.l.b16 %v39
  %v263 = vunpack.c.h.b16 %v39
  %v264 = vunpack.c.l.b16 %v40
  %v265 = vunpack.c.h.b16 %v40
  %v266 = vunpack.c.l.b16 %v41
  %v267 = vunpack.c.h.b16 %v41
  %v268 = vunpack.c.l.b16 %v42
  %v269 = vunpack.c.h.b16 %v42
  %v270 = vunpack.c.l.b16 %v43
  %v271 = vunpack.c.h.b16 %v43
  %v272 = vunpack.c.l.b16 %v44
  %v273 = vunpack.c.h.b16 %v44
  %v274 = vunpack.c.l.b16 %v45
  %v275 = vunpack.c.h.b16 %v45
  %v276 = vunpack.c.l.b16 %v46
  %v277 = vunpack.c.h.b16 %v46
  %v278 = vunpack.c.l.b16 %v47
  %v279 = vunpack.c.h.b16 %v47
  %v280 = vunpack.c.l.b16 %v48
  %v281 = vunpack.c.h.b16 %v48
  %v282 = vunpack.c.l.b16 %v49
  %v283 = vunpack.c.h.b16 %v49
  %v284 = vunpack.c.l.b16 %v50
  %v285 = vunpack.c.h.b16 %v50
  %v286 = vunpack.c.l.b16 %v51
  %v287 = vunpack.c.h.b16 %v51
  %v288 = vunpack.c.l.b16 %v52
  %v289 = vunpack.c.h.b16 %v52
  %v290 = vunpack.c.l.b16 %v53
  %v291 = vunpack.c.h.b16 %v53
  %v292 = vunpack.c.l.b16 %v54
  %v293 = vunpack.c.h.b16 %v54
  %v294 = vunpack.c.l.b16 %v55
  %v295 = vunpack.c.h.b16 %v55
  %v296 = vunpack.c.l.b16 %v56
  %v297 = vunpack.c.h.b16 %v56
  %v298 = vunpack.c.l.b16 %v57
  %v299 = vunpack.c.h.b16 %v57
  %v300 = vunpack.c.l.b16 %v58
  %v301 = vunpack.c.h.b16 %v58
  %v302 = vunpack.c.l.b16 %v59
  %v303 = vunpack.c.h.b16 %v59
  %v304 = vunpack.c.l.b16 %v60
  %v305 = vunpack.c.h.b16 %v60
  %v306 = vunpack.c.l.b16 %v61
  %v307 = vunpack.c.h.b16 %v61
  %v308 = vunpack.c.l.b16 %v62
  %v309 = vunpack.c.h.b16 %v62
  %v310 = vunpack.c.l.b16 %v63
  %v311 = vunpack.c.h.b16 %v63
  %v312 = vunpack.c.l.b16 %v64
  %v313 = vunpack.c.h.b16 %v64
  %v314 = vunpack.c.l.b16 %v65
  %v315 = vunpack.c.h.b16 %v65
  %v316 = vunpack.c.l.b16 %v66
  %v317 = vunpack.c.h.b16 %v66
  %v318 = vunpack.c.l.b16 %v67
  %v319 = vunpack.c.h.b16 %v67
  %v320 = vunpack.c.l.b16 %v68
  %v321 = vunpack.c.h.b16 %v68
  %v322 = vunpack.c.l.b16 %v69
  %v323 = vunpack.c.h.b16 %v69
  %v324 = vunpack.c.l.b16 %v70
  %v325 = vunpack.c.h.b16 %v70
  %v326 = vunpack.c.l.b16 %v71
  %v327 = vunpack.c.h.b16 %v71
  %v328 = vunpack.c.l.b16 %v72
  %v329 = vunpack.c.h.b16 %v72
  %v330 = vunpack.c.l.b16 %v73
  %v331 = vunpack.c.h.b16 %v73
  %v332 = vunpack.c.l.b16 %v74
  %v333 = vunpack.c.h.b16 %v74
  %v334 = vunpack.c.l.b16 %v75
  %v335 = vunpack.c.h.b16 %v75
  %v336 = vunpack.c.l.b16 %v76
  %v337 = vunpack.c.h.b16 %v76
  %v338 = vunpack.c.l.b16 %v77
  %v339 = vunpack.c.h.b16 %v77
  %v340 = vunpack.c.l.b16 %v78
  %v341 = vunpack.c.h.b16 %v78
  %v342 = vunpack.c.l.b16 %v79
  %v343 = vunpack.c.h.b16 %v79
  %v344 = vunpack.c.l.b16 %v80
  %v345 = vunpack.c.h.b16 %v80
  %v346 = vunpack.c.l.b16 %v81
  %v347 = vunpack.c.h.b16 %v81
  %v348 = vunpack.c.l.b16 %v82
  %v349 = vunpack.c.h.b16 %v82
  %v350 = vunpack.c.l.b16 %v83
  %v351 = vunpack.c.h.b16 %v83
  %v352 = vunpack.c.l.b16 %v84
  %v353 = vunpack.c.h.b16 %v84
  %v354 = vunpack.c.l.b16 %v85
  %v355 = vunpack.c.h.b16 %v85
  %v356 = vunpack.c.l.b16 %v86
  %v357 = vunpack.c.h.b16 %v86
  %v358 = vunpack.c.l.b16 %v87
  %v359 = vunpack.c.h.b16 %v87
  %v360 = vunpack.c.l.b16 %v88
  %v361 = vunpack.c.h.b16 %v88
  %v362 = vunpack.c.l.b16 %v89
  %v363 = vunpack.c.h.b16 %v89
  %v364 = vunpack.c.l.b16 %v90
  %v365 = vunpack.c.h.b16 %v90
  %v366 = vunpack.c.l.b16 %v91
  %v367 = vunpack.c.h.b16 %v91
  %v368 = vunpack.c.l.b16 %v92
  %v369 = vunpack.c.h.b16 %v92
  %v370 = vunpack.c.l.b16 %v93
  %v371 = vunpack.c.h.b16 %v93
  %v372 = vunpack.c.l.b16 %v94
  %v373 = vunpack.c.h.b16 %v94
  %v374 = vunpack.c.l.b16 %v95
  %v375 = vunpack.c.h.b16 %v95
  %v376 = vunpack.c.l.b16 %v96
  %v377 = vunpack.c.h.b16 %v96
  %v378 = vunpack.c.l.b16 %v97
  %v379 = vunpack.c.h.b16 %v97
  %v380 = vunpack.c.l.b16 %v98
  %v381 = vunpack.c.h.b16 %v98
  %v382 = vunpack.c.l.b16 %v99
  %v383 = vunpack.c.h.b16 %v99
  %v384 = vunpack.c.l.b16 %v100
  %v385 = vunpack.c.h.b16 %v100
  %v386 = vunpack.c.l.b16 %v101
  %v387 = vunpack.c.h.b16 %v101
  %v388 = vunpack.c.l.b16 %v102
  %v389 = vunpack.c.h.b16 %v102
  %v390 = vunpack.c.l.b16 %v103
  %v391 = vunpack.c.h.b16 %v103
  %v392 = vunpack.c.l.b16 %v104
  %v393 = vunpack.c.h.b16 %v104
  %v394 = vunpack.c.l.b16 %v105
  %v395 = vunpack.c.h.b16 %v105
  %v396 = vpack.c.b16 %v246, %v244
  %v397 = vpack.c.b16 %v247, %v245
  %v398 = vpack.c.b16 %v250, %v248
  %v399 = vpack.c.b16 %v251, %v249
  %v400 = vpack.c.b16 %v254, %v252
  %v401 = vpack.c.b16 %v255, %v253
  %v402 = vpack.c.b16 %v258, %v256
  %v403 = vpack.c.b16 %v259, %v257
  %v404 = vpack.c.b16 %v262, %v260
  %v405 = vpack.c.b16 %v263, %v261
  %v406 = vpack.c.b16 %v266, %v264
  %v407 = vpack.c.b16 %v267, %v265
  %v408 = vpack.c.b16 %v270, %v268
  %v409 = vpack.c.b16 %v271, %v269
  %v410 = vpack.c.b16 %v274, %v272
  %v411 = vpack.c.b16 %v275, %v273
  %v412 = vpack.c.b16 %v278, %v276
  %v413 = vpack.c.b16 %v279, %v277
  %v414 = vpack.c.b16 %v282, %v280
  %v415 = vpack.c.b16 %v283, %v281
  %v416 = vpack.c.b16 %v286, %v284
  %v417 = vpack.c.b16 %v287, %v285
  %v418 = vpack.c.b16 %v290, %v288
  %v419 = vpack.c.b16 %v291, %v289
  %v420 = vpack.c.b16 %v294, %v292
  %v421 = vpack.c.b16 %v295, %v293
  %v422 = vpack.c.b16 %v298, %v296
  %v423 = vpack.c.b16 %v299, %v297
  %v424 = vpack.c.b16 %v302, %v300
  %v425 = vpack.c.b16 %v303, %v301
  %v426 = vpack.c.b16 %v306, %v304
  %v427 = vpack.c.b16 %v307, %v305
  %v428 = vpack.c.b16 %v310, %v308
  %v429 = vpack.c.b16 %v311, %v309
  %v430 = vpack.c.b16 %v314, %v312
  %v431 = vpack.c.b16 %v315, %v313
  %v432 = vpack.c.b16 %v318, %v316
  %v433 = vpack.c.b16 %v319, %v317
  %v434 = vpack.c.b16 %v322, %v320
  %v435 = vpack.c.b16 %v323, %v321
  %v436 = vpack.c.b16 %v326, %v324
  %v437 = vpack.c.b16 %v327, %v325
  %v438 = vpack.c.b16 %v330, %v328
  %v439 = vpack.c.b16 %v331, %v329
  %v440 = vpack.c.b16 %v334, %v332
  %v441 = vpack.c.b16 %v335, %v333
  %v442 = vpack.c.b16 %v338, %v336
  %v443 = vpack.c.b16 %v339, %v337
  %v444 = vpack.c.b16 %v342, %v340
  %v445 = vpack.c.b16 %v343, %v341
  %v446 = vpack.c.b16 %v346, %v344
  %v447 = vpack.c.b16 %v347, %v345
  %v448 = vpack.c.b16 %v350, %v348
  %v449 = vpack.c.b16 %v351, %v349
  %v450 = vpack.c.b16 %v354, %v352
  %v451 = vpack.c.b16 %v355, %v353
  %v452 = vpack.c.b16 %v358, %v356
  %v453 = vpack.c.b16 %v359, %v357
  %v454 = vpack.c.b16 %v362, %v360
  %v455 = vpack.c.b16 %v363, %v361
  %v456 = vpack.c.b16 %v366, %v364
  %v457 = vpack.c.b16 %v367, %v365
  %v458 = vpack.c.b16 %v370, %v368
  %v459 = vpack.c.b16 %v371, %v369
  %v460 = vpack.c.b16 %v374, %v372
  %v461 = vpack.c.b16 %v375, %v373
  %v462 = vpack.c.b16 %v378, %v376
  %v463 = vpack.c.b16 %v379, %v377
  %v464 = vpack.c.b16 %v382, %v380
  %v465 = vpack.c.b16 %v383, %v381
  %v466 = vpack.c.b16 %v386, %v384
  %v467 = vpack.c.b16 %v387, %v385
  %v468 = vpack.c.b16 %v390, %v388
  %v469 = vpack.c.b16 %v391, %v389
  %v470 = vpack.c.b16 %v394, %v392
  %v471 = vpack.c.b16 %v395, %v393
  %vm546 = vcmask 744448
  %v548 = vsel %vm546, %v154, 0
  %v551 = vsel %vm546, %v159, 0
  %vm553 = vcmask 1044480
  %vm554 = vcmask 1045504
  %v555 = vsel %vm553, 4294967295, 65535
  %v556 = vsel %vm554, %v555, 0
  %v558 = vand.u32 %v470, %v556
  %v561 = vand.u32 %v471, %v556
  %563 = vmatprep.subr.bf16.mxu0 %v411
  %564 = vmatpush1.bf16.msra.mxu0 %v410
  %565 = vmatprep.subr.bf16.mxu0 %v409
  %566 = vmatpush1.bf16.msra.mxu0 %v408
  %567 = vmatprep.subr.bf16.mxu0 %v407
  %568 = vmatpush1.bf16.msra.mxu0 %v406
  %569 = vmatprep.subr.bf16.mxu0 %v405
  %570 = vmatpush1.bf16.msra.mxu0 %v404
  %571 = vmatprep.subr.bf16.mxu0 %v403
  %572 = vmatpush1.bf16.msra.mxu0 %v402
  %573 = vmatprep.subr.bf16.mxu0 %v401
  %574 = vmatpush1.bf16.msra.mxu0 %v400
  %575 = vmatprep.subr.bf16.mxu0 %v399
  %576 = vmatpush1.bf16.msra.mxu0 %v398
  %577 = vmatprep.subr.bf16.mxu0 %v397
  %578 = vmatpush1.bf16.msra.mxu0 %v396
  %579 = vmatprep.subr.bf16.mxu0 %v427
  %580 = vmatpush2.bf16.msra.mxu0 %v426
  %581 = vmatprep.subr.bf16.mxu0 %v425
  %582 = vmatpush2.bf16.msra.mxu0 %v424
  %583 = vmatprep.subr.bf16.mxu0 %v423
  %584 = vmatpush2.bf16.msra.mxu0 %v422
  %585 = vmatprep.subr.bf16.mxu0 %v421
  %586 = vmatpush2.bf16.msra.mxu0 %v420
  %587 = vmatprep.subr.bf16.mxu0 %v419
  %588 = vmatpush2.bf16.msra.mxu0 %v418
  %589 = vmatprep.subr.bf16.mxu0 %v417
  %590 = vmatpush2.bf16.msra.mxu0 %v416
  %591 = vmatprep.subr.bf16.mxu0 %v415
  %592 = vmatpush2.bf16.msra.mxu0 %v414
  %593 = vmatprep.subr.bf16.mxu0 %v413
  %594 = vmatpush2.bf16.msra.mxu0 %v412
  %595 = vmatprep.mubr.bf16.mxu0 %v151
  %596 = vmatmul.mubr.bf16.gmra.mxu0 %v150
  %v597 = vpop.f32.mrf.mxu0
  %v598 = vadd.f32 %v111, %v597
  %v599 = vpop.f32.mrf.mxu0
  %v600 = vadd.f32 %v115, %v599
  %v601 = vpop.f32.mrf.mxu0
  %v602 = vadd.f32 %v111, %v601
  %v603 = vpop.f32.mrf.mxu0
  %v604 = vadd.f32 %v115, %v603
  %605 = vmatprep.mubr.bf16.mxu0 %v156
  %606 = vmatmul.mubr.bf16.gmra.mxu0 %v155
  %v607 = vpop.f32.mrf.mxu0
  %v608 = vadd.f32 %v111, %v607
  %v609 = vpop.f32.mrf.mxu0
  %v610 = vadd.f32 %v115, %v609
  %v611 = vpop.f32.mrf.mxu0
  %v612 = vadd.f32 %v111, %v611
  %v613 = vpop.f32.mrf.mxu0
  %v614 = vadd.f32 %v115, %v613
  %615 = vdwg.mxu0
  %616 = vmatprep.subr.bf16.mxu0 %v443
  %617 = vmatpush1.bf16.msra.mxu0 %v442
  %618 = vmatprep.subr.bf16.mxu0 %v441
  %619 = vmatpush1.bf16.msra.mxu0 %v440
  %620 = vmatprep.subr.bf16.mxu0 %v439
  %621 = vmatpush1.bf16.msra.mxu0 %v438
  %622 = vmatprep.subr.bf16.mxu0 %v437
  %623 = vmatpush1.bf16.msra.mxu0 %v436
  %624 = vmatprep.subr.bf16.mxu0 %v435
  %625 = vmatpush1.bf16.msra.mxu0 %v434
  %626 = vmatprep.subr.bf16.mxu0 %v433
  %627 = vmatpush1.bf16.msra.mxu0 %v432
  %628 = vmatprep.subr.bf16.mxu0 %v431
  %629 = vmatpush1.bf16.msra.mxu0 %v430
  %630 = vmatprep.subr.bf16.mxu0 %v429
  %631 = vmatpush1.bf16.msra.mxu0 %v428
  %632 = vmatprep.subr.bf16.mxu0 %v459
  %633 = vmatpush2.bf16.msra.mxu0 %v458
  %634 = vmatprep.subr.bf16.mxu0 %v457
  %635 = vmatpush2.bf16.msra.mxu0 %v456
  %636 = vmatprep.subr.bf16.mxu0 %v455
  %637 = vmatpush2.bf16.msra.mxu0 %v454
  %638 = vmatprep.subr.bf16.mxu0 %v453
  %639 = vmatpush2.bf16.msra.mxu0 %v452
  %640 = vmatprep.subr.bf16.mxu0 %v451
  %641 = vmatpush2.bf16.msra.mxu0 %v450
  %642 = vmatprep.subr.bf16.mxu0 %v449
  %643 = vmatpush2.bf16.msra.mxu0 %v448
  %644 = vmatprep.subr.bf16.mxu0 %v447
  %645 = vmatpush2.bf16.msra.mxu0 %v446
  %646 = vmatprep.subr.bf16.mxu0 %v445
  %647 = vmatpush2.bf16.msra.mxu0 %v444
  %648 = vmatprep.mubr.bf16.mxu0 %v153
  %649 = vmatmul.mubr.bf16.gmra.mxu0 %v152
  %v650 = vpop.f32.mrf.mxu0
  %v651 = vadd.f32 %v598, %v650
  %v652 = vpop.f32.mrf.mxu0
  %v653 = vadd.f32 %v600, %v652
  %v654 = vpop.f32.mrf.mxu0
  %v655 = vadd.f32 %v602, %v654
  %v656 = vpop.f32.mrf.mxu0
  %v657 = vadd.f32 %v604, %v656
  %658 = vmatprep.mubr.bf16.mxu0 %v158
  %659 = vmatmul.mubr.bf16.gmra.mxu0 %v157
  %v660 = vpop.f32.mrf.mxu0
  %v661 = vadd.f32 %v608, %v660
  %v662 = vpop.f32.mrf.mxu0
  %v663 = vadd.f32 %v610, %v662
  %v664 = vpop.f32.mrf.mxu0
  %v665 = vadd.f32 %v612, %v664
  %v666 = vpop.f32.mrf.mxu0
  %v667 = vadd.f32 %v614, %v666
  %668 = vdwg.mxu0
  %669 = vmatprep.subr.bf16.mxu0 0
  %670 = vmatpush1.bf16.msra.mxu0 0
  %671 = vmatprep.subr.bf16.mxu0 0
  %672 = vmatpush1.bf16.msra.mxu0 0
  %673 = vmatprep.subr.bf16.mxu0 %v561
  %674 = vmatpush1.bf16.msra.mxu0 %v558
  %675 = vmatprep.subr.bf16.mxu0 %v469
  %676 = vmatpush1.bf16.msra.mxu0 %v468
  %677 = vmatprep.subr.bf16.mxu0 %v467
  %678 = vmatpush1.bf16.msra.mxu0 %v466
  %679 = vmatprep.subr.bf16.mxu0 %v465
  %680 = vmatpush1.bf16.msra.mxu0 %v464
  %681 = vmatprep.subr.bf16.mxu0 %v463
  %682 = vmatpush1.bf16.msra.mxu0 %v462
  %683 = vmatprep.subr.bf16.mxu0 %v461
  %684 = vmatpush1.bf16.msra.mxu0 %v460
  %685 = vmatprep.subr.bf16.mxu0 0
  %686 = vmatpush2.bf16.msra.mxu0 0
  %687 = vmatprep.subr.bf16.mxu0 0
  %688 = vmatpush2.bf16.msra.mxu0 0
  %689 = vmatprep.subr.bf16.mxu0 0
  %690 = vmatpush2.bf16.msra.mxu0 0
  %691 = vmatprep.subr.bf16.mxu0 0
  %692 = vmatpush2.bf16.msra.mxu0 0
  %693 = vmatprep.subr.bf16.mxu0 0
  %694 = vmatpush2.bf16.msra.mxu0 0
  %695 = vmatprep.subr.bf16.mxu0 0
  %696 = vmatpush2.bf16.msra.mxu0 0
  %697 = vmatprep.subr.bf16.mxu0 0
  %698 = vmatpush2.bf16.msra.mxu0 0
  %699 = vmatprep.subr.bf16.mxu0 0
  %700 = vmatpush2.bf16.msra.mxu0 0
  %701 = vmatprep.mubr.bf16.mxu0 0
  %702 = vmatmul.mubr.bf16.gmra.mxu0 %v548
  %v703 = vpop.f32.mrf.mxu0
  %v704 = vadd.f32 %v651, %v703
  %v705 = vpop.f32.mrf.mxu0
  %v706 = vadd.f32 %v653, %v705
  %v707 = vpop.f32.mrf.mxu0
  %v708 = vadd.f32 %v655, %v707
  %v709 = vpop.f32.mrf.mxu0
  %v710 = vadd.f32 %v657, %v709
  %711 = vmatprep.mubr.bf16.mxu0 0
  %712 = vmatmul.mubr.bf16.gmra.mxu0 %v551
  %v713 = vpop.f32.mrf.mxu0
  %v714 = vadd.f32 %v661, %v713
  %v715 = vpop.f32.mrf.mxu0
  %v716 = vadd.f32 %v663, %v715
  %v717 = vpop.f32.mrf.mxu0
  %v718 = vadd.f32 %v665, %v717
  %v719 = vpop.f32.mrf.mxu0
  %v720 = vadd.f32 %v667, %v719
  %721 = vdwg.mxu0
  %v722 = vld [vmem:[%s3] sm:$0x3]
  %v724 = vlaneseq
  %v725 = vshrl.u32 %v724, 7
  %v726 = vsub.s32 0, %v725
  %v727 = vrot.slane %v722, %v726
  %v728 = vlaneseq
  %v729 = vshrl.u32 %v728, 7
  %v730 = vsub.s32 1, %v729
  %v731 = vrot.slane %v722, %v730
  %v734 = vmax.f32 %v704, %v727
  %v735 = vmax.f32 %v706, %v731
  %v736 = vmax.f32 %v708, %v727
  %v737 = vmax.f32 %v710, %v731
  %v738 = vmax.f32 %v714, %v727
  %v739 = vmax.f32 %v716, %v731
  %v740 = vmax.f32 %v718, %v727
  %v741 = vmax.f32 %v720, %v731
  %742 = vst [vmem:[%s4] sm:$0xff] %v734
  %743 = vst [vmem:[%s4 + $0x8] sm:$0xff] %v735
  %744 = vst [vmem:[%s4 + $0x10] sm:$0xff] %v736
  %745 = vst [vmem:[%s4 + $0x18] sm:$0xff] %v737
  %746 = vst [vmem:[%s4 + $0x20] sm:$0xff] %v738
  %747 = vst [vmem:[%s4 + $0x28] sm:$0xff] %v739
  %748 = vst [vmem:[%s4 + $0x30] sm:$0xff] %v740
  %749 = vst [vmem:[%s4 + $0x38] sm:$0xff] %v741
  // Predicated region
  $region18: #{traj_predictor_forward.25} parent=0 // pred_check
    _
  $region19: #{traj_predictor_forward.25} parent=0 // pred_check_branch
    %751 = sbr.rel (0) target = $region21
  $region20: #{traj_predictor_forward.25} parent=0 // pred_region
    _
  $region21: #{traj_predictor_forward.25} parent=0 // pred_fallthru
    _
  // Predicated region
  $region22: #{traj_predictor_forward.25} parent=0 // pred_check
    _
  $region23: #{traj_predictor_forward.25} parent=0 // pred_check_branch
    %753 = sbr.rel (0) target = $region25
  $region24: #{traj_predictor_forward.25} parent=0 // pred_region
    _
  $region25: #{traj_predictor_forward.25} parent=0 // pred_fallthru
    _

// kernel: traj_predictor_forward.26
$region0: #{traj_predictor_forward.26}
  #allocation0 [shape = 'u32[]', space=smem, size = 0x4, offset = 0x4, fixed_abs, tag = 'smem constant byte address 0x4 - core index']
  #allocation1 [shape = 'u32[144,128]{1,0:T(1,128)}', space=vmem, size = 0x12000, scoped, tag = 'internal scratch']
  %s0 = inlined_call_operand.vmem [shape: bf16[32,27], index: 0, kind: input, shape index: {}]
  %s1 = inlined_call_operand.vmem [shape: bf16[27,128], index: 1, kind: input, shape index: {}]
  %s2 = inlined_call_operand.vmem [shape: f32[1,128], index: 2, kind: input, shape index: {}]
  %s3 = inlined_call_operand.vmem [shape: f32[1,128], index: 3, kind: input, shape index: {}]
  %s4 = inlined_call_operand.vmem [shape: f32[32,128], index: 4, kind: output, shape index: {}]
  %s5 = sld [smem:[#allocation0]]
  $region26: #{traj_predictor_forward.26} parent=0
    _
  %s7 = ssub.s32 1, %s5
  %s8 = scalar_select 0, %s7, %s5
  // Predicated region
  $region2: #{traj_predictor_forward.26} parent=0 // pred_check
    _
  $region3: #{traj_predictor_forward.26} parent=0 // pred_check_branch
    %10 = sbr.rel (0) target = $region5
  $region4: #{traj_predictor_forward.26} parent=0 // pred_region
    _
  $region5: #{traj_predictor_forward.26} parent=0 // pred_fallthru
    _
  // Predicated region
  $region6: #{traj_predictor_forward.26} parent=0 // pred_check
    _
  $region7: #{traj_predictor_forward.26} parent=0 // pred_check_branch
    %12 = sbr.rel (0) target = $region9
  $region8: #{traj_predictor_forward.26} parent=0 // pred_region
    _
  $region9: #{traj_predictor_forward.26} parent=0 // pred_fallthru
    _
  // Predicated region
  $region10: #{traj_predictor_forward.26} parent=0 // pred_check
    _
  $region11: #{traj_predictor_forward.26} parent=0 // pred_check_branch
    %14 = sbr.rel (0) target = $region13
  $region12: #{traj_predictor_forward.26} parent=0 // pred_region
    _
  $region13: #{traj_predictor_forward.26} parent=0 // pred_fallthru
    _
  // Predicated region
  $region14: #{traj_predictor_forward.26} parent=0 // pred_check
    _
  $region15: #{traj_predictor_forward.26} parent=0 // pred_check_branch
    %16 = sbr.rel (0) target = $region17
  $region16: #{traj_predictor_forward.26} parent=0 // pred_region
    _
  $region17: #{traj_predictor_forward.26} parent=0 // pred_fallthru
    _
  %v18 = vld [vmem:[%s0] sm:$0xf]
  %v19 = vld [vmem:[%s0 + $0x4] sm:$0xf]
  %v20 = vld [vmem:[%s0 + $0x8] sm:$0xf]
  %v21 = vld [vmem:[%s0 + $0xc] sm:$0xf]
  %v22 = vld [vmem:[%s1] sm:$0xf]
  %v23 = vld [vmem:[%s1 + $0x4] sm:$0xf]
  %v24 = vld [vmem:[%s1 + $0x8] sm:$0xf]
  %v25 = vld [vmem:[%s1 + $0xc] sm:$0x3]
  %v26 = vld [vmem:[%s2] sm:$0x1]
  %v28 = vlaneseq
  %v29 = vshrl.u32 %v28, 7
  %v30 = vsub.s32 0, %v29
  %v31 = vrot.slane %v26, %v30
  %v37 = vunpack.c.l.b16 %v18
  %v38 = vunpack.c.l.b16 %v19
  %v39 = vunpack.c.l.b16 %v20
  %v40 = vunpack.c.l.b16 %v21
  %v41 = vpack.c.b16 %v38, %v37
  %v42 = vpack.c.b16 %v40, %v39
  %v47 = vunpack.c.l.b16 %v22
  %v48 = vunpack.c.l.b16 %v23
  %v49 = vunpack.c.l.b16 %v24
  %v50 = vunpack.c.l.b16 %v25
  %v51 = vpack.c.b16 %v48, %v47
  %v52 = vpack.c.b16 %v50, %v49
  %vm54 = vcmask 220160
  %v56 = vsel %vm54, %v41, 0
  %v59 = vsel %vm54, %v42, 0
  %vm61 = vcmask 1044480
  %vm62 = vcmask 1045504
  %v63 = vsel %vm61, 4294967295, 65535
  %v64 = vsel %vm62, %v63, 0
  %v66 = vand.u32 %v52, %v64
  %68 = vmatprep.subr.bf16.mxu0 0
  %69 = vmatpush1.bf16.msra.mxu0 0
  %70 = vmatprep.subr.bf16.mxu0 0
  %71 = vmatpush1.bf16.msra.mxu0 0
  %72 = vmatprep.subr.bf16.mxu0 0
  %73 = vmatpush1.bf16.msra.mxu0 0
  %74 = vmatprep.subr.bf16.mxu0 0
  %75 = vmatpush1.bf16.msra.mxu0 0
  %76 = vmatprep.subr.bf16.mxu0 0
  %77 = vmatpush1.bf16.msra.mxu0 0
  %78 = vmatprep.subr.bf16.mxu0 0
  %79 = vmatpush1.bf16.msra.mxu0 0
  %80 = vmatprep.subr.bf16.mxu0 0
  %81 = vmatpush1.bf16.msra.mxu0 %v66
  %82 = vmatprep.subr.bf16.mxu0 0
  %83 = vmatpush1.bf16.msra.mxu0 %v51
  %84 = vmatprep.subr.bf16.mxu0 0
  %85 = vmatpush2.bf16.msra.mxu0 0
  %86 = vmatprep.subr.bf16.mxu0 0
  %87 = vmatpush2.bf16.msra.mxu0 0
  %88 = vmatprep.subr.bf16.mxu0 0
  %89 = vmatpush2.bf16.msra.mxu0 0
  %90 = vmatprep.subr.bf16.mxu0 0
  %91 = vmatpush2.bf16.msra.mxu0 0
  %92 = vmatprep.subr.bf16.mxu0 0
  %93 = vmatpush2.bf16.msra.mxu0 0
  %94 = vmatprep.subr.bf16.mxu0 0
  %95 = vmatpush2.bf16.msra.mxu0 0
  %96 = vmatprep.subr.bf16.mxu0 0
  %97 = vmatpush2.bf16.msra.mxu0 0
  %98 = vmatprep.subr.bf16.mxu0 0
  %99 = vmatpush2.bf16.msra.mxu0 0
  %100 = vmatprep.mubr.bf16.mxu0 0
  %101 = vmatmul.mubr.bf16.gmra.mxu0 %v56
  %v102 = vpop.f32.mrf.mxu0
  %v103 = vadd.f32 %v31, %v102
  %v104 = vpop.f32.mrf.mxu0
  %v105 = vpop.f32.mrf.mxu0
  %v106 = vadd.f32 %v31, %v105
  %v107 = vpop.f32.mrf.mxu0
  %108 = vmatprep.mubr.bf16.mxu0 0
  %109 = vmatmul.mubr.bf16.gmra.mxu0 %v59
  %v110 = vpop.f32.mrf.mxu0
  %v111 = vadd.f32 %v31, %v110
  %v112 = vpop.f32.mrf.mxu0
  %v113 = vpop.f32.mrf.mxu0
  %v114 = vadd.f32 %v31, %v113
  %v115 = vpop.f32.mrf.mxu0
  %116 = vdwg.mxu0
  %v117 = vld [vmem:[%s3] sm:$0x1]
  %v119 = vlaneseq
  %v120 = vshrl.u32 %v119, 7
  %v121 = vsub.s32 0, %v120
  %v122 = vrot.slane %v117, %v121
  %v124 = vmax.f32 %v103, %v122
  %v125 = vmax.f32 %v106, %v122
  %v126 = vmax.f32 %v111, %v122
  %v127 = vmax.f32 %v114, %v122
  %v128 = vxor.u32 %v124, 2147483648
  %v129 = vxor.u32 %v125, 2147483648
  %v130 = vxor.u32 %v126, 2147483648
  %v131 = vxor.u32 %v127, 2147483648
  %v132 = vmul.f32 %v128, 1.442695
  %v133 = vpow.pop %v132
  %v134 = vmul.f32 %v129, 1.442695
  %v135 = vpow.pop %v134
  %v136 = vmul.f32 %v130, 1.442695
  %v137 = vpow.pop %v136
  %v138 = vmul.f32 %v131, 1.442695
  %v139 = vpow.pop %v138
  %v140 = vadd.f32 %v133, 1.0
  %v141 = vadd.f32 %v135, 1.0
  %v142 = vadd.f32 %v137, 1.0
  %v143 = vadd.f32 %v139, 1.0
  %v144 = vrcp.pop %v140
  %v145 = vmul.f32 1.0, %v144
  %v146 = vrcp.pop %v141
  %v147 = vmul.f32 1.0, %v146
  %v148 = vrcp.pop %v142
  %v149 = vmul.f32 1.0, %v148
  %v150 = vrcp.pop %v143
  %v151 = vmul.f32 1.0, %v150
  %152 = vst [vmem:[%s4] sm:$0xff] %v145
  %153 = vst [vmem:[%s4 + $0x8] sm:$0xff] %v147
  %154 = vst [vmem:[%s4 + $0x10] sm:$0xff] %v149
  %155 = vst [vmem:[%s4 + $0x18] sm:$0xff] %v151
  // Predicated region
  $region18: #{traj_predictor_forward.26} parent=0 // pred_check
    _
  $region19: #{traj_predictor_forward.26} parent=0 // pred_check_branch
    %157 = sbr.rel (0) target = $region21
  $region20: #{traj_predictor_forward.26} parent=0 // pred_region
    _
  $region21: #{traj_predictor_forward.26} parent=0 // pred_fallthru
    _
  // Predicated region
  $region22: #{traj_predictor_forward.26} parent=0 // pred_check
    _
  $region23: #{traj_predictor_forward.26} parent=0 // pred_check_branch
    %159 = sbr.rel (0) target = $region25
  $region24: #{traj_predictor_forward.26} parent=0 // pred_region
    _
  $region25: #{traj_predictor_forward.26} parent=0 // pred_fallthru
    _

// kernel: traj_predictor_forward.27
$region0: #{traj_predictor_forward.27}
  #allocation0 [shape = 'u32[]', space=smem, size = 0x4, offset = 0x4, fixed_abs, tag = 'smem constant byte address 0x4 - core index']
  #allocation1 [shape = 'u32[144,128]{1,0:T(1,128)}', space=vmem, size = 0x12000, scoped, tag = 'internal scratch']
  %s0 = inlined_call_operand.vmem [shape: bf16[128,315], index: 0, kind: input, shape index: {}]
  %s1 = inlined_call_operand.vmem [shape: bf16[315,128], index: 1, kind: input, shape index: {}]
  %s2 = inlined_call_operand.vmem [shape: f32[1,128], index: 2, kind: input, shape index: {}]
  %s3 = inlined_call_operand.vmem [shape: f32[1,128], index: 3, kind: input, shape index: {}]
  %s4 = inlined_call_operand.vmem [shape: f32[128,128], index: 4, kind: output, shape index: {}]
  %s5 = sld [smem:[#allocation0]]
  $region26: #{traj_predictor_forward.27} parent=0
    _
  %s7 = ssub.s32 1, %s5
  %s8 = scalar_select 0, %s7, %s5
  // Predicated region
  $region2: #{traj_predictor_forward.27} parent=0 // pred_check
    _
  $region3: #{traj_predictor_forward.27} parent=0 // pred_check_branch
    %10 = sbr.rel (0) target = $region5
  $region4: #{traj_predictor_forward.27} parent=0 // pred_region
    _
  $region5: #{traj_predictor_forward.27} parent=0 // pred_fallthru
    _
  // Predicated region
  $region6: #{traj_predictor_forward.27} parent=0 // pred_check
    _
  $region7: #{traj_predictor_forward.27} parent=0 // pred_check_branch
    %12 = sbr.rel (0) target = $region9
  $region8: #{traj_predictor_forward.27} parent=0 // pred_region
    _
  $region9: #{traj_predictor_forward.27} parent=0 // pred_fallthru
    _
  // Predicated region
  $region10: #{traj_predictor_forward.27} parent=0 // pred_check
    _
  $region11: #{traj_predictor_forward.27} parent=0 // pred_check_branch
    %14 = sbr.rel (0) target = $region13
  $region12: #{traj_predictor_forward.27} parent=0 // pred_region
    _
  $region13: #{traj_predictor_forward.27} parent=0 // pred_fallthru
    _
  // Predicated region
  $region14: #{traj_predictor_forward.27} parent=0 // pred_check
    _
  $region15: #{traj_predictor_forward.27} parent=0 // pred_check_branch
    %16 = sbr.rel (0) target = $region17
  $region16: #{traj_predictor_forward.27} parent=0 // pred_region
    _
  $region17: #{traj_predictor_forward.27} parent=0 // pred_fallthru
    _
  %v18 = vld [vmem:[%s0] sm:$0xff]
  %v19 = vld [vmem:[%s0 + $0x8] sm:$0xf]
  %v20 = vld [vmem:[%s0 + $0xc] sm:$0xff]
  %v21 = vld [vmem:[%s0 + $0x14] sm:$0xf]
  %v22 = vld [vmem:[%s0 + $0x18] sm:$0xff]
  %v23 = vld [vmem:[%s0 + $0x20] sm:$0xf]
  %v24 = vld [vmem:[%s0 + $0x24] sm:$0xff]
  %v25 = vld [vmem:[%s0 + $0x2c] sm:$0xf]
  %v26 = vld [vmem:[%s0 + $0x30] sm:$0xff]
  %v27 = vld [vmem:[%s0 + $0x38] sm:$0xf]
  %v28 = vld [vmem:[%s0 + $0x3c] sm:$0xff]
  %v29 = vld [vmem:[%s0 + $0x44] sm:$0xf]
  %v30 = vld [vmem:[%s0 + $0x48] sm:$0xff]
  %v31 = vld [vmem:[%s0 + $0x50] sm:$0xf]
  %v32 = vld [vmem:[%s0 + $0x54] sm:$0xff]
  %v33 = vld [vmem:[%s0 + $0x5c] sm:$0xf]
  %v34 = vld [vmem:[%s0 + $0x60] sm:$0xff]
  %v35 = vld [vmem:[%s0 + $0x68] sm:$0xf]
  %v36 = vld [vmem:[%s0 + $0x6c] sm:$0xff]
  %v37 = vld [vmem:[%s0 + $0x74] sm:$0xf]
  %v38 = vld [vmem:[%s0 + $0x78] sm:$0xff]
  %v39 = vld [vmem:[%s0 + $0x80] sm:$0xf]
  %v40 = vld [vmem:[%s0 + $0x84] sm:$0xff]
  %v41 = vld [vmem:[%s0 + $0x8c] sm:$0xf]
  %v42 = vld [vmem:[%s0 + $0x90] sm:$0xff]
  %v43 = vld [vmem:[%s0 + $0x98] sm:$0xf]
  %v44 = vld [vmem:[%s0 + $0x9c] sm:$0xff]
  %v45 = vld [vmem:[%s0 + $0xa4] sm:$0xf]
  %v46 = vld [vmem:[%s0 + $0xa8] sm:$0xff]
  %v47 = vld [vmem:[%s0 + $0xb0] sm:$0xf]
  %v48 = vld [vmem:[%s0 + $0xb4] sm:$0xff]
  %v49 = vld [vmem:[%s0 + $0xbc] sm:$0xf]
  %v50 = vld [vmem:[%s1] sm:$0xf]
  %v51 = vld [vmem:[%s1 + $0x4] sm:$0xf]
  %v52 = vld [vmem:[%s1 + $0x8] sm:$0xf]
  %v53 = vld [vmem:[%s1 + $0xc] sm:$0xf]
  %v54 = vld [vmem:[%s1 + $0x10] sm:$0xf]
  %v55 = vld [vmem:[%s1 + $0x14] sm:$0xf]
  %v56 = vld [vmem:[%s1 + $0x18] sm:$0xf]
  %v57 = vld [vmem:[%s1 + $0x1c] sm:$0xf]
  %v58 = vld [vmem:[%s1 + $0x20] sm:$0xf]
  %v59 = vld [vmem:[%s1 + $0x24] sm:$0xf]
  %v60 = vld [vmem:[%s1 + $0x28] sm:$0xf]
  %v61 = vld [vmem:[%s1 + $0x2c] sm:$0xf]
  %v62 = vld [vmem:[%s1 + $0x30] sm:$0xf]
  %v63 = vld [vmem:[%s1 + $0x34] sm:$0xf]
  %v64 = vld [vmem:[%s1 + $0x38] sm:$0xf]
  %v65 = vld [vmem:[%s1 + $0x3c] sm:$0xf]
  %v66 = vld [vmem:[%s1 + $0x40] sm:$0xf]
  %v67 = vld [vmem:[%s1 + $0x44] sm:$0xf]
  %v68 = vld [vmem:[%s1 + $0x48] sm:$0xf]
  %v69 = vld [vmem:[%s1 + $0x4c] sm:$0xf]
  %v70 = vld [vmem:[%s1 + $0x50] sm:$0xf]
  %v71 = vld [vmem:[%s1 + $0x54] sm:$0xf]
  %v72 = vld [vmem:[%s1 + $0x58] sm:$0xf]
  %v73 = vld [vmem:[%s1 + $0x5c] sm:$0xf]
  %v74 = vld [vmem:[%s1 + $0x60] sm:$0xf]
  %v75 = vld [vmem:[%s1 + $0x64] sm:$0xf]
  %v76 = vld [vmem:[%s1 + $0x68] sm:$0xf]
  %v77 = vld [vmem:[%s1 + $0x6c] sm:$0xf]
  %v78 = vld [vmem:[%s1 + $0x70] sm:$0xf]
  %v79 = vld [vmem:[%s1 + $0x74] sm:$0xf]
  %v80 = vld [vmem:[%s1 + $0x78] sm:$0xf]
  %v81 = vld [vmem:[%s1 + $0x7c] sm:$0xf]
  %v82 = vld [vmem:[%s1 + $0x80] sm:$0xf]
  %v83 = vld [vmem:[%s1 + $0x84] sm:$0xf]
  %v84 = vld [vmem:[%s1 + $0x88] sm:$0xf]
  %v85 = vld [vmem:[%s1 + $0x8c] sm:$0xf]
  %v86 = vld [vmem:[%s1 + $0x90] sm:$0xf]
  %v87 = vld [vmem:[%s1 + $0x94] sm:$0xf]
  %v88 = vld [vmem:[%s1 + $0x98] sm:$0xf]
  %v89 = vld [vmem:[%s1 + $0x9c] sm:$0x3]
  %v90 = vld [vmem:[%s2] sm:$0x1]
  %v92 = vlaneseq
  %v93 = vshrl.u32 %v92, 7
  %v94 = vsub.s32 0, %v93
  %v95 = vrot.slane %v90, %v94
  %v129 = vunpack.c.l.b16 %v18
  %v130 = vunpack.c.h.b16 %v18
  %v131 = vunpack.c.l.b16 %v19
  %v132 = vunpack.c.l.b16 %v20
  %v133 = vunpack.c.h.b16 %v20
  %v134 = vunpack.c.l.b16 %v21
  %v135 = vunpack.c.l.b16 %v22
  %v136 = vunpack.c.h.b16 %v22
  %v137 = vunpack.c.l.b16 %v23
  %v138 = vunpack.c.l.b16 %v24
  %v139 = vunpack.c.h.b16 %v24
  %v140 = vunpack.c.l.b16 %v25
  %v141 = vunpack.c.l.b16 %v26
  %v142 = vunpack.c.h.b16 %v26
  %v143 = vunpack.c.l.b16 %v27
  %v144 = vunpack.c.l.b16 %v28
  %v145 = vunpack.c.h.b16 %v28
  %v146 = vunpack.c.l.b16 %v29
  %v147 = vunpack.c.l.b16 %v30
  %v148 = vunpack.c.h.b16 %v30
  %v149 = vunpack.c.l.b16 %v31
  %v150 = vunpack.c.l.b16 %v32
  %v151 = vunpack.c.h.b16 %v32
  %v152 = vunpack.c.l.b16 %v33
  %v153 = vunpack.c.l.b16 %v34
  %v154 = vunpack.c.h.b16 %v34
  %v155 = vunpack.c.l.b16 %v35
  %v156 = vunpack.c.l.b16 %v36
  %v157 = vunpack.c.h.b16 %v36
  %v158 = vunpack.c.l.b16 %v37
  %v159 = vunpack.c.l.b16 %v38
  %v160 = vunpack.c.h.b16 %v38
  %v161 = vunpack.c.l.b16 %v39
  %v162 = vunpack.c.l.b16 %v40
  %v163 = vunpack.c.h.b16 %v40
  %v164 = vunpack.c.l.b16 %v41
  %v165 = vunpack.c.l.b16 %v42
  %v166 = vunpack.c.h.b16 %v42
  %v167 = vunpack.c.l.b16 %v43
  %v168 = vunpack.c.l.b16 %v44
  %v169 = vunpack.c.h.b16 %v44
  %v170 = vunpack.c.l.b16 %v45
  %v171 = vunpack.c.l.b16 %v46
  %v172 = vunpack.c.h.b16 %v46
  %v173 = vunpack.c.l.b16 %v47
  %v174 = vunpack.c.l.b16 %v48
  %v175 = vunpack.c.h.b16 %v48
  %v176 = vunpack.c.l.b16 %v49
  %v177 = vpack.c.b16 %v132, %v129
  %v178 = vpack.c.b16 %v133, %v130
  %v179 = vpack.c.b16 %v134, %v131
  %v180 = vpack.c.b16 %v138, %v135
  %v181 = vpack.c.b16 %v139, %v136
  %v182 = vpack.c.b16 %v140, %v137
  %v183 = vpack.c.b16 %v144, %v141
  %v184 = vpack.c.b16 %v145, %v142
  %v185 = vpack.c.b16 %v146, %v143
  %v186 = vpack.c.b16 %v150, %v147
  %v187 = vpack.c.b16 %v151, %v148
  %v188 = vpack.c.b16 %v152, %v149
  %v189 = vpack.c.b16 %v156, %v153
  %v190 = vpack.c.b16 %v157, %v154
  %v191 = vpack.c.b16 %v158, %v155
  %v192 = vpack.c.b16 %v162, %v159
  %v193 = vpack.c.b16 %v163, %v160
  %v194 = vpack.c.b16 %v164, %v161
  %v195 = vpack.c.b16 %v168, %v165
  %v196 = vpack.c.b16 %v169, %v166
  %v197 = vpack.c.b16 %v170, %v167
  %v198 = vpack.c.b16 %v174, %v171
  %v199 = vpack.c.b16 %v175, %v172
  %v200 = vpack.c.b16 %v176, %v173
  %v257 = vunpack.c.l.b16 %v50
  %v258 = vunpack.c.l.b16 %v51
  %v259 = vunpack.c.l.b16 %v52
  %v260 = vunpack.c.l.b16 %v53
  %v261 = vunpack.c.l.b16 %v54
  %v262 = vunpack.c.l.b16 %v55
  %v263 = vunpack.c.l.b16 %v56
  %v264 = vunpack.c.l.b16 %v57
  %v265 = vunpack.c.l.b16 %v58
  %v266 = vunpack.c.l.b16 %v59
  %v267 = vunpack.c.l.b16 %v60
  %v268 = vunpack.c.l.b16 %v61
  %v269 = vunpack.c.l.b16 %v62
  %v270 = vunpack.c.l.b16 %v63
  %v271 = vunpack.c.l.b16 %v64
  %v272 = vunpack.c.l.b16 %v65
  %v273 = vunpack.c.l.b16 %v66
  %v274 = vunpack.c.l.b16 %v67
  %v275 = vunpack.c.l.b16 %v68
  %v276 = vunpack.c.l.b16 %v69
  %v277 = vunpack.c.l.b16 %v70
  %v278 = vunpack.c.l.b16 %v71
  %v279 = vunpack.c.l.b16 %v72
  %v280 = vunpack.c.l.b16 %v73
  %v281 = vunpack.c.l.b16 %v74
  %v282 = vunpack.c.l.b16 %v75
  %v283 = vunpack.c.l.b16 %v76
  %v284 = vunpack.c.l.b16 %v77
  %v285 = vunpack.c.l.b16 %v78
  %v286 = vunpack.c.l.b16 %v79
  %v287 = vunpack.c.l.b16 %v80
  %v288 = vunpack.c.l.b16 %v81
  %v289 = vunpack.c.l.b16 %v82
  %v290 = vunpack.c.l.b16 %v83
  %v291 = vunpack.c.l.b16 %v84
  %v292 = vunpack.c.l.b16 %v85
  %v293 = vunpack.c.l.b16 %v86
  %v294 = vunpack.c.l.b16 %v87
  %v295 = vunpack.c.l.b16 %v88
  %v296 = vunpack.c.l.b16 %v89
  %v297 = vpack.c.b16 %v258, %v257
  %v298 = vpack.c.b16 %v260, %v259
  %v299 = vpack.c.b16 %v262, %v261
  %v300 = vpack.c.b16 %v264, %v263
  %v301 = vpack.c.b16 %v266, %v265
  %v302 = vpack.c.b16 %v268, %v267
  %v303 = vpack.c.b16 %v270, %v269
  %v304 = vpack.c.b16 %v272, %v271
  %v305 = vpack.c.b16 %v274, %v273
  %v306 = vpack.c.b16 %v276, %v275
  %v307 = vpack.c.b16 %v278, %v277
  %v308 = vpack.c.b16 %v280, %v279
  %v309 = vpack.c.b16 %v282, %v281
  %v310 = vpack.c.b16 %v284, %v283
  %v311 = vpack.c.b16 %v286, %v285
  %v312 = vpack.c.b16 %v288, %v287
  %v313 = vpack.c.b16 %v290, %v289
  %v314 = vpack.c.b16 %v292, %v291
  %v315 = vpack.c.b16 %v294, %v293
  %v316 = vpack.c.b16 %v296, %v295
  %vm336 = vcmask 482304
  %v338 = vsel %vm336, %v179, 0
  %v341 = vsel %vm336, %v182, 0
  %v344 = vsel %vm336, %v185, 0
  %v347 = vsel %vm336, %v188, 0
  %v350 = vsel %vm336, %v191, 0
  %v353 = vsel %vm336, %v194, 0
  %v356 = vsel %vm336, %v197, 0
  %v359 = vsel %vm336, %v200, 0
  %vm361 = vcmask 1044480
  %vm362 = vcmask 1045504
  %v363 = vsel %vm361, 4294967295, 65535
  %v364 = vsel %vm362, %v363, 0
  %v366 = vand.u32 %v316, %v364
  %368 = vmatprep.subr.bf16.mxu0 0
  %369 = vmatpush1.bf16.msra.mxu0 %v304
  %370 = vmatprep.subr.bf16.mxu0 0
  %371 = vmatpush1.bf16.msra.mxu0 %v303
  %372 = vmatprep.subr.bf16.mxu0 0
  %373 = vmatpush1.bf16.msra.mxu0 %v302
  %374 = vmatprep.subr.bf16.mxu0 0
  %375 = vmatpush1.bf16.msra.mxu0 %v301
  %376 = vmatprep.subr.bf16.mxu0 0
  %377 = vmatpush1.bf16.msra.mxu0 %v300
  %378 = vmatprep.subr.bf16.mxu0 0
  %379 = vmatpush1.bf16.msra.mxu0 %v299
  %380 = vmatprep.subr.bf16.mxu0 0
  %381 = vmatpush1.bf16.msra.mxu0 %v298
  %382 = vmatprep.subr.bf16.mxu0 0
  %383 = vmatpush1.bf16.msra.mxu0 %v297
  %384 = vmatprep.subr.bf16.mxu0 0
  %385 = vmatpush2.bf16.msra.mxu0 %v312
  %386 = vmatprep.subr.bf16.mxu0 0
  %387 = vmatpush2.bf16.msra.mxu0 %v311
  %388 = vmatprep.subr.bf16.mxu0 0
  %389 = vmatpush2.bf16.msra.mxu0 %v310
  %390 = vmatprep.subr.bf16.mxu0 0
  %391 = vmatpush2.bf16.msra.mxu0 %v309
  %392 = vmatprep.subr.bf16.mxu0 0
  %393 = vmatpush2.bf16.msra.mxu0 %v308
  %394 = vmatprep.subr.bf16.mxu0 0
  %395 = vmatpush2.bf16.msra.mxu0 %v307
  %396 = vmatprep.subr.bf16.mxu0 0
  %397 = vmatpush2.bf16.msra.mxu0 %v306
  %398 = vmatprep.subr.bf16.mxu0 0
  %399 = vmatpush2.bf16.msra.mxu0 %v305
  %400 = vmatprep.mubr.bf16.mxu0 %v178
  %401 = vmatmul.mubr.bf16.gmra.mxu0 %v177
  %v402 = vpop.f32.mrf.mxu0
  %v403 = vadd.f32 %v95, %v402
  %v404 = vpop.f32.mrf.mxu0
  %v405 = vpop.f32.mrf.mxu0
  %v406 = vadd.f32 %v95, %v405
  %v407 = vpop.f32.mrf.mxu0
  %408 = vmatprep.mubr.bf16.mxu0 %v181
  %409 = vmatmul.mubr.bf16.gmra.mxu0 %v180
  %v410 = vpop.f32.mrf.mxu0
  %v411 = vadd.f32 %v95, %v410
  %v412 = vpop.f32.mrf.mxu0
  %v413 = vpop.f32.mrf.mxu0
  %v414 = vadd.f32 %v95, %v413
  %v415 = vpop.f32.mrf.mxu0
  %416 = vmatprep.mubr.bf16.mxu0 %v184
  %417 = vmatmul.mubr.bf16.gmra.mxu0 %v183
  %v418 = vpop.f32.mrf.mxu0
  %v419 = vadd.f32 %v95, %v418
  %v420 = vpop.f32.mrf.mxu0
  %v421 = vpop.f32.mrf.mxu0
  %v422 = vadd.f32 %v95, %v421
  %v423 = vpop.f32.mrf.mxu0
  %424 = vmatprep.mubr.bf16.mxu0 %v187
  %425 = vmatmul.mubr.bf16.gmra.mxu0 %v186
  %v426 = vpop.f32.mrf.mxu0
  %v427 = vadd.f32 %v95, %v426
  %v428 = vpop.f32.mrf.mxu0
  %v429 = vpop.f32.mrf.mxu0
  %v430 = vadd.f32 %v95, %v429
  %v431 = vpop.f32.mrf.mxu0
  %432 = vmatprep.mubr.bf16.mxu0 %v190
  %433 = vmatmul.mubr.bf16.gmra.mxu0 %v189
  %v434 = vpop.f32.mrf.mxu0
  %v435 = vadd.f32 %v95, %v434
  %v436 = vpop.f32.mrf.mxu0
  %v437 = vpop.f32.mrf.mxu0
  %v438 = vadd.f32 %v95, %v437
  %v439 = vpop.f32.mrf.mxu0
  %440 = vmatprep.mubr.bf16.mxu0 %v193
  %441 = vmatmul.mubr.bf16.gmra.mxu0 %v192
  %v442 = vpop.f32.mrf.mxu0
  %v443 = vadd.f32 %v95, %v442
  %v444 = vpop.f32.mrf.mxu0
  %v445 = vpop.f32.mrf.mxu0
  %v446 = vadd.f32 %v95, %v445
  %v447 = vpop.f32.mrf.mxu0
  %448 = vmatprep.mubr.bf16.mxu0 %v196
  %449 = vmatmul.mubr.bf16.gmra.mxu0 %v195
  %v450 = vpop.f32.mrf.mxu0
  %v451 = vadd.f32 %v95, %v450
  %v452 = vpop.f32.mrf.mxu0
  %v453 = vpop.f32.mrf.mxu0
  %v454 = vadd.f32 %v95, %v453
  %v455 = vpop.f32.mrf.mxu0
  %456 = vmatprep.mubr.bf16.mxu0 %v199
  %457 = vmatmul.mubr.bf16.gmra.mxu0 %v198
  %v458 = vpop.f32.mrf.mxu0
  %v459 = vadd.f32 %v95, %v458
  %v460 = vpop.f32.mrf.mxu0
  %v461 = vpop.f32.mrf.mxu0
  %v462 = vadd.f32 %v95, %v461
  %v463 = vpop.f32.mrf.mxu0
  %464 = vdwg.mxu0
  %465 = vmatprep.subr.bf16.mxu0 0
  %466 = vmatpush1.bf16.msra.mxu0 0
  %467 = vmatprep.subr.bf16.mxu0 0
  %468 = vmatpush1.bf16.msra.mxu0 0
  %469 = vmatprep.subr.bf16.mxu0 0
  %470 = vmatpush1.bf16.msra.mxu0 0
  %471 = vmatprep.subr.bf16.mxu0 0
  %472 = vmatpush1.bf16.msra.mxu0 0
  %473 = vmatprep.subr.bf16.mxu0 0
  %474 = vmatpush1.bf16.msra.mxu0 %v366
  %475 = vmatprep.subr.bf16.mxu0 0
  %476 = vmatpush1.bf16.msra.mxu0 %v315
  %477 = vmatprep.subr.bf16.mxu0 0
  %478 = vmatpush1.bf16.msra.mxu0 %v314
  %479 = vmatprep.subr.bf16.mxu0 0
  %480 = vmatpush1.bf16.msra.mxu0 %v313
  %481 = vmatprep.subr.bf16.mxu0 0
  %482 = vmatpush2.bf16.msra.mxu0 0
  %483 = vmatprep.subr.bf16.mxu0 0
  %484 = vmatpush2.bf16.msra.mxu0 0
  %485 = vmatprep.subr.bf16.mxu0 0
  %486 = vmatpush2.bf16.msra.mxu0 0
  %487 = vmatprep.subr.bf16.mxu0 0
  %488 = vmatpush2.bf16.msra.mxu0 0
  %489 = vmatprep.subr.bf16.mxu0 0
  %490 = vmatpush2.bf16.msra.mxu0 0
  %491 = vmatprep.subr.bf16.mxu0 0
  %492 = vmatpush2.bf16.msra.mxu0 0
  %493 = vmatprep.subr.bf16.mxu0 0
  %494 = vmatpush2.bf16.msra.mxu0 0
  %495 = vmatprep.subr.bf16.mxu0 0
  %496 = vmatpush2.bf16.msra.mxu0 0
  %497 = vmatprep.mubr.bf16.mxu0 0
  %498 = vmatmul.mubr.bf16.gmra.mxu0 %v338
  %v499 = vpop.f32.mrf.mxu0
  %v500 = vadd.f32 %v403, %v499
  %v501 = vpop.f32.mrf.mxu0
  %v502 = vpop.f32.mrf.mxu0
  %v503 = vadd.f32 %v406, %v502
  %v504 = vpop.f32.mrf.mxu0
  %505 = vmatprep.mubr.bf16.mxu0 0
  %506 = vmatmul.mubr.bf16.gmra.mxu0 %v341
  %v507 = vpop.f32.mrf.mxu0
  %v508 = vadd.f32 %v411, %v507
  %v509 = vpop.f32.mrf.mxu0
  %v510 = vpop.f32.mrf.mxu0
  %v511 = vadd.f32 %v414, %v510
  %v512 = vpop.f32.mrf.mxu0
  %513 = vmatprep.mubr.bf16.mxu0 0
  %514 = vmatmul.mubr.bf16.gmra.mxu0 %v344
  %v515 = vpop.f32.mrf.mxu0
  %v516 = vadd.f32 %v419, %v515
  %v517 = vpop.f32.mrf.mxu0
  %v518 = vpop.f32.mrf.mxu0
  %v519 = vadd.f32 %v422, %v518
  %v520 = vpop.f32.mrf.mxu0
  %521 = vmatprep.mubr.bf16.mxu0 0
  %522 = vmatmul.mubr.bf16.gmra.mxu0 %v347
  %v523 = vpop.f32.mrf.mxu0
  %v524 = vadd.f32 %v427, %v523
  %v525 = vpop.f32.mrf.mxu0
  %v526 = vpop.f32.mrf.mxu0
  %v527 = vadd.f32 %v430, %v526
  %v528 = vpop.f32.mrf.mxu0
  %529 = vmatprep.mubr.bf16.mxu0 0
  %530 = vmatmul.mubr.bf16.gmra.mxu0 %v350
  %v531 = vpop.f32.mrf.mxu0
  %v532 = vadd.f32 %v435, %v531
  %v533 = vpop.f32.mrf.mxu0
  %v534 = vpop.f32.mrf.mxu0
  %v535 = vadd.f32 %v438, %v534
  %v536 = vpop.f32.mrf.mxu0
  %537 = vmatprep.mubr.bf16.mxu0 0
  %538 = vmatmul.mubr.bf16.gmra.mxu0 %v353
  %v539 = vpop.f32.mrf.mxu0
  %v540 = vadd.f32 %v443, %v539
  %v541 = vpop.f32.mrf.mxu0
  %v542 = vpop.f32.mrf.mxu0
  %v543 = vadd.f32 %v446, %v542
  %v544 = vpop.f32.mrf.mxu0
  %545 = vmatprep.mubr.bf16.mxu0 0
  %546 = vmatmul.mubr.bf16.gmra.mxu0 %v356
  %v547 = vpop.f32.mrf.mxu0
  %v548 = vadd.f32 %v451, %v547
  %v549 = vpop.f32.mrf.mxu0
  %v550 = vpop.f32.mrf.mxu0
  %v551 = vadd.f32 %v454, %v550
  %v552 = vpop.f32.mrf.mxu0
  %553 = vmatprep.mubr.bf16.mxu0 0
  %554 = vmatmul.mubr.bf16.gmra.mxu0 %v359
  %v555 = vpop.f32.mrf.mxu0
  %v556 = vadd.f32 %v459, %v555
  %v557 = vpop.f32.mrf.mxu0
  %v558 = vpop.f32.mrf.mxu0
  %v559 = vadd.f32 %v462, %v558
  %v560 = vpop.f32.mrf.mxu0
  %561 = vdwg.mxu0
  %v562 = vld [vmem:[%s3] sm:$0x1]
  %v564 = vlaneseq
  %v565 = vshrl.u32 %v564, 7
  %v566 = vsub.s32 0, %v565
  %v567 = vrot.slane %v562, %v566
  %v569 = vmax.f32 %v500, %v567
  %v570 = vmax.f32 %v503, %v567
  %v571 = vmax.f32 %v508, %v567
  %v572 = vmax.f32 %v511, %v567
  %v573 = vmax.f32 %v516, %v567
  %v574 = vmax.f32 %v519, %v567
  %v575 = vmax.f32 %v524, %v567
  %v576 = vmax.f32 %v527, %v567
  %v577 = vmax.f32 %v532, %v567
  %v578 = vmax.f32 %v535, %v567
  %v579 = vmax.f32 %v540, %v567
  %v580 = vmax.f32 %v543, %v567
  %v581 = vmax.f32 %v548, %v567
  %v582 = vmax.f32 %v551, %v567
  %v583 = vmax.f32 %v556, %v567
  %v584 = vmax.f32 %v559, %v567
  %585 = vst [vmem:[%s4] sm:$0xff] %v569
  %586 = vst [vmem:[%s4 + $0x8] sm:$0xff] %v570
  %587 = vst [vmem:[%s4 + $0x10] sm:$0xff] %v571
  %588 = vst [vmem:[%s4 + $0x18] sm:$0xff] %v572
  %589 = vst [vmem:[%s4 + $0x20] sm:$0xff] %v573
  %590 = vst [vmem:[%s4 + $0x28] sm:$0xff] %v574
  %591 = vst [vmem:[%s4 + $0x30] sm:$0xff] %v575
  %592 = vst [vmem:[%s4 + $0x38] sm:$0xff] %v576
  %593 = vst [vmem:[%s4 + $0x40] sm:$0xff] %v577
  %594 = vst [vmem:[%s4 + $0x48] sm:$0xff] %v578
  %595 = vst [vmem:[%s4 + $0x50] sm:$0xff] %v579
  %596 = vst [vmem:[%s4 + $0x58] sm:$0xff] %v580
  %597 = vst [vmem:[%s4 + $0x60] sm:$0xff] %v581
  %598 = vst [vmem:[%s4 + $0x68] sm:$0xff] %v582
  %599 = vst [vmem:[%s4 + $0x70] sm:$0xff] %v583
  %600 = vst [vmem:[%s4 + $0x78] sm:$0xff] %v584
  // Predicated region
  $region18: #{traj_predictor_forward.27} parent=0 // pred_check
    _
  $region19: #{traj_predictor_forward.27} parent=0 // pred_check_branch
    %602 = sbr.rel (0) target = $region21
  $region20: #{traj_predictor_forward.27} parent=0 // pred_region
    _
  $region21: #{traj_predictor_forward.27} parent=0 // pred_fallthru
    _
  // Predicated region
  $region22: #{traj_predictor_forward.27} parent=0 // pred_check
    _
  $region23: #{traj_predictor_forward.27} parent=0 // pred_check_branch
    %604 = sbr.rel (0) target = $region25
  $region24: #{traj_predictor_forward.27} parent=0 // pred_region
    _
  $region25: #{traj_predictor_forward.27} parent=0 // pred_fallthru
    _

// kernel: traj_predictor_forward.28
$region0: #{traj_predictor_forward.28}
  #allocation0 [shape = 'u32[]', space=smem, size = 0x4, offset = 0x4, fixed_abs, tag = 'smem constant byte address 0x4 - core index']
  #allocation1 [shape = 'u32[144,128]{1,0:T(1,128)}', space=vmem, size = 0x12000, scoped, tag = 'internal scratch']
  %s0 = inlined_call_operand.vmem [shape: bf16[128,27], index: 0, kind: input, shape index: {}]
  %s1 = inlined_call_operand.vmem [shape: bf16[27,128], index: 1, kind: input, shape index: {}]
  %s2 = inlined_call_operand.vmem [shape: f32[1,128], index: 2, kind: input, shape index: {}]
  %s3 = inlined_call_operand.vmem [shape: f32[1,128], index: 3, kind: input, shape index: {}]
  %s4 = inlined_call_operand.vmem [shape: f32[128,128], index: 4, kind: output, shape index: {}]
  %s5 = sld [smem:[#allocation0]]
  $region26: #{traj_predictor_forward.28} parent=0
    _
  %s7 = ssub.s32 1, %s5
  %s8 = scalar_select 0, %s7, %s5
  // Predicated region
  $region2: #{traj_predictor_forward.28} parent=0 // pred_check
    _
  $region3: #{traj_predictor_forward.28} parent=0 // pred_check_branch
    %10 = sbr.rel (0) target = $region5
  $region4: #{traj_predictor_forward.28} parent=0 // pred_region
    _
  $region5: #{traj_predictor_forward.28} parent=0 // pred_fallthru
    _
  // Predicated region
  $region6: #{traj_predictor_forward.28} parent=0 // pred_check
    _
  $region7: #{traj_predictor_forward.28} parent=0 // pred_check_branch
    %12 = sbr.rel (0) target = $region9
  $region8: #{traj_predictor_forward.28} parent=0 // pred_region
    _
  $region9: #{traj_predictor_forward.28} parent=0 // pred_fallthru
    _
  // Predicated region
  $region10: #{traj_predictor_forward.28} parent=0 // pred_check
    _
  $region11: #{traj_predictor_forward.28} parent=0 // pred_check_branch
    %14 = sbr.rel (0) target = $region13
  $region12: #{traj_predictor_forward.28} parent=0 // pred_region
    _
  $region13: #{traj_predictor_forward.28} parent=0 // pred_fallthru
    _
  // Predicated region
  $region14: #{traj_predictor_forward.28} parent=0 // pred_check
    _
  $region15: #{traj_predictor_forward.28} parent=0 // pred_check_branch
    %16 = sbr.rel (0) target = $region17
  $region16: #{traj_predictor_forward.28} parent=0 // pred_region
    _
  $region17: #{traj_predictor_forward.28} parent=0 // pred_fallthru
    _
  %v18 = vld [vmem:[%s0] sm:$0xf]
  %v19 = vld [vmem:[%s0 + $0x4] sm:$0xf]
  %v20 = vld [vmem:[%s0 + $0x8] sm:$0xf]
  %v21 = vld [vmem:[%s0 + $0xc] sm:$0xf]
  %v22 = vld [vmem:[%s0 + $0x10] sm:$0xf]
  %v23 = vld [vmem:[%s0 + $0x14] sm:$0xf]
  %v24 = vld [vmem:[%s0 + $0x18] sm:$0xf]
  %v25 = vld [vmem:[%s0 + $0x1c] sm:$0xf]
  %v26 = vld [vmem:[%s0 + $0x20] sm:$0xf]
  %v27 = vld [vmem:[%s0 + $0x24] sm:$0xf]
  %v28 = vld [vmem:[%s0 + $0x28] sm:$0xf]
  %v29 = vld [vmem:[%s0 + $0x2c] sm:$0xf]
  %v30 = vld [vmem:[%s0 + $0x30] sm:$0xf]
  %v31 = vld [vmem:[%s0 + $0x34] sm:$0xf]
  %v32 = vld [vmem:[%s0 + $0x38] sm:$0xf]
  %v33 = vld [vmem:[%s0 + $0x3c] sm:$0xf]
  %v34 = vld [vmem:[%s1] sm:$0xf]
  %v35 = vld [vmem:[%s1 + $0x4] sm:$0xf]
  %v36 = vld [vmem:[%s1 + $0x8] sm:$0xf]
  %v37 = vld [vmem:[%s1 + $0xc] sm:$0x3]
  %v38 = vld [vmem:[%s2] sm:$0x1]
  %v40 = vlaneseq
  %v41 = vshrl.u32 %v40, 7
  %v42 = vsub.s32 0, %v41
  %v43 = vrot.slane %v38, %v42
  %v61 = vunpack.c.l.b16 %v18
  %v62 = vunpack.c.l.b16 %v19
  %v63 = vunpack.c.l.b16 %v20
  %v64 = vunpack.c.l.b16 %v21
  %v65 = vunpack.c.l.b16 %v22
  %v66 = vunpack.c.l.b16 %v23
  %v67 = vunpack.c.l.b16 %v24
  %v68 = vunpack.c.l.b16 %v25
  %v69 = vunpack.c.l.b16 %v26
  %v70 = vunpack.c.l.b16 %v27
  %v71 = vunpack.c.l.b16 %v28
  %v72 = vunpack.c.l.b16 %v29
  %v73 = vunpack.c.l.b16 %v30
  %v74 = vunpack.c.l.b16 %v31
  %v75 = vunpack.c.l.b16 %v32
  %v76 = vunpack.c.l.b16 %v33
  %v77 = vpack.c.b16 %v62, %v61
  %v78 = vpack.c.b16 %v64, %v63
  %v79 = vpack.c.b16 %v66, %v65
  %v80 = vpack.c.b16 %v68, %v67
  %v81 = vpack.c.b16 %v70, %v69
  %v82 = vpack.c.b16 %v72, %v71
  %v83 = vpack.c.b16 %v74, %v73
  %v84 = vpack.c.b16 %v76, %v75
  %v89 = vunpack.c.l.b16 %v34
  %v90 = vunpack.c.l.b16 %v35
  %v91 = vunpack.c.l.b16 %v36
  %v92 = vunpack.c.l.b16 %v37
  %v93 = vpack.c.b16 %v90, %v89
  %v94 = vpack.c.b16 %v92, %v91
  %vm96 = vcmask 220160
  %v98 = vsel %vm96, %v77, 0
  %v101 = vsel %vm96, %v78, 0
  %v104 = vsel %vm96, %v79, 0
  %v107 = vsel %vm96, %v80, 0
  %v110 = vsel %vm96, %v81, 0
  %v113 = vsel %vm96, %v82, 0
  %v116 = vsel %vm96, %v83, 0
  %v119 = vsel %vm96, %v84, 0
  %vm121 = vcmask 1044480
  %vm122 = vcmask 1045504
  %v123 = vsel %vm121, 4294967295, 65535
  %v124 = vsel %vm122, %v123, 0
  %v126 = vand.u32 %v94, %v124
  %128 = vmatprep.subr.bf16.mxu0 0
  %129 = vmatpush1.bf16.msra.mxu0 0
  %130 = vmatprep.subr.bf16.mxu0 0
  %131 = vmatpush1.bf16.msra.mxu0 0
  %132 = vmatprep.subr.bf16.mxu0 0
  %133 = vmatpush1.bf16.msra.mxu0 0
  %134 = vmatprep.subr.bf16.mxu0 0
  %135 = vmatpush1.bf16.msra.mxu0 0
  %136 = vmatprep.subr.bf16.mxu0 0
  %137 = vmatpush1.bf16.msra.mxu0 0
  %138 = vmatprep.subr.bf16.mxu0 0
  %139 = vmatpush1.bf16.msra.mxu0 0
  %140 = vmatprep.subr.bf16.mxu0 0
  %141 = vmatpush1.bf16.msra.mxu0 %v126
  %142 = vmatprep.subr.bf16.mxu0 0
  %143 = vmatpush1.bf16.msra.mxu0 %v93
  %144 = vmatprep.subr.bf16.mxu0 0
  %145 = vmatpush2.bf16.msra.mxu0 0
  %146 = vmatprep.subr.bf16.mxu0 0
  %147 = vmatpush2.bf16.msra.mxu0 0
  %148 = vmatprep.subr.bf16.mxu0 0
  %149 = vmatpush2.bf16.msra.mxu0 0
  %150 = vmatprep.subr.bf16.mxu0 0
  %151 = vmatpush2.bf16.msra.mxu0 0
  %152 = vmatprep.subr.bf16.mxu0 0
  %153 = vmatpush2.bf16.msra.mxu0 0
  %154 = vmatprep.subr.bf16.mxu0 0
  %155 = vmatpush2.bf16.msra.mxu0 0
  %156 = vmatprep.subr.bf16.mxu0 0
  %157 = vmatpush2.bf16.msra.mxu0 0
  %158 = vmatprep.subr.bf16.mxu0 0
  %159 = vmatpush2.bf16.msra.mxu0 0
  %160 = vmatprep.mubr.bf16.mxu0 0
  %161 = vmatmul.mubr.bf16.gmra.mxu0 %v98
  %v162 = vpop.f32.mrf.mxu0
  %v163 = vadd.f32 %v43, %v162
  %v164 = vpop.f32.mrf.mxu0
  %v165 = vpop.f32.mrf.mxu0
  %v166 = vadd.f32 %v43, %v165
  %v167 = vpop.f32.mrf.mxu0
  %168 = vmatprep.mubr.bf16.mxu0 0
  %169 = vmatmul.mubr.bf16.gmra.mxu0 %v101
  %v170 = vpop.f32.mrf.mxu0
  %v171 = vadd.f32 %v43, %v170
  %v172 = vpop.f32.mrf.mxu0
  %v173 = vpop.f32.mrf.mxu0
  %v174 = vadd.f32 %v43, %v173
  %v175 = vpop.f32.mrf.mxu0
  %176 = vmatprep.mubr.bf16.mxu0 0
  %177 = vmatmul.mubr.bf16.gmra.mxu0 %v104
  %v178 = vpop.f32.mrf.mxu0
  %v179 = vadd.f32 %v43, %v178
  %v180 = vpop.f32.mrf.mxu0
  %v181 = vpop.f32.mrf.mxu0
  %v182 = vadd.f32 %v43, %v181
  %v183 = vpop.f32.mrf.mxu0
  %184 = vmatprep.mubr.bf16.mxu0 0
  %185 = vmatmul.mubr.bf16.gmra.mxu0 %v107
  %v186 = vpop.f32.mrf.mxu0
  %v187 = vadd.f32 %v43, %v186
  %v188 = vpop.f32.mrf.mxu0
  %v189 = vpop.f32.mrf.mxu0
  %v190 = vadd.f32 %v43, %v189
  %v191 = vpop.f32.mrf.mxu0
  %192 = vmatprep.mubr.bf16.mxu0 0
  %193 = vmatmul.mubr.bf16.gmra.mxu0 %v110
  %v194 = vpop.f32.mrf.mxu0
  %v195 = vadd.f32 %v43, %v194
  %v196 = vpop.f32.mrf.mxu0
  %v197 = vpop.f32.mrf.mxu0
  %v198 = vadd.f32 %v43, %v197
  %v199 = vpop.f32.mrf.mxu0
  %200 = vmatprep.mubr.bf16.mxu0 0
  %201 = vmatmul.mubr.bf16.gmra.mxu0 %v113
  %v202 = vpop.f32.mrf.mxu0
  %v203 = vadd.f32 %v43, %v202
  %v204 = vpop.f32.mrf.mxu0
  %v205 = vpop.f32.mrf.mxu0
  %v206 = vadd.f32 %v43, %v205
  %v207 = vpop.f32.mrf.mxu0
  %208 = vmatprep.mubr.bf16.mxu0 0
  %209 = vmatmul.mubr.bf16.gmra.mxu0 %v116
  %v210 = vpop.f32.mrf.mxu0
  %v211 = vadd.f32 %v43, %v210
  %v212 = vpop.f32.mrf.mxu0
  %v213 = vpop.f32.mrf.mxu0
  %v214 = vadd.f32 %v43, %v213
  %v215 = vpop.f32.mrf.mxu0
  %216 = vmatprep.mubr.bf16.mxu0 0
  %217 = vmatmul.mubr.bf16.gmra.mxu0 %v119
  %v218 = vpop.f32.mrf.mxu0
  %v219 = vadd.f32 %v43, %v218
  %v220 = vpop.f32.mrf.mxu0
  %v221 = vpop.f32.mrf.mxu0
  %v222 = vadd.f32 %v43, %v221
  %v223 = vpop.f32.mrf.mxu0
  %224 = vdwg.mxu0
  %v225 = vld [vmem:[%s3] sm:$0x1]
  %v227 = vlaneseq
  %v228 = vshrl.u32 %v227, 7
  %v229 = vsub.s32 0, %v228
  %v230 = vrot.slane %v225, %v229
  %v232 = vmax.f32 %v163, %v230
  %v233 = vmax.f32 %v166, %v230
  %v234 = vmax.f32 %v171, %v230
  %v235 = vmax.f32 %v174, %v230
  %v236 = vmax.f32 %v179, %v230
  %v237 = vmax.f32 %v182, %v230
  %v238 = vmax.f32 %v187, %v230
  %v239 = vmax.f32 %v190, %v230
  %v240 = vmax.f32 %v195, %v230
  %v241 = vmax.f32 %v198, %v230
  %v242 = vmax.f32 %v203, %v230
  %v243 = vmax.f32 %v206, %v230
  %v244 = vmax.f32 %v211, %v230
  %v245 = vmax.f32 %v214, %v230
  %v246 = vmax.f32 %v219, %v230
  %v247 = vmax.f32 %v222, %v230
  %v248 = vxor.u32 %v232, 2147483648
  %v249 = vxor.u32 %v233, 2147483648
  %v250 = vxor.u32 %v234, 2147483648
  %v251 = vxor.u32 %v235, 2147483648
  %v252 = vxor.u32 %v236, 2147483648
  %v253 = vxor.u32 %v237, 2147483648
  %v254 = vxor.u32 %v238, 2147483648
  %v255 = vxor.u32 %v239, 2147483648
  %v256 = vxor.u32 %v240, 2147483648
  %v257 = vxor.u32 %v241, 2147483648
  %v258 = vxor.u32 %v242, 2147483648
  %v259 = vxor.u32 %v243, 2147483648
  %v260 = vxor.u32 %v244, 2147483648
  %v261 = vxor.u32 %v245, 2147483648
  %v262 = vxor.u32 %v246, 2147483648
  %v263 = vxor.u32 %v247, 2147483648
  %v264 = vmul.f32 %v248, 1.442695
  %v265 = vpow.pop %v264
  %v266 = vmul.f32 %v249, 1.442695
  %v267 = vpow.pop %v266
  %v268 = vmul.f32 %v250, 1.442695
  %v269 = vpow.pop %v268
  %v270 = vmul.f32 %v251, 1.442695
  %v271 = vpow.pop %v270
  %v272 = vmul.f32 %v252, 1.442695
  %v273 = vpow.pop %v272
  %v274 = vmul.f32 %v253, 1.442695
  %v275 = vpow.pop %v274
  %v276 = vmul.f32 %v254, 1.442695
  %v277 = vpow.pop %v276
  %v278 = vmul.f32 %v255, 1.442695
  %v279 = vpow.pop %v278
  %v280 = vmul.f32 %v256, 1.442695
  %v281 = vpow.pop %v280
  %v282 = vmul.f32 %v257, 1.442695
  %v283 = vpow.pop %v282
  %v284 = vmul.f32 %v258, 1.442695
  %v285 = vpow.pop %v284
  %v286 = vmul.f32 %v259, 1.442695
  %v287 = vpow.pop %v286
  %v288 = vmul.f32 %v260, 1.442695
  %v289 = vpow.pop %v288
  %v290 = vmul.f32 %v261, 1.442695
  %v291 = vpow.pop %v290
  %v292 = vmul.f32 %v262, 1.442695
  %v293 = vpow.pop %v292
  %v294 = vmul.f32 %v263, 1.442695
  %v295 = vpow.pop %v294
  %v296 = vadd.f32 %v265, 1.0
  %v297 = vadd.f32 %v267, 1.0
  %v298 = vadd.f32 %v269, 1.0
  %v299 = vadd.f32 %v271, 1.0
  %v300 = vadd.f32 %v273, 1.0
  %v301 = vadd.f32 %v275, 1.0
  %v302 = vadd.f32 %v277, 1.0
  %v303 = vadd.f32 %v279, 1.0
  %v304 = vadd.f32 %v281, 1.0
  %v305 = vadd.f32 %v283, 1.0
  %v306 = vadd.f32 %v285, 1.0
  %v307 = vadd.f32 %v287, 1.0
  %v308 = vadd.f32 %v289, 1.0
  %v309 = vadd.f32 %v291, 1.0
  %v310 = vadd.f32 %v293, 1.0
  %v311 = vadd.f32 %v295, 1.0
  %v312 = vrcp.pop %v296
  %v313 = vmul.f32 1.0, %v312
  %v314 = vrcp.pop %v297
  %v315 = vmul.f32 1.0, %v314
  %v316 = vrcp.pop %v298
  %v317 = vmul.f32 1.0, %v316
  %v318 = vrcp.pop %v299
  %v319 = vmul.f32 1.0, %v318
  %v320 = vrcp.pop %v300
  %v321 = vmul.f32 1.0, %v320
  %v322 = vrcp.pop %v301
  %v323 = vmul.f32 1.0, %v322
  %v324 = vrcp.pop %v302
  %v325 = vmul.f32 1.0, %v324
  %v326 = vrcp.pop %v303
  %v327 = vmul.f32 1.0, %v326
  %v328 = vrcp.pop %v304
  %v329 = vmul.f32 1.0, %v328
  %v330 = vrcp.pop %v305
  %v331 = vmul.f32 1.0, %v330
  %v332 = vrcp.pop %v306
  %v333 = vmul.f32 1.0, %v332
  %v334 = vrcp.pop %v307
  %v335 = vmul.f32 1.0, %v334
  %v336 = vrcp.pop %v308
  %v337 = vmul.f32 1.0, %v336
  %v338 = vrcp.pop %v309
  %v339 = vmul.f32 1.0, %v338
  %v340 = vrcp.pop %v310
  %v341 = vmul.f32 1.0, %v340
  %v342 = vrcp.pop %v311
  %v343 = vmul.f32 1.0, %v342
  %344 = vst [vmem:[%s4] sm:$0xff] %v313
  %345 = vst [vmem:[%s4 + $0x8] sm:$0xff] %v315
  %346 = vst [vmem:[%s4 + $0x10] sm:$0xff] %v317
  %347 = vst [vmem:[%s4 + $0x18] sm:$0xff] %v319
  %348 = vst [vmem:[%s4 + $0x20] sm:$0xff] %v321
  %349 = vst [vmem:[%s4 + $0x28] sm:$0xff] %v323
  %350 = vst [vmem:[%s4 + $0x30] sm:$0xff] %v325
  %351 = vst [vmem:[%s4 + $0x38] sm:$0xff] %v327
  %352 = vst [vmem:[%s4 + $0x40] sm:$0xff] %v329
  %353 = vst [vmem:[%s4 + $0x48] sm:$0xff] %v331
  %354 = vst [vmem:[%s4 + $0x50] sm:$0xff] %v333
  %355 = vst [vmem:[%s4 + $0x58] sm:$0xff] %v335
  %356 = vst [vmem:[%s4 + $0x60] sm:$0xff] %v337
  %357 = vst [vmem:[%s4 + $0x68] sm:$0xff] %v339
  %358 = vst [vmem:[%s4 + $0x70] sm:$0xff] %v341
  %359 = vst [vmem:[%s4 + $0x78] sm:$0xff] %v343
  // Predicated region
  $region18: #{traj_predictor_forward.28} parent=0 // pred_check
    _
  $region19: #{traj_predictor_forward.28} parent=0 // pred_check_branch
    %361 = sbr.rel (0) target = $region21
  $region20: #{traj_predictor_forward.28} parent=0 // pred_region
    _
  $region21: #{traj_predictor_forward.28} parent=0 // pred_fallthru
    _
  // Predicated region
  $region22: #{traj_predictor_forward.28} parent=0 // pred_check
    _
  $region23: #{traj_predictor_forward.28} parent=0 // pred_check_branch
    %363 = sbr.rel (0) target = $region25
  $region24: #{traj_predictor_forward.28} parent=0 // pred_region
    _
  $region25: #{traj_predictor_forward.28} parent=0 // pred_fallthru
    _

// kernel: traj_predictor_forward.29
$region0: #{traj_predictor_forward.29}
  #allocation0 [shape = 'u32[]', space=smem, size = 0x4, offset = 0x4, fixed_abs, tag = 'smem constant byte address 0x4 - core index']
  #allocation1 [shape = 'u32[144,128]{1,0:T(1,128)}', space=vmem, size = 0x12000, scoped, tag = 'internal scratch']
  %s0 = inlined_call_operand.vmem [shape: bf16[512,171], index: 0, kind: input, shape index: {}]
  %s1 = inlined_call_operand.vmem [shape: bf16[171,128], index: 1, kind: input, shape index: {}]
  %s2 = inlined_call_operand.vmem [shape: f32[1,128], index: 2, kind: input, shape index: {}]
  %s3 = inlined_call_operand.vmem [shape: f32[1,128], index: 3, kind: input, shape index: {}]
  %s4 = inlined_call_operand.vmem [shape: f32[512,128], index: 4, kind: output, shape index: {}]
  %s5 = sld [smem:[#allocation0]]
  $region49: #{traj_predictor_forward.29} parent=0
    _
  %s7 = ssub.s32 1, %s5
  %s8 = scalar_select 0, %s7, %s5
  loop: start=0, step=1, limit=4
  $region2: #{traj_predictor_forward.29} parent=0 // loop_pre_header
    _
  $region3: #{traj_predictor_forward.29} parent=0 // loop_header
    %s10 = sphi 0, %s14
    %p11 = scmp.ge.s32.totalorder %s10, 4
    %s20 = sphi 0, %s22
    %s23 = sphi 0, %s20
    %s24 = sphi 0, %s23
    %s40 = sphi 0, %s24
    %s44 = sphi 0, %s44
    %s46 = sphi 0, %s44
    %s47 = sphi 0, %s46
    %s61 = sphi 0, %s47
    %s65 = sphi 0, %s65
    %s67 = sphi 0, %s65
    %s68 = sphi 0, %s67
    %s82 = sphi 0, %s68
    %s86 = sphi 0, %s86
    %s88 = sphi 0, %s86
    %s89 = sphi 0, %s88
    %s103 = sphi 0, %s89
    %s109 = sphi 0, %s111
    %s112 = sphi 0, %s109
    %s113 = sphi 0, %s112
    %s129 = sphi 0, %s113
  $region4: #{traj_predictor_forward.29} parent=0 // loop_header_branch
    %13 = sbr.rel (%p11) target = $region8
  $region5: #{traj_predictor_forward.29} parent=0 // loop_body
    %s15 = ssub.s32 %s10, 1
    %s16 = ssub.s32 %s10, 2
    %s17 = sadd.s32 %s10, 1
    %s18 = ssub.s32 %s10, %s17
    %p19 = scmp.eq.s32.totalorder %s18, 0
    %s21 = sadd.s32 %s20, 1
    %s22 = scalar_select %p19, %s20, %s21
    %p25 = pneg %p19
    %p26 = scmp.eq.s32.totalorder %s10, 1
    %p27 = por %p25, %p26
    %p28 = scmp.ne.s32.totalorder %s20, %s23
    %p29 = scmp.eq.s32.totalorder %s10, 0
    %p30 = por %p28, %p29
    %p31 = scmp.ne.s32.totalorder %s20, %s23
    %p32 = scmp.eq.s32.totalorder %s15, 1
    %p33 = por %p31, %p32
    %p34 = scmp.ne.s32.totalorder %s23, %s24
    %p35 = scmp.eq.s32.totalorder %s15, 0
    %p36 = por %p34, %p35
    %p37 = scmp.ne.s32.totalorder %s23, %s24
    %p38 = scmp.eq.s32.totalorder %s16, 1
    %p39 = por %p37, %p38
    %p41 = scmp.ne.s32.totalorder %s24, %s40
    %p42 = scmp.eq.s32.totalorder %s16, 0
    %p43 = por %p41, %p42
    %s45 = sadd.s32 %s44, 1
    %p48 = scmp.eq.s32.totalorder %s10, 1
    %p49 = scmp.ne.s32.totalorder %s44, %s46
    %p50 = scmp.eq.s32.totalorder %s10, 0
    %p51 = por %p49, %p50
    %p52 = scmp.ne.s32.totalorder %s44, %s46
    %p53 = scmp.eq.s32.totalorder %s15, 1
    %p54 = por %p52, %p53
    %p55 = scmp.ne.s32.totalorder %s46, %s47
    %p56 = scmp.eq.s32.totalorder %s15, 0
    %p57 = por %p55, %p56
    %p58 = scmp.ne.s32.totalorder %s46, %s47
    %p59 = scmp.eq.s32.totalorder %s16, 1
    %p60 = por %p58, %p59
    %p62 = scmp.ne.s32.totalorder %s47, %s61
    %p63 = scmp.eq.s32.totalorder %s16, 0
    %p64 = por %p62, %p63
    %s66 = sadd.s32 %s65, 1
    %p69 = scmp.eq.s32.totalorder %s10, 1
    %p70 = scmp.ne.s32.totalorder %s65, %s67
    %p71 = scmp.eq.s32.totalorder %s10, 0
    %p72 = por %p70, %p71
    %p73 = scmp.ne.s32.totalorder %s65, %s67
    %p74 = scmp.eq.s32.totalorder %s15, 1
    %p75 = por %p73, %p74
    %p76 = scmp.ne.s32.totalorder %s67, %s68
    %p77 = scmp.eq.s32.totalorder %s15, 0
    %p78 = por %p76, %p77
    %p79 = scmp.ne.s32.totalorder %s67, %s68
    %p80 = scmp.eq.s32.totalorder %s16, 1
    %p81 = por %p79, %p80
    %p83 = scmp.ne.s32.totalorder %s68, %s82
    %p84 = scmp.eq.s32.totalorder %s16, 0
    %p85 = por %p83, %p84
    %s87 = sadd.s32 %s86, 1
    %p90 = scmp.eq.s32.totalorder %s10, 1
    %p91 = scmp.ne.s32.totalorder %s86, %s88
    %p92 = scmp.eq.s32.totalorder %s10, 0
    %p93 = por %p91, %p92
    %p94 = scmp.ne.s32.totalorder %s86, %s88
    %p95 = scmp.eq.s32.totalorder %s15, 1
    %p96 = por %p94, %p95
    %p97 = scmp.ne.s32.totalorder %s88, %s89
    %p98 = scmp.eq.s32.totalorder %s15, 0
    %p99 = por %p97, %p98
    %p100 = scmp.ne.s32.totalorder %s88, %s89
    %p101 = scmp.eq.s32.totalorder %s16, 1
    %p102 = por %p100, %p101
    %p104 = scmp.ne.s32.totalorder %s89, %s103
    %p105 = scmp.eq.s32.totalorder %s16, 0
    %p106 = por %p104, %p105
    %s107 = ssub.s32 %s10, %s17
    %p108 = scmp.eq.s32.totalorder %s107, 0
    %s110 = sadd.s32 %s109, 1
    %s111 = scalar_select %p108, %s109, %s110
    %p114 = pneg %p108
    %p115 = scmp.eq.s32.totalorder %s10, 1
    %p116 = por %p114, %p115
    %p117 = scmp.ne.s32.totalorder %s109, %s112
    %p118 = scmp.eq.s32.totalorder %s10, 0
    %p119 = por %p117, %p118
    %p120 = scmp.ne.s32.totalorder %s109, %s112
    %p121 = scmp.eq.s32.totalorder %s15, 1
    %p122 = por %p120, %p121
    %p123 = scmp.ne.s32.totalorder %s112, %s113
    %p124 = scmp.eq.s32.totalorder %s15, 0
    %p125 = por %p123, %p124
    %p126 = scmp.ne.s32.totalorder %s112, %s113
    %p127 = scmp.eq.s32.totalorder %s16, 1
    %p128 = por %p126, %p127
    %p130 = scmp.ne.s32.totalorder %s113, %s129
    %p131 = scmp.eq.s32.totalorder %s16, 0
    %p132 = por %p130, %p131
    %p133 = scmp.le.s32.totalorder 1, %s10
    %p134 = scmp.lt.s32.totalorder %s10, 3
    %p135 = pnand %p133, %p134
    %p136 = pneg %p135
    // Predicated region
    $region9: #{traj_predictor_forward.29} parent=5 // pred_check
      _
    $region10: #{traj_predictor_forward.29} parent=5 // pred_check_branch
      %138 = sbr.rel (%p135) target = $region12
    $region11: #{traj_predictor_forward.29} parent=5 // pred_region
      %s139 = ssub.s32 %s10, 1
      // Predicated region
      $region13: #{traj_predictor_forward.29} parent=11 // pred_check
        %p140 = pneg %p57
      $region14: #{traj_predictor_forward.29} parent=11 // pred_check_branch
        %142 = sbr.rel (%p140) target = $region16
      $region15: #{traj_predictor_forward.29} parent=11 // pred_region
        _
      $region16: #{traj_predictor_forward.29} parent=11 // pred_fallthru
        _
      // Predicated region
      $region17: #{traj_predictor_forward.29} parent=11 // pred_check
        %p143 = pneg %p78
      $region18: #{traj_predictor_forward.29} parent=11 // pred_check_branch
        %145 = sbr.rel (%p143) target = $region20
      $region19: #{traj_predictor_forward.29} parent=11 // pred_region
        _
      $region20: #{traj_predictor_forward.29} parent=11 // pred_fallthru
        _
      // Predicated region
      $region21: #{traj_predictor_forward.29} parent=11 // pred_check
        %p146 = pneg %p99
      $region22: #{traj_predictor_forward.29} parent=11 // pred_check_branch
        %148 = sbr.rel (%p146) target = $region24
      $region23: #{traj_predictor_forward.29} parent=11 // pred_region
        _
      $region24: #{traj_predictor_forward.29} parent=11 // pred_fallthru
        _
    $region12: #{traj_predictor_forward.29} parent=5 // pred_fallthru
      _
    %p149 = scmp.lt.s32.totalorder %s10, 2
    // Predicated region
    $region25: #{traj_predictor_forward.29} parent=5 // pred_check
      %p150 = pneg %p149
    $region26: #{traj_predictor_forward.29} parent=5 // pred_check_branch
      %152 = sbr.rel (%p150) target = $region28
    $region27: #{traj_predictor_forward.29} parent=5 // pred_region
      // Predicated region
      $region29: #{traj_predictor_forward.29} parent=27 // pred_check
        %p153 = pneg %p30
      $region30: #{traj_predictor_forward.29} parent=27 // pred_check_branch
        %155 = sbr.rel (%p153) target = $region32
      $region31: #{traj_predictor_forward.29} parent=27 // pred_region
        %s156 = smul.u32 32, %s10
        %p157 = scmp.lt.s32.totalorder %s156, 63
        %s158 = scalar_select %p157, %s156, 63
        %s159 = smul.addr %s158, 2
        %s160 = smul.addr %s159, 4
        %s161 = scalar_lea.vmem %s0, %s160
        %s162 = smul.u32 32, %s10
      $region32: #{traj_predictor_forward.29} parent=27 // pred_fallthru
        _
    $region28: #{traj_predictor_forward.29} parent=5 // pred_fallthru
      _
    %p163 = scmp.le.s32.totalorder 1, %s10
    %p164 = scmp.lt.s32.totalorder %s10, 3
    %p165 = pnand %p163, %p164
    %p166 = pneg %p165
    // Predicated region
    $region33: #{traj_predictor_forward.29} parent=5 // pred_check
      _
    $region34: #{traj_predictor_forward.29} parent=5 // pred_check_branch
      %168 = sbr.rel (%p165) target = $region36
    $region35: #{traj_predictor_forward.29} parent=5 // pred_region
      %s169 = ssub.s32 %s10, 1
      %s170 = smul.u32 32, %s15
      %p171 = scmp.lt.s32.totalorder %s170, 63
      %s172 = scalar_select %p171, %s170, 63
      %s173 = smul.addr %s172, 2
      %s174 = smul.addr %s173, 4
      %s175 = scalar_lea.vmem %s0, %s174
      %p176 = pneg %p36
      %p177 = pneg %p33
      %p178 = pneg %p57
      %p179 = pneg %p54
      %p180 = pneg %p78
      %p181 = pneg %p75
      %p182 = pneg %p99
      %p183 = pneg %p96
      %p184 = pneg %p125
      %p185 = pneg %p122
      %s186 = smul.u32 32, %s15
      %p187 = scmp.lt.s32.totalorder %s186, 63
      %s188 = scalar_select %p187, %s186, 63
      %s189 = smul.addr %s188, 8
      %s190 = scalar_lea.vmem %s4, %s189
      %s191 = smul.u32 32, %s15
      %p192 = scmp.lt.s32.totalorder %s191, 63
      %s193 = scalar_select %p192, %s191, 63
      %s194 = smul.addr %s193, 2
      %s195 = smul.addr %s194, 4
      %s196 = scalar_lea.vmem %s0, %s195
      %s197 = smul.u32 32, %s15
      %s198 = smul.u32 32, %s15
      %p199 = scmp.lt.s32.totalorder %s198, 63
      %s200 = scalar_select %p199, %s198, 63
      %s201 = smul.addr %s200, 8
      %s202 = scalar_lea.vmem %s4, %s201
      %s203 = smul.u32 32, %s15
      %v205 = vld [vmem:[%s196] sm:$0xff]
      %v206 = vld [vmem:[%s196 + $0x8] sm:$0xff]
      %v207 = vld [vmem:[%s196 + $0x10] sm:$0xff]
      %v208 = vld [vmem:[%s196 + $0x18] sm:$0xff]
      %v209 = vld [vmem:[%s196 + $0x20] sm:$0xff]
      %v210 = vld [vmem:[%s196 + $0x28] sm:$0xff]
      %v211 = vld [vmem:[%s196 + $0x30] sm:$0xff]
      %v212 = vld [vmem:[%s196 + $0x38] sm:$0xff]
      %v213 = vld [vmem:[%s196 + $0x40] sm:$0xff]
      %v214 = vld [vmem:[%s196 + $0x48] sm:$0xff]
      %v215 = vld [vmem:[%s196 + $0x50] sm:$0xff]
      %v216 = vld [vmem:[%s196 + $0x58] sm:$0xff]
      %v217 = vld [vmem:[%s196 + $0x60] sm:$0xff]
      %v218 = vld [vmem:[%s196 + $0x68] sm:$0xff]
      %v219 = vld [vmem:[%s196 + $0x70] sm:$0xff]
      %v220 = vld [vmem:[%s196 + $0x78] sm:$0xff]
      %v221 = vld [vmem:[%s196 + $0x80] sm:$0xff]
      %v222 = vld [vmem:[%s196 + $0x88] sm:$0xff]
      %v223 = vld [vmem:[%s196 + $0x90] sm:$0xff]
      %v224 = vld [vmem:[%s196 + $0x98] sm:$0xff]
      %v225 = vld [vmem:[%s196 + $0xa0] sm:$0xff]
      %v226 = vld [vmem:[%s196 + $0xa8] sm:$0xff]
      %v227 = vld [vmem:[%s196 + $0xb0] sm:$0xff]
      %v228 = vld [vmem:[%s196 + $0xb8] sm:$0xff]
      %v229 = vld [vmem:[%s196 + $0xc0] sm:$0xff]
      %v230 = vld [vmem:[%s196 + $0xc8] sm:$0xff]
      %v231 = vld [vmem:[%s196 + $0xd0] sm:$0xff]
      %v232 = vld [vmem:[%s196 + $0xd8] sm:$0xff]
      %v233 = vld [vmem:[%s196 + $0xe0] sm:$0xff]
      %v234 = vld [vmem:[%s196 + $0xe8] sm:$0xff]
      %v235 = vld [vmem:[%s196 + $0xf0] sm:$0xff]
      %v236 = vld [vmem:[%s196 + $0xf8] sm:$0xff]
      %v237 = vld [vmem:[%s1] sm:$0xf]
      %v238 = vld [vmem:[%s1 + $0x4] sm:$0xf]
      %v239 = vld [vmem:[%s1 + $0x8] sm:$0xf]
      %v240 = vld [vmem:[%s1 + $0xc] sm:$0xf]
      %v241 = vld [vmem:[%s1 + $0x10] sm:$0xf]
      %v242 = vld [vmem:[%s1 + $0x14] sm:$0xf]
      %v243 = vld [vmem:[%s1 + $0x18] sm:$0xf]
      %v244 = vld [vmem:[%s1 + $0x1c] sm:$0xf]
      %v245 = vld [vmem:[%s1 + $0x20] sm:$0xf]
      %v246 = vld [vmem:[%s1 + $0x24] sm:$0xf]
      %v247 = vld [vmem:[%s1 + $0x28] sm:$0xf]
      %v248 = vld [vmem:[%s1 + $0x2c] sm:$0xf]
      %v249 = vld [vmem:[%s1 + $0x30] sm:$0xf]
      %v250 = vld [vmem:[%s1 + $0x34] sm:$0xf]
      %v251 = vld [vmem:[%s1 + $0x38] sm:$0xf]
      %v252 = vld [vmem:[%s1 + $0x3c] sm:$0xf]
      %v253 = vld [vmem:[%s1 + $0x40] sm:$0xf]
      %v254 = vld [vmem:[%s1 + $0x44] sm:$0xf]
      %v255 = vld [vmem:[%s1 + $0x48] sm:$0xf]
      %v256 = vld [vmem:[%s1 + $0x4c] sm:$0xf]
      %v257 = vld [vmem:[%s1 + $0x50] sm:$0xf]
      %v258 = vld [vmem:[%s1 + $0x54] sm:$0x3]
      %v259 = vld [vmem:[%s2] sm:$0x1]
      %v261 = vlaneseq
      %v262 = vshrl.u32 %v261, 7
      %v263 = vsub.s32 0, %v262
      %v264 = vrot.slane %v259, %v263
      %v298 = vunpack.c.l.b16 %v205
      %v299 = vunpack.c.h.b16 %v205
      %v300 = vunpack.c.l.b16 %v206
      %v301 = vunpack.c.h.b16 %v206
      %v302 = vunpack.c.l.b16 %v207
      %v303 = vunpack.c.h.b16 %v207
      %v304 = vunpack.c.l.b16 %v208
      %v305 = vunpack.c.h.b16 %v208
      %v306 = vunpack.c.l.b16 %v209
      %v307 = vunpack.c.h.b16 %v209
      %v308 = vunpack.c.l.b16 %v210
      %v309 = vunpack.c.h.b16 %v210
      %v310 = vunpack.c.l.b16 %v211
      %v311 = vunpack.c.h.b16 %v211
      %v312 = vunpack.c.l.b16 %v212
      %v313 = vunpack.c.h.b16 %v212
      %v314 = vunpack.c.l.b16 %v213
      %v315 = vunpack.c.h.b16 %v213
      %v316 = vunpack.c.l.b16 %v214
      %v317 = vunpack.c.h.b16 %v214
      %v318 = vunpack.c.l.b16 %v215
      %v319 = vunpack.c.h.b16 %v215
      %v320 = vunpack.c.l.b16 %v216
      %v321 = vunpack.c.h.b16 %v216
      %v322 = vunpack.c.l.b16 %v217
      %v323 = vunpack.c.h.b16 %v217
      %v324 = vunpack.c.l.b16 %v218
      %v325 = vunpack.c.h.b16 %v218
      %v326 = vunpack.c.l.b16 %v219
      %v327 = vunpack.c.h.b16 %v219
      %v328 = vunpack.c.l.b16 %v220
      %v329 = vunpack.c.h.b16 %v220
      %v330 = vunpack.c.l.b16 %v221
      %v331 = vunpack.c.h.b16 %v221
      %v332 = vunpack.c.l.b16 %v222
      %v333 = vunpack.c.h.b16 %v222
      %v334 = vunpack.c.l.b16 %v223
      %v335 = vunpack.c.h.b16 %v223
      %v336 = vunpack.c.l.b16 %v224
      %v337 = vunpack.c.h.b16 %v224
      %v338 = vunpack.c.l.b16 %v225
      %v339 = vunpack.c.h.b16 %v225
      %v340 = vunpack.c.l.b16 %v226
      %v341 = vunpack.c.h.b16 %v226
      %v342 = vunpack.c.l.b16 %v227
      %v343 = vunpack.c.h.b16 %v227
      %v344 = vunpack.c.l.b16 %v228
      %v345 = vunpack.c.h.b16 %v228
      %v346 = vunpack.c.l.b16 %v229
      %v347 = vunpack.c.h.b16 %v229
      %v348 = vunpack.c.l.b16 %v230
      %v349 = vunpack.c.h.b16 %v230
      %v350 = vunpack.c.l.b16 %v231
      %v351 = vunpack.c.h.b16 %v231
      %v352 = vunpack.c.l.b16 %v232
      %v353 = vunpack.c.h.b16 %v232
      %v354 = vunpack.c.l.b16 %v233
      %v355 = vunpack.c.h.b16 %v233
      %v356 = vunpack.c.l.b16 %v234
      %v357 = vunpack.c.h.b16 %v234
      %v358 = vunpack.c.l.b16 %v235
      %v359 = vunpack.c.h.b16 %v235
      %v360 = vunpack.c.l.b16 %v236
      %v361 = vunpack.c.h.b16 %v236
      %v362 = vpack.c.b16 %v300, %v298
      %v363 = vpack.c.b16 %v301, %v299
      %v364 = vpack.c.b16 %v304, %v302
      %v365 = vpack.c.b16 %v305, %v303
      %v366 = vpack.c.b16 %v308, %v306
      %v367 = vpack.c.b16 %v309, %v307
      %v368 = vpack.c.b16 %v312, %v310
      %v369 = vpack.c.b16 %v313, %v311
      %v370 = vpack.c.b16 %v316, %v314
      %v371 = vpack.c.b16 %v317, %v315
      %v372 = vpack.c.b16 %v320, %v318
      %v373 = vpack.c.b16 %v321, %v319
      %v374 = vpack.c.b16 %v324, %v322
      %v375 = vpack.c.b16 %v325, %v323
      %v376 = vpack.c.b16 %v328, %v326
      %v377 = vpack.c.b16 %v329, %v327
      %v378 = vpack.c.b16 %v332, %v330
      %v379 = vpack.c.b16 %v333, %v331
      %v380 = vpack.c.b16 %v336, %v334
      %v381 = vpack.c.b16 %v337, %v335
      %v382 = vpack.c.b16 %v340, %v338
      %v383 = vpack.c.b16 %v341, %v339
      %v384 = vpack.c.b16 %v344, %v342
      %v385 = vpack.c.b16 %v345, %v343
      %v386 = vpack.c.b16 %v348, %v346
      %v387 = vpack.c.b16 %v349, %v347
      %v388 = vpack.c.b16 %v352, %v350
      %v389 = vpack.c.b16 %v353, %v351
      %v390 = vpack.c.b16 %v356, %v354
      %v391 = vpack.c.b16 %v357, %v355
      %v392 = vpack.c.b16 %v360, %v358
      %v393 = vpack.c.b16 %v361, %v359
      %v432 = vunpack.c.l.b16 %v237
      %v433 = vunpack.c.l.b16 %v238
      %v434 = vunpack.c.l.b16 %v239
      %v435 = vunpack.c.l.b16 %v240
      %v436 = vunpack.c.l.b16 %v241
      %v437 = vunpack.c.l.b16 %v242
      %v438 = vunpack.c.l.b16 %v243
      %v439 = vunpack.c.l.b16 %v244
      %v440 = vunpack.c.l.b16 %v245
      %v441 = vunpack.c.l.b16 %v246
      %v442 = vunpack.c.l.b16 %v247
      %v443 = vunpack.c.l.b16 %v248
      %v444 = vunpack.c.l.b16 %v249
      %v445 = vunpack.c.l.b16 %v250
      %v446 = vunpack.c.l.b16 %v251
      %v447 = vunpack.c.l.b16 %v252
      %v448 = vunpack.c.l.b16 %v253
      %v449 = vunpack.c.l.b16 %v254
      %v450 = vunpack.c.l.b16 %v255
      %v451 = vunpack.c.l.b16 %v256
      %v452 = vunpack.c.l.b16 %v257
      %v453 = vunpack.c.l.b16 %v258
      %v454 = vpack.c.b16 %v433, %v432
      %v455 = vpack.c.b16 %v435, %v434
      %v456 = vpack.c.b16 %v437, %v436
      %v457 = vpack.c.b16 %v439, %v438
      %v458 = vpack.c.b16 %v441, %v440
      %v459 = vpack.c.b16 %v443, %v442
      %v460 = vpack.c.b16 %v445, %v444
      %v461 = vpack.c.b16 %v447, %v446
      %v462 = vpack.c.b16 %v449, %v448
      %v463 = vpack.c.b16 %v451, %v450
      %v464 = vpack.c.b16 %v453, %v452
      %vm475 = vcmask 351232
      %v477 = vsel %vm475, %v363, 0
      %v480 = vsel %vm475, %v365, 0
      %v483 = vsel %vm475, %v367, 0
      %v486 = vsel %vm475, %v369, 0
      %v489 = vsel %vm475, %v371, 0
      %v492 = vsel %vm475, %v373, 0
      %v495 = vsel %vm475, %v375, 0
      %v498 = vsel %vm475, %v377, 0
      %v501 = vsel %vm475, %v379, 0
      %v504 = vsel %vm475, %v381, 0
      %v507 = vsel %vm475, %v383, 0
      %v510 = vsel %vm475, %v385, 0
      %v513 = vsel %vm475, %v387, 0
      %v516 = vsel %vm475, %v389, 0
      %v519 = vsel %vm475, %v391, 0
      %v522 = vsel %vm475, %v393, 0
      %vm524 = vcmask 1044480
      %vm525 = vcmask 1045504
      %v526 = vsel %vm524, 4294967295, 65535
      %v527 = vsel %vm525, %v526, 0
      %v529 = vand.u32 %v464, %v527
      %531 = vmatprep.subr.bf16.mxu0 0
      %532 = vmatpush1.bf16.msra.mxu0 %v461
      %533 = vmatprep.subr.bf16.mxu0 0
      %534 = vmatpush1.bf16.msra.mxu0 %v460
      %535 = vmatprep.subr.bf16.mxu0 0
      %536 = vmatpush1.bf16.msra.mxu0 %v459
      %537 = vmatprep.subr.bf16.mxu0 0
      %538 = vmatpush1.bf16.msra.mxu0 %v458
      %539 = vmatprep.subr.bf16.mxu0 0
      %540 = vmatpush1.bf16.msra.mxu0 %v457
      %541 = vmatprep.subr.bf16.mxu0 0
      %542 = vmatpush1.bf16.msra.mxu0 %v456
      %543 = vmatprep.subr.bf16.mxu0 0
      %544 = vmatpush1.bf16.msra.mxu0 %v455
      %545 = vmatprep.subr.bf16.mxu0 0
      %546 = vmatpush1.bf16.msra.mxu0 %v454
      %547 = vmatprep.subr.bf16.mxu0 0
      %548 = vmatpush2.bf16.msra.mxu0 0
      %549 = vmatprep.subr.bf16.mxu0 0
      %550 = vmatpush2.bf16.msra.mxu0 0
      %551 = vmatprep.subr.bf16.mxu0 0
      %552 = vmatpush2.bf16.msra.mxu0 0
      %553 = vmatprep.subr.bf16.mxu0 0
      %554 = vmatpush2.bf16.msra.mxu0 0
      %555 = vmatprep.subr.bf16.mxu0 0
      %556 = vmatpush2.bf16.msra.mxu0 0
      %557 = vmatprep.subr.bf16.mxu0 0
      %558 = vmatpush2.bf16.msra.mxu0 %v529
      %559 = vmatprep.subr.bf16.mxu0 0
      %560 = vmatpush2.bf16.msra.mxu0 %v463
      %561 = vmatprep.subr.bf16.mxu0 0
      %562 = vmatpush2.bf16.msra.mxu0 %v462
      %563 = vmatprep.mubr.bf16.mxu0 %v477
      %564 = vmatmul.mubr.bf16.gmra.mxu0 %v362
      %v565 = vpop.f32.mrf.mxu0
      %v566 = vadd.f32 %v264, %v565
      %v567 = vpop.f32.mrf.mxu0
      %v568 = vpop.f32.mrf.mxu0
      %v569 = vadd.f32 %v264, %v568
      %v570 = vpop.f32.mrf.mxu0
      %571 = vmatprep.mubr.bf16.mxu0 %v480
      %572 = vmatmul.mubr.bf16.gmra.mxu0 %v364
      %v573 = vpop.f32.mrf.mxu0
      %v574 = vadd.f32 %v264, %v573
      %v575 = vpop.f32.mrf.mxu0
      %v576 = vpop.f32.mrf.mxu0
      %v577 = vadd.f32 %v264, %v576
      %v578 = vpop.f32.mrf.mxu0
      %579 = vmatprep.mubr.bf16.mxu0 %v483
      %580 = vmatmul.mubr.bf16.gmra.mxu0 %v366
      %v581 = vpop.f32.mrf.mxu0
      %v582 = vadd.f32 %v264, %v581
      %v583 = vpop.f32.mrf.mxu0
      %v584 = vpop.f32.mrf.mxu0
      %v585 = vadd.f32 %v264, %v584
      %v586 = vpop.f32.mrf.mxu0
      %587 = vmatprep.mubr.bf16.mxu0 %v486
      %588 = vmatmul.mubr.bf16.gmra.mxu0 %v368
      %v589 = vpop.f32.mrf.mxu0
      %v590 = vadd.f32 %v264, %v589
      %v591 = vpop.f32.mrf.mxu0
      %v592 = vpop.f32.mrf.mxu0
      %v593 = vadd.f32 %v264, %v592
      %v594 = vpop.f32.mrf.mxu0
      %595 = vmatprep.mubr.bf16.mxu0 %v489
      %596 = vmatmul.mubr.bf16.gmra.mxu0 %v370
      %v597 = vpop.f32.mrf.mxu0
      %v598 = vadd.f32 %v264, %v597
      %v599 = vpop.f32.mrf.mxu0
      %v600 = vpop.f32.mrf.mxu0
      %v601 = vadd.f32 %v264, %v600
      %v602 = vpop.f32.mrf.mxu0
      %603 = vmatprep.mubr.bf16.mxu0 %v492
      %604 = vmatmul.mubr.bf16.gmra.mxu0 %v372
      %v605 = vpop.f32.mrf.mxu0
      %v606 = vadd.f32 %v264, %v605
      %v607 = vpop.f32.mrf.mxu0
      %v608 = vpop.f32.mrf.mxu0
      %v609 = vadd.f32 %v264, %v608
      %v610 = vpop.f32.mrf.mxu0
      %611 = vmatprep.mubr.bf16.mxu0 %v495
      %612 = vmatmul.mubr.bf16.gmra.mxu0 %v374
      %v613 = vpop.f32.mrf.mxu0
      %v614 = vadd.f32 %v264, %v613
      %v615 = vpop.f32.mrf.mxu0
      %v616 = vpop.f32.mrf.mxu0
      %v617 = vadd.f32 %v264, %v616
      %v618 = vpop.f32.mrf.mxu0
      %619 = vmatprep.mubr.bf16.mxu0 %v498
      %620 = vmatmul.mubr.bf16.gmra.mxu0 %v376
      %v621 = vpop.f32.mrf.mxu0
      %v622 = vadd.f32 %v264, %v621
      %v623 = vpop.f32.mrf.mxu0
      %v624 = vpop.f32.mrf.mxu0
      %v625 = vadd.f32 %v264, %v624
      %v626 = vpop.f32.mrf.mxu0
      %627 = vmatprep.mubr.bf16.mxu0 %v501
      %628 = vmatmul.mubr.bf16.gmra.mxu0 %v378
      %v629 = vpop.f32.mrf.mxu0
      %v630 = vadd.f32 %v264, %v629
      %v631 = vpop.f32.mrf.mxu0
      %v632 = vpop.f32.mrf.mxu0
      %v633 = vadd.f32 %v264, %v632
      %v634 = vpop.f32.mrf.mxu0
      %635 = vmatprep.mubr.bf16.mxu0 %v504
      %636 = vmatmul.mubr.bf16.gmra.mxu0 %v380
      %v637 = vpop.f32.mrf.mxu0
      %v638 = vadd.f32 %v264, %v637
      %v639 = vpop.f32.mrf.mxu0
      %v640 = vpop.f32.mrf.mxu0
      %v641 = vadd.f32 %v264, %v640
      %v642 = vpop.f32.mrf.mxu0
      %643 = vmatprep.mubr.bf16.mxu0 %v507
      %644 = vmatmul.mubr.bf16.gmra.mxu0 %v382
      %v645 = vpop.f32.mrf.mxu0
      %v646 = vadd.f32 %v264, %v645
      %v647 = vpop.f32.mrf.mxu0
      %v648 = vpop.f32.mrf.mxu0
      %v649 = vadd.f32 %v264, %v648
      %v650 = vpop.f32.mrf.mxu0
      %651 = vmatprep.mubr.bf16.mxu0 %v510
      %652 = vmatmul.mubr.bf16.gmra.mxu0 %v384
      %v653 = vpop.f32.mrf.mxu0
      %v654 = vadd.f32 %v264, %v653
      %v655 = vpop.f32.mrf.mxu0
      %v656 = vpop.f32.mrf.mxu0
      %v657 = vadd.f32 %v264, %v656
      %v658 = vpop.f32.mrf.mxu0
      %659 = vmatprep.mubr.bf16.mxu0 %v513
      %660 = vmatmul.mubr.bf16.gmra.mxu0 %v386
      %v661 = vpop.f32.mrf.mxu0
      %v662 = vadd.f32 %v264, %v661
      %v663 = vpop.f32.mrf.mxu0
      %v664 = vpop.f32.mrf.mxu0
      %v665 = vadd.f32 %v264, %v664
      %v666 = vpop.f32.mrf.mxu0
      %667 = vmatprep.mubr.bf16.mxu0 %v516
      %668 = vmatmul.mubr.bf16.gmra.mxu0 %v388
      %v669 = vpop.f32.mrf.mxu0
      %v670 = vadd.f32 %v264, %v669
      %v671 = vpop.f32.mrf.mxu0
      %v672 = vpop.f32.mrf.mxu0
      %v673 = vadd.f32 %v264, %v672
      %v674 = vpop.f32.mrf.mxu0
      %675 = vmatprep.mubr.bf16.mxu0 %v519
      %676 = vmatmul.mubr.bf16.gmra.mxu0 %v390
      %v677 = vpop.f32.mrf.mxu0
      %v678 = vadd.f32 %v264, %v677
      %v679 = vpop.f32.mrf.mxu0
      %v680 = vpop.f32.mrf.mxu0
      %v681 = vadd.f32 %v264, %v680
      %v682 = vpop.f32.mrf.mxu0
      %683 = vmatprep.mubr.bf16.mxu0 %v522
      %684 = vmatmul.mubr.bf16.gmra.mxu0 %v392
      %v685 = vpop.f32.mrf.mxu0
      %v686 = vadd.f32 %v264, %v685
      %v687 = vpop.f32.mrf.mxu0
      %v688 = vpop.f32.mrf.mxu0
      %v689 = vadd.f32 %v264, %v688
      %v690 = vpop.f32.mrf.mxu0
      %691 = vdwg.mxu0
      %v692 = vld [vmem:[%s3] sm:$0x1]
      %v694 = vlaneseq
      %v695 = vshrl.u32 %v694, 7
      %v696 = vsub.s32 0, %v695
      %v697 = vrot.slane %v692, %v696
      %v699 = vmax.f32 %v566, %v697
      %v700 = vmax.f32 %v569, %v697
      %v701 = vmax.f32 %v574, %v697
      %v702 = vmax.f32 %v577, %v697
      %v703 = vmax.f32 %v582, %v697
      %v704 = vmax.f32 %v585, %v697
      %v705 = vmax.f32 %v590, %v697
      %v706 = vmax.f32 %v593, %v697
      %v707 = vmax.f32 %v598, %v697
      %v708 = vmax.f32 %v601, %v697
      %v709 = vmax.f32 %v606, %v697
      %v710 = vmax.f32 %v609, %v697
      %v711 = vmax.f32 %v614, %v697
      %v712 = vmax.f32 %v617, %v697
      %v713 = vmax.f32 %v622, %v697
      %v714 = vmax.f32 %v625, %v697
      %v715 = vmax.f32 %v630, %v697
      %v716 = vmax.f32 %v633, %v697
      %v717 = vmax.f32 %v638, %v697
      %v718 = vmax.f32 %v641, %v697
      %v719 = vmax.f32 %v646, %v697
      %v720 = vmax.f32 %v649, %v697
      %v721 = vmax.f32 %v654, %v697
      %v722 = vmax.f32 %v657, %v697
      %v723 = vmax.f32 %v662, %v697
      %v724 = vmax.f32 %v665, %v697
      %v725 = vmax.f32 %v670, %v697
      %v726 = vmax.f32 %v673, %v697
      %v727 = vmax.f32 %v678, %v697
      %v728 = vmax.f32 %v681, %v697
      %v729 = vmax.f32 %v686, %v697
      %v730 = vmax.f32 %v689, %v697
      %v731 = vxor.u32 %v699, 2147483648
      %v732 = vxor.u32 %v700, 2147483648
      %v733 = vxor.u32 %v701, 2147483648
      %v734 = vxor.u32 %v702, 2147483648
      %v735 = vxor.u32 %v703, 2147483648
      %v736 = vxor.u32 %v704, 2147483648
      %v737 = vxor.u32 %v705, 2147483648
      %v738 = vxor.u32 %v706, 2147483648
      %v739 = vxor.u32 %v707, 2147483648
      %v740 = vxor.u32 %v708, 2147483648
      %v741 = vxor.u32 %v709, 2147483648
      %v742 = vxor.u32 %v710, 2147483648
      %v743 = vxor.u32 %v711, 2147483648
      %v744 = vxor.u32 %v712, 2147483648
      %v745 = vxor.u32 %v713, 2147483648
      %v746 = vxor.u32 %v714, 2147483648
      %v747 = vxor.u32 %v715, 2147483648
      %v748 = vxor.u32 %v716, 2147483648
      %v749 = vxor.u32 %v717, 2147483648
      %v750 = vxor.u32 %v718, 2147483648
      %v751 = vxor.u32 %v719, 2147483648
      %v752 = vxor.u32 %v720, 2147483648
      %v753 = vxor.u32 %v721, 2147483648
      %v754 = vxor.u32 %v722, 2147483648
      %v755 = vxor.u32 %v723, 2147483648
      %v756 = vxor.u32 %v724, 2147483648
      %v757 = vxor.u32 %v725, 2147483648
      %v758 = vxor.u32 %v726, 2147483648
      %v759 = vxor.u32 %v727, 2147483648
      %v760 = vxor.u32 %v728, 2147483648
      %v761 = vxor.u32 %v729, 2147483648
      %v762 = vxor.u32 %v730, 2147483648
      %v763 = vmul.f32 %v731, 1.442695
      %v764 = vpow.pop %v763
      %v765 = vmul.f32 %v732, 1.442695
      %v766 = vpow.pop %v765
      %v767 = vmul.f32 %v733, 1.442695
      %v768 = vpow.pop %v767
      %v769 = vmul.f32 %v734, 1.442695
      %v770 = vpow.pop %v769
      %v771 = vmul.f32 %v735, 1.442695
      %v772 = vpow.pop %v771
      %v773 = vmul.f32 %v736, 1.442695
      %v774 = vpow.pop %v773
      %v775 = vmul.f32 %v737, 1.442695
      %v776 = vpow.pop %v775
      %v777 = vmul.f32 %v738, 1.442695
      %v778 = vpow.pop %v777
      %v779 = vmul.f32 %v739, 1.442695
      %v780 = vpow.pop %v779
      %v781 = vmul.f32 %v740, 1.442695
      %v782 = vpow.pop %v781
      %v783 = vmul.f32 %v741, 1.442695
      %v784 = vpow.pop %v783
      %v785 = vmul.f32 %v742, 1.442695
      %v786 = vpow.pop %v785
      %v787 = vmul.f32 %v743, 1.442695
      %v788 = vpow.pop %v787
      %v789 = vmul.f32 %v744, 1.442695
      %v790 = vpow.pop %v789
      %v791 = vmul.f32 %v745, 1.442695
      %v792 = vpow.pop %v791
      %v793 = vmul.f32 %v746, 1.442695
      %v794 = vpow.pop %v793
      %v795 = vmul.f32 %v747, 1.442695
      %v796 = vpow.pop %v795
      %v797 = vmul.f32 %v748, 1.442695
      %v798 = vpow.pop %v797
      %v799 = vmul.f32 %v749, 1.442695
      %v800 = vpow.pop %v799
      %v801 = vmul.f32 %v750, 1.442695
      %v802 = vpow.pop %v801
      %v803 = vmul.f32 %v751, 1.442695
      %v804 = vpow.pop %v803
      %v805 = vmul.f32 %v752, 1.442695
      %v806 = vpow.pop %v805
      %v807 = vmul.f32 %v753, 1.442695
      %v808 = vpow.pop %v807
      %v809 = vmul.f32 %v754, 1.442695
      %v810 = vpow.pop %v809
      %v811 = vmul.f32 %v755, 1.442695
      %v812 = vpow.pop %v811
      %v813 = vmul.f32 %v756, 1.442695
      %v814 = vpow.pop %v813
      %v815 = vmul.f32 %v757, 1.442695
      %v816 = vpow.pop %v815
      %v817 = vmul.f32 %v758, 1.442695
      %v818 = vpow.pop %v817
      %v819 = vmul.f32 %v759, 1.442695
      %v820 = vpow.pop %v819
      %v821 = vmul.f32 %v760, 1.442695
      %v822 = vpow.pop %v821
      %v823 = vmul.f32 %v761, 1.442695
      %v824 = vpow.pop %v823
      %v825 = vmul.f32 %v762, 1.442695
      %v826 = vpow.pop %v825
      %v827 = vadd.f32 %v764, 1.0
      %v828 = vadd.f32 %v766, 1.0
      %v829 = vadd.f32 %v768, 1.0
      %v830 = vadd.f32 %v770, 1.0
      %v831 = vadd.f32 %v772, 1.0
      %v832 = vadd.f32 %v774, 1.0
      %v833 = vadd.f32 %v776, 1.0
      %v834 = vadd.f32 %v778, 1.0
      %v835 = vadd.f32 %v780, 1.0
      %v836 = vadd.f32 %v782, 1.0
      %v837 = vadd.f32 %v784, 1.0
      %v838 = vadd.f32 %v786, 1.0
      %v839 = vadd.f32 %v788, 1.0
      %v840 = vadd.f32 %v790, 1.0
      %v841 = vadd.f32 %v792, 1.0
      %v842 = vadd.f32 %v794, 1.0
      %v843 = vadd.f32 %v796, 1.0
      %v844 = vadd.f32 %v798, 1.0
      %v845 = vadd.f32 %v800, 1.0
      %v846 = vadd.f32 %v802, 1.0
      %v847 = vadd.f32 %v804, 1.0
      %v848 = vadd.f32 %v806, 1.0
      %v849 = vadd.f32 %v808, 1.0
      %v850 = vadd.f32 %v810, 1.0
      %v851 = vadd.f32 %v812, 1.0
      %v852 = vadd.f32 %v814, 1.0
      %v853 = vadd.f32 %v816, 1.0
      %v854 = vadd.f32 %v818, 1.0
      %v855 = vadd.f32 %v820, 1.0
      %v856 = vadd.f32 %v822, 1.0
      %v857 = vadd.f32 %v824, 1.0
      %v858 = vadd.f32 %v826, 1.0
      %v859 = vrcp.pop %v827
      %v860 = vmul.f32 1.0, %v859
      %v861 = vrcp.pop %v828
      %v862 = vmul.f32 1.0, %v861
      %v863 = vrcp.pop %v829
      %v864 = vmul.f32 1.0, %v863
      %v865 = vrcp.pop %v830
      %v866 = vmul.f32 1.0, %v865
      %v867 = vrcp.pop %v831
      %v868 = vmul.f32 1.0, %v867
      %v869 = vrcp.pop %v832
      %v870 = vmul.f32 1.0, %v869
      %v871 = vrcp.pop %v833
      %v872 = vmul.f32 1.0, %v871
      %v873 = vrcp.pop %v834
      %v874 = vmul.f32 1.0, %v873
      %v875 = vrcp.pop %v835
      %v876 = vmul.f32 1.0, %v875
      %v877 = vrcp.pop %v836
      %v878 = vmul.f32 1.0, %v877
      %v879 = vrcp.pop %v837
      %v880 = vmul.f32 1.0, %v879
      %v881 = vrcp.pop %v838
      %v882 = vmul.f32 1.0, %v881
      %v883 = vrcp.pop %v839
      %v884 = vmul.f32 1.0, %v883
      %v885 = vrcp.pop %v840
      %v886 = vmul.f32 1.0, %v885
      %v887 = vrcp.pop %v841
      %v888 = vmul.f32 1.0, %v887
      %v889 = vrcp.pop %v842
      %v890 = vmul.f32 1.0, %v889
      %v891 = vrcp.pop %v843
      %v892 = vmul.f32 1.0, %v891
      %v893 = vrcp.pop %v844
      %v894 = vmul.f32 1.0, %v893
      %v895 = vrcp.pop %v845
      %v896 = vmul.f32 1.0, %v895
      %v897 = vrcp.pop %v846
      %v898 = vmul.f32 1.0, %v897
      %v899 = vrcp.pop %v847
      %v900 = vmul.f32 1.0, %v899
      %v901 = vrcp.pop %v848
      %v902 = vmul.f32 1.0, %v901
      %v903 = vrcp.pop %v849
      %v904 = vmul.f32 1.0, %v903
      %v905 = vrcp.pop %v850
      %v906 = vmul.f32 1.0, %v905
      %v907 = vrcp.pop %v851
      %v908 = vmul.f32 1.0, %v907
      %v909 = vrcp.pop %v852
      %v910 = vmul.f32 1.0, %v909
      %v911 = vrcp.pop %v853
      %v912 = vmul.f32 1.0, %v911
      %v913 = vrcp.pop %v854
      %v914 = vmul.f32 1.0, %v913
      %v915 = vrcp.pop %v855
      %v916 = vmul.f32 1.0, %v915
      %v917 = vrcp.pop %v856
      %v918 = vmul.f32 1.0, %v917
      %v919 = vrcp.pop %v857
      %v920 = vmul.f32 1.0, %v919
      %v921 = vrcp.pop %v858
      %v922 = vmul.f32 1.0, %v921
      %923 = vst [vmem:[%s202] sm:$0xff] %v860
      %924 = vst [vmem:[%s202 + $0x8] sm:$0xff] %v862
      %925 = vst [vmem:[%s202 + $0x10] sm:$0xff] %v864
      %926 = vst [vmem:[%s202 + $0x18] sm:$0xff] %v866
      %927 = vst [vmem:[%s202 + $0x20] sm:$0xff] %v868
      %928 = vst [vmem:[%s202 + $0x28] sm:$0xff] %v870
      %929 = vst [vmem:[%s202 + $0x30] sm:$0xff] %v872
      %930 = vst [vmem:[%s202 + $0x38] sm:$0xff] %v874
      %931 = vst [vmem:[%s202 + $0x40] sm:$0xff] %v876
      %932 = vst [vmem:[%s202 + $0x48] sm:$0xff] %v878
      %933 = vst [vmem:[%s202 + $0x50] sm:$0xff] %v880
      %934 = vst [vmem:[%s202 + $0x58] sm:$0xff] %v882
      %935 = vst [vmem:[%s202 + $0x60] sm:$0xff] %v884
      %936 = vst [vmem:[%s202 + $0x68] sm:$0xff] %v886
      %937 = vst [vmem:[%s202 + $0x70] sm:$0xff] %v888
      %938 = vst [vmem:[%s202 + $0x78] sm:$0xff] %v890
      %939 = vst [vmem:[%s202 + $0x80] sm:$0xff] %v892
      %940 = vst [vmem:[%s202 + $0x88] sm:$0xff] %v894
      %941 = vst [vmem:[%s202 + $0x90] sm:$0xff] %v896
      %942 = vst [vmem:[%s202 + $0x98] sm:$0xff] %v898
      %943 = vst [vmem:[%s202 + $0xa0] sm:$0xff] %v900
      %944 = vst [vmem:[%s202 + $0xa8] sm:$0xff] %v902
      %945 = vst [vmem:[%s202 + $0xb0] sm:$0xff] %v904
      %946 = vst [vmem:[%s202 + $0xb8] sm:$0xff] %v906
      %947 = vst [vmem:[%s202 + $0xc0] sm:$0xff] %v908
      %948 = vst [vmem:[%s202 + $0xc8] sm:$0xff] %v910
      %949 = vst [vmem:[%s202 + $0xd0] sm:$0xff] %v912
      %950 = vst [vmem:[%s202 + $0xd8] sm:$0xff] %v914
      %951 = vst [vmem:[%s202 + $0xe0] sm:$0xff] %v916
      %952 = vst [vmem:[%s202 + $0xe8] sm:$0xff] %v918
      %953 = vst [vmem:[%s202 + $0xf0] sm:$0xff] %v920
      %954 = vst [vmem:[%s202 + $0xf8] sm:$0xff] %v922
      %s955 = smul.u32 32, %s15
      %p956 = scmp.lt.s32.totalorder %s955, 63
      %s957 = scalar_select %p956, %s955, 63
      %s958 = smul.addr %s957, 8
      %s959 = scalar_lea.vmem %s4, %s958
      // Predicated region
      $region37: #{traj_predictor_forward.29} parent=35 // pred_check
        %p960 = pneg %p122
      $region38: #{traj_predictor_forward.29} parent=35 // pred_check_branch
        %962 = sbr.rel (%p960) target = $region40
      $region39: #{traj_predictor_forward.29} parent=35 // pred_region
        %s963 = smul.u32 32, %s15
      $region40: #{traj_predictor_forward.29} parent=35 // pred_fallthru
        _
    $region36: #{traj_predictor_forward.29} parent=5 // pred_fallthru
      _
    %p964 = scmp.le.s32.totalorder 2, %s10
    // Predicated region
    $region41: #{traj_predictor_forward.29} parent=5 // pred_check
      %p965 = pneg %p964
    $region42: #{traj_predictor_forward.29} parent=5 // pred_check_branch
      %967 = sbr.rel (%p965) target = $region44
    $region43: #{traj_predictor_forward.29} parent=5 // pred_region
      %s968 = ssub.s32 %s10, 2
      // Predicated region
      $region45: #{traj_predictor_forward.29} parent=43 // pred_check
        %p969 = pneg %p128
      $region46: #{traj_predictor_forward.29} parent=43 // pred_check_branch
        %971 = sbr.rel (%p969) target = $region48
      $region47: #{traj_predictor_forward.29} parent=43 // pred_region
        %s972 = smul.u32 32, %s16
        %p973 = scmp.lt.s32.totalorder %s972, 63
        %s974 = scalar_select %p973, %s972, 63
        %s975 = smul.addr %s974, 8
        %s976 = scalar_lea.vmem %s4, %s975
      $region48: #{traj_predictor_forward.29} parent=43 // pred_fallthru
        _
    $region44: #{traj_predictor_forward.29} parent=5 // pred_fallthru
      _
  $region6: #{traj_predictor_forward.29} parent=0 // loop_footer
    %s14 = sadd.s32 1, %s10
  $region7: #{traj_predictor_forward.29} parent=0 // loop_footer_branch
    %9 = sbr.rel target = $region3
  $region8: #{traj_predictor_forward.29} parent=0 // loop_exit
    _

</llo_original>
